<compile_context>
chip_gen: v7x
topology: tpu7x:2x2x1
jax: 0.10.0
libtpu: 0.0.40
codegen_flags: <defaults>
</compile_context>

<pallas_src>
import jax
import jax.numpy as jnp
from jax.experimental import pallas as pl
from jax.experimental.pallas import tpu as pltpu

EPS = 1e-5  # PyTorch InstanceNorm2d default (affine=False, no running stats)


# ----------------------------- kernel helpers ------------------------------

def _conv3x3(x, w_ref):
    """3x3 convolution with reflection padding 1 (no bias).

    x:     (H, W, Cp) activations (any float dtype; cast to bf16 for the MXU)
    w_ref: (3, 3*Cp, Cp) bf16 weight Ref; K laid out as dw*Cp + cin per dh
    returns (H*W, Cp) float32
    """
    H, W, Cp = x.shape
    xb = x.astype(jnp.bfloat16)

    # Reflection pad along H only (leading, untiled dim -> cheap row stacking).
    xh = jnp.concatenate([xb[1:2], xb, xb[H - 2:H - 1]], axis=0)            # (H+2, W, Cp)

    # dw-shifted copies (reflection along W) concatenated on the channel
    # (lane) axis: K index = dw*Cp + cin, matching the wrapper's weight layout.
    left = jnp.concatenate([xh[:, 1:2, :], xh[:, :W - 1, :]], axis=1)       # col (w-1)
    right = jnp.concatenate([xh[:, 1:, :], xh[:, W - 2:W - 1, :]], axis=1)  # col (w+1)
    slab = jnp.concatenate([left, xh, right], axis=-1)                      # (H+2, W, 3*Cp)

    # 3 MXU dots with K = 3*Cp (one per dh); accumulation stays inside the
    # MXU f32 accumulators instead of a VMEM-resident f32 tile.
    out = jnp.dot(slab[0:H].reshape(H * W, 3 * Cp), w_ref[0],
                  preferred_element_type=jnp.float32)
    out = out + jnp.dot(slab[1:H + 1].reshape(H * W, 3 * Cp), w_ref[1],
                        preferred_element_type=jnp.float32)
    out = out + jnp.dot(slab[2:H + 2].reshape(H * W, 3 * Cp), w_ref[2],
                        preferred_element_type=jnp.float32)
    return out


def _instance_norm_flat(y, n_pix, relu):
    """Affine-free per-channel instance norm on flat (H*W, C) f32 data.

    Single-pass moments (sum / sum-of-squares); var clamped at 0 against
    cancellation.  Tolerances here are loose (bf16 matmul operands) -- switch
    to a two-pass centered variance if they ever tighten.
    """
    inv_n = 1.0 / n_pix
    s = jnp.sum(y, axis=0, keepdims=True)                 # (1, C)
    ss = jnp.sum(y * y, axis=0, keepdims=True)            # (1, C)
    mean = s * inv_n
    var = jnp.maximum(ss * inv_n - mean * mean, 0.0)
    out = (y - mean) * jax.lax.rsqrt(var + EPS)
    if relu:
        out = jnp.maximum(out, 0.0)
    return out


# -------------------------------- kernel -----------------------------------

def residual_block_kernel(x_ref, w1_ref, w2_ref, o_ref):
    _, H, W, Cp = x_ref.shape
    n_pix = H * W

    x = x_ref[0]                                              # (H, W, Cp) f32
    # Conv1.  Bias omitted: the affine-free InstanceNorm below subtracts the
    # per-channel mean, so a per-channel constant bias cancels exactly.
    y = _conv3x3(x, w1_ref)                                   # (H*W, Cp) f32
    # Fused IN1 + ReLU + bf16 cast: one elementwise pass, bf16 result feeds
    # conv2's slab build directly.
    y = _instance_norm_flat(y, n_pix, relu=True).astype(jnp.bfloat16)
    y = _conv3x3(y.reshape(H, W, Cp), w2_ref)                 # conv2
    y = _instance_norm_flat(y, n_pix, relu=False)             # IN2
    o_ref[0] = (x + y.reshape(H, W, Cp)).astype(o_ref.dtype)  # residual add


# ------------------------------- wrappers -----------------------------------

def _physical_vmem_bytes():
    """Per-TensorCore VMEM; conservative fallback if the query is unavailable."""
    try:
        return int(pltpu.get_tpu_info().vmem_capacity_bytes)
    except Exception:
        return 64 << 20          # v7x per-core size == smallest current part


def _vmem_budget_bytes(H, W, Cp):
    f32, bf16 = 4, 2
    hw = H * W
    io = 2 * 2 * hw * Cp * f32                     # x + out blocks, double-buffered
    wts = 2 * 3 * (3 * Cp) * Cp * bf16             # two weight tensors, single-buffered
    slab = (H + 2) * W * (3 * Cp) * bf16           # channel-concat slab (per conv)
    shifts = 3 * (H + 2) * W * Cp * bf16           # xh + left/right temporaries
    acts = hw * Cp * (2 * f32 + bf16)              # conv acc + IN temps + bf16 act
    return io + wts + slab + shifts + acts + (4 << 20)


def residual_block_nhwc(x_nhwc, w1, b1, w2, b2):
    """x_nhwc: (N, H, W, C) float32; w*: (Cout, Cin, 3, 3) PyTorch layout.

    Biases b1/b2 are accepted for API parity but unused: the affine-free
    InstanceNorm directly after each conv cancels any per-channel constant.
    Prefer this NHWC entry point; the NCHW wrapper below adds two full-tensor
    transposes (pure HBM overhead).
    """
    del b1, b2
    N, H, W, C = x_nhwc.shape
    if H < 2 or W < 2:
        raise ValueError("reflection padding of 1 requires H >= 2 and W >= 2")
    if W % 16 != 0:
        # bf16 sublane packing: the in-kernel (H, W, C) -> (H*W, C) reshape is
        # only layout-preserving (no relayout copies) when W % 16 == 0.
        raise ValueError("W must be a multiple of 16 for this kernel")

    # Pad channels up to a multiple of 128 (lane width): unmasked lane-dense
    # stores + full MXU columns.  Padded channels stay exactly zero through
    # conv (zero weights), IN (0 * rsqrt(eps) = 0), ReLU and the residual add.
    Cp = ((C + 127) // 128) * 128

    def prep_w(w):
        wk = jnp.transpose(w, (2, 3, 1, 0))                        # (kh, kw, Cin, Cout)
        wk = jnp.pad(wk, ((0, 0), (0, 0), (0, Cp - C), (0, Cp - C)))
        # Flatten (kw, Cin) -> K so K index = dw*Cp + cin, matching the slab.
        return wk.reshape(3, 3 * Cp, Cp).astype(jnp.bfloat16)

    w1k, w2k = prep_w(w1), prep_w(w2)
    xp = x_nhwc if Cp == C else jnp.pad(
        x_nhwc, ((0, 0), (0, 0), (0, 0), (0, Cp - C)))

    phys = _physical_vmem_bytes()
    vmem_limit = int(min(max(_vmem_budget_bytes(H, W, Cp), 32 << 20),
                         int(phys * 0.85)))

    img_map = lambda n: (n, 0, 0, 0)
    # TODO(synk): for N == 1 on v7x (2 TensorCores) or images too large for a
    # whole-image VMEM block, add an H-tiled grid axis with two-pass
    # InstanceNorm statistics so work shards across cores / stays in VMEM.

    def build(single_buffer_weights):
        wspec_kw = ({"pipeline_mode": pl.Buffered(buffer_count=1)}
                    if single_buffer_weights else {})
        w_spec = pl.BlockSpec((3, 3 * Cp, Cp), lambda n: (0, 0, 0), **wspec_kw)
        return pl.pallas_call(
            residual_block_kernel,
            out_shape=jax.ShapeDtypeStruct((N, H, W, Cp), x_nhwc.dtype),
            grid_spec=pltpu.PrefetchScalarGridSpec(
                num_scalar_prefetch=0,
                grid=(N,),
                in_specs=[pl.BlockSpec((1, H, W, Cp), img_map), w_spec, w_spec],
                out_specs=pl.BlockSpec((1, H, W, Cp), img_map),
            ),
            compiler_params=pltpu.CompilerParams(
                dimension_semantics=("parallel",),
                vmem_limit_bytes=vmem_limit),
        )

    try:
        # Weights have a constant index_map across the grid -> single-buffer
        # them (saves a duplicate ~2x 9*Cp*Cp bf16 copy; matters on v7x).
        out = build(True)(xp, w1k, w2k)
    except Exception:
        out = build(False)(xp, w1k, w2k)   # builds without pipeline_mode support

    return out if Cp == C else out[..., :C]


def residual_block(x_nchw, w1, b1, w2, b2):
    """PyTorch-style NCHW entry point.

    NOTE: if adjacent layers can stay NHWC, call residual_block_nhwc directly
    and skip the two full-tensor HBM transposes below.
    """
    x = jnp.transpose(x_nchw, (0, 2, 3, 1))      # NCHW -> NHWC
    out = residual_block_nhwc(x, w1, b1, w2, b2)
    return jnp.transpose(out, (0, 3, 1, 2))      # NHWC -> NCHW


# ------------------------- pure-JAX reference (NCHW) ------------------------

def _ref_residual_block(x, w1, b1, w2, b2):
    def conv(z, w, b):
        zp = jnp.pad(z, ((0, 0), (0, 0), (1, 1), (1, 1)), mode="reflect")
        y = jax.lax.conv_general_dilated(
            zp, w, window_strides=(1, 1), padding="VALID",
            dimension_numbers=("NCHW", "OIHW", "NCHW"))
        return y + b.reshape(1, -1, 1, 1)

    def inorm(y):
        mean = jnp.mean(y, axis=(2, 3), keepdims=True)
        var = jnp.mean(jnp.square(y - mean), axis=(2, 3), keepdims=True)
        return (y - mean) * jax.lax.rsqrt(var + EPS)

    y = conv(x, w1, b1)
    y = inorm(y)
    y = jnp.maximum(y, 0.0)
    y = conv(y, w2, b2)
    y = inorm(y)
    return x + y


# --------------------------------- main --------------------------------------

if __name__ == "__main__":
    N, C, H, W = 2, 4, 16, 16
    key = jax.random.PRNGKey(0)
    kx, kw1, kb1, kw2, kb2 = jax.random.split(key, 5)

    x = jax.random.normal(kx, (N, C, H, W), jnp.float32)

    # deterministic synthetic parameters (Conv2d-style fan-in scaling)
    scale = 1.0 / jnp.sqrt(jnp.float32(C * 3 * 3))
    w1 = jax.random.uniform(kw1, (C, C, 3, 3), jnp.float32, -scale, scale)
    b1 = jax.random.uniform(kb1, (C,), jnp.float32, -scale, scale)
    w2 = jax.random.uniform(kw2, (C, C, 3, 3), jnp.float32, -scale, scale)
    b2 = jax.random.uniform(kb2, (C,), jnp.float32, -scale, scale)

    out = jax.block_until_ready(residual_block(x, w1, b1, w2, b2))

    ref = jax.block_until_ready(_ref_residual_block(x, w1, b1, w2, b2))
    assert out.shape == (N, C, H, W)
    # Tolerance widened vs. an all-f32 version because the conv matmul
    # operands are bf16 (accumulation stays f32).
    assert jnp.allclose(out, ref, rtol=2e-2, atol=2e-2), "mismatch vs reference"

    print("KERNEL_OK")
</pallas_src>

<mosaic_0001>
module attributes {stable_mosaic.version = 11 : i64} {
  func.func @residual_block_kernel(%arg0: i32, %arg1: memref<1x16x16x128xf32, #tpu.memory_space<vmem>>, %arg2: memref<3x384x128xbf16, #tpu.memory_space<vmem>>, %arg3: memref<3x384x128xbf16, #tpu.memory_space<vmem>>, %arg4: memref<1x16x16x128xf32, #tpu.memory_space<vmem>>) attributes {dimension_semantics = [#tpu.dimension_semantics<parallel>], iteration_bounds = array<i64: 2>, scalar_prefetch = 0 : i64, scratch_operands = 0 : i64, tpu.core_type = #tpu.core_type<tc>, window_params = [{transform_indices = @transform_0, window_bounds = array<i64: 1, 16, 16, 128>}, {pipeline_mode = #tpu.pipeline_mode<synchronous>, transform_indices = @transform_1, window_bounds = array<i64: 3, 384, 128>}, {pipeline_mode = #tpu.pipeline_mode<synchronous>, transform_indices = @transform_2, window_bounds = array<i64: 3, 384, 128>}, {transform_indices = @transform_3, window_bounds = array<i64: 1, 16, 16, 128>}]} {
    %c0 = arith.constant 0 : index
    %c0_0 = arith.constant 0 : index
    %c0_1 = arith.constant 0 : index
    %c0_2 = arith.constant 0 : index
    %0 = vector.load %arg1[%c0, %c0_0, %c0_1, %c0_2] : memref<1x16x16x128xf32, #tpu.memory_space<vmem>>, vector<1x16x16x128xf32>
    %1 = vector.shape_cast %0 : vector<1x16x16x128xf32> to vector<16x16x128xf32>
    %2 = arith.truncf %1 : vector<16x16x128xf32> to vector<16x16x128xbf16>
    %3 = vector.extract_strided_slice %2 {offsets = [1, 0, 0], sizes = [1, 16, 128], strides = [1, 1, 1]} : vector<16x16x128xbf16> to vector<1x16x128xbf16>
    %4 = vector.extract_strided_slice %2 {offsets = [14, 0, 0], sizes = [1, 16, 128], strides = [1, 1, 1]} : vector<16x16x128xbf16> to vector<1x16x128xbf16>
    %5 = tpu.concatenate %3, %2, %4 in 0 : vector<1x16x128xbf16>, vector<16x16x128xbf16>, vector<1x16x128xbf16> -> vector<18x16x128xbf16>
    %6 = vector.extract_strided_slice %5 {offsets = [0, 1, 0], sizes = [18, 1, 128], strides = [1, 1, 1]} : vector<18x16x128xbf16> to vector<18x1x128xbf16>
    %7 = vector.extract_strided_slice %5 {offsets = [0, 0, 0], sizes = [18, 15, 128], strides = [1, 1, 1]} : vector<18x16x128xbf16> to vector<18x15x128xbf16>
    %8 = tpu.concatenate %6, %7 in 1 : vector<18x1x128xbf16>, vector<18x15x128xbf16> -> vector<18x16x128xbf16>
    %9 = vector.extract_strided_slice %5 {offsets = [0, 1, 0], sizes = [18, 15, 128], strides = [1, 1, 1]} : vector<18x16x128xbf16> to vector<18x15x128xbf16>
    %10 = vector.extract_strided_slice %5 {offsets = [0, 14, 0], sizes = [18, 1, 128], strides = [1, 1, 1]} : vector<18x16x128xbf16> to vector<18x1x128xbf16>
    %11 = tpu.concatenate %9, %10 in 1 : vector<18x15x128xbf16>, vector<18x1x128xbf16> -> vector<18x16x128xbf16>
    %12 = tpu.concatenate %8, %5, %11 in 2 : vector<18x16x128xbf16>, vector<18x16x128xbf16>, vector<18x16x128xbf16> -> vector<18x16x384xbf16>
    %13 = vector.extract_strided_slice %12 {offsets = [0, 0, 0], sizes = [16, 16, 384], strides = [1, 1, 1]} : vector<18x16x384xbf16> to vector<16x16x384xbf16>
    %14 = vector.shape_cast %13 : vector<16x16x384xbf16> to vector<256x384xbf16>
    %c0_3 = arith.constant 0 : index
    %c0_4 = arith.constant 0 : index
    %c0_5 = arith.constant 0 : index
    %15 = vector.load %arg2[%c0_3, %c0_4, %c0_5] : memref<3x384x128xbf16, #tpu.memory_space<vmem>>, vector<1x384x128xbf16>
    %16 = vector.shape_cast %15 : vector<1x384x128xbf16> to vector<384x128xbf16>
    %cst = arith.constant dense<0.000000e+00> : vector<256x128xf32>
    %17 = tpu.matmul %14, %16, %cst {dimension_numbers = #tpu.dot_dimension_numbers<[1], [0], [0], [1], [0, 0, 1, 1], [], []>} : vector<256x384xbf16>, vector<384x128xbf16>, vector<256x128xf32> -> vector<256x128xf32>
    %18 = vector.extract_strided_slice %12 {offsets = [1, 0, 0], sizes = [16, 16, 384], strides = [1, 1, 1]} : vector<18x16x384xbf16> to vector<16x16x384xbf16>
    %19 = vector.shape_cast %18 : vector<16x16x384xbf16> to vector<256x384xbf16>
    %c1 = arith.constant 1 : index
    %c0_6 = arith.constant 0 : index
    %c0_7 = arith.constant 0 : index
    %20 = vector.load %arg2[%c1, %c0_6, %c0_7] : memref<3x384x128xbf16, #tpu.memory_space<vmem>>, vector<1x384x128xbf16>
    %21 = vector.shape_cast %20 : vector<1x384x128xbf16> to vector<384x128xbf16>
    %cst_8 = arith.constant dense<0.000000e+00> : vector<256x128xf32>
    %22 = tpu.matmul %19, %21, %cst_8 {dimension_numbers = #tpu.dot_dimension_numbers<[1], [0], [0], [1], [0, 0, 1, 1], [], []>} : vector<256x384xbf16>, vector<384x128xbf16>, vector<256x128xf32> -> vector<256x128xf32>
    %23 = arith.addf %17, %22 : vector<256x128xf32>
    %24 = vector.extract_strided_slice %12 {offsets = [2, 0, 0], sizes = [16, 16, 384], strides = [1, 1, 1]} : vector<18x16x384xbf16> to vector<16x16x384xbf16>
    %25 = vector.shape_cast %24 : vector<16x16x384xbf16> to vector<256x384xbf16>
    %c2 = arith.constant 2 : index
    %c0_9 = arith.constant 0 : index
    %c0_10 = arith.constant 0 : index
    %26 = vector.load %arg2[%c2, %c0_9, %c0_10] : memref<3x384x128xbf16, #tpu.memory_space<vmem>>, vector<1x384x128xbf16>
    %27 = vector.shape_cast %26 : vector<1x384x128xbf16> to vector<384x128xbf16>
    %cst_11 = arith.constant dense<0.000000e+00> : vector<256x128xf32>
    %28 = tpu.matmul %25, %27, %cst_11 {dimension_numbers = #tpu.dot_dimension_numbers<[1], [0], [0], [1], [0, 0, 1, 1], [], []>} : vector<256x384xbf16>, vector<384x128xbf16>, vector<256x128xf32> -> vector<256x128xf32>
    %29 = arith.addf %23, %28 : vector<256x128xf32>
    %cst_12 = arith.constant dense<0.000000e+00> : vector<128xf32>
    %30 = vector.multi_reduction <add>, %29, %cst_12 [0] : vector<256x128xf32> to vector<128xf32>
    %31 = vector.shape_cast %30 : vector<128xf32> to vector<1x128xf32>
    %32 = arith.mulf %29, %29 : vector<256x128xf32>
    %cst_13 = arith.constant dense<0.000000e+00> : vector<128xf32>
    %33 = vector.multi_reduction <add>, %32, %cst_13 [0] : vector<256x128xf32> to vector<128xf32>
    %34 = vector.shape_cast %33 : vector<128xf32> to vector<1x128xf32>
    %cst_14 = arith.constant 3.906250e-03 : f32
    %35 = vector.broadcast %cst_14 : f32 to vector<1x128xf32>
    %36 = arith.mulf %31, %35 : vector<1x128xf32>
    %cst_15 = arith.constant 3.906250e-03 : f32
    %37 = vector.broadcast %cst_15 : f32 to vector<1x128xf32>
    %38 = arith.mulf %34, %37 : vector<1x128xf32>
    %39 = arith.mulf %36, %36 : vector<1x128xf32>
    %40 = arith.subf %38, %39 : vector<1x128xf32>
    %cst_16 = arith.constant 0.000000e+00 : f32
    %41 = vector.broadcast %cst_16 : f32 to vector<1x128xf32>
    %42 = arith.maximumf %40, %41 : vector<1x128xf32>
    %43 = vector.broadcast %36 : vector<1x128xf32> to vector<256x128xf32>
    %44 = arith.subf %29, %43 : vector<256x128xf32>
    %cst_17 = arith.constant 9.99999974E-6 : f32
    %45 = vector.broadcast %cst_17 : f32 to vector<1x128xf32>
    %46 = arith.addf %42, %45 : vector<1x128xf32>
    %47 = math.rsqrt %46 : vector<1x128xf32>
    %48 = vector.broadcast %47 : vector<1x128xf32> to vector<256x128xf32>
    %49 = arith.mulf %44, %48 : vector<256x128xf32>
    %cst_18 = arith.constant 0.000000e+00 : f32
    %50 = vector.broadcast %cst_18 : f32 to vector<256x128xf32>
    %51 = arith.maximumf %49, %50 : vector<256x128xf32>
    %52 = arith.truncf %51 : vector<256x128xf32> to vector<256x128xbf16>
    %53 = vector.shape_cast %52 : vector<256x128xbf16> to vector<16x16x128xbf16>
    %54 = vector.extract_strided_slice %53 {offsets = [1, 0, 0], sizes = [1, 16, 128], strides = [1, 1, 1]} : vector<16x16x128xbf16> to vector<1x16x128xbf16>
    %55 = vector.extract_strided_slice %53 {offsets = [14, 0, 0], sizes = [1, 16, 128], strides = [1, 1, 1]} : vector<16x16x128xbf16> to vector<1x16x128xbf16>
    %56 = tpu.concatenate %54, %53, %55 in 0 : vector<1x16x128xbf16>, vector<16x16x128xbf16>, vector<1x16x128xbf16> -> vector<18x16x128xbf16>
    %57 = vector.extract_strided_slice %56 {offsets = [0, 1, 0], sizes = [18, 1, 128], strides = [1, 1, 1]} : vector<18x16x128xbf16> to vector<18x1x128xbf16>
    %58 = vector.extract_strided_slice %56 {offsets = [0, 0, 0], sizes = [18, 15, 128], strides = [1, 1, 1]} : vector<18x16x128xbf16> to vector<18x15x128xbf16>
    %59 = tpu.concatenate %57, %58 in 1 : vector<18x1x128xbf16>, vector<18x15x128xbf16> -> vector<18x16x128xbf16>
    %60 = vector.extract_strided_slice %56 {offsets = [0, 1, 0], sizes = [18, 15, 128], strides = [1, 1, 1]} : vector<18x16x128xbf16> to vector<18x15x128xbf16>
    %61 = vector.extract_strided_slice %56 {offsets = [0, 14, 0], sizes = [18, 1, 128], strides = [1, 1, 1]} : vector<18x16x128xbf16> to vector<18x1x128xbf16>
    %62 = tpu.concatenate %60, %61 in 1 : vector<18x15x128xbf16>, vector<18x1x128xbf16> -> vector<18x16x128xbf16>
    %63 = tpu.concatenate %59, %56, %62 in 2 : vector<18x16x128xbf16>, vector<18x16x128xbf16>, vector<18x16x128xbf16> -> vector<18x16x384xbf16>
    %64 = vector.extract_strided_slice %63 {offsets = [0, 0, 0], sizes = [16, 16, 384], strides = [1, 1, 1]} : vector<18x16x384xbf16> to vector<16x16x384xbf16>
    %65 = vector.shape_cast %64 : vector<16x16x384xbf16> to vector<256x384xbf16>
    %c0_19 = arith.constant 0 : index
    %c0_20 = arith.constant 0 : index
    %c0_21 = arith.constant 0 : index
    %66 = vector.load %arg3[%c0_19, %c0_20, %c0_21] : memref<3x384x128xbf16, #tpu.memory_space<vmem>>, vector<1x384x128xbf16>
    %67 = vector.shape_cast %66 : vector<1x384x128xbf16> to vector<384x128xbf16>
    %cst_22 = arith.constant dense<0.000000e+00> : vector<256x128xf32>
    %68 = tpu.matmul %65, %67, %cst_22 {dimension_numbers = #tpu.dot_dimension_numbers<[1], [0], [0], [1], [0, 0, 1, 1], [], []>} : vector<256x384xbf16>, vector<384x128xbf16>, vector<256x128xf32> -> vector<256x128xf32>
    %69 = vector.extract_strided_slice %63 {offsets = [1, 0, 0], sizes = [16, 16, 384], strides = [1, 1, 1]} : vector<18x16x384xbf16> to vector<16x16x384xbf16>
    %70 = vector.shape_cast %69 : vector<16x16x384xbf16> to vector<256x384xbf16>
    %c1_23 = arith.constant 1 : index
    %c0_24 = arith.constant 0 : index
    %c0_25 = arith.constant 0 : index
    %71 = vector.load %arg3[%c1_23, %c0_24, %c0_25] : memref<3x384x128xbf16, #tpu.memory_space<vmem>>, vector<1x384x128xbf16>
    %72 = vector.shape_cast %71 : vector<1x384x128xbf16> to vector<384x128xbf16>
    %cst_26 = arith.constant dense<0.000000e+00> : vector<256x128xf32>
    %73 = tpu.matmul %70, %72, %cst_26 {dimension_numbers = #tpu.dot_dimension_numbers<[1], [0], [0], [1], [0, 0, 1, 1], [], []>} : vector<256x384xbf16>, vector<384x128xbf16>, vector<256x128xf32> -> vector<256x128xf32>
    %74 = arith.addf %68, %73 : vector<256x128xf32>
    %75 = vector.extract_strided_slice %63 {offsets = [2, 0, 0], sizes = [16, 16, 384], strides = [1, 1, 1]} : vector<18x16x384xbf16> to vector<16x16x384xbf16>
    %76 = vector.shape_cast %75 : vector<16x16x384xbf16> to vector<256x384xbf16>
    %c2_27 = arith.constant 2 : index
    %c0_28 = arith.constant 0 : index
    %c0_29 = arith.constant 0 : index
    %77 = vector.load %arg3[%c2_27, %c0_28, %c0_29] : memref<3x384x128xbf16, #tpu.memory_space<vmem>>, vector<1x384x128xbf16>
    %78 = vector.shape_cast %77 : vector<1x384x128xbf16> to vector<384x128xbf16>
    %cst_30 = arith.constant dense<0.000000e+00> : vector<256x128xf32>
    %79 = tpu.matmul %76, %78, %cst_30 {dimension_numbers = #tpu.dot_dimension_numbers<[1], [0], [0], [1], [0, 0, 1, 1], [], []>} : vector<256x384xbf16>, vector<384x128xbf16>, vector<256x128xf32> -> vector<256x128xf32>
    %80 = arith.addf %74, %79 : vector<256x128xf32>
    %cst_31 = arith.constant dense<0.000000e+00> : vector<128xf32>
    %81 = vector.multi_reduction <add>, %80, %cst_31 [0] : vector<256x128xf32> to vector<128xf32>
    %82 = vector.shape_cast %81 : vector<128xf32> to vector<1x128xf32>
    %83 = arith.mulf %80, %80 : vector<256x128xf32>
    %cst_32 = arith.constant dense<0.000000e+00> : vector<128xf32>
    %84 = vector.multi_reduction <add>, %83, %cst_32 [0] : vector<256x128xf32> to vector<128xf32>
    %85 = vector.shape_cast %84 : vector<128xf32> to vector<1x128xf32>
    %cst_33 = arith.constant 3.906250e-03 : f32
    %86 = vector.broadcast %cst_33 : f32 to vector<1x128xf32>
    %87 = arith.mulf %82, %86 : vector<1x128xf32>
    %cst_34 = arith.constant 3.906250e-03 : f32
    %88 = vector.broadcast %cst_34 : f32 to vector<1x128xf32>
    %89 = arith.mulf %85, %88 : vector<1x128xf32>
    %90 = arith.mulf %87, %87 : vector<1x128xf32>
    %91 = arith.subf %89, %90 : vector<1x128xf32>
    %cst_35 = arith.constant 0.000000e+00 : f32
    %92 = vector.broadcast %cst_35 : f32 to vector<1x128xf32>
    %93 = arith.maximumf %91, %92 : vector<1x128xf32>
    %94 = vector.broadcast %87 : vector<1x128xf32> to vector<256x128xf32>
    %95 = arith.subf %80, %94 : vector<256x128xf32>
    %cst_36 = arith.constant 9.99999974E-6 : f32
    %96 = vector.broadcast %cst_36 : f32 to vector<1x128xf32>
    %97 = arith.addf %93, %96 : vector<1x128xf32>
    %98 = math.rsqrt %97 : vector<1x128xf32>
    %99 = vector.broadcast %98 : vector<1x128xf32> to vector<256x128xf32>
    %100 = arith.mulf %95, %99 : vector<256x128xf32>
    %101 = vector.shape_cast %100 : vector<256x128xf32> to vector<16x16x128xf32>
    %102 = arith.addf %1, %101 : vector<16x16x128xf32>
    %c0_37 = arith.constant 0 : index
    %c0_38 = arith.constant 0 : index
    %c0_39 = arith.constant 0 : index
    %c0_40 = arith.constant 0 : index
    %103 = vector.load %arg4[%c0_37, %c0_38, %c0_39, %c0_40] : memref<1x16x16x128xf32, #tpu.memory_space<vmem>>, vector<1x16x16x128xf32>
    %104 = vector.shape_cast %103 : vector<1x16x16x128xf32> to vector<16x16x128xf32>
    %105 = vector.shape_cast %102 : vector<16x16x128xf32> to vector<1x16x16x128xf32>
    tpu.vector_store %arg4[%c0_37, %c0_38, %c0_39, %c0_40], %105 {strides = array<i32>} : memref<1x16x16x128xf32, #tpu.memory_space<vmem>>, vector<1x16x16x128xf32>,
    return
  }
  func.func @transform_0(%arg0: i32) -> (i32, i32, i32, i32) {
    %c0_i32 = arith.constant 0 : i32
    %c0_i32_0 = arith.constant 0 : i32
    %c0_i32_1 = arith.constant 0 : i32
    %c0_i32_2 = arith.constant 0 : i32
    return %arg0, %c0_i32, %c0_i32_0, %c0_i32_1 : i32, i32, i32, i32
  }
  func.func @transform_1(%arg0: i32) -> (i32, i32, i32) {
    %c0_i32 = arith.constant 0 : i32
    %c0_i32_0 = arith.constant 0 : i32
    %c0_i32_1 = arith.constant 0 : i32
    %c0_i32_2 = arith.constant 0 : i32
    return %c0_i32, %c0_i32_0, %c0_i32_1 : i32, i32, i32
  }
  func.func @transform_2(%arg0: i32) -> (i32, i32, i32) {
    %c0_i32 = arith.constant 0 : i32
    %c0_i32_0 = arith.constant 0 : i32
    %c0_i32_1 = arith.constant 0 : i32
    %c0_i32_2 = arith.constant 0 : i32
    return %c0_i32, %c0_i32_0, %c0_i32_1 : i32, i32, i32
  }
  func.func @transform_3(%arg0: i32) -> (i32, i32, i32, i32) {
    %c0_i32 = arith.constant 0 : i32
    %c0_i32_0 = arith.constant 0 : i32
    %c0_i32_1 = arith.constant 0 : i32
    %c0_i32_2 = arith.constant 0 : i32
    return %arg0, %c0_i32, %c0_i32_0, %c0_i32_1 : i32, i32, i32, i32
  }
}

module attributes {stable_mosaic.version = 11 : i64} {
  func.func @residual_block_kernel(%arg0: i32, %arg1: memref<1x16x16x128xf32, #tpu.memory_space<vmem>>, %arg2: memref<3x384x128xbf16, #tpu.memory_space<vmem>>, %arg3: memref<3x384x128xbf16, #tpu.memory_space<vmem>>, %arg4: memref<1x16x16x128xf32, #tpu.memory_space<vmem>>) attributes {dimension_semantics = [#tpu.dimension_semantics<parallel>], iteration_bounds = array<i64: 2>, scalar_prefetch = 0 : i64, scratch_operands = 0 : i64, tpu.core_type = #tpu.core_type<tc>, window_params = [{transform_indices = @transform_0, window_bounds = array<i64: 1, 16, 16, 128>}, {pipeline_mode = #tpu.pipeline_mode<synchronous>, transform_indices = @transform_1, window_bounds = array<i64: 3, 384, 128>}, {pipeline_mode = #tpu.pipeline_mode<synchronous>, transform_indices = @transform_2, window_bounds = array<i64: 3, 384, 128>}, {transform_indices = @transform_3, window_bounds = array<i64: 1, 16, 16, 128>}]} {
    %c0 = arith.constant 0 : index
    %c0_0 = arith.constant 0 : index
    %c0_1 = arith.constant 0 : index
    %c0_2 = arith.constant 0 : index
    %0 = vector.load %arg1[%c0, %c0_0, %c0_1, %c0_2] : memref<1x16x16x128xf32, #tpu.memory_space<vmem>>, vector<1x16x16x128xf32>
    %1 = vector.shape_cast %0 : vector<1x16x16x128xf32> to vector<16x16x128xf32>
    %2 = arith.truncf %1 : vector<16x16x128xf32> to vector<16x16x128xbf16>
    %3 = vector.extract_strided_slice %2 {offsets = [1, 0, 0], sizes = [1, 16, 128], strides = [1, 1, 1]} : vector<16x16x128xbf16> to vector<1x16x128xbf16>
    %4 = vector.extract_strided_slice %2 {offsets = [14, 0, 0], sizes = [1, 16, 128], strides = [1, 1, 1]} : vector<16x16x128xbf16> to vector<1x16x128xbf16>
    %5 = tpu.concatenate %3, %2, %4 in 0 : vector<1x16x128xbf16>, vector<16x16x128xbf16>, vector<1x16x128xbf16> -> vector<18x16x128xbf16>
    %6 = vector.extract_strided_slice %5 {offsets = [0, 1, 0], sizes = [18, 1, 128], strides = [1, 1, 1]} : vector<18x16x128xbf16> to vector<18x1x128xbf16>
    %7 = vector.extract_strided_slice %5 {offsets = [0, 0, 0], sizes = [18, 15, 128], strides = [1, 1, 1]} : vector<18x16x128xbf16> to vector<18x15x128xbf16>
    %8 = tpu.concatenate %6, %7 in 1 : vector<18x1x128xbf16>, vector<18x15x128xbf16> -> vector<18x16x128xbf16>
    %9 = vector.extract_strided_slice %5 {offsets = [0, 1, 0], sizes = [18, 15, 128], strides = [1, 1, 1]} : vector<18x16x128xbf16> to vector<18x15x128xbf16>
    %10 = vector.extract_strided_slice %5 {offsets = [0, 14, 0], sizes = [18, 1, 128], strides = [1, 1, 1]} : vector<18x16x128xbf16> to vector<18x1x128xbf16>
    %11 = tpu.concatenate %9, %10 in 1 : vector<18x15x128xbf16>, vector<18x1x128xbf16> -> vector<18x16x128xbf16>
    %12 = tpu.concatenate %8, %5, %11 in 2 : vector<18x16x128xbf16>, vector<18x16x128xbf16>, vector<18x16x128xbf16> -> vector<18x16x384xbf16>
    %13 = vector.extract_strided_slice %12 {offsets = [0, 0, 0], sizes = [16, 16, 384], strides = [1, 1, 1]} : vector<18x16x384xbf16> to vector<16x16x384xbf16>
    %14 = vector.shape_cast %13 : vector<16x16x384xbf16> to vector<256x384xbf16>
    %c0_3 = arith.constant 0 : index
    %c0_4 = arith.constant 0 : index
    %c0_5 = arith.constant 0 : index
    %15 = vector.load %arg2[%c0_3, %c0_4, %c0_5] : memref<3x384x128xbf16, #tpu.memory_space<vmem>>, vector<1x384x128xbf16>
    %16 = vector.shape_cast %15 : vector<1x384x128xbf16> to vector<384x128xbf16>
    %cst = arith.constant dense<0.000000e+00> : vector<256x128xf32>
    %17 = tpu.matmul %14, %16, %cst {dimension_numbers = #tpu.dot_dimension_numbers<[1], [0], [0], [1], [0, 0, 1, 1], [], []>} : vector<256x384xbf16>, vector<384x128xbf16>, vector<256x128xf32> -> vector<256x128xf32>
    %18 = vector.extract_strided_slice %12 {offsets = [1, 0, 0], sizes = [16, 16, 384], strides = [1, 1, 1]} : vector<18x16x384xbf16> to vector<16x16x384xbf16>
    %19 = vector.shape_cast %18 : vector<16x16x384xbf16> to vector<256x384xbf16>
    %c1 = arith.constant 1 : index
    %c0_6 = arith.constant 0 : index
    %c0_7 = arith.constant 0 : index
    %20 = vector.load %arg2[%c1, %c0_6, %c0_7] : memref<3x384x128xbf16, #tpu.memory_space<vmem>>, vector<1x384x128xbf16>
    %21 = vector.shape_cast %20 : vector<1x384x128xbf16> to vector<384x128xbf16>
    %cst_8 = arith.constant dense<0.000000e+00> : vector<256x128xf32>
    %22 = tpu.matmul %19, %21, %cst_8 {dimension_numbers = #tpu.dot_dimension_numbers<[1], [0], [0], [1], [0, 0, 1, 1], [], []>} : vector<256x384xbf16>, vector<384x128xbf16>, vector<256x128xf32> -> vector<256x128xf32>
    %23 = arith.addf %17, %22 : vector<256x128xf32>
    %24 = vector.extract_strided_slice %12 {offsets = [2, 0, 0], sizes = [16, 16, 384], strides = [1, 1, 1]} : vector<18x16x384xbf16> to vector<16x16x384xbf16>
    %25 = vector.shape_cast %24 : vector<16x16x384xbf16> to vector<256x384xbf16>
    %c2 = arith.constant 2 : index
    %c0_9 = arith.constant 0 : index
    %c0_10 = arith.constant 0 : index
    %26 = vector.load %arg2[%c2, %c0_9, %c0_10] : memref<3x384x128xbf16, #tpu.memory_space<vmem>>, vector<1x384x128xbf16>
    %27 = vector.shape_cast %26 : vector<1x384x128xbf16> to vector<384x128xbf16>
    %cst_11 = arith.constant dense<0.000000e+00> : vector<256x128xf32>
    %28 = tpu.matmul %25, %27, %cst_11 {dimension_numbers = #tpu.dot_dimension_numbers<[1], [0], [0], [1], [0, 0, 1, 1], [], []>} : vector<256x384xbf16>, vector<384x128xbf16>, vector<256x128xf32> -> vector<256x128xf32>
    %29 = arith.addf %23, %28 : vector<256x128xf32>
    %cst_12 = arith.constant dense<0.000000e+00> : vector<128xf32>
    %30 = vector.multi_reduction <add>, %29, %cst_12 [0] : vector<256x128xf32> to vector<128xf32>
    %31 = vector.shape_cast %30 : vector<128xf32> to vector<1x128xf32>
    %32 = arith.mulf %29, %29 : vector<256x128xf32>
    %cst_13 = arith.constant dense<0.000000e+00> : vector<128xf32>
    %33 = vector.multi_reduction <add>, %32, %cst_13 [0] : vector<256x128xf32> to vector<128xf32>
    %34 = vector.shape_cast %33 : vector<128xf32> to vector<1x128xf32>
    %cst_14 = arith.constant 3.906250e-03 : f32
    %35 = vector.broadcast %cst_14 : f32 to vector<1x128xf32>
    %36 = arith.mulf %31, %35 : vector<1x128xf32>
    %cst_15 = arith.constant 3.906250e-03 : f32
    %37 = vector.broadcast %cst_15 : f32 to vector<1x128xf32>
    %38 = arith.mulf %34, %37 : vector<1x128xf32>
    %39 = arith.mulf %36, %36 : vector<1x128xf32>
    %40 = arith.subf %38, %39 : vector<1x128xf32>
    %cst_16 = arith.constant 0.000000e+00 : f32
    %41 = vector.broadcast %cst_16 : f32 to vector<1x128xf32>
    %42 = arith.maximumf %40, %41 : vector<1x128xf32>
    %43 = vector.broadcast %36 : vector<1x128xf32> to vector<256x128xf32>
    %44 = arith.subf %29, %43 : vector<256x128xf32>
    %cst_17 = arith.constant 9.99999974E-6 : f32
    %45 = vector.broadcast %cst_17 : f32 to vector<1x128xf32>
    %46 = arith.addf %42, %45 : vector<1x128xf32>
    %47 = math.rsqrt %46 : vector<1x128xf32>
    %48 = vector.broadcast %47 : vector<1x128xf32> to vector<256x128xf32>
    %49 = arith.mulf %44, %48 : vector<256x128xf32>
    %cst_18 = arith.constant 0.000000e+00 : f32
    %50 = vector.broadcast %cst_18 : f32 to vector<256x128xf32>
    %51 = arith.maximumf %49, %50 : vector<256x128xf32>
    %52 = arith.truncf %51 : vector<256x128xf32> to vector<256x128xbf16>
    %53 = vector.shape_cast %52 : vector<256x128xbf16> to vector<16x16x128xbf16>
    %54 = vector.extract_strided_slice %53 {offsets = [1, 0, 0], sizes = [1, 16, 128], strides = [1, 1, 1]} : vector<16x16x128xbf16> to vector<1x16x128xbf16>
    %55 = vector.extract_strided_slice %53 {offsets = [14, 0, 0], sizes = [1, 16, 128], strides = [1, 1, 1]} : vector<16x16x128xbf16> to vector<1x16x128xbf16>
    %56 = tpu.concatenate %54, %53, %55 in 0 : vector<1x16x128xbf16>, vector<16x16x128xbf16>, vector<1x16x128xbf16> -> vector<18x16x128xbf16>
    %57 = vector.extract_strided_slice %56 {offsets = [0, 1, 0], sizes = [18, 1, 128], strides = [1, 1, 1]} : vector<18x16x128xbf16> to vector<18x1x128xbf16>
    %58 = vector.extract_strided_slice %56 {offsets = [0, 0, 0], sizes = [18, 15, 128], strides = [1, 1, 1]} : vector<18x16x128xbf16> to vector<18x15x128xbf16>
    %59 = tpu.concatenate %57, %58 in 1 : vector<18x1x128xbf16>, vector<18x15x128xbf16> -> vector<18x16x128xbf16>
    %60 = vector.extract_strided_slice %56 {offsets = [0, 1, 0], sizes = [18, 15, 128], strides = [1, 1, 1]} : vector<18x16x128xbf16> to vector<18x15x128xbf16>
    %61 = vector.extract_strided_slice %56 {offsets = [0, 14, 0], sizes = [18, 1, 128], strides = [1, 1, 1]} : vector<18x16x128xbf16> to vector<18x1x128xbf16>
    %62 = tpu.concatenate %60, %61 in 1 : vector<18x15x128xbf16>, vector<18x1x128xbf16> -> vector<18x16x128xbf16>
    %63 = tpu.concatenate %59, %56, %62 in 2 : vector<18x16x128xbf16>, vector<18x16x128xbf16>, vector<18x16x128xbf16> -> vector<18x16x384xbf16>
    %64 = vector.extract_strided_slice %63 {offsets = [0, 0, 0], sizes = [16, 16, 384], strides = [1, 1, 1]} : vector<18x16x384xbf16> to vector<16x16x384xbf16>
    %65 = vector.shape_cast %64 : vector<16x16x384xbf16> to vector<256x384xbf16>
    %c0_19 = arith.constant 0 : index
    %c0_20 = arith.constant 0 : index
    %c0_21 = arith.constant 0 : index
    %66 = vector.load %arg3[%c0_19, %c0_20, %c0_21] : memref<3x384x128xbf16, #tpu.memory_space<vmem>>, vector<1x384x128xbf16>
    %67 = vector.shape_cast %66 : vector<1x384x128xbf16> to vector<384x128xbf16>
    %cst_22 = arith.constant dense<0.000000e+00> : vector<256x128xf32>
    %68 = tpu.matmul %65, %67, %cst_22 {dimension_numbers = #tpu.dot_dimension_numbers<[1], [0], [0], [1], [0, 0, 1, 1], [], []>} : vector<256x384xbf16>, vector<384x128xbf16>, vector<256x128xf32> -> vector<256x128xf32>
    %69 = vector.extract_strided_slice %63 {offsets = [1, 0, 0], sizes = [16, 16, 384], strides = [1, 1, 1]} : vector<18x16x384xbf16> to vector<16x16x384xbf16>
    %70 = vector.shape_cast %69 : vector<16x16x384xbf16> to vector<256x384xbf16>
    %c1_23 = arith.constant 1 : index
    %c0_24 = arith.constant 0 : index
    %c0_25 = arith.constant 0 : index
    %71 = vector.load %arg3[%c1_23, %c0_24, %c0_25] : memref<3x384x128xbf16, #tpu.memory_space<vmem>>, vector<1x384x128xbf16>
    %72 = vector.shape_cast %71 : vector<1x384x128xbf16> to vector<384x128xbf16>
    %cst_26 = arith.constant dense<0.000000e+00> : vector<256x128xf32>
    %73 = tpu.matmul %70, %72, %cst_26 {dimension_numbers = #tpu.dot_dimension_numbers<[1], [0], [0], [1], [0, 0, 1, 1], [], []>} : vector<256x384xbf16>, vector<384x128xbf16>, vector<256x128xf32> -> vector<256x128xf32>
    %74 = arith.addf %68, %73 : vector<256x128xf32>
    %75 = vector.extract_strided_slice %63 {offsets = [2, 0, 0], sizes = [16, 16, 384], strides = [1, 1, 1]} : vector<18x16x384xbf16> to vector<16x16x384xbf16>
    %76 = vector.shape_cast %75 : vector<16x16x384xbf16> to vector<256x384xbf16>
    %c2_27 = arith.constant 2 : index
    %c0_28 = arith.constant 0 : index
    %c0_29 = arith.constant 0 : index
    %77 = vector.load %arg3[%c2_27, %c0_28, %c0_29] : memref<3x384x128xbf16, #tpu.memory_space<vmem>>, vector<1x384x128xbf16>
    %78 = vector.shape_cast %77 : vector<1x384x128xbf16> to vector<384x128xbf16>
    %cst_30 = arith.constant dense<0.000000e+00> : vector<256x128xf32>
    %79 = tpu.matmul %76, %78, %cst_30 {dimension_numbers = #tpu.dot_dimension_numbers<[1], [0], [0], [1], [0, 0, 1, 1], [], []>} : vector<256x384xbf16>, vector<384x128xbf16>, vector<256x128xf32> -> vector<256x128xf32>
    %80 = arith.addf %74, %79 : vector<256x128xf32>
    %cst_31 = arith.constant dense<0.000000e+00> : vector<128xf32>
    %81 = vector.multi_reduction <add>, %80, %cst_31 [0] : vector<256x128xf32> to vector<128xf32>
    %82 = vector.shape_cast %81 : vector<128xf32> to vector<1x128xf32>
    %83 = arith.mulf %80, %80 : vector<256x128xf32>
    %cst_32 = arith.constant dense<0.000000e+00> : vector<128xf32>
    %84 = vector.multi_reduction <add>, %83, %cst_32 [0] : vector<256x128xf32> to vector<128xf32>
    %85 = vector.shape_cast %84 : vector<128xf32> to vector<1x128xf32>
    %cst_33 = arith.constant 3.906250e-03 : f32
    %86 = vector.broadcast %cst_33 : f32 to vector<1x128xf32>
    %87 = arith.mulf %82, %86 : vector<1x128xf32>
    %cst_34 = arith.constant 3.906250e-03 : f32
    %88 = vector.broadcast %cst_34 : f32 to vector<1x128xf32>
    %89 = arith.mulf %85, %88 : vector<1x128xf32>
    %90 = arith.mulf %87, %87 : vector<1x128xf32>
    %91 = arith.subf %89, %90 : vector<1x128xf32>
    %cst_35 = arith.constant 0.000000e+00 : f32
    %92 = vector.broadcast %cst_35 : f32 to vector<1x128xf32>
    %93 = arith.maximumf %91, %92 : vector<1x128xf32>
    %94 = vector.broadcast %87 : vector<1x128xf32> to vector<256x128xf32>
    %95 = arith.subf %80, %94 : vector<256x128xf32>
    %cst_36 = arith.constant 9.99999974E-6 : f32
    %96 = vector.broadcast %cst_36 : f32 to vector<1x128xf32>
    %97 = arith.addf %93, %96 : vector<1x128xf32>
    %98 = math.rsqrt %97 : vector<1x128xf32>
    %99 = vector.broadcast %98 : vector<1x128xf32> to vector<256x128xf32>
    %100 = arith.mulf %95, %99 : vector<256x128xf32>
    %101 = vector.shape_cast %100 : vector<256x128xf32> to vector<16x16x128xf32>
    %102 = arith.addf %1, %101 : vector<16x16x128xf32>
    %c0_37 = arith.constant 0 : index
    %c0_38 = arith.constant 0 : index
    %c0_39 = arith.constant 0 : index
    %c0_40 = arith.constant 0 : index
    %103 = vector.load %arg4[%c0_37, %c0_38, %c0_39, %c0_40] : memref<1x16x16x128xf32, #tpu.memory_space<vmem>>, vector<1x16x16x128xf32>
    %104 = vector.shape_cast %103 : vector<1x16x16x128xf32> to vector<16x16x128xf32>
    %105 = vector.shape_cast %102 : vector<16x16x128xf32> to vector<1x16x16x128xf32>
    tpu.vector_store %arg4[%c0_37, %c0_38, %c0_39, %c0_40], %105 {strides = array<i32>} : memref<1x16x16x128xf32, #tpu.memory_space<vmem>>, vector<1x16x16x128xf32>,
    return
  }
  func.func @transform_0(%arg0: i32) -> (i32, i32, i32, i32) {
    %c0_i32 = arith.constant 0 : i32
    %c0_i32_0 = arith.constant 0 : i32
    %c0_i32_1 = arith.constant 0 : i32
    %c0_i32_2 = arith.constant 0 : i32
    return %arg0, %c0_i32, %c0_i32_0, %c0_i32_1 : i32, i32, i32, i32
  }
  func.func @transform_1(%arg0: i32) -> (i32, i32, i32) {
    %c0_i32 = arith.constant 0 : i32
    %c0_i32_0 = arith.constant 0 : i32
    %c0_i32_1 = arith.constant 0 : i32
    %c0_i32_2 = arith.constant 0 : i32
    return %c0_i32, %c0_i32_0, %c0_i32_1 : i32, i32, i32
  }
  func.func @transform_2(%arg0: i32) -> (i32, i32, i32) {
    %c0_i32 = arith.constant 0 : i32
    %c0_i32_0 = arith.constant 0 : i32
    %c0_i32_1 = arith.constant 0 : i32
    %c0_i32_2 = arith.constant 0 : i32
    return %c0_i32, %c0_i32_0, %c0_i32_1 : i32, i32, i32
  }
  func.func @transform_3(%arg0: i32) -> (i32, i32, i32, i32) {
    %c0_i32 = arith.constant 0 : i32
    %c0_i32_0 = arith.constant 0 : i32
    %c0_i32_1 = arith.constant 0 : i32
    %c0_i32_2 = arith.constant 0 : i32
    return %arg0, %c0_i32, %c0_i32_0, %c0_i32_1 : i32, i32, i32, i32
  }
}

</mosaic_0001>

<llo_original>
// kernel: tpu_custom_call.1
$region0: #{tpu_custom_call.1}
  #allocation0 [shape = 'u32[]', space=smem, size = 0x4, offset = 0x4, fixed_abs, tag = 'smem constant byte address 0x4 - core index']
  #allocation1 [shape = 'u32[144,128]{1,0:T(1,128)}', space=vmem, size = 0x12000, scoped, tag = 'internal scratch']
  %s0 = inlined_call_operand.hbm [shape: f32[2,16,16,128], index: 0, kind: input, shape index: {}]
  %s1 = inlined_call_operand.hbm [shape: bf16[3,384,128], index: 1, kind: input, shape index: {}]
  %s2 = inlined_call_operand.hbm [shape: bf16[3,384,128], index: 2, kind: input, shape index: {}]
  %s3 = inlined_call_operand.hbm [shape: f32[2,16,16,128], index: 3, kind: output, shape index: {}]
  %s4 = sld [smem:[#allocation0]]
  $region57: #{tpu_custom_call.1} parent=0
    _
  %s6 = ssub.s32 1, %s4
  %s7 = scalar_select 0, %s6, %s4
  $region1: #{tpu_custom_call.1} parent=0
    #allocation2 [shape = 'u8[262144]{0}', space=vmem, size = 0x40000, scoped, tag = 'input window, operand 0']
    #allocation3 [shape = 's32[2]{0}', space=sflag, size = 0x8, scoped, tag = 'scoped memory for tpu_custom_call.1']
    #allocation4 [shape = 's32[2]{0}', space=sflag, size = 0x8, scoped, tag = 'scoped memory for tpu_custom_call.1']
    #allocation5 [shape = 'u8[294912]{0}', space=vmem, size = 0x48000, scoped, tag = 'input window, operand 1, single buffered']
    #allocation6 [shape = 's32[1]{0}', space=sflag, size = 0x4, scoped, tag = 'scoped memory for tpu_custom_call.1']
    #allocation7 [shape = 'u8[294912]{0}', space=vmem, size = 0x48000, scoped, tag = 'input window, operand 2, single buffered']
    #allocation8 [shape = 'u8[262144]{0}', space=vmem, size = 0x40000, scoped, tag = 'output window, operand 0']
    %8 = vsyncpa [#allocation3], 0
    %s9 = scalar_lea.sflag [#allocation3], 1
    %10 = vsyncpa %s9, 0
    %11 = vsyncpa [#allocation6], 0
    %12 = vsyncpa [#allocation4], 0
    %s13 = scalar_lea.sflag [#allocation4], 1
    %14 = vsyncpa %s13, 0
    loop: start=0, step=1, limit=4
    $region2: #{tpu_custom_call.1} parent=1 // loop_pre_header
      _
    $region3: #{tpu_custom_call.1} parent=1 // loop_header
      %s16 = sphi 0, %s20
      %p17 = scmp.ge.s32.totalorder %s16, 4
      %s26 = sphi 0, %s28
      %s29 = sphi 0, %s26
      %s30 = sphi 0, %s29
      %s46 = sphi 0, %s30
      %s50 = sphi 0, %s50
      %s52 = sphi 0, %s50
      %s53 = sphi 0, %s52
      %s67 = sphi 0, %s53
      %s71 = sphi 0, %s71
      %s73 = sphi 0, %s71
      %s74 = sphi 0, %s73
      %s88 = sphi 0, %s74
      %s94 = sphi 0, %s96
      %s97 = sphi 0, %s94
      %s98 = sphi 0, %s97
      %s114 = sphi 0, %s98
    $region4: #{tpu_custom_call.1} parent=1 // loop_header_branch
      %19 = sbr.rel (%p17) target = $region8
    $region5: #{tpu_custom_call.1} parent=1 // loop_body
      %s21 = ssub.s32 %s16, 1
      %s22 = ssub.s32 %s16, 2
      %s23 = sadd.s32 %s16, 1
      %s24 = ssub.s32 %s16, %s23
      %p25 = scmp.eq.s32.totalorder %s24, 0
      %s27 = sadd.s32 %s26, 1
      %s28 = scalar_select %p25, %s26, %s27
      %p31 = pneg %p25
      %p32 = scmp.eq.s32.totalorder %s16, 1
      %p33 = por %p31, %p32
      %p34 = scmp.ne.s32.totalorder %s26, %s29
      %p35 = scmp.eq.s32.totalorder %s16, 0
      %p36 = por %p34, %p35
      %p37 = scmp.ne.s32.totalorder %s26, %s29
      %p38 = scmp.eq.s32.totalorder %s21, 1
      %p39 = por %p37, %p38
      %p40 = scmp.ne.s32.totalorder %s29, %s30
      %p41 = scmp.eq.s32.totalorder %s21, 0
      %p42 = por %p40, %p41
      %p43 = scmp.ne.s32.totalorder %s29, %s30
      %p44 = scmp.eq.s32.totalorder %s22, 1
      %p45 = por %p43, %p44
      %p47 = scmp.ne.s32.totalorder %s30, %s46
      %p48 = scmp.eq.s32.totalorder %s22, 0
      %p49 = por %p47, %p48
      %s51 = sadd.s32 %s50, 1
      %p54 = scmp.eq.s32.totalorder %s16, 1
      %p55 = scmp.ne.s32.totalorder %s50, %s52
      %p56 = scmp.eq.s32.totalorder %s16, 0
      %p57 = por %p55, %p56
      %p58 = scmp.ne.s32.totalorder %s50, %s52
      %p59 = scmp.eq.s32.totalorder %s21, 1
      %p60 = por %p58, %p59
      %p61 = scmp.ne.s32.totalorder %s52, %s53
      %p62 = scmp.eq.s32.totalorder %s21, 0
      %p63 = por %p61, %p62
      %p64 = scmp.ne.s32.totalorder %s52, %s53
      %p65 = scmp.eq.s32.totalorder %s22, 1
      %p66 = por %p64, %p65
      %p68 = scmp.ne.s32.totalorder %s53, %s67
      %p69 = scmp.eq.s32.totalorder %s22, 0
      %p70 = por %p68, %p69
      %s72 = sadd.s32 %s71, 1
      %p75 = scmp.eq.s32.totalorder %s16, 1
      %p76 = scmp.ne.s32.totalorder %s71, %s73
      %p77 = scmp.eq.s32.totalorder %s16, 0
      %p78 = por %p76, %p77
      %p79 = scmp.ne.s32.totalorder %s71, %s73
      %p80 = scmp.eq.s32.totalorder %s21, 1
      %p81 = por %p79, %p80
      %p82 = scmp.ne.s32.totalorder %s73, %s74
      %p83 = scmp.eq.s32.totalorder %s21, 0
      %p84 = por %p82, %p83
      %p85 = scmp.ne.s32.totalorder %s73, %s74
      %p86 = scmp.eq.s32.totalorder %s22, 1
      %p87 = por %p85, %p86
      %p89 = scmp.ne.s32.totalorder %s74, %s88
      %p90 = scmp.eq.s32.totalorder %s22, 0
      %p91 = por %p89, %p90
      %s92 = ssub.s32 %s16, %s23
      %p93 = scmp.eq.s32.totalorder %s92, 0
      %s95 = sadd.s32 %s94, 1
      %s96 = scalar_select %p93, %s94, %s95
      %p99 = pneg %p93
      %p100 = scmp.eq.s32.totalorder %s16, 1
      %p101 = por %p99, %p100
      %p102 = scmp.ne.s32.totalorder %s94, %s97
      %p103 = scmp.eq.s32.totalorder %s16, 0
      %p104 = por %p102, %p103
      %p105 = scmp.ne.s32.totalorder %s94, %s97
      %p106 = scmp.eq.s32.totalorder %s21, 1
      %p107 = por %p105, %p106
      %p108 = scmp.ne.s32.totalorder %s97, %s98
      %p109 = scmp.eq.s32.totalorder %s21, 0
      %p110 = por %p108, %p109
      %p111 = scmp.ne.s32.totalorder %s97, %s98
      %p112 = scmp.eq.s32.totalorder %s22, 1
      %p113 = por %p111, %p112
      %p115 = scmp.ne.s32.totalorder %s98, %s114
      %p116 = scmp.eq.s32.totalorder %s22, 0
      %p117 = por %p115, %p116
      %p118 = scmp.le.s32.totalorder 1, %s16
      %p119 = scmp.lt.s32.totalorder %s16, 3
      %p120 = pnand %p118, %p119
      %p121 = pneg %p120
      // Predicated region
      $region9: #{tpu_custom_call.1} parent=5 // pred_check
        _
      $region10: #{tpu_custom_call.1} parent=5 // pred_check_branch
        %123 = sbr.rel (%p120) target = $region12
      $region11: #{tpu_custom_call.1} parent=5 // pred_region
        %s124 = ssub.s32 %s16, 1
        // Predicated region
        $region13: #{tpu_custom_call.1} parent=11 // pred_check
          %p125 = pneg %p63
        $region14: #{tpu_custom_call.1} parent=11 // pred_check_branch
          %127 = sbr.rel (%p125) target = $region16
        $region15: #{tpu_custom_call.1} parent=11 // pred_region
          %s129 = ssub.s32 9216, 9216
          %130 = vsyncadd [#allocation6], %s129
          %s131 = sshll.u32 [#allocation5], 4
          %s132 = int_to_ptr.vmem [resolvable:$true] %s131
          %137 = dma.hbm_to_vmem [thread:$0]  %s1, 9216, %s132, [#allocation6], 64, 64, 4
        $region16: #{tpu_custom_call.1} parent=11 // pred_fallthru
          _
        // Predicated region
        $region17: #{tpu_custom_call.1} parent=11 // pred_check
          %p138 = pneg %p84
        $region18: #{tpu_custom_call.1} parent=11 // pred_check_branch
          %140 = sbr.rel (%p138) target = $region20
        $region19: #{tpu_custom_call.1} parent=11 // pred_region
          %s142 = ssub.s32 9216, 9216
          %143 = vsyncadd [#allocation6], %s142
          %s144 = sshll.u32 [#allocation7], 4
          %s145 = int_to_ptr.vmem [resolvable:$true] %s144
          %150 = dma.hbm_to_vmem [thread:$0]  %s2, 9216, %s145, [#allocation6], 64, 64, 4
        $region20: #{tpu_custom_call.1} parent=11 // pred_fallthru
          _
      $region12: #{tpu_custom_call.1} parent=5 // pred_fallthru
        _
      %p151 = scmp.lt.s32.totalorder %s16, 2
      // Predicated region
      $region21: #{tpu_custom_call.1} parent=5 // pred_check
        %p152 = pneg %p151
      $region22: #{tpu_custom_call.1} parent=5 // pred_check_branch
        %154 = sbr.rel (%p152) target = $region24
      $region23: #{tpu_custom_call.1} parent=5 // pred_region
        // Predicated region
        $region25: #{tpu_custom_call.1} parent=23 // pred_check
          %p155 = pneg %p36
        $region26: #{tpu_custom_call.1} parent=23 // pred_check_branch
          %157 = sbr.rel (%p155) target = $region28
        $region27: #{tpu_custom_call.1} parent=23 // pred_region
          %s158 = sand.u32 %s26, 1
          %s159 = scalar_lea.sflag [#allocation3], %s158
          %s160 = sand.u32 %s26, 1
          %s161 = smul.addr %s160, 256
          %s162 = scalar_lea.vmem [#allocation2], %s161
          %s164 = ssub.s32 4096, 4096
          %165 = vsyncadd %s159, %s164
          %s166 = smul.addr %s16, 32
          %s167 = smul.addr %s166, 128
          %s168 = scalar_lea.hbm %s0, %s167
          %s169 = sshll.u32 %s162, 4
          %s170 = int_to_ptr.vmem [resolvable:$true] %s169
          %175 = dma.hbm_to_vmem [thread:$0]  %s168, 4096, %s170, %s159, 128, 128, 8
        $region28: #{tpu_custom_call.1} parent=23 // pred_fallthru
          _
      $region24: #{tpu_custom_call.1} parent=5 // pred_fallthru
        _
      %p176 = scmp.le.s32.totalorder 1, %s16
      %p177 = scmp.lt.s32.totalorder %s16, 3
      %p178 = pnand %p176, %p177
      %p179 = pneg %p178
      // Predicated region
      $region29: #{tpu_custom_call.1} parent=5 // pred_check
        _
      $region30: #{tpu_custom_call.1} parent=5 // pred_check_branch
        %181 = sbr.rel (%p178) target = $region32
      $region31: #{tpu_custom_call.1} parent=5 // pred_region
        %s182 = ssub.s32 %s16, 1
        %s183 = sand.u32 %s29, 1
        %s184 = scalar_lea.sflag [#allocation3], %s183
        %s185 = sand.u32 %s29, 1
        %s186 = smul.addr %s185, 256
        %s187 = scalar_lea.vmem [#allocation2], %s186
        // Predicated region
        $region33: #{tpu_custom_call.1} parent=31 // pred_check
          %p188 = pneg %p42
        $region34: #{tpu_custom_call.1} parent=31 // pred_check_branch
          %190 = sbr.rel (%p188) target = $region36
        $region35: #{tpu_custom_call.1} parent=31 // pred_region
          %191 = dma.done %s184, 4096
        $region36: #{tpu_custom_call.1} parent=31 // pred_fallthru
          _
        // Predicated region
        $region37: #{tpu_custom_call.1} parent=31 // pred_check
          %p192 = pneg %p63
        $region38: #{tpu_custom_call.1} parent=31 // pred_check_branch
          %194 = sbr.rel (%p192) target = $region40
        $region39: #{tpu_custom_call.1} parent=31 // pred_region
          %195 = dma.done [#allocation6], 9216
        $region40: #{tpu_custom_call.1} parent=31 // pred_fallthru
          _
        // Predicated region
        $region41: #{tpu_custom_call.1} parent=31 // pred_check
          %p196 = pneg %p84
        $region42: #{tpu_custom_call.1} parent=31 // pred_check_branch
          %198 = sbr.rel (%p196) target = $region44
        $region43: #{tpu_custom_call.1} parent=31 // pred_region
          %199 = dma.done [#allocation6], 9216
        $region44: #{tpu_custom_call.1} parent=31 // pred_fallthru
          _
        %s200 = sand.u32 %s29, 1
        %s201 = scalar_lea.sflag [#allocation3], %s200
        %s202 = sand.u32 %s29, 1
        %s203 = smul.addr %s202, 256
        %s204 = scalar_lea.vmem [#allocation2], %s203
        %p205 = pneg %p42
        %p206 = pneg %p39
        %p207 = pneg %p63
        %p208 = pneg %p60
        %p209 = pneg %p84
        %p210 = pneg %p81
        %p211 = pneg %p110
        %p212 = pneg %p107
        %s213 = sand.u32 %s97, 1
        %s214 = scalar_lea.sflag [#allocation4], %s213
        %s215 = sand.u32 %s97, 1
        %s216 = smul.addr %s215, 256
        %s217 = scalar_lea.vmem [#allocation8], %s216
        %v219 = vld [vmem:[%s187] sm:$0xff]
        %v220 = vld [vmem:[%s187 + $0x8] sm:$0xff]
        %v221 = vld [vmem:[%s187 + $0x10] sm:$0xff]
        %v222 = vld [vmem:[%s187 + $0x18] sm:$0xff]
        %v223 = vld [vmem:[%s187 + $0x20] sm:$0xff]
        %v224 = vld [vmem:[%s187 + $0x28] sm:$0xff]
        %v225 = vld [vmem:[%s187 + $0x30] sm:$0xff]
        %v226 = vld [vmem:[%s187 + $0x38] sm:$0xff]
        %v227 = vld [vmem:[%s187 + $0x40] sm:$0xff]
        %v228 = vld [vmem:[%s187 + $0x48] sm:$0xff]
        %v229 = vld [vmem:[%s187 + $0x50] sm:$0xff]
        %v230 = vld [vmem:[%s187 + $0x58] sm:$0xff]
        %v231 = vld [vmem:[%s187 + $0x60] sm:$0xff]
        %v232 = vld [vmem:[%s187 + $0x68] sm:$0xff]
        %v233 = vld [vmem:[%s187 + $0x70] sm:$0xff]
        %v234 = vld [vmem:[%s187 + $0x78] sm:$0xff]
        %v235 = vld [vmem:[%s187 + $0x80] sm:$0xff]
        %v236 = vld [vmem:[%s187 + $0x88] sm:$0xff]
        %v237 = vld [vmem:[%s187 + $0x90] sm:$0xff]
        %v238 = vld [vmem:[%s187 + $0x98] sm:$0xff]
        %v239 = vld [vmem:[%s187 + $0xa0] sm:$0xff]
        %v240 = vld [vmem:[%s187 + $0xa8] sm:$0xff]
        %v241 = vld [vmem:[%s187 + $0xb0] sm:$0xff]
        %v242 = vld [vmem:[%s187 + $0xb8] sm:$0xff]
        %v243 = vld [vmem:[%s187 + $0xc0] sm:$0xff]
        %v244 = vld [vmem:[%s187 + $0xc8] sm:$0xff]
        %v245 = vld [vmem:[%s187 + $0xd0] sm:$0xff]
        %v246 = vld [vmem:[%s187 + $0xd8] sm:$0xff]
        %v247 = vld [vmem:[%s187 + $0xe0] sm:$0xff]
        %v248 = vld [vmem:[%s187 + $0xe8] sm:$0xff]
        %v249 = vld [vmem:[%s187 + $0xf0] sm:$0xff]
        %v250 = vld [vmem:[%s187 + $0xf8] sm:$0xff]
        %v251 = vpack.c.bf16 %v220, %v219
        %v252 = vpack.c.bf16 %v222, %v221
        %v253 = vpack.c.bf16 %v224, %v223
        %v254 = vpack.c.bf16 %v226, %v225
        %v255 = vpack.c.bf16 %v228, %v227
        %v256 = vpack.c.bf16 %v230, %v229
        %v257 = vpack.c.bf16 %v232, %v231
        %v258 = vpack.c.bf16 %v234, %v233
        %v259 = vpack.c.bf16 %v236, %v235
        %v260 = vpack.c.bf16 %v238, %v237
        %v261 = vpack.c.bf16 %v240, %v239
        %v262 = vpack.c.bf16 %v242, %v241
        %v263 = vpack.c.bf16 %v244, %v243
        %v264 = vpack.c.bf16 %v246, %v245
        %v265 = vpack.c.bf16 %v248, %v247
        %v266 = vpack.c.bf16 %v250, %v249
        %v268 = vshrl.u32 %v252, 16
        %v271 = vshrl.u32 %v251, 16
        %v274 = vshrl.u32 %v253, 16
        %v277 = vshrl.u32 %v254, 16
        %v280 = vshrl.u32 %v255, 16
        %v283 = vshrl.u32 %v256, 16
        %v286 = vshrl.u32 %v257, 16
        %v289 = vshrl.u32 %v258, 16
        %v292 = vshrl.u32 %v259, 16
        %v295 = vshrl.u32 %v260, 16
        %v298 = vshrl.u32 %v261, 16
        %v301 = vshrl.u32 %v262, 16
        %v304 = vshrl.u32 %v263, 16
        %v307 = vshrl.u32 %v264, 16
        %v310 = vshrl.u32 %v265, 16
        %v313 = vshrl.u32 %v266, 16
        %v331 = vrot.slane %v268, 7
        %v332 = vshll.u32 %v252, 16
        %v334 = vor.u32 %v331, %v332
        %v335 = vrot.slane %v271, 7
        %v336 = vshll.u32 %v251, 16
        %v338 = vor.u32 %v335, %v336
        %v339 = vrot.slane %v274, 7
        %v340 = vshll.u32 %v253, 16
        %v342 = vor.u32 %v339, %v340
        %v343 = vrot.slane %v277, 7
        %v344 = vshll.u32 %v254, 16
        %v346 = vor.u32 %v343, %v344
        %v347 = vrot.slane %v280, 7
        %v348 = vshll.u32 %v255, 16
        %v350 = vor.u32 %v347, %v348
        %v351 = vrot.slane %v283, 7
        %v352 = vshll.u32 %v256, 16
        %v354 = vor.u32 %v351, %v352
        %v355 = vrot.slane %v286, 7
        %v356 = vshll.u32 %v257, 16
        %v358 = vor.u32 %v355, %v356
        %v359 = vrot.slane %v289, 7
        %v360 = vshll.u32 %v258, 16
        %v362 = vor.u32 %v359, %v360
        %v363 = vrot.slane %v292, 7
        %v364 = vshll.u32 %v259, 16
        %v366 = vor.u32 %v363, %v364
        %v367 = vrot.slane %v295, 7
        %v368 = vshll.u32 %v260, 16
        %v370 = vor.u32 %v367, %v368
        %v371 = vrot.slane %v298, 7
        %v372 = vshll.u32 %v261, 16
        %v374 = vor.u32 %v371, %v372
        %v375 = vrot.slane %v301, 7
        %v376 = vshll.u32 %v262, 16
        %v378 = vor.u32 %v375, %v376
        %v379 = vrot.slane %v304, 7
        %v380 = vshll.u32 %v263, 16
        %v382 = vor.u32 %v379, %v380
        %v383 = vrot.slane %v307, 7
        %v384 = vshll.u32 %v264, 16
        %v386 = vor.u32 %v383, %v384
        %v387 = vrot.slane %v310, 7
        %v388 = vshll.u32 %v265, 16
        %v390 = vor.u32 %v387, %v388
        %v391 = vrot.slane %v313, 7
        %v392 = vshll.u32 %v266, 16
        %v394 = vor.u32 %v391, %v392
        %vm411 = vcmask 1040384
        %vm412 = vsmask.f32 256
        %vm413 = vmand %vm411, %vm412
        %v414 = vsel %vm413, %v268, %v334
        %v415 = vsel %vm413, %v271, %v338
        %v416 = vsel %vm413, %v274, %v342
        %v417 = vsel %vm413, %v277, %v346
        %v418 = vsel %vm413, %v280, %v350
        %v419 = vsel %vm413, %v283, %v354
        %v420 = vsel %vm413, %v286, %v358
        %v421 = vsel %vm413, %v289, %v362
        %v422 = vsel %vm413, %v292, %v366
        %v423 = vsel %vm413, %v295, %v370
        %v424 = vsel %vm413, %v298, %v374
        %v425 = vsel %vm413, %v301, %v378
        %v426 = vsel %vm413, %v304, %v382
        %v427 = vsel %vm413, %v307, %v386
        %v428 = vsel %vm413, %v310, %v390
        %v429 = vsel %vm413, %v313, %v394
        %v430 = vrot.slane %v332, 1
        %v431 = vor.u32 %v268, %v430
        %v432 = vrot.slane %v336, 1
        %v433 = vor.u32 %v271, %v432
        %v434 = vrot.slane %v340, 1
        %v435 = vor.u32 %v274, %v434
        %v436 = vrot.slane %v344, 1
        %v437 = vor.u32 %v277, %v436
        %v438 = vrot.slane %v348, 1
        %v439 = vor.u32 %v280, %v438
        %v440 = vrot.slane %v352, 1
        %v441 = vor.u32 %v283, %v440
        %v442 = vrot.slane %v356, 1
        %v443 = vor.u32 %v286, %v442
        %v444 = vrot.slane %v360, 1
        %v445 = vor.u32 %v289, %v444
        %v446 = vrot.slane %v364, 1
        %v447 = vor.u32 %v292, %v446
        %v448 = vrot.slane %v368, 1
        %v449 = vor.u32 %v295, %v448
        %v450 = vrot.slane %v372, 1
        %v451 = vor.u32 %v298, %v450
        %v452 = vrot.slane %v376, 1
        %v453 = vor.u32 %v301, %v452
        %v454 = vrot.slane %v380, 1
        %v455 = vor.u32 %v304, %v454
        %v456 = vrot.slane %v384, 1
        %v457 = vor.u32 %v307, %v456
        %v458 = vrot.slane %v388, 1
        %v459 = vor.u32 %v310, %v458
        %v460 = vrot.slane %v392, 1
        %v461 = vor.u32 %v313, %v460
        %vm494 = vcmask 1047552
        %vm495 = vsmask.f32 7424
        %vm496 = vmand %vm494, %vm495
        %v497 = vsel %vm496, %v431, %v332
        %v498 = vsel %vm496, %v433, %v336
        %v499 = vsel %vm496, %v435, %v340
        %v500 = vsel %vm496, %v437, %v344
        %v501 = vsel %vm496, %v439, %v348
        %v502 = vsel %vm496, %v441, %v352
        %v503 = vsel %vm496, %v443, %v356
        %v504 = vsel %vm496, %v445, %v360
        %v505 = vsel %vm496, %v447, %v364
        %v506 = vsel %vm496, %v449, %v368
        %v507 = vsel %vm496, %v451, %v372
        %v508 = vsel %vm496, %v453, %v376
        %v509 = vsel %vm496, %v455, %v380
        %v510 = vsel %vm496, %v457, %v384
        %v511 = vsel %vm496, %v459, %v388
        %v512 = vsel %vm496, %v461, %v392
        %v513 = vld [vmem:[#allocation5] sm:$0xf]
        %v514 = vld [vmem:[#allocation5 + $0x4] sm:$0xf]
        %v515 = vld [vmem:[#allocation5 + $0x8] sm:$0xf]
        %v516 = vld [vmem:[#allocation5 + $0xc] sm:$0xf]
        %v517 = vld [vmem:[#allocation5 + $0x10] sm:$0xf]
        %v518 = vld [vmem:[#allocation5 + $0x14] sm:$0xf]
        %v519 = vld [vmem:[#allocation5 + $0x18] sm:$0xf]
        %v520 = vld [vmem:[#allocation5 + $0x1c] sm:$0xf]
        %v521 = vld [vmem:[#allocation5 + $0x20] sm:$0xf]
        %v522 = vld [vmem:[#allocation5 + $0x24] sm:$0xf]
        %v523 = vld [vmem:[#allocation5 + $0x28] sm:$0xf]
        %v524 = vld [vmem:[#allocation5 + $0x2c] sm:$0xf]
        %v525 = vld [vmem:[#allocation5 + $0x30] sm:$0xf]
        %v526 = vld [vmem:[#allocation5 + $0x34] sm:$0xf]
        %v527 = vld [vmem:[#allocation5 + $0x38] sm:$0xf]
        %v528 = vld [vmem:[#allocation5 + $0x3c] sm:$0xf]
        %v529 = vld [vmem:[#allocation5 + $0x40] sm:$0xf]
        %v530 = vld [vmem:[#allocation5 + $0x44] sm:$0xf]
        %v531 = vld [vmem:[#allocation5 + $0x48] sm:$0xf]
        %v532 = vld [vmem:[#allocation5 + $0x4c] sm:$0xf]
        %v533 = vld [vmem:[#allocation5 + $0x50] sm:$0xf]
        %v534 = vld [vmem:[#allocation5 + $0x54] sm:$0xf]
        %v535 = vld [vmem:[#allocation5 + $0x58] sm:$0xf]
        %v536 = vld [vmem:[#allocation5 + $0x5c] sm:$0xf]
        %v537 = vld [vmem:[#allocation5 + $0x60] sm:$0xf]
        %v538 = vld [vmem:[#allocation5 + $0x64] sm:$0xf]
        %v539 = vld [vmem:[#allocation5 + $0x68] sm:$0xf]
        %v540 = vld [vmem:[#allocation5 + $0x6c] sm:$0xf]
        %v541 = vld [vmem:[#allocation5 + $0x70] sm:$0xf]
        %v542 = vld [vmem:[#allocation5 + $0x74] sm:$0xf]
        %v543 = vld [vmem:[#allocation5 + $0x78] sm:$0xf]
        %v544 = vld [vmem:[#allocation5 + $0x7c] sm:$0xf]
        %v545 = vld [vmem:[#allocation5 + $0x80] sm:$0xf]
        %v546 = vld [vmem:[#allocation5 + $0x84] sm:$0xf]
        %v547 = vld [vmem:[#allocation5 + $0x88] sm:$0xf]
        %v548 = vld [vmem:[#allocation5 + $0x8c] sm:$0xf]
        %v549 = vld [vmem:[#allocation5 + $0x90] sm:$0xf]
        %v550 = vld [vmem:[#allocation5 + $0x94] sm:$0xf]
        %v551 = vld [vmem:[#allocation5 + $0x98] sm:$0xf]
        %v552 = vld [vmem:[#allocation5 + $0x9c] sm:$0xf]
        %v553 = vld [vmem:[#allocation5 + $0xa0] sm:$0xf]
        %v554 = vld [vmem:[#allocation5 + $0xa4] sm:$0xf]
        %v555 = vld [vmem:[#allocation5 + $0xa8] sm:$0xf]
        %v556 = vld [vmem:[#allocation5 + $0xac] sm:$0xf]
        %v557 = vld [vmem:[#allocation5 + $0xb0] sm:$0xf]
        %v558 = vld [vmem:[#allocation5 + $0xb4] sm:$0xf]
        %v559 = vld [vmem:[#allocation5 + $0xb8] sm:$0xf]
        %v560 = vld [vmem:[#allocation5 + $0xbc] sm:$0xf]
        %s561 = scalar_lea.vmem [#allocation5], 192
        %v562 = vld [vmem:[%s561] sm:$0xf]
        %v563 = vld [vmem:[%s561 + $0x4] sm:$0xf]
        %v564 = vld [vmem:[%s561 + $0x8] sm:$0xf]
        %v565 = vld [vmem:[%s561 + $0xc] sm:$0xf]
        %v566 = vld [vmem:[%s561 + $0x10] sm:$0xf]
        %v567 = vld [vmem:[%s561 + $0x14] sm:$0xf]
        %v568 = vld [vmem:[%s561 + $0x18] sm:$0xf]
        %v569 = vld [vmem:[%s561 + $0x1c] sm:$0xf]
        %v570 = vld [vmem:[%s561 + $0x20] sm:$0xf]
        %v571 = vld [vmem:[%s561 + $0x24] sm:$0xf]
        %v572 = vld [vmem:[%s561 + $0x28] sm:$0xf]
        %v573 = vld [vmem:[%s561 + $0x2c] sm:$0xf]
        %v574 = vld [vmem:[%s561 + $0x30] sm:$0xf]
        %v575 = vld [vmem:[%s561 + $0x34] sm:$0xf]
        %v576 = vld [vmem:[%s561 + $0x38] sm:$0xf]
        %v577 = vld [vmem:[%s561 + $0x3c] sm:$0xf]
        %v578 = vld [vmem:[%s561 + $0x40] sm:$0xf]
        %v579 = vld [vmem:[%s561 + $0x44] sm:$0xf]
        %v580 = vld [vmem:[%s561 + $0x48] sm:$0xf]
        %v581 = vld [vmem:[%s561 + $0x4c] sm:$0xf]
        %v582 = vld [vmem:[%s561 + $0x50] sm:$0xf]
        %v583 = vld [vmem:[%s561 + $0x54] sm:$0xf]
        %v584 = vld [vmem:[%s561 + $0x58] sm:$0xf]
        %v585 = vld [vmem:[%s561 + $0x5c] sm:$0xf]
        %v586 = vld [vmem:[%s561 + $0x60] sm:$0xf]
        %v587 = vld [vmem:[%s561 + $0x64] sm:$0xf]
        %v588 = vld [vmem:[%s561 + $0x68] sm:$0xf]
        %v589 = vld [vmem:[%s561 + $0x6c] sm:$0xf]
        %v590 = vld [vmem:[%s561 + $0x70] sm:$0xf]
        %v591 = vld [vmem:[%s561 + $0x74] sm:$0xf]
        %v592 = vld [vmem:[%s561 + $0x78] sm:$0xf]
        %v593 = vld [vmem:[%s561 + $0x7c] sm:$0xf]
        %v594 = vld [vmem:[%s561 + $0x80] sm:$0xf]
        %v595 = vld [vmem:[%s561 + $0x84] sm:$0xf]
        %v596 = vld [vmem:[%s561 + $0x88] sm:$0xf]
        %v597 = vld [vmem:[%s561 + $0x8c] sm:$0xf]
        %v598 = vld [vmem:[%s561 + $0x90] sm:$0xf]
        %v599 = vld [vmem:[%s561 + $0x94] sm:$0xf]
        %v600 = vld [vmem:[%s561 + $0x98] sm:$0xf]
        %v601 = vld [vmem:[%s561 + $0x9c] sm:$0xf]
        %v602 = vld [vmem:[%s561 + $0xa0] sm:$0xf]
        %v603 = vld [vmem:[%s561 + $0xa4] sm:$0xf]
        %v604 = vld [vmem:[%s561 + $0xa8] sm:$0xf]
        %v605 = vld [vmem:[%s561 + $0xac] sm:$0xf]
        %v606 = vld [vmem:[%s561 + $0xb0] sm:$0xf]
        %v607 = vld [vmem:[%s561 + $0xb4] sm:$0xf]
        %v608 = vld [vmem:[%s561 + $0xb8] sm:$0xf]
        %v609 = vld [vmem:[%s561 + $0xbc] sm:$0xf]
        %v658 = vunpack.c.l.b16 %v562
        %v659 = vunpack.c.l.b16 %v563
        %v660 = vunpack.c.l.b16 %v564
        %v661 = vunpack.c.l.b16 %v565
        %v662 = vunpack.c.l.b16 %v566
        %v663 = vunpack.c.l.b16 %v567
        %v664 = vunpack.c.l.b16 %v568
        %v665 = vunpack.c.l.b16 %v569
        %v666 = vunpack.c.l.b16 %v570
        %v667 = vunpack.c.l.b16 %v571
        %v668 = vunpack.c.l.b16 %v572
        %v669 = vunpack.c.l.b16 %v573
        %v670 = vunpack.c.l.b16 %v574
        %v671 = vunpack.c.l.b16 %v575
        %v672 = vunpack.c.l.b16 %v576
        %v673 = vunpack.c.l.b16 %v577
        %v674 = vunpack.c.l.b16 %v578
        %v675 = vunpack.c.l.b16 %v579
        %v676 = vunpack.c.l.b16 %v580
        %v677 = vunpack.c.l.b16 %v581
        %v678 = vunpack.c.l.b16 %v582
        %v679 = vunpack.c.l.b16 %v583
        %v680 = vunpack.c.l.b16 %v584
        %v681 = vunpack.c.l.b16 %v585
        %v682 = vunpack.c.l.b16 %v586
        %v683 = vunpack.c.l.b16 %v587
        %v684 = vunpack.c.l.b16 %v588
        %v685 = vunpack.c.l.b16 %v589
        %v686 = vunpack.c.l.b16 %v590
        %v687 = vunpack.c.l.b16 %v591
        %v688 = vunpack.c.l.b16 %v592
        %v689 = vunpack.c.l.b16 %v593
        %v690 = vunpack.c.l.b16 %v594
        %v691 = vunpack.c.l.b16 %v595
        %v692 = vunpack.c.l.b16 %v596
        %v693 = vunpack.c.l.b16 %v597
        %v694 = vunpack.c.l.b16 %v598
        %v695 = vunpack.c.l.b16 %v599
        %v696 = vunpack.c.l.b16 %v600
        %v697 = vunpack.c.l.b16 %v601
        %v698 = vunpack.c.l.b16 %v602
        %v699 = vunpack.c.l.b16 %v603
        %v700 = vunpack.c.l.b16 %v604
        %v701 = vunpack.c.l.b16 %v605
        %v702 = vunpack.c.l.b16 %v606
        %v703 = vunpack.c.l.b16 %v607
        %v704 = vunpack.c.l.b16 %v608
        %v705 = vunpack.c.l.b16 %v609
        %v706 = vpack.c.b16 %v659, %v658
        %v707 = vpack.c.b16 %v661, %v660
        %v708 = vpack.c.b16 %v663, %v662
        %v709 = vpack.c.b16 %v665, %v664
        %v710 = vpack.c.b16 %v667, %v666
        %v711 = vpack.c.b16 %v669, %v668
        %v712 = vpack.c.b16 %v671, %v670
        %v713 = vpack.c.b16 %v673, %v672
        %v714 = vpack.c.b16 %v675, %v674
        %v715 = vpack.c.b16 %v677, %v676
        %v716 = vpack.c.b16 %v679, %v678
        %v717 = vpack.c.b16 %v681, %v680
        %v718 = vpack.c.b16 %v683, %v682
        %v719 = vpack.c.b16 %v685, %v684
        %v720 = vpack.c.b16 %v687, %v686
        %v721 = vpack.c.b16 %v689, %v688
        %v722 = vpack.c.b16 %v691, %v690
        %v723 = vpack.c.b16 %v693, %v692
        %v724 = vpack.c.b16 %v695, %v694
        %v725 = vpack.c.b16 %v697, %v696
        %v726 = vpack.c.b16 %v699, %v698
        %v727 = vpack.c.b16 %v701, %v700
        %v728 = vpack.c.b16 %v703, %v702
        %v729 = vpack.c.b16 %v705, %v704
        %754 = vmatprep.subr.bf16.mxu0 0
        %755 = vmatpush1.bf16.msra.mxu0 %v706
        %756 = vmatprep.subr.bf16.mxu0 0
        %757 = vmatpush1.bf16.msra.mxu0 %v707
        %758 = vmatprep.subr.bf16.mxu0 0
        %759 = vmatpush1.bf16.msra.mxu0 %v708
        %760 = vmatprep.subr.bf16.mxu0 0
        %761 = vmatpush1.bf16.msra.mxu0 %v709
        %762 = vmatprep.subr.bf16.mxu0 0
        %763 = vmatpush1.bf16.msra.mxu0 %v710
        %764 = vmatprep.subr.bf16.mxu0 0
        %765 = vmatpush1.bf16.msra.mxu0 %v711
        %766 = vmatprep.subr.bf16.mxu0 0
        %767 = vmatpush1.bf16.msra.mxu0 %v712
        %768 = vmatprep.subr.bf16.mxu0 0
        %769 = vmatpush1.bf16.msra.mxu0 %v713
        %770 = vmatprep.subr.bf16.mxu0 0
        %771 = vmatpush1.bf16.msra.mxu0 %v714
        %772 = vmatprep.subr.bf16.mxu0 0
        %773 = vmatpush1.bf16.msra.mxu0 %v715
        %774 = vmatprep.subr.bf16.mxu0 0
        %775 = vmatpush1.bf16.msra.mxu0 %v716
        %776 = vmatprep.subr.bf16.mxu0 0
        %777 = vmatpush1.bf16.msra.mxu0 %v717
        %778 = vmatprep.subr.bf16.mxu0 0
        %779 = vmatpush1.bf16.msra.mxu0 %v718
        %780 = vmatprep.subr.bf16.mxu0 0
        %781 = vmatpush1.bf16.msra.mxu0 %v719
        %782 = vmatprep.subr.bf16.mxu0 0
        %783 = vmatpush1.bf16.msra.mxu0 %v720
        %784 = vmatprep.subr.bf16.mxu0 0
        %785 = vmatpush1.bf16.msra.mxu0 %v721
        %786 = vmatprep.mubr.bf16.mxu0 %v251
        %787 = vmatmul.mubr.bf16.gmra.mrb[0].mxu0 %v415
        %v788 = vpop.f32.mrb[0].mxu0
        %v789 = vadd.f32 0.0, %v788
        %v790 = vpop.f32.mrb[0].mxu0
        %v791 = vpop.f32.mrb[0].mxu0
        %v792 = vadd.f32 0.0, %v791
        %v793 = vpop.f32.mrb[0].mxu0
        %794 = vmatprep.mubr.bf16.mxu0 %v252
        %795 = vmatmul.mubr.bf16.gmra.mrb[0].mxu0 %v414
        %v796 = vpop.f32.mrb[0].mxu0
        %v797 = vadd.f32 0.0, %v796
        %v798 = vpop.f32.mrb[0].mxu0
        %v799 = vpop.f32.mrb[0].mxu0
        %v800 = vadd.f32 0.0, %v799
        %v801 = vpop.f32.mrb[0].mxu0
        %802 = vmatprep.mubr.bf16.mxu0 %v253
        %803 = vmatmul.mubr.bf16.gmra.mrb[0].mxu0 %v416
        %v804 = vpop.f32.mrb[0].mxu0
        %v805 = vadd.f32 0.0, %v804
        %v806 = vpop.f32.mrb[0].mxu0
        %v807 = vpop.f32.mrb[0].mxu0
        %v808 = vadd.f32 0.0, %v807
        %v809 = vpop.f32.mrb[0].mxu0
        %810 = vmatprep.mubr.bf16.mxu0 %v254
        %811 = vmatmul.mubr.bf16.gmra.mrb[0].mxu0 %v417
        %v812 = vpop.f32.mrb[0].mxu0
        %v813 = vadd.f32 0.0, %v812
        %v814 = vpop.f32.mrb[0].mxu0
        %v815 = vpop.f32.mrb[0].mxu0
        %v816 = vadd.f32 0.0, %v815
        %v817 = vpop.f32.mrb[0].mxu0
        %818 = vmatprep.mubr.bf16.mxu0 %v255
        %819 = vmatmul.mubr.bf16.gmra.mrb[0].mxu0 %v418
        %v820 = vpop.f32.mrb[0].mxu0
        %v821 = vadd.f32 0.0, %v820
        %v822 = vpop.f32.mrb[0].mxu0
        %v823 = vpop.f32.mrb[0].mxu0
        %v824 = vadd.f32 0.0, %v823
        %v825 = vpop.f32.mrb[0].mxu0
        %826 = vmatprep.mubr.bf16.mxu0 %v256
        %827 = vmatmul.mubr.bf16.gmra.mrb[0].mxu0 %v419
        %v828 = vpop.f32.mrb[0].mxu0
        %v829 = vadd.f32 0.0, %v828
        %v830 = vpop.f32.mrb[0].mxu0
        %v831 = vpop.f32.mrb[0].mxu0
        %v832 = vadd.f32 0.0, %v831
        %v833 = vpop.f32.mrb[0].mxu0
        %834 = vmatprep.mubr.bf16.mxu0 %v257
        %835 = vmatmul.mubr.bf16.gmra.mrb[0].mxu0 %v420
        %v836 = vpop.f32.mrb[0].mxu0
        %v837 = vadd.f32 0.0, %v836
        %v838 = vpop.f32.mrb[0].mxu0
        %v839 = vpop.f32.mrb[0].mxu0
        %v840 = vadd.f32 0.0, %v839
        %v841 = vpop.f32.mrb[0].mxu0
        %842 = vmatprep.mubr.bf16.mxu0 %v258
        %843 = vmatmul.mubr.bf16.gmra.mrb[0].mxu0 %v421
        %v844 = vpop.f32.mrb[0].mxu0
        %v845 = vadd.f32 0.0, %v844
        %v846 = vpop.f32.mrb[0].mxu0
        %v847 = vpop.f32.mrb[0].mxu0
        %v848 = vadd.f32 0.0, %v847
        %v849 = vpop.f32.mrb[0].mxu0
        %850 = vmatprep.mubr.bf16.mxu0 %v259
        %851 = vmatmul.mubr.bf16.gmra.mrb[0].mxu0 %v422
        %v852 = vpop.f32.mrb[0].mxu0
        %v853 = vadd.f32 0.0, %v852
        %v854 = vpop.f32.mrb[0].mxu0
        %v855 = vpop.f32.mrb[0].mxu0
        %v856 = vadd.f32 0.0, %v855
        %v857 = vpop.f32.mrb[0].mxu0
        %858 = vmatprep.mubr.bf16.mxu0 %v260
        %859 = vmatmul.mubr.bf16.gmra.mrb[0].mxu0 %v423
        %v860 = vpop.f32.mrb[0].mxu0
        %v861 = vadd.f32 0.0, %v860
        %v862 = vpop.f32.mrb[0].mxu0
        %v863 = vpop.f32.mrb[0].mxu0
        %v864 = vadd.f32 0.0, %v863
        %v865 = vpop.f32.mrb[0].mxu0
        %866 = vmatprep.mubr.bf16.mxu0 %v261
        %867 = vmatmul.mubr.bf16.gmra.mrb[0].mxu0 %v424
        %v868 = vpop.f32.mrb[0].mxu0
        %v869 = vadd.f32 0.0, %v868
        %v870 = vpop.f32.mrb[0].mxu0
        %v871 = vpop.f32.mrb[0].mxu0
        %v872 = vadd.f32 0.0, %v871
        %v873 = vpop.f32.mrb[0].mxu0
        %874 = vmatprep.mubr.bf16.mxu0 %v262
        %875 = vmatmul.mubr.bf16.gmra.mrb[0].mxu0 %v425
        %v876 = vpop.f32.mrb[0].mxu0
        %v877 = vadd.f32 0.0, %v876
        %v878 = vpop.f32.mrb[0].mxu0
        %v879 = vpop.f32.mrb[0].mxu0
        %v880 = vadd.f32 0.0, %v879
        %v881 = vpop.f32.mrb[0].mxu0
        %882 = vmatprep.mubr.bf16.mxu0 %v263
        %883 = vmatmul.mubr.bf16.gmra.mrb[0].mxu0 %v426
        %v884 = vpop.f32.mrb[0].mxu0
        %v885 = vadd.f32 0.0, %v884
        %v886 = vpop.f32.mrb[0].mxu0
        %v887 = vpop.f32.mrb[0].mxu0
        %v888 = vadd.f32 0.0, %v887
        %v889 = vpop.f32.mrb[0].mxu0
        %890 = vmatprep.mubr.bf16.mxu0 %v264
        %891 = vmatmul.mubr.bf16.gmra.mrb[0].mxu0 %v427
        %v892 = vpop.f32.mrb[0].mxu0
        %v893 = vadd.f32 0.0, %v892
        %v894 = vpop.f32.mrb[0].mxu0
        %v895 = vpop.f32.mrb[0].mxu0
        %v896 = vadd.f32 0.0, %v895
        %v897 = vpop.f32.mrb[0].mxu0
        %898 = vmatprep.mubr.bf16.mxu0 %v265
        %899 = vmatmul.mubr.bf16.gmra.mrb[0].mxu0 %v428
        %v900 = vpop.f32.mrb[0].mxu0
        %v901 = vadd.f32 0.0, %v900
        %v902 = vpop.f32.mrb[0].mxu0
        %v903 = vpop.f32.mrb[0].mxu0
        %v904 = vadd.f32 0.0, %v903
        %v905 = vpop.f32.mrb[0].mxu0
        %906 = vmatprep.mubr.bf16.mxu0 %v266
        %907 = vmatmul.mubr.bf16.gmra.mrb[0].mxu0 %v429
        %v908 = vpop.f32.mrb[0].mxu0
        %v909 = vadd.f32 0.0, %v908
        %v910 = vpop.f32.mrb[0].mxu0
        %v911 = vpop.f32.mrb[0].mxu0
        %v912 = vadd.f32 0.0, %v911
        %v913 = vpop.f32.mrb[0].mxu0
        %914 = vdwg.mxu0
        %915 = vmatprep.subr.bf16.mxu0 0
        %916 = vmatpush1.bf16.msra.mxu0 %v722
        %917 = vmatprep.subr.bf16.mxu0 0
        %918 = vmatpush1.bf16.msra.mxu0 %v723
        %919 = vmatprep.subr.bf16.mxu0 0
        %920 = vmatpush1.bf16.msra.mxu0 %v724
        %921 = vmatprep.subr.bf16.mxu0 0
        %922 = vmatpush1.bf16.msra.mxu0 %v725
        %923 = vmatprep.subr.bf16.mxu0 0
        %924 = vmatpush1.bf16.msra.mxu0 %v726
        %925 = vmatprep.subr.bf16.mxu0 0
        %926 = vmatpush1.bf16.msra.mxu0 %v727
        %927 = vmatprep.subr.bf16.mxu0 0
        %928 = vmatpush1.bf16.msra.mxu0 %v728
        %929 = vmatprep.subr.bf16.mxu0 0
        %930 = vmatpush1.bf16.msra.mxu0 %v729
        %931 = vmatprep.subr.bf16.mxu0 0
        %932 = vmatpush1.bf16.msra.mxu0 0
        %933 = vmatprep.subr.bf16.mxu0 0
        %934 = vmatpush1.bf16.msra.mxu0 0
        %935 = vmatprep.subr.bf16.mxu0 0
        %936 = vmatpush1.bf16.msra.mxu0 0
        %937 = vmatprep.subr.bf16.mxu0 0
        %938 = vmatpush1.bf16.msra.mxu0 0
        %939 = vmatprep.subr.bf16.mxu0 0
        %940 = vmatpush1.bf16.msra.mxu0 0
        %941 = vmatprep.subr.bf16.mxu0 0
        %942 = vmatpush1.bf16.msra.mxu0 0
        %943 = vmatprep.subr.bf16.mxu0 0
        %944 = vmatpush1.bf16.msra.mxu0 0
        %945 = vmatprep.subr.bf16.mxu0 0
        %946 = vmatpush1.bf16.msra.mxu0 0
        %947 = vmatprep.mubr.bf16.mxu0 0
        %948 = vmatmul.mubr.bf16.gmra.mrb[0].mxu0 %v498
        %v949 = vpop.f32.mrb[0].mxu0
        %v950 = vadd.f32 %v789, %v949
        %v951 = vpop.f32.mrb[0].mxu0
        %v952 = vpop.f32.mrb[0].mxu0
        %v953 = vadd.f32 %v792, %v952
        %v954 = vpop.f32.mrb[0].mxu0
        %955 = vmatprep.mubr.bf16.mxu0 0
        %956 = vmatmul.mubr.bf16.gmra.mrb[0].mxu0 %v497
        %v957 = vpop.f32.mrb[0].mxu0
        %v958 = vadd.f32 %v797, %v957
        %v959 = vpop.f32.mrb[0].mxu0
        %v960 = vpop.f32.mrb[0].mxu0
        %v961 = vadd.f32 %v800, %v960
        %v962 = vpop.f32.mrb[0].mxu0
        %963 = vmatprep.mubr.bf16.mxu0 0
        %964 = vmatmul.mubr.bf16.gmra.mrb[0].mxu0 %v499
        %v965 = vpop.f32.mrb[0].mxu0
        %v966 = vadd.f32 %v805, %v965
        %v967 = vpop.f32.mrb[0].mxu0
        %v968 = vpop.f32.mrb[0].mxu0
        %v969 = vadd.f32 %v808, %v968
        %v970 = vpop.f32.mrb[0].mxu0
        %971 = vmatprep.mubr.bf16.mxu0 0
        %972 = vmatmul.mubr.bf16.gmra.mrb[0].mxu0 %v500
        %v973 = vpop.f32.mrb[0].mxu0
        %v974 = vadd.f32 %v813, %v973
        %v975 = vpop.f32.mrb[0].mxu0
        %v976 = vpop.f32.mrb[0].mxu0
        %v977 = vadd.f32 %v816, %v976
        %v978 = vpop.f32.mrb[0].mxu0
        %979 = vmatprep.mubr.bf16.mxu0 0
        %980 = vmatmul.mubr.bf16.gmra.mrb[0].mxu0 %v501
        %v981 = vpop.f32.mrb[0].mxu0
        %v982 = vadd.f32 %v821, %v981
        %v983 = vpop.f32.mrb[0].mxu0
        %v984 = vpop.f32.mrb[0].mxu0
        %v985 = vadd.f32 %v824, %v984
        %v986 = vpop.f32.mrb[0].mxu0
        %987 = vmatprep.mubr.bf16.mxu0 0
        %988 = vmatmul.mubr.bf16.gmra.mrb[0].mxu0 %v502
        %v989 = vpop.f32.mrb[0].mxu0
        %v990 = vadd.f32 %v829, %v989
        %v991 = vpop.f32.mrb[0].mxu0
        %v992 = vpop.f32.mrb[0].mxu0
        %v993 = vadd.f32 %v832, %v992
        %v994 = vpop.f32.mrb[0].mxu0
        %995 = vmatprep.mubr.bf16.mxu0 0
        %996 = vmatmul.mubr.bf16.gmra.mrb[0].mxu0 %v503
        %v997 = vpop.f32.mrb[0].mxu0
        %v998 = vadd.f32 %v837, %v997
        %v999 = vpop.f32.mrb[0].mxu0
        %v1000 = vpop.f32.mrb[0].mxu0
        %v1001 = vadd.f32 %v840, %v1000
        %v1002 = vpop.f32.mrb[0].mxu0
        %1003 = vmatprep.mubr.bf16.mxu0 0
        %1004 = vmatmul.mubr.bf16.gmra.mrb[0].mxu0 %v504
        %v1005 = vpop.f32.mrb[0].mxu0
        %v1006 = vadd.f32 %v845, %v1005
        %v1007 = vpop.f32.mrb[0].mxu0
        %v1008 = vpop.f32.mrb[0].mxu0
        %v1009 = vadd.f32 %v848, %v1008
        %v1010 = vpop.f32.mrb[0].mxu0
        %1011 = vmatprep.mubr.bf16.mxu0 0
        %1012 = vmatmul.mubr.bf16.gmra.mrb[0].mxu0 %v505
        %v1013 = vpop.f32.mrb[0].mxu0
        %v1014 = vadd.f32 %v853, %v1013
        %v1015 = vpop.f32.mrb[0].mxu0
        %v1016 = vpop.f32.mrb[0].mxu0
        %v1017 = vadd.f32 %v856, %v1016
        %v1018 = vpop.f32.mrb[0].mxu0
        %1019 = vmatprep.mubr.bf16.mxu0 0
        %1020 = vmatmul.mubr.bf16.gmra.mrb[0].mxu0 %v506
        %v1021 = vpop.f32.mrb[0].mxu0
        %v1022 = vadd.f32 %v861, %v1021
        %v1023 = vpop.f32.mrb[0].mxu0
        %v1024 = vpop.f32.mrb[0].mxu0
        %v1025 = vadd.f32 %v864, %v1024
        %v1026 = vpop.f32.mrb[0].mxu0
        %1027 = vmatprep.mubr.bf16.mxu0 0
        %1028 = vmatmul.mubr.bf16.gmra.mrb[0].mxu0 %v507
        %v1029 = vpop.f32.mrb[0].mxu0
        %v1030 = vadd.f32 %v869, %v1029
        %v1031 = vpop.f32.mrb[0].mxu0
        %v1032 = vpop.f32.mrb[0].mxu0
        %v1033 = vadd.f32 %v872, %v1032
        %v1034 = vpop.f32.mrb[0].mxu0
        %1035 = vmatprep.mubr.bf16.mxu0 0
        %1036 = vmatmul.mubr.bf16.gmra.mrb[0].mxu0 %v508
        %v1037 = vpop.f32.mrb[0].mxu0
        %v1038 = vadd.f32 %v877, %v1037
        %v1039 = vpop.f32.mrb[0].mxu0
        %v1040 = vpop.f32.mrb[0].mxu0
        %v1041 = vadd.f32 %v880, %v1040
        %v1042 = vpop.f32.mrb[0].mxu0
        %1043 = vmatprep.mubr.bf16.mxu0 0
        %1044 = vmatmul.mubr.bf16.gmra.mrb[0].mxu0 %v509
        %v1045 = vpop.f32.mrb[0].mxu0
        %v1046 = vadd.f32 %v885, %v1045
        %v1047 = vpop.f32.mrb[0].mxu0
        %v1048 = vpop.f32.mrb[0].mxu0
        %v1049 = vadd.f32 %v888, %v1048
        %v1050 = vpop.f32.mrb[0].mxu0
        %1051 = vmatprep.mubr.bf16.mxu0 0
        %1052 = vmatmul.mubr.bf16.gmra.mrb[0].mxu0 %v510
        %v1053 = vpop.f32.mrb[0].mxu0
        %v1054 = vadd.f32 %v893, %v1053
        %v1055 = vpop.f32.mrb[0].mxu0
        %v1056 = vpop.f32.mrb[0].mxu0
        %v1057 = vadd.f32 %v896, %v1056
        %v1058 = vpop.f32.mrb[0].mxu0
        %1059 = vmatprep.mubr.bf16.mxu0 0
        %1060 = vmatmul.mubr.bf16.gmra.mrb[0].mxu0 %v511
        %v1061 = vpop.f32.mrb[0].mxu0
        %v1062 = vadd.f32 %v901, %v1061
        %v1063 = vpop.f32.mrb[0].mxu0
        %v1064 = vpop.f32.mrb[0].mxu0
        %v1065 = vadd.f32 %v904, %v1064
        %v1066 = vpop.f32.mrb[0].mxu0
        %1067 = vmatprep.mubr.bf16.mxu0 0
        %1068 = vmatmul.mubr.bf16.gmra.mrb[0].mxu0 %v512
        %v1069 = vpop.f32.mrb[0].mxu0
        %v1070 = vadd.f32 %v909, %v1069
        %v1071 = vpop.f32.mrb[0].mxu0
        %v1072 = vpop.f32.mrb[0].mxu0
        %v1073 = vadd.f32 %v912, %v1072
        %v1074 = vpop.f32.mrb[0].mxu0
        %1075 = vdwg.mxu0
        %v1124 = vunpack.c.l.b16 %v513
        %v1125 = vunpack.c.l.b16 %v514
        %v1126 = vunpack.c.l.b16 %v515
        %v1127 = vunpack.c.l.b16 %v516
        %v1128 = vunpack.c.l.b16 %v517
        %v1129 = vunpack.c.l.b16 %v518
        %v1130 = vunpack.c.l.b16 %v519
        %v1131 = vunpack.c.l.b16 %v520
        %v1132 = vunpack.c.l.b16 %v521
        %v1133 = vunpack.c.l.b16 %v522
        %v1134 = vunpack.c.l.b16 %v523
        %v1135 = vunpack.c.l.b16 %v524
        %v1136 = vunpack.c.l.b16 %v525
        %v1137 = vunpack.c.l.b16 %v526
        %v1138 = vunpack.c.l.b16 %v527
        %v1139 = vunpack.c.l.b16 %v528
        %v1140 = vunpack.c.l.b16 %v529
        %v1141 = vunpack.c.l.b16 %v530
        %v1142 = vunpack.c.l.b16 %v531
        %v1143 = vunpack.c.l.b16 %v532
        %v1144 = vunpack.c.l.b16 %v533
        %v1145 = vunpack.c.l.b16 %v534
        %v1146 = vunpack.c.l.b16 %v535
        %v1147 = vunpack.c.l.b16 %v536
        %v1148 = vunpack.c.l.b16 %v537
        %v1149 = vunpack.c.l.b16 %v538
        %v1150 = vunpack.c.l.b16 %v539
        %v1151 = vunpack.c.l.b16 %v540
        %v1152 = vunpack.c.l.b16 %v541
        %v1153 = vunpack.c.l.b16 %v542
        %v1154 = vunpack.c.l.b16 %v543
        %v1155 = vunpack.c.l.b16 %v544
        %v1156 = vunpack.c.l.b16 %v545
        %v1157 = vunpack.c.l.b16 %v546
        %v1158 = vunpack.c.l.b16 %v547
        %v1159 = vunpack.c.l.b16 %v548
        %v1160 = vunpack.c.l.b16 %v549
        %v1161 = vunpack.c.l.b16 %v550
        %v1162 = vunpack.c.l.b16 %v551
        %v1163 = vunpack.c.l.b16 %v552
        %v1164 = vunpack.c.l.b16 %v553
        %v1165 = vunpack.c.l.b16 %v554
        %v1166 = vunpack.c.l.b16 %v555
        %v1167 = vunpack.c.l.b16 %v556
        %v1168 = vunpack.c.l.b16 %v557
        %v1169 = vunpack.c.l.b16 %v558
        %v1170 = vunpack.c.l.b16 %v559
        %v1171 = vunpack.c.l.b16 %v560
        %v1172 = vpack.c.b16 %v1125, %v1124
        %v1173 = vpack.c.b16 %v1127, %v1126
        %v1174 = vpack.c.b16 %v1129, %v1128
        %v1175 = vpack.c.b16 %v1131, %v1130
        %v1176 = vpack.c.b16 %v1133, %v1132
        %v1177 = vpack.c.b16 %v1135, %v1134
        %v1178 = vpack.c.b16 %v1137, %v1136
        %v1179 = vpack.c.b16 %v1139, %v1138
        %v1180 = vpack.c.b16 %v1141, %v1140
        %v1181 = vpack.c.b16 %v1143, %v1142
        %v1182 = vpack.c.b16 %v1145, %v1144
        %v1183 = vpack.c.b16 %v1147, %v1146
        %v1184 = vpack.c.b16 %v1149, %v1148
        %v1185 = vpack.c.b16 %v1151, %v1150
        %v1186 = vpack.c.b16 %v1153, %v1152
        %v1187 = vpack.c.b16 %v1155, %v1154
        %v1188 = vpack.c.b16 %v1157, %v1156
        %v1189 = vpack.c.b16 %v1159, %v1158
        %v1190 = vpack.c.b16 %v1161, %v1160
        %v1191 = vpack.c.b16 %v1163, %v1162
        %v1192 = vpack.c.b16 %v1165, %v1164
        %v1193 = vpack.c.b16 %v1167, %v1166
        %v1194 = vpack.c.b16 %v1169, %v1168
        %v1195 = vpack.c.b16 %v1171, %v1170
        %1220 = vmatprep.subr.bf16.mxu0 0
        %1221 = vmatpush1.bf16.msra.mxu0 %v1172
        %1222 = vmatprep.subr.bf16.mxu0 0
        %1223 = vmatpush1.bf16.msra.mxu0 %v1173
        %1224 = vmatprep.subr.bf16.mxu0 0
        %1225 = vmatpush1.bf16.msra.mxu0 %v1174
        %1226 = vmatprep.subr.bf16.mxu0 0
        %1227 = vmatpush1.bf16.msra.mxu0 %v1175
        %1228 = vmatprep.subr.bf16.mxu0 0
        %1229 = vmatpush1.bf16.msra.mxu0 %v1176
        %1230 = vmatprep.subr.bf16.mxu0 0
        %1231 = vmatpush1.bf16.msra.mxu0 %v1177
        %1232 = vmatprep.subr.bf16.mxu0 0
        %1233 = vmatpush1.bf16.msra.mxu0 %v1178
        %1234 = vmatprep.subr.bf16.mxu0 0
        %1235 = vmatpush1.bf16.msra.mxu0 %v1179
        %1236 = vmatprep.subr.bf16.mxu0 0
        %1237 = vmatpush1.bf16.msra.mxu0 %v1180
        %1238 = vmatprep.subr.bf16.mxu0 0
        %1239 = vmatpush1.bf16.msra.mxu0 %v1181
        %1240 = vmatprep.subr.bf16.mxu0 0
        %1241 = vmatpush1.bf16.msra.mxu0 %v1182
        %1242 = vmatprep.subr.bf16.mxu0 0
        %1243 = vmatpush1.bf16.msra.mxu0 %v1183
        %1244 = vmatprep.subr.bf16.mxu0 0
        %1245 = vmatpush1.bf16.msra.mxu0 %v1184
        %1246 = vmatprep.subr.bf16.mxu0 0
        %1247 = vmatpush1.bf16.msra.mxu0 %v1185
        %1248 = vmatprep.subr.bf16.mxu0 0
        %1249 = vmatpush1.bf16.msra.mxu0 %v1186
        %1250 = vmatprep.subr.bf16.mxu0 0
        %1251 = vmatpush1.bf16.msra.mxu0 %v1187
        %1252 = vmatprep.mubr.bf16.mxu0 %v252
        %1253 = vmatmul.mubr.bf16.gmra.mrb[0].mxu0 %v414
        %v1254 = vpop.f32.mrb[0].mxu0
        %v1255 = vadd.f32 %v950, %v1254
        %v1256 = vpop.f32.mrb[0].mxu0
        %v1257 = vpop.f32.mrb[0].mxu0
        %v1258 = vadd.f32 %v953, %v1257
        %v1259 = vpop.f32.mrb[0].mxu0
        %1260 = vmatprep.mubr.bf16.mxu0 %v251
        %1261 = vmatmul.mubr.bf16.gmra.mrb[0].mxu0 %v415
        %v1262 = vpop.f32.mrb[0].mxu0
        %v1263 = vadd.f32 %v958, %v1262
        %v1264 = vpop.f32.mrb[0].mxu0
        %v1265 = vpop.f32.mrb[0].mxu0
        %v1266 = vadd.f32 %v961, %v1265
        %v1267 = vpop.f32.mrb[0].mxu0
        %1268 = vmatprep.mubr.bf16.mxu0 %v252
        %1269 = vmatmul.mubr.bf16.gmra.mrb[0].mxu0 %v414
        %v1270 = vpop.f32.mrb[0].mxu0
        %v1271 = vadd.f32 %v966, %v1270
        %v1272 = vpop.f32.mrb[0].mxu0
        %v1273 = vpop.f32.mrb[0].mxu0
        %v1274 = vadd.f32 %v969, %v1273
        %v1275 = vpop.f32.mrb[0].mxu0
        %1276 = vmatprep.mubr.bf16.mxu0 %v253
        %1277 = vmatmul.mubr.bf16.gmra.mrb[0].mxu0 %v416
        %v1278 = vpop.f32.mrb[0].mxu0
        %v1279 = vadd.f32 %v974, %v1278
        %v1280 = vpop.f32.mrb[0].mxu0
        %v1281 = vpop.f32.mrb[0].mxu0
        %v1282 = vadd.f32 %v977, %v1281
        %v1283 = vpop.f32.mrb[0].mxu0
        %1284 = vmatprep.mubr.bf16.mxu0 %v254
        %1285 = vmatmul.mubr.bf16.gmra.mrb[0].mxu0 %v417
        %v1286 = vpop.f32.mrb[0].mxu0
        %v1287 = vadd.f32 %v982, %v1286
        %v1288 = vpop.f32.mrb[0].mxu0
        %v1289 = vpop.f32.mrb[0].mxu0
        %v1290 = vadd.f32 %v985, %v1289
        %v1291 = vpop.f32.mrb[0].mxu0
        %1292 = vmatprep.mubr.bf16.mxu0 %v255
        %1293 = vmatmul.mubr.bf16.gmra.mrb[0].mxu0 %v418
        %v1294 = vpop.f32.mrb[0].mxu0
        %v1295 = vadd.f32 %v990, %v1294
        %v1296 = vpop.f32.mrb[0].mxu0
        %v1297 = vpop.f32.mrb[0].mxu0
        %v1298 = vadd.f32 %v993, %v1297
        %v1299 = vpop.f32.mrb[0].mxu0
        %1300 = vmatprep.mubr.bf16.mxu0 %v256
        %1301 = vmatmul.mubr.bf16.gmra.mrb[0].mxu0 %v419
        %v1302 = vpop.f32.mrb[0].mxu0
        %v1303 = vadd.f32 %v998, %v1302
        %v1304 = vpop.f32.mrb[0].mxu0
        %v1305 = vpop.f32.mrb[0].mxu0
        %v1306 = vadd.f32 %v1001, %v1305
        %v1307 = vpop.f32.mrb[0].mxu0
        %1308 = vmatprep.mubr.bf16.mxu0 %v257
        %1309 = vmatmul.mubr.bf16.gmra.mrb[0].mxu0 %v420
        %v1310 = vpop.f32.mrb[0].mxu0
        %v1311 = vadd.f32 %v1006, %v1310
        %v1312 = vpop.f32.mrb[0].mxu0
        %v1313 = vpop.f32.mrb[0].mxu0
        %v1314 = vadd.f32 %v1009, %v1313
        %v1315 = vpop.f32.mrb[0].mxu0
        %1316 = vmatprep.mubr.bf16.mxu0 %v258
        %1317 = vmatmul.mubr.bf16.gmra.mrb[0].mxu0 %v421
        %v1318 = vpop.f32.mrb[0].mxu0
        %v1319 = vadd.f32 %v1014, %v1318
        %v1320 = vpop.f32.mrb[0].mxu0
        %v1321 = vpop.f32.mrb[0].mxu0
        %v1322 = vadd.f32 %v1017, %v1321
        %v1323 = vpop.f32.mrb[0].mxu0
        %1324 = vmatprep.mubr.bf16.mxu0 %v259
        %1325 = vmatmul.mubr.bf16.gmra.mrb[0].mxu0 %v422
        %v1326 = vpop.f32.mrb[0].mxu0
        %v1327 = vadd.f32 %v1022, %v1326
        %v1328 = vpop.f32.mrb[0].mxu0
        %v1329 = vpop.f32.mrb[0].mxu0
        %v1330 = vadd.f32 %v1025, %v1329
        %v1331 = vpop.f32.mrb[0].mxu0
        %1332 = vmatprep.mubr.bf16.mxu0 %v260
        %1333 = vmatmul.mubr.bf16.gmra.mrb[0].mxu0 %v423
        %v1334 = vpop.f32.mrb[0].mxu0
        %v1335 = vadd.f32 %v1030, %v1334
        %v1336 = vpop.f32.mrb[0].mxu0
        %v1337 = vpop.f32.mrb[0].mxu0
        %v1338 = vadd.f32 %v1033, %v1337
        %v1339 = vpop.f32.mrb[0].mxu0
        %1340 = vmatprep.mubr.bf16.mxu0 %v261
        %1341 = vmatmul.mubr.bf16.gmra.mrb[0].mxu0 %v424
        %v1342 = vpop.f32.mrb[0].mxu0
        %v1343 = vadd.f32 %v1038, %v1342
        %v1344 = vpop.f32.mrb[0].mxu0
        %v1345 = vpop.f32.mrb[0].mxu0
        %v1346 = vadd.f32 %v1041, %v1345
        %v1347 = vpop.f32.mrb[0].mxu0
        %1348 = vmatprep.mubr.bf16.mxu0 %v262
        %1349 = vmatmul.mubr.bf16.gmra.mrb[0].mxu0 %v425
        %v1350 = vpop.f32.mrb[0].mxu0
        %v1351 = vadd.f32 %v1046, %v1350
        %v1352 = vpop.f32.mrb[0].mxu0
        %v1353 = vpop.f32.mrb[0].mxu0
        %v1354 = vadd.f32 %v1049, %v1353
        %v1355 = vpop.f32.mrb[0].mxu0
        %1356 = vmatprep.mubr.bf16.mxu0 %v263
        %1357 = vmatmul.mubr.bf16.gmra.mrb[0].mxu0 %v426
        %v1358 = vpop.f32.mrb[0].mxu0
        %v1359 = vadd.f32 %v1054, %v1358
        %v1360 = vpop.f32.mrb[0].mxu0
        %v1361 = vpop.f32.mrb[0].mxu0
        %v1362 = vadd.f32 %v1057, %v1361
        %v1363 = vpop.f32.mrb[0].mxu0
        %1364 = vmatprep.mubr.bf16.mxu0 %v264
        %1365 = vmatmul.mubr.bf16.gmra.mrb[0].mxu0 %v427
        %v1366 = vpop.f32.mrb[0].mxu0
        %v1367 = vadd.f32 %v1062, %v1366
        %v1368 = vpop.f32.mrb[0].mxu0
        %v1369 = vpop.f32.mrb[0].mxu0
        %v1370 = vadd.f32 %v1065, %v1369
        %v1371 = vpop.f32.mrb[0].mxu0
        %1372 = vmatprep.mubr.bf16.mxu0 %v265
        %1373 = vmatmul.mubr.bf16.gmra.mrb[0].mxu0 %v428
        %v1374 = vpop.f32.mrb[0].mxu0
        %v1375 = vadd.f32 %v1070, %v1374
        %v1376 = vpop.f32.mrb[0].mxu0
        %v1377 = vpop.f32.mrb[0].mxu0
        %v1378 = vadd.f32 %v1073, %v1377
        %v1379 = vpop.f32.mrb[0].mxu0
        %1380 = vdwg.mxu0
        %1381 = vmatprep.subr.bf16.mxu0 0
        %1382 = vmatpush1.bf16.msra.mxu0 %v1188
        %1383 = vmatprep.subr.bf16.mxu0 0
        %1384 = vmatpush1.bf16.msra.mxu0 %v1189
        %1385 = vmatprep.subr.bf16.mxu0 0
        %1386 = vmatpush1.bf16.msra.mxu0 %v1190
        %1387 = vmatprep.subr.bf16.mxu0 0
        %1388 = vmatpush1.bf16.msra.mxu0 %v1191
        %1389 = vmatprep.subr.bf16.mxu0 0
        %1390 = vmatpush1.bf16.msra.mxu0 %v1192
        %1391 = vmatprep.subr.bf16.mxu0 0
        %1392 = vmatpush1.bf16.msra.mxu0 %v1193
        %1393 = vmatprep.subr.bf16.mxu0 0
        %1394 = vmatpush1.bf16.msra.mxu0 %v1194
        %1395 = vmatprep.subr.bf16.mxu0 0
        %1396 = vmatpush1.bf16.msra.mxu0 %v1195
        %1397 = vmatprep.subr.bf16.mxu0 0
        %1398 = vmatpush1.bf16.msra.mxu0 0
        %1399 = vmatprep.subr.bf16.mxu0 0
        %1400 = vmatpush1.bf16.msra.mxu0 0
        %1401 = vmatprep.subr.bf16.mxu0 0
        %1402 = vmatpush1.bf16.msra.mxu0 0
        %1403 = vmatprep.subr.bf16.mxu0 0
        %1404 = vmatpush1.bf16.msra.mxu0 0
        %1405 = vmatprep.subr.bf16.mxu0 0
        %1406 = vmatpush1.bf16.msra.mxu0 0
        %1407 = vmatprep.subr.bf16.mxu0 0
        %1408 = vmatpush1.bf16.msra.mxu0 0
        %1409 = vmatprep.subr.bf16.mxu0 0
        %1410 = vmatpush1.bf16.msra.mxu0 0
        %1411 = vmatprep.subr.bf16.mxu0 0
        %1412 = vmatpush1.bf16.msra.mxu0 0
        %1413 = vmatprep.mubr.bf16.mxu0 0
        %1414 = vmatmul.mubr.bf16.gmra.mrb[0].mxu0 %v497
        %v1415 = vpop.f32.mrb[0].mxu0
        %v1416 = vadd.f32 %v1255, %v1415
        %v1417 = vpop.f32.mrb[0].mxu0
        %v1418 = vpop.f32.mrb[0].mxu0
        %v1419 = vadd.f32 %v1258, %v1418
        %v1420 = vpop.f32.mrb[0].mxu0
        %1421 = vmatprep.mubr.bf16.mxu0 0
        %1422 = vmatmul.mubr.bf16.gmra.mrb[0].mxu0 %v498
        %v1423 = vpop.f32.mrb[0].mxu0
        %v1424 = vadd.f32 %v1263, %v1423
        %v1425 = vpop.f32.mrb[0].mxu0
        %v1426 = vpop.f32.mrb[0].mxu0
        %v1427 = vadd.f32 %v1266, %v1426
        %v1428 = vpop.f32.mrb[0].mxu0
        %1429 = vmatprep.mubr.bf16.mxu0 0
        %1430 = vmatmul.mubr.bf16.gmra.mrb[0].mxu0 %v497
        %v1431 = vpop.f32.mrb[0].mxu0
        %v1432 = vadd.f32 %v1271, %v1431
        %v1433 = vpop.f32.mrb[0].mxu0
        %v1434 = vpop.f32.mrb[0].mxu0
        %v1435 = vadd.f32 %v1274, %v1434
        %v1436 = vpop.f32.mrb[0].mxu0
        %1437 = vmatprep.mubr.bf16.mxu0 0
        %1438 = vmatmul.mubr.bf16.gmra.mrb[0].mxu0 %v499
        %v1439 = vpop.f32.mrb[0].mxu0
        %v1440 = vadd.f32 %v1279, %v1439
        %v1441 = vpop.f32.mrb[0].mxu0
        %v1442 = vpop.f32.mrb[0].mxu0
        %v1443 = vadd.f32 %v1282, %v1442
        %v1444 = vpop.f32.mrb[0].mxu0
        %1445 = vmatprep.mubr.bf16.mxu0 0
        %1446 = vmatmul.mubr.bf16.gmra.mrb[0].mxu0 %v500
        %v1447 = vpop.f32.mrb[0].mxu0
        %v1448 = vadd.f32 %v1287, %v1447
        %v1449 = vpop.f32.mrb[0].mxu0
        %v1450 = vpop.f32.mrb[0].mxu0
        %v1451 = vadd.f32 %v1290, %v1450
        %v1452 = vpop.f32.mrb[0].mxu0
        %1453 = vmatprep.mubr.bf16.mxu0 0
        %1454 = vmatmul.mubr.bf16.gmra.mrb[0].mxu0 %v501
        %v1455 = vpop.f32.mrb[0].mxu0
        %v1456 = vadd.f32 %v1295, %v1455
        %v1457 = vpop.f32.mrb[0].mxu0
        %v1458 = vpop.f32.mrb[0].mxu0
        %v1459 = vadd.f32 %v1298, %v1458
        %v1460 = vpop.f32.mrb[0].mxu0
        %1461 = vmatprep.mubr.bf16.mxu0 0
        %1462 = vmatmul.mubr.bf16.gmra.mrb[0].mxu0 %v502
        %v1463 = vpop.f32.mrb[0].mxu0
        %v1464 = vadd.f32 %v1303, %v1463
        %v1465 = vpop.f32.mrb[0].mxu0
        %v1466 = vpop.f32.mrb[0].mxu0
        %v1467 = vadd.f32 %v1306, %v1466
        %v1468 = vpop.f32.mrb[0].mxu0
        %1469 = vmatprep.mubr.bf16.mxu0 0
        %1470 = vmatmul.mubr.bf16.gmra.mrb[0].mxu0 %v503
        %v1471 = vpop.f32.mrb[0].mxu0
        %v1472 = vadd.f32 %v1311, %v1471
        %v1473 = vpop.f32.mrb[0].mxu0
        %v1474 = vpop.f32.mrb[0].mxu0
        %v1475 = vadd.f32 %v1314, %v1474
        %v1476 = vpop.f32.mrb[0].mxu0
        %1477 = vmatprep.mubr.bf16.mxu0 0
        %1478 = vmatmul.mubr.bf16.gmra.mrb[0].mxu0 %v504
        %v1479 = vpop.f32.mrb[0].mxu0
        %v1480 = vadd.f32 %v1319, %v1479
        %v1481 = vpop.f32.mrb[0].mxu0
        %v1482 = vpop.f32.mrb[0].mxu0
        %v1483 = vadd.f32 %v1322, %v1482
        %v1484 = vpop.f32.mrb[0].mxu0
        %1485 = vmatprep.mubr.bf16.mxu0 0
        %1486 = vmatmul.mubr.bf16.gmra.mrb[0].mxu0 %v505
        %v1487 = vpop.f32.mrb[0].mxu0
        %v1488 = vadd.f32 %v1327, %v1487
        %v1489 = vpop.f32.mrb[0].mxu0
        %v1490 = vpop.f32.mrb[0].mxu0
        %v1491 = vadd.f32 %v1330, %v1490
        %v1492 = vpop.f32.mrb[0].mxu0
        %1493 = vmatprep.mubr.bf16.mxu0 0
        %1494 = vmatmul.mubr.bf16.gmra.mrb[0].mxu0 %v506
        %v1495 = vpop.f32.mrb[0].mxu0
        %v1496 = vadd.f32 %v1335, %v1495
        %v1497 = vpop.f32.mrb[0].mxu0
        %v1498 = vpop.f32.mrb[0].mxu0
        %v1499 = vadd.f32 %v1338, %v1498
        %v1500 = vpop.f32.mrb[0].mxu0
        %1501 = vmatprep.mubr.bf16.mxu0 0
        %1502 = vmatmul.mubr.bf16.gmra.mrb[0].mxu0 %v507
        %v1503 = vpop.f32.mrb[0].mxu0
        %v1504 = vadd.f32 %v1343, %v1503
        %v1505 = vpop.f32.mrb[0].mxu0
        %v1506 = vpop.f32.mrb[0].mxu0
        %v1507 = vadd.f32 %v1346, %v1506
        %v1508 = vpop.f32.mrb[0].mxu0
        %1509 = vmatprep.mubr.bf16.mxu0 0
        %1510 = vmatmul.mubr.bf16.gmra.mrb[0].mxu0 %v508
        %v1511 = vpop.f32.mrb[0].mxu0
        %v1512 = vadd.f32 %v1351, %v1511
        %v1513 = vpop.f32.mrb[0].mxu0
        %v1514 = vpop.f32.mrb[0].mxu0
        %v1515 = vadd.f32 %v1354, %v1514
        %v1516 = vpop.f32.mrb[0].mxu0
        %1517 = vmatprep.mubr.bf16.mxu0 0
        %1518 = vmatmul.mubr.bf16.gmra.mrb[0].mxu0 %v509
        %v1519 = vpop.f32.mrb[0].mxu0
        %v1520 = vadd.f32 %v1359, %v1519
        %v1521 = vpop.f32.mrb[0].mxu0
        %v1522 = vpop.f32.mrb[0].mxu0
        %v1523 = vadd.f32 %v1362, %v1522
        %v1524 = vpop.f32.mrb[0].mxu0
        %1525 = vmatprep.mubr.bf16.mxu0 0
        %1526 = vmatmul.mubr.bf16.gmra.mrb[0].mxu0 %v510
        %v1527 = vpop.f32.mrb[0].mxu0
        %v1528 = vadd.f32 %v1367, %v1527
        %v1529 = vpop.f32.mrb[0].mxu0
        %v1530 = vpop.f32.mrb[0].mxu0
        %v1531 = vadd.f32 %v1370, %v1530
        %v1532 = vpop.f32.mrb[0].mxu0
        %1533 = vmatprep.mubr.bf16.mxu0 0
        %1534 = vmatmul.mubr.bf16.gmra.mrb[0].mxu0 %v511
        %v1535 = vpop.f32.mrb[0].mxu0
        %v1536 = vadd.f32 %v1375, %v1535
        %v1537 = vpop.f32.mrb[0].mxu0
        %v1538 = vpop.f32.mrb[0].mxu0
        %v1539 = vadd.f32 %v1378, %v1538
        %v1540 = vpop.f32.mrb[0].mxu0
        %1541 = vdwg.mxu0
        %s1542 = scalar_lea.vmem [#allocation5], 384
        %v1543 = vld [vmem:[%s1542] sm:$0xf]
        %v1544 = vld [vmem:[%s1542 + $0x4] sm:$0xf]
        %v1545 = vld [vmem:[%s1542 + $0x8] sm:$0xf]
        %v1546 = vld [vmem:[%s1542 + $0xc] sm:$0xf]
        %v1547 = vld [vmem:[%s1542 + $0x10] sm:$0xf]
        %v1548 = vld [vmem:[%s1542 + $0x14] sm:$0xf]
        %v1549 = vld [vmem:[%s1542 + $0x18] sm:$0xf]
        %v1550 = vld [vmem:[%s1542 + $0x1c] sm:$0xf]
        %v1551 = vld [vmem:[%s1542 + $0x20] sm:$0xf]
        %v1552 = vld [vmem:[%s1542 + $0x24] sm:$0xf]
        %v1553 = vld [vmem:[%s1542 + $0x28] sm:$0xf]
        %v1554 = vld [vmem:[%s1542 + $0x2c] sm:$0xf]
        %v1555 = vld [vmem:[%s1542 + $0x30] sm:$0xf]
        %v1556 = vld [vmem:[%s1542 + $0x34] sm:$0xf]
        %v1557 = vld [vmem:[%s1542 + $0x38] sm:$0xf]
        %v1558 = vld [vmem:[%s1542 + $0x3c] sm:$0xf]
        %v1559 = vld [vmem:[%s1542 + $0x40] sm:$0xf]
        %v1560 = vld [vmem:[%s1542 + $0x44] sm:$0xf]
        %v1561 = vld [vmem:[%s1542 + $0x48] sm:$0xf]
        %v1562 = vld [vmem:[%s1542 + $0x4c] sm:$0xf]
        %v1563 = vld [vmem:[%s1542 + $0x50] sm:$0xf]
        %v1564 = vld [vmem:[%s1542 + $0x54] sm:$0xf]
        %v1565 = vld [vmem:[%s1542 + $0x58] sm:$0xf]
        %v1566 = vld [vmem:[%s1542 + $0x5c] sm:$0xf]
        %v1567 = vld [vmem:[%s1542 + $0x60] sm:$0xf]
        %v1568 = vld [vmem:[%s1542 + $0x64] sm:$0xf]
        %v1569 = vld [vmem:[%s1542 + $0x68] sm:$0xf]
        %v1570 = vld [vmem:[%s1542 + $0x6c] sm:$0xf]
        %v1571 = vld [vmem:[%s1542 + $0x70] sm:$0xf]
        %v1572 = vld [vmem:[%s1542 + $0x74] sm:$0xf]
        %v1573 = vld [vmem:[%s1542 + $0x78] sm:$0xf]
        %v1574 = vld [vmem:[%s1542 + $0x7c] sm:$0xf]
        %v1575 = vld [vmem:[%s1542 + $0x80] sm:$0xf]
        %v1576 = vld [vmem:[%s1542 + $0x84] sm:$0xf]
        %v1577 = vld [vmem:[%s1542 + $0x88] sm:$0xf]
        %v1578 = vld [vmem:[%s1542 + $0x8c] sm:$0xf]
        %v1579 = vld [vmem:[%s1542 + $0x90] sm:$0xf]
        %v1580 = vld [vmem:[%s1542 + $0x94] sm:$0xf]
        %v1581 = vld [vmem:[%s1542 + $0x98] sm:$0xf]
        %v1582 = vld [vmem:[%s1542 + $0x9c] sm:$0xf]
        %v1583 = vld [vmem:[%s1542 + $0xa0] sm:$0xf]
        %v1584 = vld [vmem:[%s1542 + $0xa4] sm:$0xf]
        %v1585 = vld [vmem:[%s1542 + $0xa8] sm:$0xf]
        %v1586 = vld [vmem:[%s1542 + $0xac] sm:$0xf]
        %v1587 = vld [vmem:[%s1542 + $0xb0] sm:$0xf]
        %v1588 = vld [vmem:[%s1542 + $0xb4] sm:$0xf]
        %v1589 = vld [vmem:[%s1542 + $0xb8] sm:$0xf]
        %v1590 = vld [vmem:[%s1542 + $0xbc] sm:$0xf]
        %v1639 = vunpack.c.l.b16 %v1543
        %v1640 = vunpack.c.l.b16 %v1544
        %v1641 = vunpack.c.l.b16 %v1545
        %v1642 = vunpack.c.l.b16 %v1546
        %v1643 = vunpack.c.l.b16 %v1547
        %v1644 = vunpack.c.l.b16 %v1548
        %v1645 = vunpack.c.l.b16 %v1549
        %v1646 = vunpack.c.l.b16 %v1550
        %v1647 = vunpack.c.l.b16 %v1551
        %v1648 = vunpack.c.l.b16 %v1552
        %v1649 = vunpack.c.l.b16 %v1553
        %v1650 = vunpack.c.l.b16 %v1554
        %v1651 = vunpack.c.l.b16 %v1555
        %v1652 = vunpack.c.l.b16 %v1556
        %v1653 = vunpack.c.l.b16 %v1557
        %v1654 = vunpack.c.l.b16 %v1558
        %v1655 = vunpack.c.l.b16 %v1559
        %v1656 = vunpack.c.l.b16 %v1560
        %v1657 = vunpack.c.l.b16 %v1561
        %v1658 = vunpack.c.l.b16 %v1562
        %v1659 = vunpack.c.l.b16 %v1563
        %v1660 = vunpack.c.l.b16 %v1564
        %v1661 = vunpack.c.l.b16 %v1565
        %v1662 = vunpack.c.l.b16 %v1566
        %v1663 = vunpack.c.l.b16 %v1567
        %v1664 = vunpack.c.l.b16 %v1568
        %v1665 = vunpack.c.l.b16 %v1569
        %v1666 = vunpack.c.l.b16 %v1570
        %v1667 = vunpack.c.l.b16 %v1571
        %v1668 = vunpack.c.l.b16 %v1572
        %v1669 = vunpack.c.l.b16 %v1573
        %v1670 = vunpack.c.l.b16 %v1574
        %v1671 = vunpack.c.l.b16 %v1575
        %v1672 = vunpack.c.l.b16 %v1576
        %v1673 = vunpack.c.l.b16 %v1577
        %v1674 = vunpack.c.l.b16 %v1578
        %v1675 = vunpack.c.l.b16 %v1579
        %v1676 = vunpack.c.l.b16 %v1580
        %v1677 = vunpack.c.l.b16 %v1581
        %v1678 = vunpack.c.l.b16 %v1582
        %v1679 = vunpack.c.l.b16 %v1583
        %v1680 = vunpack.c.l.b16 %v1584
        %v1681 = vunpack.c.l.b16 %v1585
        %v1682 = vunpack.c.l.b16 %v1586
        %v1683 = vunpack.c.l.b16 %v1587
        %v1684 = vunpack.c.l.b16 %v1588
        %v1685 = vunpack.c.l.b16 %v1589
        %v1686 = vunpack.c.l.b16 %v1590
        %v1687 = vpack.c.b16 %v1640, %v1639
        %v1688 = vpack.c.b16 %v1642, %v1641
        %v1689 = vpack.c.b16 %v1644, %v1643
        %v1690 = vpack.c.b16 %v1646, %v1645
        %v1691 = vpack.c.b16 %v1648, %v1647
        %v1692 = vpack.c.b16 %v1650, %v1649
        %v1693 = vpack.c.b16 %v1652, %v1651
        %v1694 = vpack.c.b16 %v1654, %v1653
        %v1695 = vpack.c.b16 %v1656, %v1655
        %v1696 = vpack.c.b16 %v1658, %v1657
        %v1697 = vpack.c.b16 %v1660, %v1659
        %v1698 = vpack.c.b16 %v1662, %v1661
        %v1699 = vpack.c.b16 %v1664, %v1663
        %v1700 = vpack.c.b16 %v1666, %v1665
        %v1701 = vpack.c.b16 %v1668, %v1667
        %v1702 = vpack.c.b16 %v1670, %v1669
        %v1703 = vpack.c.b16 %v1672, %v1671
        %v1704 = vpack.c.b16 %v1674, %v1673
        %v1705 = vpack.c.b16 %v1676, %v1675
        %v1706 = vpack.c.b16 %v1678, %v1677
        %v1707 = vpack.c.b16 %v1680, %v1679
        %v1708 = vpack.c.b16 %v1682, %v1681
        %v1709 = vpack.c.b16 %v1684, %v1683
        %v1710 = vpack.c.b16 %v1686, %v1685
        %1735 = vmatprep.subr.bf16.mxu0 0
        %1736 = vmatpush1.bf16.msra.mxu0 %v1687
        %1737 = vmatprep.subr.bf16.mxu0 0
        %1738 = vmatpush1.bf16.msra.mxu0 %v1688
        %1739 = vmatprep.subr.bf16.mxu0 0
        %1740 = vmatpush1.bf16.msra.mxu0 %v1689
        %1741 = vmatprep.subr.bf16.mxu0 0
        %1742 = vmatpush1.bf16.msra.mxu0 %v1690
        %1743 = vmatprep.subr.bf16.mxu0 0
        %1744 = vmatpush1.bf16.msra.mxu0 %v1691
        %1745 = vmatprep.subr.bf16.mxu0 0
        %1746 = vmatpush1.bf16.msra.mxu0 %v1692
        %1747 = vmatprep.subr.bf16.mxu0 0
        %1748 = vmatpush1.bf16.msra.mxu0 %v1693
        %1749 = vmatprep.subr.bf16.mxu0 0
        %1750 = vmatpush1.bf16.msra.mxu0 %v1694
        %1751 = vmatprep.subr.bf16.mxu0 0
        %1752 = vmatpush1.bf16.msra.mxu0 %v1695
        %1753 = vmatprep.subr.bf16.mxu0 0
        %1754 = vmatpush1.bf16.msra.mxu0 %v1696
        %1755 = vmatprep.subr.bf16.mxu0 0
        %1756 = vmatpush1.bf16.msra.mxu0 %v1697
        %1757 = vmatprep.subr.bf16.mxu0 0
        %1758 = vmatpush1.bf16.msra.mxu0 %v1698
        %1759 = vmatprep.subr.bf16.mxu0 0
        %1760 = vmatpush1.bf16.msra.mxu0 %v1699
        %1761 = vmatprep.subr.bf16.mxu0 0
        %1762 = vmatpush1.bf16.msra.mxu0 %v1700
        %1763 = vmatprep.subr.bf16.mxu0 0
        %1764 = vmatpush1.bf16.msra.mxu0 %v1701
        %1765 = vmatprep.subr.bf16.mxu0 0
        %1766 = vmatpush1.bf16.msra.mxu0 %v1702
        %1767 = vmatprep.mubr.bf16.mxu0 %v252
        %1768 = vmatmul.mubr.bf16.gmra.mrb[0].mxu0 %v414
        %v1769 = vpop.f32.mrb[0].mxu0
        %v1770 = vadd.f32 0.0, %v1769
        %v1771 = vpop.f32.mrb[0].mxu0
        %v1772 = vpop.f32.mrb[0].mxu0
        %v1773 = vadd.f32 0.0, %v1772
        %v1774 = vpop.f32.mrb[0].mxu0
        %1775 = vmatprep.mubr.bf16.mxu0 %v253
        %1776 = vmatmul.mubr.bf16.gmra.mrb[0].mxu0 %v416
        %v1777 = vpop.f32.mrb[0].mxu0
        %v1778 = vadd.f32 0.0, %v1777
        %v1779 = vpop.f32.mrb[0].mxu0
        %v1780 = vpop.f32.mrb[0].mxu0
        %v1781 = vadd.f32 0.0, %v1780
        %v1782 = vpop.f32.mrb[0].mxu0
        %1783 = vmatprep.mubr.bf16.mxu0 %v254
        %1784 = vmatmul.mubr.bf16.gmra.mrb[0].mxu0 %v417
        %v1785 = vpop.f32.mrb[0].mxu0
        %v1786 = vadd.f32 0.0, %v1785
        %v1787 = vpop.f32.mrb[0].mxu0
        %v1788 = vpop.f32.mrb[0].mxu0
        %v1789 = vadd.f32 0.0, %v1788
        %v1790 = vpop.f32.mrb[0].mxu0
        %1791 = vmatprep.mubr.bf16.mxu0 %v255
        %1792 = vmatmul.mubr.bf16.gmra.mrb[0].mxu0 %v418
        %v1793 = vpop.f32.mrb[0].mxu0
        %v1794 = vadd.f32 0.0, %v1793
        %v1795 = vpop.f32.mrb[0].mxu0
        %v1796 = vpop.f32.mrb[0].mxu0
        %v1797 = vadd.f32 0.0, %v1796
        %v1798 = vpop.f32.mrb[0].mxu0
        %1799 = vmatprep.mubr.bf16.mxu0 %v256
        %1800 = vmatmul.mubr.bf16.gmra.mrb[0].mxu0 %v419
        %v1801 = vpop.f32.mrb[0].mxu0
        %v1802 = vadd.f32 0.0, %v1801
        %v1803 = vpop.f32.mrb[0].mxu0
        %v1804 = vpop.f32.mrb[0].mxu0
        %v1805 = vadd.f32 0.0, %v1804
        %v1806 = vpop.f32.mrb[0].mxu0
        %1807 = vmatprep.mubr.bf16.mxu0 %v257
        %1808 = vmatmul.mubr.bf16.gmra.mrb[0].mxu0 %v420
        %v1809 = vpop.f32.mrb[0].mxu0
        %v1810 = vadd.f32 0.0, %v1809
        %v1811 = vpop.f32.mrb[0].mxu0
        %v1812 = vpop.f32.mrb[0].mxu0
        %v1813 = vadd.f32 0.0, %v1812
        %v1814 = vpop.f32.mrb[0].mxu0
        %1815 = vmatprep.mubr.bf16.mxu0 %v258
        %1816 = vmatmul.mubr.bf16.gmra.mrb[0].mxu0 %v421
        %v1817 = vpop.f32.mrb[0].mxu0
        %v1818 = vadd.f32 0.0, %v1817
        %v1819 = vpop.f32.mrb[0].mxu0
        %v1820 = vpop.f32.mrb[0].mxu0
        %v1821 = vadd.f32 0.0, %v1820
        %v1822 = vpop.f32.mrb[0].mxu0
        %1823 = vmatprep.mubr.bf16.mxu0 %v259
        %1824 = vmatmul.mubr.bf16.gmra.mrb[0].mxu0 %v422
        %v1825 = vpop.f32.mrb[0].mxu0
        %v1826 = vadd.f32 0.0, %v1825
        %v1827 = vpop.f32.mrb[0].mxu0
        %v1828 = vpop.f32.mrb[0].mxu0
        %v1829 = vadd.f32 0.0, %v1828
        %v1830 = vpop.f32.mrb[0].mxu0
        %1831 = vmatprep.mubr.bf16.mxu0 %v260
        %1832 = vmatmul.mubr.bf16.gmra.mrb[0].mxu0 %v423
        %v1833 = vpop.f32.mrb[0].mxu0
        %v1834 = vadd.f32 0.0, %v1833
        %v1835 = vpop.f32.mrb[0].mxu0
        %v1836 = vpop.f32.mrb[0].mxu0
        %v1837 = vadd.f32 0.0, %v1836
        %v1838 = vpop.f32.mrb[0].mxu0
        %1839 = vmatprep.mubr.bf16.mxu0 %v261
        %1840 = vmatmul.mubr.bf16.gmra.mrb[0].mxu0 %v424
        %v1841 = vpop.f32.mrb[0].mxu0
        %v1842 = vadd.f32 0.0, %v1841
        %v1843 = vpop.f32.mrb[0].mxu0
        %v1844 = vpop.f32.mrb[0].mxu0
        %v1845 = vadd.f32 0.0, %v1844
        %v1846 = vpop.f32.mrb[0].mxu0
        %1847 = vmatprep.mubr.bf16.mxu0 %v262
        %1848 = vmatmul.mubr.bf16.gmra.mrb[0].mxu0 %v425
        %v1849 = vpop.f32.mrb[0].mxu0
        %v1850 = vadd.f32 0.0, %v1849
        %v1851 = vpop.f32.mrb[0].mxu0
        %v1852 = vpop.f32.mrb[0].mxu0
        %v1853 = vadd.f32 0.0, %v1852
        %v1854 = vpop.f32.mrb[0].mxu0
        %1855 = vmatprep.mubr.bf16.mxu0 %v263
        %1856 = vmatmul.mubr.bf16.gmra.mrb[0].mxu0 %v426
        %v1857 = vpop.f32.mrb[0].mxu0
        %v1858 = vadd.f32 0.0, %v1857
        %v1859 = vpop.f32.mrb[0].mxu0
        %v1860 = vpop.f32.mrb[0].mxu0
        %v1861 = vadd.f32 0.0, %v1860
        %v1862 = vpop.f32.mrb[0].mxu0
        %1863 = vmatprep.mubr.bf16.mxu0 %v264
        %1864 = vmatmul.mubr.bf16.gmra.mrb[0].mxu0 %v427
        %v1865 = vpop.f32.mrb[0].mxu0
        %v1866 = vadd.f32 0.0, %v1865
        %v1867 = vpop.f32.mrb[0].mxu0
        %v1868 = vpop.f32.mrb[0].mxu0
        %v1869 = vadd.f32 0.0, %v1868
        %v1870 = vpop.f32.mrb[0].mxu0
        %1871 = vmatprep.mubr.bf16.mxu0 %v265
        %1872 = vmatmul.mubr.bf16.gmra.mrb[0].mxu0 %v428
        %v1873 = vpop.f32.mrb[0].mxu0
        %v1874 = vadd.f32 0.0, %v1873
        %v1875 = vpop.f32.mrb[0].mxu0
        %v1876 = vpop.f32.mrb[0].mxu0
        %v1877 = vadd.f32 0.0, %v1876
        %v1878 = vpop.f32.mrb[0].mxu0
        %1879 = vmatprep.mubr.bf16.mxu0 %v266
        %1880 = vmatmul.mubr.bf16.gmra.mrb[0].mxu0 %v429
        %v1881 = vpop.f32.mrb[0].mxu0
        %v1882 = vadd.f32 0.0, %v1881
        %v1883 = vpop.f32.mrb[0].mxu0
        %v1884 = vpop.f32.mrb[0].mxu0
        %v1885 = vadd.f32 0.0, %v1884
        %v1886 = vpop.f32.mrb[0].mxu0
        %1887 = vmatprep.mubr.bf16.mxu0 %v265
        %1888 = vmatmul.mubr.bf16.gmra.mrb[0].mxu0 %v428
        %v1889 = vpop.f32.mrb[0].mxu0
        %v1890 = vadd.f32 0.0, %v1889
        %v1891 = vpop.f32.mrb[0].mxu0
        %v1892 = vpop.f32.mrb[0].mxu0
        %v1893 = vadd.f32 0.0, %v1892
        %v1894 = vpop.f32.mrb[0].mxu0
        %1895 = vdwg.mxu0
        %1896 = vmatprep.subr.bf16.mxu0 0
        %1897 = vmatpush1.bf16.msra.mxu0 %v1703
        %1898 = vmatprep.subr.bf16.mxu0 0
        %1899 = vmatpush1.bf16.msra.mxu0 %v1704
        %1900 = vmatprep.subr.bf16.mxu0 0
        %1901 = vmatpush1.bf16.msra.mxu0 %v1705
        %1902 = vmatprep.subr.bf16.mxu0 0
        %1903 = vmatpush1.bf16.msra.mxu0 %v1706
        %1904 = vmatprep.subr.bf16.mxu0 0
        %1905 = vmatpush1.bf16.msra.mxu0 %v1707
        %1906 = vmatprep.subr.bf16.mxu0 0
        %1907 = vmatpush1.bf16.msra.mxu0 %v1708
        %1908 = vmatprep.subr.bf16.mxu0 0
        %1909 = vmatpush1.bf16.msra.mxu0 %v1709
        %1910 = vmatprep.subr.bf16.mxu0 0
        %1911 = vmatpush1.bf16.msra.mxu0 %v1710
        %1912 = vmatprep.subr.bf16.mxu0 0
        %1913 = vmatpush1.bf16.msra.mxu0 0
        %1914 = vmatprep.subr.bf16.mxu0 0
        %1915 = vmatpush1.bf16.msra.mxu0 0
        %1916 = vmatprep.subr.bf16.mxu0 0
        %1917 = vmatpush1.bf16.msra.mxu0 0
        %1918 = vmatprep.subr.bf16.mxu0 0
        %1919 = vmatpush1.bf16.msra.mxu0 0
        %1920 = vmatprep.subr.bf16.mxu0 0
        %1921 = vmatpush1.bf16.msra.mxu0 0
        %1922 = vmatprep.subr.bf16.mxu0 0
        %1923 = vmatpush1.bf16.msra.mxu0 0
        %1924 = vmatprep.subr.bf16.mxu0 0
        %1925 = vmatpush1.bf16.msra.mxu0 0
        %1926 = vmatprep.subr.bf16.mxu0 0
        %1927 = vmatpush1.bf16.msra.mxu0 0
        %1928 = vmatprep.mubr.bf16.mxu0 0
        %1929 = vmatmul.mubr.bf16.gmra.mrb[0].mxu0 %v497
        %v1930 = vpop.f32.mrb[0].mxu0
        %v1931 = vadd.f32 %v1770, %v1930
        %v1932 = vpop.f32.mrb[0].mxu0
        %v1933 = vpop.f32.mrb[0].mxu0
        %v1934 = vadd.f32 %v1773, %v1933
        %v1935 = vpop.f32.mrb[0].mxu0
        %1936 = vmatprep.mubr.bf16.mxu0 0
        %1937 = vmatmul.mubr.bf16.gmra.mrb[0].mxu0 %v499
        %v1938 = vpop.f32.mrb[0].mxu0
        %v1939 = vadd.f32 %v1778, %v1938
        %v1940 = vpop.f32.mrb[0].mxu0
        %v1941 = vpop.f32.mrb[0].mxu0
        %v1942 = vadd.f32 %v1781, %v1941
        %v1943 = vpop.f32.mrb[0].mxu0
        %1944 = vmatprep.mubr.bf16.mxu0 0
        %1945 = vmatmul.mubr.bf16.gmra.mrb[0].mxu0 %v500
        %v1946 = vpop.f32.mrb[0].mxu0
        %v1947 = vadd.f32 %v1786, %v1946
        %v1948 = vpop.f32.mrb[0].mxu0
        %v1949 = vpop.f32.mrb[0].mxu0
        %v1950 = vadd.f32 %v1789, %v1949
        %v1951 = vpop.f32.mrb[0].mxu0
        %1952 = vmatprep.mubr.bf16.mxu0 0
        %1953 = vmatmul.mubr.bf16.gmra.mrb[0].mxu0 %v501
        %v1954 = vpop.f32.mrb[0].mxu0
        %v1955 = vadd.f32 %v1794, %v1954
        %v1956 = vpop.f32.mrb[0].mxu0
        %v1957 = vpop.f32.mrb[0].mxu0
        %v1958 = vadd.f32 %v1797, %v1957
        %v1959 = vpop.f32.mrb[0].mxu0
        %1960 = vmatprep.mubr.bf16.mxu0 0
        %1961 = vmatmul.mubr.bf16.gmra.mrb[0].mxu0 %v502
        %v1962 = vpop.f32.mrb[0].mxu0
        %v1963 = vadd.f32 %v1802, %v1962
        %v1964 = vpop.f32.mrb[0].mxu0
        %v1965 = vpop.f32.mrb[0].mxu0
        %v1966 = vadd.f32 %v1805, %v1965
        %v1967 = vpop.f32.mrb[0].mxu0
        %1968 = vmatprep.mubr.bf16.mxu0 0
        %1969 = vmatmul.mubr.bf16.gmra.mrb[0].mxu0 %v503
        %v1970 = vpop.f32.mrb[0].mxu0
        %v1971 = vadd.f32 %v1810, %v1970
        %v1972 = vpop.f32.mrb[0].mxu0
        %v1973 = vpop.f32.mrb[0].mxu0
        %v1974 = vadd.f32 %v1813, %v1973
        %v1975 = vpop.f32.mrb[0].mxu0
        %1976 = vmatprep.mubr.bf16.mxu0 0
        %1977 = vmatmul.mubr.bf16.gmra.mrb[0].mxu0 %v504
        %v1978 = vpop.f32.mrb[0].mxu0
        %v1979 = vadd.f32 %v1818, %v1978
        %v1980 = vpop.f32.mrb[0].mxu0
        %v1981 = vpop.f32.mrb[0].mxu0
        %v1982 = vadd.f32 %v1821, %v1981
        %v1983 = vpop.f32.mrb[0].mxu0
        %1984 = vmatprep.mubr.bf16.mxu0 0
        %1985 = vmatmul.mubr.bf16.gmra.mrb[0].mxu0 %v505
        %v1986 = vpop.f32.mrb[0].mxu0
        %v1987 = vadd.f32 %v1826, %v1986
        %v1988 = vpop.f32.mrb[0].mxu0
        %v1989 = vpop.f32.mrb[0].mxu0
        %v1990 = vadd.f32 %v1829, %v1989
        %v1991 = vpop.f32.mrb[0].mxu0
        %1992 = vmatprep.mubr.bf16.mxu0 0
        %1993 = vmatmul.mubr.bf16.gmra.mrb[0].mxu0 %v506
        %v1994 = vpop.f32.mrb[0].mxu0
        %v1995 = vadd.f32 %v1834, %v1994
        %v1996 = vpop.f32.mrb[0].mxu0
        %v1997 = vpop.f32.mrb[0].mxu0
        %v1998 = vadd.f32 %v1837, %v1997
        %v1999 = vpop.f32.mrb[0].mxu0
        %2000 = vmatprep.mubr.bf16.mxu0 0
        %2001 = vmatmul.mubr.bf16.gmra.mrb[0].mxu0 %v507
        %v2002 = vpop.f32.mrb[0].mxu0
        %v2003 = vadd.f32 %v1842, %v2002
        %v2004 = vpop.f32.mrb[0].mxu0
        %v2005 = vpop.f32.mrb[0].mxu0
        %v2006 = vadd.f32 %v1845, %v2005
        %v2007 = vpop.f32.mrb[0].mxu0
        %2008 = vmatprep.mubr.bf16.mxu0 0
        %2009 = vmatmul.mubr.bf16.gmra.mrb[0].mxu0 %v508
        %v2010 = vpop.f32.mrb[0].mxu0
        %v2011 = vadd.f32 %v1850, %v2010
        %v2012 = vpop.f32.mrb[0].mxu0
        %v2013 = vpop.f32.mrb[0].mxu0
        %v2014 = vadd.f32 %v1853, %v2013
        %v2015 = vpop.f32.mrb[0].mxu0
        %2016 = vmatprep.mubr.bf16.mxu0 0
        %2017 = vmatmul.mubr.bf16.gmra.mrb[0].mxu0 %v509
        %v2018 = vpop.f32.mrb[0].mxu0
        %v2019 = vadd.f32 %v1858, %v2018
        %v2020 = vpop.f32.mrb[0].mxu0
        %v2021 = vpop.f32.mrb[0].mxu0
        %v2022 = vadd.f32 %v1861, %v2021
        %v2023 = vpop.f32.mrb[0].mxu0
        %2024 = vmatprep.mubr.bf16.mxu0 0
        %2025 = vmatmul.mubr.bf16.gmra.mrb[0].mxu0 %v510
        %v2026 = vpop.f32.mrb[0].mxu0
        %v2027 = vadd.f32 %v1866, %v2026
        %v2028 = vpop.f32.mrb[0].mxu0
        %v2029 = vpop.f32.mrb[0].mxu0
        %v2030 = vadd.f32 %v1869, %v2029
        %v2031 = vpop.f32.mrb[0].mxu0
        %2032 = vmatprep.mubr.bf16.mxu0 0
        %2033 = vmatmul.mubr.bf16.gmra.mrb[0].mxu0 %v511
        %v2034 = vpop.f32.mrb[0].mxu0
        %v2035 = vadd.f32 %v1874, %v2034
        %v2036 = vpop.f32.mrb[0].mxu0
        %v2037 = vpop.f32.mrb[0].mxu0
        %v2038 = vadd.f32 %v1877, %v2037
        %v2039 = vpop.f32.mrb[0].mxu0
        %2040 = vmatprep.mubr.bf16.mxu0 0
        %2041 = vmatmul.mubr.bf16.gmra.mrb[0].mxu0 %v512
        %v2042 = vpop.f32.mrb[0].mxu0
        %v2043 = vadd.f32 %v1882, %v2042
        %v2044 = vpop.f32.mrb[0].mxu0
        %v2045 = vpop.f32.mrb[0].mxu0
        %v2046 = vadd.f32 %v1885, %v2045
        %v2047 = vpop.f32.mrb[0].mxu0
        %2048 = vmatprep.mubr.bf16.mxu0 0
        %2049 = vmatmul.mubr.bf16.gmra.mrb[0].mxu0 %v511
        %v2050 = vpop.f32.mrb[0].mxu0
        %v2051 = vadd.f32 %v1890, %v2050
        %v2052 = vpop.f32.mrb[0].mxu0
        %v2053 = vpop.f32.mrb[0].mxu0
        %v2054 = vadd.f32 %v1893, %v2053
        %v2055 = vpop.f32.mrb[0].mxu0
        %2056 = vdwg.mxu0
        %v2057 = vadd.f32 %v1416, %v1931
        %v2058 = vadd.f32 %v1419, %v1934
        %v2059 = vadd.f32 %v1424, %v1939
        %v2060 = vadd.f32 %v1427, %v1942
        %v2061 = vadd.f32 %v1432, %v1947
        %v2062 = vadd.f32 %v1435, %v1950
        %v2063 = vadd.f32 %v1440, %v1955
        %v2064 = vadd.f32 %v1443, %v1958
        %v2065 = vadd.f32 %v1448, %v1963
        %v2066 = vadd.f32 %v1451, %v1966
        %v2067 = vadd.f32 %v1456, %v1971
        %v2068 = vadd.f32 %v1459, %v1974
        %v2069 = vadd.f32 %v1464, %v1979
        %v2070 = vadd.f32 %v1467, %v1982
        %v2071 = vadd.f32 %v1472, %v1987
        %v2072 = vadd.f32 %v1475, %v1990
        %v2073 = vadd.f32 %v1480, %v1995
        %v2074 = vadd.f32 %v1483, %v1998
        %v2075 = vadd.f32 %v1488, %v2003
        %v2076 = vadd.f32 %v1491, %v2006
        %v2077 = vadd.f32 %v1496, %v2011
        %v2078 = vadd.f32 %v1499, %v2014
        %v2079 = vadd.f32 %v1504, %v2019
        %v2080 = vadd.f32 %v1507, %v2022
        %v2081 = vadd.f32 %v1512, %v2027
        %v2082 = vadd.f32 %v1515, %v2030
        %v2083 = vadd.f32 %v1520, %v2035
        %v2084 = vadd.f32 %v1523, %v2038
        %v2085 = vadd.f32 %v1528, %v2043
        %v2086 = vadd.f32 %v1531, %v2046
        %v2087 = vadd.f32 %v1536, %v2051
        %v2088 = vadd.f32 %v1539, %v2054
        %v2089 = vadd.f32 %v2057, %v2058
        %v2090 = vadd.f32 %v2089, %v2059
        %v2091 = vadd.f32 %v2090, %v2060
        %v2092 = vadd.f32 %v2091, %v2061
        %v2093 = vadd.f32 %v2092, %v2062
        %v2094 = vadd.f32 %v2093, %v2063
        %v2095 = vadd.f32 %v2094, %v2064
        %v2096 = vadd.f32 %v2095, %v2065
        %v2097 = vadd.f32 %v2096, %v2066
        %v2098 = vadd.f32 %v2097, %v2067
        %v2099 = vadd.f32 %v2098, %v2068
        %v2100 = vadd.f32 %v2099, %v2069
        %v2101 = vadd.f32 %v2100, %v2070
        %v2102 = vadd.f32 %v2101, %v2071
        %v2103 = vadd.f32 %v2102, %v2072
        %v2104 = vadd.f32 %v2103, %v2073
        %v2105 = vadd.f32 %v2104, %v2074
        %v2106 = vadd.f32 %v2105, %v2075
        %v2107 = vadd.f32 %v2106, %v2076
        %v2108 = vadd.f32 %v2107, %v2077
        %v2109 = vadd.f32 %v2108, %v2078
        %v2110 = vadd.f32 %v2109, %v2079
        %v2111 = vadd.f32 %v2110, %v2080
        %v2112 = vadd.f32 %v2111, %v2081
        %v2113 = vadd.f32 %v2112, %v2082
        %v2114 = vadd.f32 %v2113, %v2083
        %v2115 = vadd.f32 %v2114, %v2084
        %v2116 = vadd.f32 %v2115, %v2085
        %v2117 = vadd.f32 %v2116, %v2086
        %v2118 = vadd.f32 %v2117, %v2087
        %v2119 = vadd.f32 %v2118, %v2088
        %v2120 = vrot.slane %v2119, 4
        %v2121 = vadd.f32 %v2119, %v2120
        %v2122 = vrot.slane %v2121, 2
        %v2123 = vadd.f32 %v2121, %v2122
        %v2124 = vrot.slane %v2123, 1
        %v2125 = vadd.f32 %v2123, %v2124
        %v2126 = vmul.f32 %v2057, %v2057
        %v2127 = vmul.f32 %v2058, %v2058
        %v2128 = vmul.f32 %v2059, %v2059
        %v2129 = vmul.f32 %v2060, %v2060
        %v2130 = vmul.f32 %v2061, %v2061
        %v2131 = vmul.f32 %v2062, %v2062
        %v2132 = vmul.f32 %v2063, %v2063
        %v2133 = vmul.f32 %v2064, %v2064
        %v2134 = vmul.f32 %v2065, %v2065
        %v2135 = vmul.f32 %v2066, %v2066
        %v2136 = vmul.f32 %v2067, %v2067
        %v2137 = vmul.f32 %v2068, %v2068
        %v2138 = vmul.f32 %v2069, %v2069
        %v2139 = vmul.f32 %v2070, %v2070
        %v2140 = vmul.f32 %v2071, %v2071
        %v2141 = vmul.f32 %v2072, %v2072
        %v2142 = vmul.f32 %v2073, %v2073
        %v2143 = vmul.f32 %v2074, %v2074
        %v2144 = vmul.f32 %v2075, %v2075
        %v2145 = vmul.f32 %v2076, %v2076
        %v2146 = vmul.f32 %v2077, %v2077
        %v2147 = vmul.f32 %v2078, %v2078
        %v2148 = vmul.f32 %v2079, %v2079
        %v2149 = vmul.f32 %v2080, %v2080
        %v2150 = vmul.f32 %v2081, %v2081
        %v2151 = vmul.f32 %v2082, %v2082
        %v2152 = vmul.f32 %v2083, %v2083
        %v2153 = vmul.f32 %v2084, %v2084
        %v2154 = vmul.f32 %v2085, %v2085
        %v2155 = vmul.f32 %v2086, %v2086
        %v2156 = vmul.f32 %v2087, %v2087
        %v2157 = vmul.f32 %v2088, %v2088
        %v2158 = vadd.f32 %v2126, %v2127
        %v2159 = vadd.f32 %v2158, %v2128
        %v2160 = vadd.f32 %v2159, %v2129
        %v2161 = vadd.f32 %v2160, %v2130
        %v2162 = vadd.f32 %v2161, %v2131
        %v2163 = vadd.f32 %v2162, %v2132
        %v2164 = vadd.f32 %v2163, %v2133
        %v2165 = vadd.f32 %v2164, %v2134
        %v2166 = vadd.f32 %v2165, %v2135
        %v2167 = vadd.f32 %v2166, %v2136
        %v2168 = vadd.f32 %v2167, %v2137
        %v2169 = vadd.f32 %v2168, %v2138
        %v2170 = vadd.f32 %v2169, %v2139
        %v2171 = vadd.f32 %v2170, %v2140
        %v2172 = vadd.f32 %v2171, %v2141
        %v2173 = vadd.f32 %v2172, %v2142
        %v2174 = vadd.f32 %v2173, %v2143
        %v2175 = vadd.f32 %v2174, %v2144
        %v2176 = vadd.f32 %v2175, %v2145
        %v2177 = vadd.f32 %v2176, %v2146
        %v2178 = vadd.f32 %v2177, %v2147
        %v2179 = vadd.f32 %v2178, %v2148
        %v2180 = vadd.f32 %v2179, %v2149
        %v2181 = vadd.f32 %v2180, %v2150
        %v2182 = vadd.f32 %v2181, %v2151
        %v2183 = vadd.f32 %v2182, %v2152
        %v2184 = vadd.f32 %v2183, %v2153
        %v2185 = vadd.f32 %v2184, %v2154
        %v2186 = vadd.f32 %v2185, %v2155
        %v2187 = vadd.f32 %v2186, %v2156
        %v2188 = vadd.f32 %v2187, %v2157
        %v2189 = vrot.slane %v2188, 4
        %v2190 = vadd.f32 %v2188, %v2189
        %v2191 = vrot.slane %v2190, 2
        %v2192 = vadd.f32 %v2190, %v2191
        %v2193 = vrot.slane %v2192, 1
        %v2194 = vadd.f32 %v2192, %v2193
        %v2195 = vmul.f32 %v2125, 0.00390625
        %v2196 = vmul.f32 %v2194, 0.00390625
        %v2197 = vmul.f32 %v2195, %v2195
        %v2198 = vsub.f32 %v2196, %v2197
        %v2199 = vmax.f32 %v2198, 0.0
        %v2200 = vsub.f32 %v2057, %v2195
        %v2201 = vsub.f32 %v2058, %v2195
        %v2202 = vsub.f32 %v2059, %v2195
        %v2203 = vsub.f32 %v2060, %v2195
        %v2204 = vsub.f32 %v2061, %v2195
        %v2205 = vsub.f32 %v2062, %v2195
        %v2206 = vsub.f32 %v2063, %v2195
        %v2207 = vsub.f32 %v2064, %v2195
        %v2208 = vsub.f32 %v2065, %v2195
        %v2209 = vsub.f32 %v2066, %v2195
        %v2210 = vsub.f32 %v2067, %v2195
        %v2211 = vsub.f32 %v2068, %v2195
        %v2212 = vsub.f32 %v2069, %v2195
        %v2213 = vsub.f32 %v2070, %v2195
        %v2214 = vsub.f32 %v2071, %v2195
        %v2215 = vsub.f32 %v2072, %v2195
        %v2216 = vsub.f32 %v2073, %v2195
        %v2217 = vsub.f32 %v2074, %v2195
        %v2218 = vsub.f32 %v2075, %v2195
        %v2219 = vsub.f32 %v2076, %v2195
        %v2220 = vsub.f32 %v2077, %v2195
        %v2221 = vsub.f32 %v2078, %v2195
        %v2222 = vsub.f32 %v2079, %v2195
        %v2223 = vsub.f32 %v2080, %v2195
        %v2224 = vsub.f32 %v2081, %v2195
        %v2225 = vsub.f32 %v2082, %v2195
        %v2226 = vsub.f32 %v2083, %v2195
        %v2227 = vsub.f32 %v2084, %v2195
        %v2228 = vsub.f32 %v2085, %v2195
        %v2229 = vsub.f32 %v2086, %v2195
        %v2230 = vsub.f32 %v2087, %v2195
        %v2231 = vsub.f32 %v2088, %v2195
        %v2232 = vadd.f32 %v2199, 1e-05
        %v2233 = vrsqrt.pop %v2232
        %v2234 = vmul.f32 %v2200, %v2233
        %v2235 = vmul.f32 %v2201, %v2233
        %v2236 = vmul.f32 %v2202, %v2233
        %v2237 = vmul.f32 %v2203, %v2233
        %v2238 = vmul.f32 %v2204, %v2233
        %v2239 = vmul.f32 %v2205, %v2233
        %v2240 = vmul.f32 %v2206, %v2233
        %v2241 = vmul.f32 %v2207, %v2233
        %v2242 = vmul.f32 %v2208, %v2233
        %v2243 = vmul.f32 %v2209, %v2233
        %v2244 = vmul.f32 %v2210, %v2233
        %v2245 = vmul.f32 %v2211, %v2233
        %v2246 = vmul.f32 %v2212, %v2233
        %v2247 = vmul.f32 %v2213, %v2233
        %v2248 = vmul.f32 %v2214, %v2233
        %v2249 = vmul.f32 %v2215, %v2233
        %v2250 = vmul.f32 %v2216, %v2233
        %v2251 = vmul.f32 %v2217, %v2233
        %v2252 = vmul.f32 %v2218, %v2233
        %v2253 = vmul.f32 %v2219, %v2233
        %v2254 = vmul.f32 %v2220, %v2233
        %v2255 = vmul.f32 %v2221, %v2233
        %v2256 = vmul.f32 %v2222, %v2233
        %v2257 = vmul.f32 %v2223, %v2233
        %v2258 = vmul.f32 %v2224, %v2233
        %v2259 = vmul.f32 %v2225, %v2233
        %v2260 = vmul.f32 %v2226, %v2233
        %v2261 = vmul.f32 %v2227, %v2233
        %v2262 = vmul.f32 %v2228, %v2233
        %v2263 = vmul.f32 %v2229, %v2233
        %v2264 = vmul.f32 %v2230, %v2233
        %v2265 = vmul.f32 %v2231, %v2233
        %v2266 = vmax.f32 %v2234, 0.0
        %v2267 = vmax.f32 %v2235, 0.0
        %v2268 = vmax.f32 %v2236, 0.0
        %v2269 = vmax.f32 %v2237, 0.0
        %v2270 = vmax.f32 %v2238, 0.0
        %v2271 = vmax.f32 %v2239, 0.0
        %v2272 = vmax.f32 %v2240, 0.0
        %v2273 = vmax.f32 %v2241, 0.0
        %v2274 = vmax.f32 %v2242, 0.0
        %v2275 = vmax.f32 %v2243, 0.0
        %v2276 = vmax.f32 %v2244, 0.0
        %v2277 = vmax.f32 %v2245, 0.0
        %v2278 = vmax.f32 %v2246, 0.0
        %v2279 = vmax.f32 %v2247, 0.0
        %v2280 = vmax.f32 %v2248, 0.0
        %v2281 = vmax.f32 %v2249, 0.0
        %v2282 = vmax.f32 %v2250, 0.0
        %v2283 = vmax.f32 %v2251, 0.0
        %v2284 = vmax.f32 %v2252, 0.0
        %v2285 = vmax.f32 %v2253, 0.0
        %v2286 = vmax.f32 %v2254, 0.0
        %v2287 = vmax.f32 %v2255, 0.0
        %v2288 = vmax.f32 %v2256, 0.0
        %v2289 = vmax.f32 %v2257, 0.0
        %v2290 = vmax.f32 %v2258, 0.0
        %v2291 = vmax.f32 %v2259, 0.0
        %v2292 = vmax.f32 %v2260, 0.0
        %v2293 = vmax.f32 %v2261, 0.0
        %v2294 = vmax.f32 %v2262, 0.0
        %v2295 = vmax.f32 %v2263, 0.0
        %v2296 = vmax.f32 %v2264, 0.0
        %v2297 = vmax.f32 %v2265, 0.0
        %v2298 = vpack.c.bf16 %v2267, %v2266
        %v2299 = vpack.c.bf16 %v2269, %v2268
        %v2300 = vpack.c.bf16 %v2271, %v2270
        %v2301 = vpack.c.bf16 %v2273, %v2272
        %v2302 = vpack.c.bf16 %v2275, %v2274
        %v2303 = vpack.c.bf16 %v2277, %v2276
        %v2304 = vpack.c.bf16 %v2279, %v2278
        %v2305 = vpack.c.bf16 %v2281, %v2280
        %v2306 = vpack.c.bf16 %v2283, %v2282
        %v2307 = vpack.c.bf16 %v2285, %v2284
        %v2308 = vpack.c.bf16 %v2287, %v2286
        %v2309 = vpack.c.bf16 %v2289, %v2288
        %v2310 = vpack.c.bf16 %v2291, %v2290
        %v2311 = vpack.c.bf16 %v2293, %v2292
        %v2312 = vpack.c.bf16 %v2295, %v2294
        %v2313 = vpack.c.bf16 %v2297, %v2296
        %v2315 = vshrl.u32 %v2299, 16
        %v2318 = vshrl.u32 %v2298, 16
        %v2321 = vshrl.u32 %v2300, 16
        %v2324 = vshrl.u32 %v2301, 16
        %v2327 = vshrl.u32 %v2302, 16
        %v2330 = vshrl.u32 %v2303, 16
        %v2333 = vshrl.u32 %v2304, 16
        %v2336 = vshrl.u32 %v2305, 16
        %v2339 = vshrl.u32 %v2306, 16
        %v2342 = vshrl.u32 %v2307, 16
        %v2345 = vshrl.u32 %v2308, 16
        %v2348 = vshrl.u32 %v2309, 16
        %v2351 = vshrl.u32 %v2310, 16
        %v2354 = vshrl.u32 %v2311, 16
        %v2357 = vshrl.u32 %v2312, 16
        %v2360 = vshrl.u32 %v2313, 16
        %v2378 = vrot.slane %v2315, 7
        %v2379 = vshll.u32 %v2299, 16
        %v2381 = vor.u32 %v2378, %v2379
        %v2382 = vrot.slane %v2318, 7
        %v2383 = vshll.u32 %v2298, 16
        %v2385 = vor.u32 %v2382, %v2383
        %v2386 = vrot.slane %v2321, 7
        %v2387 = vshll.u32 %v2300, 16
        %v2389 = vor.u32 %v2386, %v2387
        %v2390 = vrot.slane %v2324, 7
        %v2391 = vshll.u32 %v2301, 16
        %v2393 = vor.u32 %v2390, %v2391
        %v2394 = vrot.slane %v2327, 7
        %v2395 = vshll.u32 %v2302, 16
        %v2397 = vor.u32 %v2394, %v2395
        %v2398 = vrot.slane %v2330, 7
        %v2399 = vshll.u32 %v2303, 16
        %v2401 = vor.u32 %v2398, %v2399
        %v2402 = vrot.slane %v2333, 7
        %v2403 = vshll.u32 %v2304, 16
        %v2405 = vor.u32 %v2402, %v2403
        %v2406 = vrot.slane %v2336, 7
        %v2407 = vshll.u32 %v2305, 16
        %v2409 = vor.u32 %v2406, %v2407
        %v2410 = vrot.slane %v2339, 7
        %v2411 = vshll.u32 %v2306, 16
        %v2413 = vor.u32 %v2410, %v2411
        %v2414 = vrot.slane %v2342, 7
        %v2415 = vshll.u32 %v2307, 16
        %v2417 = vor.u32 %v2414, %v2415
        %v2418 = vrot.slane %v2345, 7
        %v2419 = vshll.u32 %v2308, 16
        %v2421 = vor.u32 %v2418, %v2419
        %v2422 = vrot.slane %v2348, 7
        %v2423 = vshll.u32 %v2309, 16
        %v2425 = vor.u32 %v2422, %v2423
        %v2426 = vrot.slane %v2351, 7
        %v2427 = vshll.u32 %v2310, 16
        %v2429 = vor.u32 %v2426, %v2427
        %v2430 = vrot.slane %v2354, 7
        %v2431 = vshll.u32 %v2311, 16
        %v2433 = vor.u32 %v2430, %v2431
        %v2434 = vrot.slane %v2357, 7
        %v2435 = vshll.u32 %v2312, 16
        %v2437 = vor.u32 %v2434, %v2435
        %v2438 = vrot.slane %v2360, 7
        %v2439 = vshll.u32 %v2313, 16
        %v2441 = vor.u32 %v2438, %v2439
        %v2458 = vsel %vm413, %v2315, %v2381
        %v2459 = vsel %vm413, %v2318, %v2385
        %v2460 = vsel %vm413, %v2321, %v2389
        %v2461 = vsel %vm413, %v2324, %v2393
        %v2462 = vsel %vm413, %v2327, %v2397
        %v2463 = vsel %vm413, %v2330, %v2401
        %v2464 = vsel %vm413, %v2333, %v2405
        %v2465 = vsel %vm413, %v2336, %v2409
        %v2466 = vsel %vm413, %v2339, %v2413
        %v2467 = vsel %vm413, %v2342, %v2417
        %v2468 = vsel %vm413, %v2345, %v2421
        %v2469 = vsel %vm413, %v2348, %v2425
        %v2470 = vsel %vm413, %v2351, %v2429
        %v2471 = vsel %vm413, %v2354, %v2433
        %v2472 = vsel %vm413, %v2357, %v2437
        %v2473 = vsel %vm413, %v2360, %v2441
        %v2474 = vrot.slane %v2379, 1
        %v2475 = vor.u32 %v2315, %v2474
        %v2476 = vrot.slane %v2383, 1
        %v2477 = vor.u32 %v2318, %v2476
        %v2478 = vrot.slane %v2387, 1
        %v2479 = vor.u32 %v2321, %v2478
        %v2480 = vrot.slane %v2391, 1
        %v2481 = vor.u32 %v2324, %v2480
        %v2482 = vrot.slane %v2395, 1
        %v2483 = vor.u32 %v2327, %v2482
        %v2484 = vrot.slane %v2399, 1
        %v2485 = vor.u32 %v2330, %v2484
        %v2486 = vrot.slane %v2403, 1
        %v2487 = vor.u32 %v2333, %v2486
        %v2488 = vrot.slane %v2407, 1
        %v2489 = vor.u32 %v2336, %v2488
        %v2490 = vrot.slane %v2411, 1
        %v2491 = vor.u32 %v2339, %v2490
        %v2492 = vrot.slane %v2415, 1
        %v2493 = vor.u32 %v2342, %v2492
        %v2494 = vrot.slane %v2419, 1
        %v2495 = vor.u32 %v2345, %v2494
        %v2496 = vrot.slane %v2423, 1
        %v2497 = vor.u32 %v2348, %v2496
        %v2498 = vrot.slane %v2427, 1
        %v2499 = vor.u32 %v2351, %v2498
        %v2500 = vrot.slane %v2431, 1
        %v2501 = vor.u32 %v2354, %v2500
        %v2502 = vrot.slane %v2435, 1
        %v2503 = vor.u32 %v2357, %v2502
        %v2504 = vrot.slane %v2439, 1
        %v2505 = vor.u32 %v2360, %v2504
        %v2538 = vsel %vm496, %v2475, %v2379
        %v2539 = vsel %vm496, %v2477, %v2383
        %v2540 = vsel %vm496, %v2479, %v2387
        %v2541 = vsel %vm496, %v2481, %v2391
        %v2542 = vsel %vm496, %v2483, %v2395
        %v2543 = vsel %vm496, %v2485, %v2399
        %v2544 = vsel %vm496, %v2487, %v2403
        %v2545 = vsel %vm496, %v2489, %v2407
        %v2546 = vsel %vm496, %v2491, %v2411
        %v2547 = vsel %vm496, %v2493, %v2415
        %v2548 = vsel %vm496, %v2495, %v2419
        %v2549 = vsel %vm496, %v2497, %v2423
        %v2550 = vsel %vm496, %v2499, %v2427
        %v2551 = vsel %vm496, %v2501, %v2431
        %v2552 = vsel %vm496, %v2503, %v2435
        %v2553 = vsel %vm496, %v2505, %v2439
        %v2554 = vld [vmem:[#allocation7] sm:$0xf]
        %v2555 = vld [vmem:[#allocation7 + $0x4] sm:$0xf]
        %v2556 = vld [vmem:[#allocation7 + $0x8] sm:$0xf]
        %v2557 = vld [vmem:[#allocation7 + $0xc] sm:$0xf]
        %v2558 = vld [vmem:[#allocation7 + $0x10] sm:$0xf]
        %v2559 = vld [vmem:[#allocation7 + $0x14] sm:$0xf]
        %v2560 = vld [vmem:[#allocation7 + $0x18] sm:$0xf]
        %v2561 = vld [vmem:[#allocation7 + $0x1c] sm:$0xf]
        %v2562 = vld [vmem:[#allocation7 + $0x20] sm:$0xf]
        %v2563 = vld [vmem:[#allocation7 + $0x24] sm:$0xf]
        %v2564 = vld [vmem:[#allocation7 + $0x28] sm:$0xf]
        %v2565 = vld [vmem:[#allocation7 + $0x2c] sm:$0xf]
        %v2566 = vld [vmem:[#allocation7 + $0x30] sm:$0xf]
        %v2567 = vld [vmem:[#allocation7 + $0x34] sm:$0xf]
        %v2568 = vld [vmem:[#allocation7 + $0x38] sm:$0xf]
        %v2569 = vld [vmem:[#allocation7 + $0x3c] sm:$0xf]
        %v2570 = vld [vmem:[#allocation7 + $0x40] sm:$0xf]
        %v2571 = vld [vmem:[#allocation7 + $0x44] sm:$0xf]
        %v2572 = vld [vmem:[#allocation7 + $0x48] sm:$0xf]
        %v2573 = vld [vmem:[#allocation7 + $0x4c] sm:$0xf]
        %v2574 = vld [vmem:[#allocation7 + $0x50] sm:$0xf]
        %v2575 = vld [vmem:[#allocation7 + $0x54] sm:$0xf]
        %v2576 = vld [vmem:[#allocation7 + $0x58] sm:$0xf]
        %v2577 = vld [vmem:[#allocation7 + $0x5c] sm:$0xf]
        %v2578 = vld [vmem:[#allocation7 + $0x60] sm:$0xf]
        %v2579 = vld [vmem:[#allocation7 + $0x64] sm:$0xf]
        %v2580 = vld [vmem:[#allocation7 + $0x68] sm:$0xf]
        %v2581 = vld [vmem:[#allocation7 + $0x6c] sm:$0xf]
        %v2582 = vld [vmem:[#allocation7 + $0x70] sm:$0xf]
        %v2583 = vld [vmem:[#allocation7 + $0x74] sm:$0xf]
        %v2584 = vld [vmem:[#allocation7 + $0x78] sm:$0xf]
        %v2585 = vld [vmem:[#allocation7 + $0x7c] sm:$0xf]
        %v2586 = vld [vmem:[#allocation7 + $0x80] sm:$0xf]
        %v2587 = vld [vmem:[#allocation7 + $0x84] sm:$0xf]
        %v2588 = vld [vmem:[#allocation7 + $0x88] sm:$0xf]
        %v2589 = vld [vmem:[#allocation7 + $0x8c] sm:$0xf]
        %v2590 = vld [vmem:[#allocation7 + $0x90] sm:$0xf]
        %v2591 = vld [vmem:[#allocation7 + $0x94] sm:$0xf]
        %v2592 = vld [vmem:[#allocation7 + $0x98] sm:$0xf]
        %v2593 = vld [vmem:[#allocation7 + $0x9c] sm:$0xf]
        %v2594 = vld [vmem:[#allocation7 + $0xa0] sm:$0xf]
        %v2595 = vld [vmem:[#allocation7 + $0xa4] sm:$0xf]
        %v2596 = vld [vmem:[#allocation7 + $0xa8] sm:$0xf]
        %v2597 = vld [vmem:[#allocation7 + $0xac] sm:$0xf]
        %v2598 = vld [vmem:[#allocation7 + $0xb0] sm:$0xf]
        %v2599 = vld [vmem:[#allocation7 + $0xb4] sm:$0xf]
        %v2600 = vld [vmem:[#allocation7 + $0xb8] sm:$0xf]
        %v2601 = vld [vmem:[#allocation7 + $0xbc] sm:$0xf]
        %s2602 = scalar_lea.vmem [#allocation7], 192
        %v2603 = vld [vmem:[%s2602] sm:$0xf]
        %v2604 = vld [vmem:[%s2602 + $0x4] sm:$0xf]
        %v2605 = vld [vmem:[%s2602 + $0x8] sm:$0xf]
        %v2606 = vld [vmem:[%s2602 + $0xc] sm:$0xf]
        %v2607 = vld [vmem:[%s2602 + $0x10] sm:$0xf]
        %v2608 = vld [vmem:[%s2602 + $0x14] sm:$0xf]
        %v2609 = vld [vmem:[%s2602 + $0x18] sm:$0xf]
        %v2610 = vld [vmem:[%s2602 + $0x1c] sm:$0xf]
        %v2611 = vld [vmem:[%s2602 + $0x20] sm:$0xf]
        %v2612 = vld [vmem:[%s2602 + $0x24] sm:$0xf]
        %v2613 = vld [vmem:[%s2602 + $0x28] sm:$0xf]
        %v2614 = vld [vmem:[%s2602 + $0x2c] sm:$0xf]
        %v2615 = vld [vmem:[%s2602 + $0x30] sm:$0xf]
        %v2616 = vld [vmem:[%s2602 + $0x34] sm:$0xf]
        %v2617 = vld [vmem:[%s2602 + $0x38] sm:$0xf]
        %v2618 = vld [vmem:[%s2602 + $0x3c] sm:$0xf]
        %v2619 = vld [vmem:[%s2602 + $0x40] sm:$0xf]
        %v2620 = vld [vmem:[%s2602 + $0x44] sm:$0xf]
        %v2621 = vld [vmem:[%s2602 + $0x48] sm:$0xf]
        %v2622 = vld [vmem:[%s2602 + $0x4c] sm:$0xf]
        %v2623 = vld [vmem:[%s2602 + $0x50] sm:$0xf]
        %v2624 = vld [vmem:[%s2602 + $0x54] sm:$0xf]
        %v2625 = vld [vmem:[%s2602 + $0x58] sm:$0xf]
        %v2626 = vld [vmem:[%s2602 + $0x5c] sm:$0xf]
        %v2627 = vld [vmem:[%s2602 + $0x60] sm:$0xf]
        %v2628 = vld [vmem:[%s2602 + $0x64] sm:$0xf]
        %v2629 = vld [vmem:[%s2602 + $0x68] sm:$0xf]
        %v2630 = vld [vmem:[%s2602 + $0x6c] sm:$0xf]
        %v2631 = vld [vmem:[%s2602 + $0x70] sm:$0xf]
        %v2632 = vld [vmem:[%s2602 + $0x74] sm:$0xf]
        %v2633 = vld [vmem:[%s2602 + $0x78] sm:$0xf]
        %v2634 = vld [vmem:[%s2602 + $0x7c] sm:$0xf]
        %v2635 = vld [vmem:[%s2602 + $0x80] sm:$0xf]
        %v2636 = vld [vmem:[%s2602 + $0x84] sm:$0xf]
        %v2637 = vld [vmem:[%s2602 + $0x88] sm:$0xf]
        %v2638 = vld [vmem:[%s2602 + $0x8c] sm:$0xf]
        %v2639 = vld [vmem:[%s2602 + $0x90] sm:$0xf]
        %v2640 = vld [vmem:[%s2602 + $0x94] sm:$0xf]
        %v2641 = vld [vmem:[%s2602 + $0x98] sm:$0xf]
        %v2642 = vld [vmem:[%s2602 + $0x9c] sm:$0xf]
        %v2643 = vld [vmem:[%s2602 + $0xa0] sm:$0xf]
        %v2644 = vld [vmem:[%s2602 + $0xa4] sm:$0xf]
        %v2645 = vld [vmem:[%s2602 + $0xa8] sm:$0xf]
        %v2646 = vld [vmem:[%s2602 + $0xac] sm:$0xf]
        %v2647 = vld [vmem:[%s2602 + $0xb0] sm:$0xf]
        %v2648 = vld [vmem:[%s2602 + $0xb4] sm:$0xf]
        %v2649 = vld [vmem:[%s2602 + $0xb8] sm:$0xf]
        %v2650 = vld [vmem:[%s2602 + $0xbc] sm:$0xf]
        %v2699 = vunpack.c.l.b16 %v2603
        %v2700 = vunpack.c.l.b16 %v2604
        %v2701 = vunpack.c.l.b16 %v2605
        %v2702 = vunpack.c.l.b16 %v2606
        %v2703 = vunpack.c.l.b16 %v2607
        %v2704 = vunpack.c.l.b16 %v2608
        %v2705 = vunpack.c.l.b16 %v2609
        %v2706 = vunpack.c.l.b16 %v2610
        %v2707 = vunpack.c.l.b16 %v2611
        %v2708 = vunpack.c.l.b16 %v2612
        %v2709 = vunpack.c.l.b16 %v2613
        %v2710 = vunpack.c.l.b16 %v2614
        %v2711 = vunpack.c.l.b16 %v2615
        %v2712 = vunpack.c.l.b16 %v2616
        %v2713 = vunpack.c.l.b16 %v2617
        %v2714 = vunpack.c.l.b16 %v2618
        %v2715 = vunpack.c.l.b16 %v2619
        %v2716 = vunpack.c.l.b16 %v2620
        %v2717 = vunpack.c.l.b16 %v2621
        %v2718 = vunpack.c.l.b16 %v2622
        %v2719 = vunpack.c.l.b16 %v2623
        %v2720 = vunpack.c.l.b16 %v2624
        %v2721 = vunpack.c.l.b16 %v2625
        %v2722 = vunpack.c.l.b16 %v2626
        %v2723 = vunpack.c.l.b16 %v2627
        %v2724 = vunpack.c.l.b16 %v2628
        %v2725 = vunpack.c.l.b16 %v2629
        %v2726 = vunpack.c.l.b16 %v2630
        %v2727 = vunpack.c.l.b16 %v2631
        %v2728 = vunpack.c.l.b16 %v2632
        %v2729 = vunpack.c.l.b16 %v2633
        %v2730 = vunpack.c.l.b16 %v2634
        %v2731 = vunpack.c.l.b16 %v2635
        %v2732 = vunpack.c.l.b16 %v2636
        %v2733 = vunpack.c.l.b16 %v2637
        %v2734 = vunpack.c.l.b16 %v2638
        %v2735 = vunpack.c.l.b16 %v2639
        %v2736 = vunpack.c.l.b16 %v2640
        %v2737 = vunpack.c.l.b16 %v2641
        %v2738 = vunpack.c.l.b16 %v2642
        %v2739 = vunpack.c.l.b16 %v2643
        %v2740 = vunpack.c.l.b16 %v2644
        %v2741 = vunpack.c.l.b16 %v2645
        %v2742 = vunpack.c.l.b16 %v2646
        %v2743 = vunpack.c.l.b16 %v2647
        %v2744 = vunpack.c.l.b16 %v2648
        %v2745 = vunpack.c.l.b16 %v2649
        %v2746 = vunpack.c.l.b16 %v2650
        %v2747 = vpack.c.b16 %v2700, %v2699
        %v2748 = vpack.c.b16 %v2702, %v2701
        %v2749 = vpack.c.b16 %v2704, %v2703
        %v2750 = vpack.c.b16 %v2706, %v2705
        %v2751 = vpack.c.b16 %v2708, %v2707
        %v2752 = vpack.c.b16 %v2710, %v2709
        %v2753 = vpack.c.b16 %v2712, %v2711
        %v2754 = vpack.c.b16 %v2714, %v2713
        %v2755 = vpack.c.b16 %v2716, %v2715
        %v2756 = vpack.c.b16 %v2718, %v2717
        %v2757 = vpack.c.b16 %v2720, %v2719
        %v2758 = vpack.c.b16 %v2722, %v2721
        %v2759 = vpack.c.b16 %v2724, %v2723
        %v2760 = vpack.c.b16 %v2726, %v2725
        %v2761 = vpack.c.b16 %v2728, %v2727
        %v2762 = vpack.c.b16 %v2730, %v2729
        %v2763 = vpack.c.b16 %v2732, %v2731
        %v2764 = vpack.c.b16 %v2734, %v2733
        %v2765 = vpack.c.b16 %v2736, %v2735
        %v2766 = vpack.c.b16 %v2738, %v2737
        %v2767 = vpack.c.b16 %v2740, %v2739
        %v2768 = vpack.c.b16 %v2742, %v2741
        %v2769 = vpack.c.b16 %v2744, %v2743
        %v2770 = vpack.c.b16 %v2746, %v2745
        %2795 = vmatprep.subr.bf16.mxu0 0
        %2796 = vmatpush1.bf16.msra.mxu0 %v2747
        %2797 = vmatprep.subr.bf16.mxu0 0
        %2798 = vmatpush1.bf16.msra.mxu0 %v2748
        %2799 = vmatprep.subr.bf16.mxu0 0
        %2800 = vmatpush1.bf16.msra.mxu0 %v2749
        %2801 = vmatprep.subr.bf16.mxu0 0
        %2802 = vmatpush1.bf16.msra.mxu0 %v2750
        %2803 = vmatprep.subr.bf16.mxu0 0
        %2804 = vmatpush1.bf16.msra.mxu0 %v2751
        %2805 = vmatprep.subr.bf16.mxu0 0
        %2806 = vmatpush1.bf16.msra.mxu0 %v2752
        %2807 = vmatprep.subr.bf16.mxu0 0
        %2808 = vmatpush1.bf16.msra.mxu0 %v2753
        %2809 = vmatprep.subr.bf16.mxu0 0
        %2810 = vmatpush1.bf16.msra.mxu0 %v2754
        %2811 = vmatprep.subr.bf16.mxu0 0
        %2812 = vmatpush1.bf16.msra.mxu0 %v2755
        %2813 = vmatprep.subr.bf16.mxu0 0
        %2814 = vmatpush1.bf16.msra.mxu0 %v2756
        %2815 = vmatprep.subr.bf16.mxu0 0
        %2816 = vmatpush1.bf16.msra.mxu0 %v2757
        %2817 = vmatprep.subr.bf16.mxu0 0
        %2818 = vmatpush1.bf16.msra.mxu0 %v2758
        %2819 = vmatprep.subr.bf16.mxu0 0
        %2820 = vmatpush1.bf16.msra.mxu0 %v2759
        %2821 = vmatprep.subr.bf16.mxu0 0
        %2822 = vmatpush1.bf16.msra.mxu0 %v2760
        %2823 = vmatprep.subr.bf16.mxu0 0
        %2824 = vmatpush1.bf16.msra.mxu0 %v2761
        %2825 = vmatprep.subr.bf16.mxu0 0
        %2826 = vmatpush1.bf16.msra.mxu0 %v2762
        %2827 = vmatprep.mubr.bf16.mxu0 %v2298
        %2828 = vmatmul.mubr.bf16.gmra.mrb[0].mxu0 %v2459
        %v2829 = vpop.f32.mrb[0].mxu0
        %v2830 = vadd.f32 0.0, %v2829
        %v2831 = vpop.f32.mrb[0].mxu0
        %v2832 = vpop.f32.mrb[0].mxu0
        %v2833 = vadd.f32 0.0, %v2832
        %v2834 = vpop.f32.mrb[0].mxu0
        %2835 = vmatprep.mubr.bf16.mxu0 %v2299
        %2836 = vmatmul.mubr.bf16.gmra.mrb[0].mxu0 %v2458
        %v2837 = vpop.f32.mrb[0].mxu0
        %v2838 = vadd.f32 0.0, %v2837
        %v2839 = vpop.f32.mrb[0].mxu0
        %v2840 = vpop.f32.mrb[0].mxu0
        %v2841 = vadd.f32 0.0, %v2840
        %v2842 = vpop.f32.mrb[0].mxu0
        %2843 = vmatprep.mubr.bf16.mxu0 %v2300
        %2844 = vmatmul.mubr.bf16.gmra.mrb[0].mxu0 %v2460
        %v2845 = vpop.f32.mrb[0].mxu0
        %v2846 = vadd.f32 0.0, %v2845
        %v2847 = vpop.f32.mrb[0].mxu0
        %v2848 = vpop.f32.mrb[0].mxu0
        %v2849 = vadd.f32 0.0, %v2848
        %v2850 = vpop.f32.mrb[0].mxu0
        %2851 = vmatprep.mubr.bf16.mxu0 %v2301
        %2852 = vmatmul.mubr.bf16.gmra.mrb[0].mxu0 %v2461
        %v2853 = vpop.f32.mrb[0].mxu0
        %v2854 = vadd.f32 0.0, %v2853
        %v2855 = vpop.f32.mrb[0].mxu0
        %v2856 = vpop.f32.mrb[0].mxu0
        %v2857 = vadd.f32 0.0, %v2856
        %v2858 = vpop.f32.mrb[0].mxu0
        %2859 = vmatprep.mubr.bf16.mxu0 %v2302
        %2860 = vmatmul.mubr.bf16.gmra.mrb[0].mxu0 %v2462
        %v2861 = vpop.f32.mrb[0].mxu0
        %v2862 = vadd.f32 0.0, %v2861
        %v2863 = vpop.f32.mrb[0].mxu0
        %v2864 = vpop.f32.mrb[0].mxu0
        %v2865 = vadd.f32 0.0, %v2864
        %v2866 = vpop.f32.mrb[0].mxu0
        %2867 = vmatprep.mubr.bf16.mxu0 %v2303
        %2868 = vmatmul.mubr.bf16.gmra.mrb[0].mxu0 %v2463
        %v2869 = vpop.f32.mrb[0].mxu0
        %v2870 = vadd.f32 0.0, %v2869
        %v2871 = vpop.f32.mrb[0].mxu0
        %v2872 = vpop.f32.mrb[0].mxu0
        %v2873 = vadd.f32 0.0, %v2872
        %v2874 = vpop.f32.mrb[0].mxu0
        %2875 = vmatprep.mubr.bf16.mxu0 %v2304
        %2876 = vmatmul.mubr.bf16.gmra.mrb[0].mxu0 %v2464
        %v2877 = vpop.f32.mrb[0].mxu0
        %v2878 = vadd.f32 0.0, %v2877
        %v2879 = vpop.f32.mrb[0].mxu0
        %v2880 = vpop.f32.mrb[0].mxu0
        %v2881 = vadd.f32 0.0, %v2880
        %v2882 = vpop.f32.mrb[0].mxu0
        %2883 = vmatprep.mubr.bf16.mxu0 %v2305
        %2884 = vmatmul.mubr.bf16.gmra.mrb[0].mxu0 %v2465
        %v2885 = vpop.f32.mrb[0].mxu0
        %v2886 = vadd.f32 0.0, %v2885
        %v2887 = vpop.f32.mrb[0].mxu0
        %v2888 = vpop.f32.mrb[0].mxu0
        %v2889 = vadd.f32 0.0, %v2888
        %v2890 = vpop.f32.mrb[0].mxu0
        %2891 = vmatprep.mubr.bf16.mxu0 %v2306
        %2892 = vmatmul.mubr.bf16.gmra.mrb[0].mxu0 %v2466
        %v2893 = vpop.f32.mrb[0].mxu0
        %v2894 = vadd.f32 0.0, %v2893
        %v2895 = vpop.f32.mrb[0].mxu0
        %v2896 = vpop.f32.mrb[0].mxu0
        %v2897 = vadd.f32 0.0, %v2896
        %v2898 = vpop.f32.mrb[0].mxu0
        %2899 = vmatprep.mubr.bf16.mxu0 %v2307
        %2900 = vmatmul.mubr.bf16.gmra.mrb[0].mxu0 %v2467
        %v2901 = vpop.f32.mrb[0].mxu0
        %v2902 = vadd.f32 0.0, %v2901
        %v2903 = vpop.f32.mrb[0].mxu0
        %v2904 = vpop.f32.mrb[0].mxu0
        %v2905 = vadd.f32 0.0, %v2904
        %v2906 = vpop.f32.mrb[0].mxu0
        %2907 = vmatprep.mubr.bf16.mxu0 %v2308
        %2908 = vmatmul.mubr.bf16.gmra.mrb[0].mxu0 %v2468
        %v2909 = vpop.f32.mrb[0].mxu0
        %v2910 = vadd.f32 0.0, %v2909
        %v2911 = vpop.f32.mrb[0].mxu0
        %v2912 = vpop.f32.mrb[0].mxu0
        %v2913 = vadd.f32 0.0, %v2912
        %v2914 = vpop.f32.mrb[0].mxu0
        %2915 = vmatprep.mubr.bf16.mxu0 %v2309
        %2916 = vmatmul.mubr.bf16.gmra.mrb[0].mxu0 %v2469
        %v2917 = vpop.f32.mrb[0].mxu0
        %v2918 = vadd.f32 0.0, %v2917
        %v2919 = vpop.f32.mrb[0].mxu0
        %v2920 = vpop.f32.mrb[0].mxu0
        %v2921 = vadd.f32 0.0, %v2920
        %v2922 = vpop.f32.mrb[0].mxu0
        %2923 = vmatprep.mubr.bf16.mxu0 %v2310
        %2924 = vmatmul.mubr.bf16.gmra.mrb[0].mxu0 %v2470
        %v2925 = vpop.f32.mrb[0].mxu0
        %v2926 = vadd.f32 0.0, %v2925
        %v2927 = vpop.f32.mrb[0].mxu0
        %v2928 = vpop.f32.mrb[0].mxu0
        %v2929 = vadd.f32 0.0, %v2928
        %v2930 = vpop.f32.mrb[0].mxu0
        %2931 = vmatprep.mubr.bf16.mxu0 %v2311
        %2932 = vmatmul.mubr.bf16.gmra.mrb[0].mxu0 %v2471
        %v2933 = vpop.f32.mrb[0].mxu0
        %v2934 = vadd.f32 0.0, %v2933
        %v2935 = vpop.f32.mrb[0].mxu0
        %v2936 = vpop.f32.mrb[0].mxu0
        %v2937 = vadd.f32 0.0, %v2936
        %v2938 = vpop.f32.mrb[0].mxu0
        %2939 = vmatprep.mubr.bf16.mxu0 %v2312
        %2940 = vmatmul.mubr.bf16.gmra.mrb[0].mxu0 %v2472
        %v2941 = vpop.f32.mrb[0].mxu0
        %v2942 = vadd.f32 0.0, %v2941
        %v2943 = vpop.f32.mrb[0].mxu0
        %v2944 = vpop.f32.mrb[0].mxu0
        %v2945 = vadd.f32 0.0, %v2944
        %v2946 = vpop.f32.mrb[0].mxu0
        %2947 = vmatprep.mubr.bf16.mxu0 %v2313
        %2948 = vmatmul.mubr.bf16.gmra.mrb[0].mxu0 %v2473
        %v2949 = vpop.f32.mrb[0].mxu0
        %v2950 = vadd.f32 0.0, %v2949
        %v2951 = vpop.f32.mrb[0].mxu0
        %v2952 = vpop.f32.mrb[0].mxu0
        %v2953 = vadd.f32 0.0, %v2952
        %v2954 = vpop.f32.mrb[0].mxu0
        %2955 = vdwg.mxu0
        %2956 = vmatprep.subr.bf16.mxu0 0
        %2957 = vmatpush1.bf16.msra.mxu0 %v2763
        %2958 = vmatprep.subr.bf16.mxu0 0
        %2959 = vmatpush1.bf16.msra.mxu0 %v2764
        %2960 = vmatprep.subr.bf16.mxu0 0
        %2961 = vmatpush1.bf16.msra.mxu0 %v2765
        %2962 = vmatprep.subr.bf16.mxu0 0
        %2963 = vmatpush1.bf16.msra.mxu0 %v2766
        %2964 = vmatprep.subr.bf16.mxu0 0
        %2965 = vmatpush1.bf16.msra.mxu0 %v2767
        %2966 = vmatprep.subr.bf16.mxu0 0
        %2967 = vmatpush1.bf16.msra.mxu0 %v2768
        %2968 = vmatprep.subr.bf16.mxu0 0
        %2969 = vmatpush1.bf16.msra.mxu0 %v2769
        %2970 = vmatprep.subr.bf16.mxu0 0
        %2971 = vmatpush1.bf16.msra.mxu0 %v2770
        %2972 = vmatprep.subr.bf16.mxu0 0
        %2973 = vmatpush1.bf16.msra.mxu0 0
        %2974 = vmatprep.subr.bf16.mxu0 0
        %2975 = vmatpush1.bf16.msra.mxu0 0
        %2976 = vmatprep.subr.bf16.mxu0 0
        %2977 = vmatpush1.bf16.msra.mxu0 0
        %2978 = vmatprep.subr.bf16.mxu0 0
        %2979 = vmatpush1.bf16.msra.mxu0 0
        %2980 = vmatprep.subr.bf16.mxu0 0
        %2981 = vmatpush1.bf16.msra.mxu0 0
        %2982 = vmatprep.subr.bf16.mxu0 0
        %2983 = vmatpush1.bf16.msra.mxu0 0
        %2984 = vmatprep.subr.bf16.mxu0 0
        %2985 = vmatpush1.bf16.msra.mxu0 0
        %2986 = vmatprep.subr.bf16.mxu0 0
        %2987 = vmatpush1.bf16.msra.mxu0 0
        %2988 = vmatprep.mubr.bf16.mxu0 0
        %2989 = vmatmul.mubr.bf16.gmra.mrb[0].mxu0 %v2539
        %v2990 = vpop.f32.mrb[0].mxu0
        %v2991 = vadd.f32 %v2830, %v2990
        %v2992 = vpop.f32.mrb[0].mxu0
        %v2993 = vpop.f32.mrb[0].mxu0
        %v2994 = vadd.f32 %v2833, %v2993
        %v2995 = vpop.f32.mrb[0].mxu0
        %2996 = vmatprep.mubr.bf16.mxu0 0
        %2997 = vmatmul.mubr.bf16.gmra.mrb[0].mxu0 %v2538
        %v2998 = vpop.f32.mrb[0].mxu0
        %v2999 = vadd.f32 %v2838, %v2998
        %v3000 = vpop.f32.mrb[0].mxu0
        %v3001 = vpop.f32.mrb[0].mxu0
        %v3002 = vadd.f32 %v2841, %v3001
        %v3003 = vpop.f32.mrb[0].mxu0
        %3004 = vmatprep.mubr.bf16.mxu0 0
        %3005 = vmatmul.mubr.bf16.gmra.mrb[0].mxu0 %v2540
        %v3006 = vpop.f32.mrb[0].mxu0
        %v3007 = vadd.f32 %v2846, %v3006
        %v3008 = vpop.f32.mrb[0].mxu0
        %v3009 = vpop.f32.mrb[0].mxu0
        %v3010 = vadd.f32 %v2849, %v3009
        %v3011 = vpop.f32.mrb[0].mxu0
        %3012 = vmatprep.mubr.bf16.mxu0 0
        %3013 = vmatmul.mubr.bf16.gmra.mrb[0].mxu0 %v2541
        %v3014 = vpop.f32.mrb[0].mxu0
        %v3015 = vadd.f32 %v2854, %v3014
        %v3016 = vpop.f32.mrb[0].mxu0
        %v3017 = vpop.f32.mrb[0].mxu0
        %v3018 = vadd.f32 %v2857, %v3017
        %v3019 = vpop.f32.mrb[0].mxu0
        %3020 = vmatprep.mubr.bf16.mxu0 0
        %3021 = vmatmul.mubr.bf16.gmra.mrb[0].mxu0 %v2542
        %v3022 = vpop.f32.mrb[0].mxu0
        %v3023 = vadd.f32 %v2862, %v3022
        %v3024 = vpop.f32.mrb[0].mxu0
        %v3025 = vpop.f32.mrb[0].mxu0
        %v3026 = vadd.f32 %v2865, %v3025
        %v3027 = vpop.f32.mrb[0].mxu0
        %3028 = vmatprep.mubr.bf16.mxu0 0
        %3029 = vmatmul.mubr.bf16.gmra.mrb[0].mxu0 %v2543
        %v3030 = vpop.f32.mrb[0].mxu0
        %v3031 = vadd.f32 %v2870, %v3030
        %v3032 = vpop.f32.mrb[0].mxu0
        %v3033 = vpop.f32.mrb[0].mxu0
        %v3034 = vadd.f32 %v2873, %v3033
        %v3035 = vpop.f32.mrb[0].mxu0
        %3036 = vmatprep.mubr.bf16.mxu0 0
        %3037 = vmatmul.mubr.bf16.gmra.mrb[0].mxu0 %v2544
        %v3038 = vpop.f32.mrb[0].mxu0
        %v3039 = vadd.f32 %v2878, %v3038
        %v3040 = vpop.f32.mrb[0].mxu0
        %v3041 = vpop.f32.mrb[0].mxu0
        %v3042 = vadd.f32 %v2881, %v3041
        %v3043 = vpop.f32.mrb[0].mxu0
        %3044 = vmatprep.mubr.bf16.mxu0 0
        %3045 = vmatmul.mubr.bf16.gmra.mrb[0].mxu0 %v2545
        %v3046 = vpop.f32.mrb[0].mxu0
        %v3047 = vadd.f32 %v2886, %v3046
        %v3048 = vpop.f32.mrb[0].mxu0
        %v3049 = vpop.f32.mrb[0].mxu0
        %v3050 = vadd.f32 %v2889, %v3049
        %v3051 = vpop.f32.mrb[0].mxu0
        %3052 = vmatprep.mubr.bf16.mxu0 0
        %3053 = vmatmul.mubr.bf16.gmra.mrb[0].mxu0 %v2546
        %v3054 = vpop.f32.mrb[0].mxu0
        %v3055 = vadd.f32 %v2894, %v3054
        %v3056 = vpop.f32.mrb[0].mxu0
        %v3057 = vpop.f32.mrb[0].mxu0
        %v3058 = vadd.f32 %v2897, %v3057
        %v3059 = vpop.f32.mrb[0].mxu0
        %3060 = vmatprep.mubr.bf16.mxu0 0
        %3061 = vmatmul.mubr.bf16.gmra.mrb[0].mxu0 %v2547
        %v3062 = vpop.f32.mrb[0].mxu0
        %v3063 = vadd.f32 %v2902, %v3062
        %v3064 = vpop.f32.mrb[0].mxu0
        %v3065 = vpop.f32.mrb[0].mxu0
        %v3066 = vadd.f32 %v2905, %v3065
        %v3067 = vpop.f32.mrb[0].mxu0
        %3068 = vmatprep.mubr.bf16.mxu0 0
        %3069 = vmatmul.mubr.bf16.gmra.mrb[0].mxu0 %v2548
        %v3070 = vpop.f32.mrb[0].mxu0
        %v3071 = vadd.f32 %v2910, %v3070
        %v3072 = vpop.f32.mrb[0].mxu0
        %v3073 = vpop.f32.mrb[0].mxu0
        %v3074 = vadd.f32 %v2913, %v3073
        %v3075 = vpop.f32.mrb[0].mxu0
        %3076 = vmatprep.mubr.bf16.mxu0 0
        %3077 = vmatmul.mubr.bf16.gmra.mrb[0].mxu0 %v2549
        %v3078 = vpop.f32.mrb[0].mxu0
        %v3079 = vadd.f32 %v2918, %v3078
        %v3080 = vpop.f32.mrb[0].mxu0
        %v3081 = vpop.f32.mrb[0].mxu0
        %v3082 = vadd.f32 %v2921, %v3081
        %v3083 = vpop.f32.mrb[0].mxu0
        %3084 = vmatprep.mubr.bf16.mxu0 0
        %3085 = vmatmul.mubr.bf16.gmra.mrb[0].mxu0 %v2550
        %v3086 = vpop.f32.mrb[0].mxu0
        %v3087 = vadd.f32 %v2926, %v3086
        %v3088 = vpop.f32.mrb[0].mxu0
        %v3089 = vpop.f32.mrb[0].mxu0
        %v3090 = vadd.f32 %v2929, %v3089
        %v3091 = vpop.f32.mrb[0].mxu0
        %3092 = vmatprep.mubr.bf16.mxu0 0
        %3093 = vmatmul.mubr.bf16.gmra.mrb[0].mxu0 %v2551
        %v3094 = vpop.f32.mrb[0].mxu0
        %v3095 = vadd.f32 %v2934, %v3094
        %v3096 = vpop.f32.mrb[0].mxu0
        %v3097 = vpop.f32.mrb[0].mxu0
        %v3098 = vadd.f32 %v2937, %v3097
        %v3099 = vpop.f32.mrb[0].mxu0
        %3100 = vmatprep.mubr.bf16.mxu0 0
        %3101 = vmatmul.mubr.bf16.gmra.mrb[0].mxu0 %v2552
        %v3102 = vpop.f32.mrb[0].mxu0
        %v3103 = vadd.f32 %v2942, %v3102
        %v3104 = vpop.f32.mrb[0].mxu0
        %v3105 = vpop.f32.mrb[0].mxu0
        %v3106 = vadd.f32 %v2945, %v3105
        %v3107 = vpop.f32.mrb[0].mxu0
        %3108 = vmatprep.mubr.bf16.mxu0 0
        %3109 = vmatmul.mubr.bf16.gmra.mrb[0].mxu0 %v2553
        %v3110 = vpop.f32.mrb[0].mxu0
        %v3111 = vadd.f32 %v2950, %v3110
        %v3112 = vpop.f32.mrb[0].mxu0
        %v3113 = vpop.f32.mrb[0].mxu0
        %v3114 = vadd.f32 %v2953, %v3113
        %v3115 = vpop.f32.mrb[0].mxu0
        %3116 = vdwg.mxu0
        %v3165 = vunpack.c.l.b16 %v2554
        %v3166 = vunpack.c.l.b16 %v2555
        %v3167 = vunpack.c.l.b16 %v2556
        %v3168 = vunpack.c.l.b16 %v2557
        %v3169 = vunpack.c.l.b16 %v2558
        %v3170 = vunpack.c.l.b16 %v2559
        %v3171 = vunpack.c.l.b16 %v2560
        %v3172 = vunpack.c.l.b16 %v2561
        %v3173 = vunpack.c.l.b16 %v2562
        %v3174 = vunpack.c.l.b16 %v2563
        %v3175 = vunpack.c.l.b16 %v2564
        %v3176 = vunpack.c.l.b16 %v2565
        %v3177 = vunpack.c.l.b16 %v2566
        %v3178 = vunpack.c.l.b16 %v2567
        %v3179 = vunpack.c.l.b16 %v2568
        %v3180 = vunpack.c.l.b16 %v2569
        %v3181 = vunpack.c.l.b16 %v2570
        %v3182 = vunpack.c.l.b16 %v2571
        %v3183 = vunpack.c.l.b16 %v2572
        %v3184 = vunpack.c.l.b16 %v2573
        %v3185 = vunpack.c.l.b16 %v2574
        %v3186 = vunpack.c.l.b16 %v2575
        %v3187 = vunpack.c.l.b16 %v2576
        %v3188 = vunpack.c.l.b16 %v2577
        %v3189 = vunpack.c.l.b16 %v2578
        %v3190 = vunpack.c.l.b16 %v2579
        %v3191 = vunpack.c.l.b16 %v2580
        %v3192 = vunpack.c.l.b16 %v2581
        %v3193 = vunpack.c.l.b16 %v2582
        %v3194 = vunpack.c.l.b16 %v2583
        %v3195 = vunpack.c.l.b16 %v2584
        %v3196 = vunpack.c.l.b16 %v2585
        %v3197 = vunpack.c.l.b16 %v2586
        %v3198 = vunpack.c.l.b16 %v2587
        %v3199 = vunpack.c.l.b16 %v2588
        %v3200 = vunpack.c.l.b16 %v2589
        %v3201 = vunpack.c.l.b16 %v2590
        %v3202 = vunpack.c.l.b16 %v2591
        %v3203 = vunpack.c.l.b16 %v2592
        %v3204 = vunpack.c.l.b16 %v2593
        %v3205 = vunpack.c.l.b16 %v2594
        %v3206 = vunpack.c.l.b16 %v2595
        %v3207 = vunpack.c.l.b16 %v2596
        %v3208 = vunpack.c.l.b16 %v2597
        %v3209 = vunpack.c.l.b16 %v2598
        %v3210 = vunpack.c.l.b16 %v2599
        %v3211 = vunpack.c.l.b16 %v2600
        %v3212 = vunpack.c.l.b16 %v2601
        %v3213 = vpack.c.b16 %v3166, %v3165
        %v3214 = vpack.c.b16 %v3168, %v3167
        %v3215 = vpack.c.b16 %v3170, %v3169
        %v3216 = vpack.c.b16 %v3172, %v3171
        %v3217 = vpack.c.b16 %v3174, %v3173
        %v3218 = vpack.c.b16 %v3176, %v3175
        %v3219 = vpack.c.b16 %v3178, %v3177
        %v3220 = vpack.c.b16 %v3180, %v3179
        %v3221 = vpack.c.b16 %v3182, %v3181
        %v3222 = vpack.c.b16 %v3184, %v3183
        %v3223 = vpack.c.b16 %v3186, %v3185
        %v3224 = vpack.c.b16 %v3188, %v3187
        %v3225 = vpack.c.b16 %v3190, %v3189
        %v3226 = vpack.c.b16 %v3192, %v3191
        %v3227 = vpack.c.b16 %v3194, %v3193
        %v3228 = vpack.c.b16 %v3196, %v3195
        %v3229 = vpack.c.b16 %v3198, %v3197
        %v3230 = vpack.c.b16 %v3200, %v3199
        %v3231 = vpack.c.b16 %v3202, %v3201
        %v3232 = vpack.c.b16 %v3204, %v3203
        %v3233 = vpack.c.b16 %v3206, %v3205
        %v3234 = vpack.c.b16 %v3208, %v3207
        %v3235 = vpack.c.b16 %v3210, %v3209
        %v3236 = vpack.c.b16 %v3212, %v3211
        %3261 = vmatprep.subr.bf16.mxu0 0
        %3262 = vmatpush1.bf16.msra.mxu0 %v3213
        %3263 = vmatprep.subr.bf16.mxu0 0
        %3264 = vmatpush1.bf16.msra.mxu0 %v3214
        %3265 = vmatprep.subr.bf16.mxu0 0
        %3266 = vmatpush1.bf16.msra.mxu0 %v3215
        %3267 = vmatprep.subr.bf16.mxu0 0
        %3268 = vmatpush1.bf16.msra.mxu0 %v3216
        %3269 = vmatprep.subr.bf16.mxu0 0
        %3270 = vmatpush1.bf16.msra.mxu0 %v3217
        %3271 = vmatprep.subr.bf16.mxu0 0
        %3272 = vmatpush1.bf16.msra.mxu0 %v3218
        %3273 = vmatprep.subr.bf16.mxu0 0
        %3274 = vmatpush1.bf16.msra.mxu0 %v3219
        %3275 = vmatprep.subr.bf16.mxu0 0
        %3276 = vmatpush1.bf16.msra.mxu0 %v3220
        %3277 = vmatprep.subr.bf16.mxu0 0
        %3278 = vmatpush1.bf16.msra.mxu0 %v3221
        %3279 = vmatprep.subr.bf16.mxu0 0
        %3280 = vmatpush1.bf16.msra.mxu0 %v3222
        %3281 = vmatprep.subr.bf16.mxu0 0
        %3282 = vmatpush1.bf16.msra.mxu0 %v3223
        %3283 = vmatprep.subr.bf16.mxu0 0
        %3284 = vmatpush1.bf16.msra.mxu0 %v3224
        %3285 = vmatprep.subr.bf16.mxu0 0
        %3286 = vmatpush1.bf16.msra.mxu0 %v3225
        %3287 = vmatprep.subr.bf16.mxu0 0
        %3288 = vmatpush1.bf16.msra.mxu0 %v3226
        %3289 = vmatprep.subr.bf16.mxu0 0
        %3290 = vmatpush1.bf16.msra.mxu0 %v3227
        %3291 = vmatprep.subr.bf16.mxu0 0
        %3292 = vmatpush1.bf16.msra.mxu0 %v3228
        %3293 = vmatprep.mubr.bf16.mxu0 %v2299
        %3294 = vmatmul.mubr.bf16.gmra.mrb[0].mxu0 %v2458
        %v3295 = vpop.f32.mrb[0].mxu0
        %v3296 = vadd.f32 %v2991, %v3295
        %v3297 = vpop.f32.mrb[0].mxu0
        %v3298 = vpop.f32.mrb[0].mxu0
        %v3299 = vadd.f32 %v2994, %v3298
        %v3300 = vpop.f32.mrb[0].mxu0
        %3301 = vmatprep.mubr.bf16.mxu0 %v2298
        %3302 = vmatmul.mubr.bf16.gmra.mrb[0].mxu0 %v2459
        %v3303 = vpop.f32.mrb[0].mxu0
        %v3304 = vadd.f32 %v2999, %v3303
        %v3305 = vpop.f32.mrb[0].mxu0
        %v3306 = vpop.f32.mrb[0].mxu0
        %v3307 = vadd.f32 %v3002, %v3306
        %v3308 = vpop.f32.mrb[0].mxu0
        %3309 = vmatprep.mubr.bf16.mxu0 %v2299
        %3310 = vmatmul.mubr.bf16.gmra.mrb[0].mxu0 %v2458
        %v3311 = vpop.f32.mrb[0].mxu0
        %v3312 = vadd.f32 %v3007, %v3311
        %v3313 = vpop.f32.mrb[0].mxu0
        %v3314 = vpop.f32.mrb[0].mxu0
        %v3315 = vadd.f32 %v3010, %v3314
        %v3316 = vpop.f32.mrb[0].mxu0
        %3317 = vmatprep.mubr.bf16.mxu0 %v2300
        %3318 = vmatmul.mubr.bf16.gmra.mrb[0].mxu0 %v2460
        %v3319 = vpop.f32.mrb[0].mxu0
        %v3320 = vadd.f32 %v3015, %v3319
        %v3321 = vpop.f32.mrb[0].mxu0
        %v3322 = vpop.f32.mrb[0].mxu0
        %v3323 = vadd.f32 %v3018, %v3322
        %v3324 = vpop.f32.mrb[0].mxu0
        %3325 = vmatprep.mubr.bf16.mxu0 %v2301
        %3326 = vmatmul.mubr.bf16.gmra.mrb[0].mxu0 %v2461
        %v3327 = vpop.f32.mrb[0].mxu0
        %v3328 = vadd.f32 %v3023, %v3327
        %v3329 = vpop.f32.mrb[0].mxu0
        %v3330 = vpop.f32.mrb[0].mxu0
        %v3331 = vadd.f32 %v3026, %v3330
        %v3332 = vpop.f32.mrb[0].mxu0
        %3333 = vmatprep.mubr.bf16.mxu0 %v2302
        %3334 = vmatmul.mubr.bf16.gmra.mrb[0].mxu0 %v2462
        %v3335 = vpop.f32.mrb[0].mxu0
        %v3336 = vadd.f32 %v3031, %v3335
        %v3337 = vpop.f32.mrb[0].mxu0
        %v3338 = vpop.f32.mrb[0].mxu0
        %v3339 = vadd.f32 %v3034, %v3338
        %v3340 = vpop.f32.mrb[0].mxu0
        %3341 = vmatprep.mubr.bf16.mxu0 %v2303
        %3342 = vmatmul.mubr.bf16.gmra.mrb[0].mxu0 %v2463
        %v3343 = vpop.f32.mrb[0].mxu0
        %v3344 = vadd.f32 %v3039, %v3343
        %v3345 = vpop.f32.mrb[0].mxu0
        %v3346 = vpop.f32.mrb[0].mxu0
        %v3347 = vadd.f32 %v3042, %v3346
        %v3348 = vpop.f32.mrb[0].mxu0
        %3349 = vmatprep.mubr.bf16.mxu0 %v2304
        %3350 = vmatmul.mubr.bf16.gmra.mrb[0].mxu0 %v2464
        %v3351 = vpop.f32.mrb[0].mxu0
        %v3352 = vadd.f32 %v3047, %v3351
        %v3353 = vpop.f32.mrb[0].mxu0
        %v3354 = vpop.f32.mrb[0].mxu0
        %v3355 = vadd.f32 %v3050, %v3354
        %v3356 = vpop.f32.mrb[0].mxu0
        %3357 = vmatprep.mubr.bf16.mxu0 %v2305
        %3358 = vmatmul.mubr.bf16.gmra.mrb[0].mxu0 %v2465
        %v3359 = vpop.f32.mrb[0].mxu0
        %v3360 = vadd.f32 %v3055, %v3359
        %v3361 = vpop.f32.mrb[0].mxu0
        %v3362 = vpop.f32.mrb[0].mxu0
        %v3363 = vadd.f32 %v3058, %v3362
        %v3364 = vpop.f32.mrb[0].mxu0
        %3365 = vmatprep.mubr.bf16.mxu0 %v2306
        %3366 = vmatmul.mubr.bf16.gmra.mrb[0].mxu0 %v2466
        %v3367 = vpop.f32.mrb[0].mxu0
        %v3368 = vadd.f32 %v3063, %v3367
        %v3369 = vpop.f32.mrb[0].mxu0
        %v3370 = vpop.f32.mrb[0].mxu0
        %v3371 = vadd.f32 %v3066, %v3370
        %v3372 = vpop.f32.mrb[0].mxu0
        %3373 = vmatprep.mubr.bf16.mxu0 %v2307
        %3374 = vmatmul.mubr.bf16.gmra.mrb[0].mxu0 %v2467
        %v3375 = vpop.f32.mrb[0].mxu0
        %v3376 = vadd.f32 %v3071, %v3375
        %v3377 = vpop.f32.mrb[0].mxu0
        %v3378 = vpop.f32.mrb[0].mxu0
        %v3379 = vadd.f32 %v3074, %v3378
        %v3380 = vpop.f32.mrb[0].mxu0
        %3381 = vmatprep.mubr.bf16.mxu0 %v2308
        %3382 = vmatmul.mubr.bf16.gmra.mrb[0].mxu0 %v2468
        %v3383 = vpop.f32.mrb[0].mxu0
        %v3384 = vadd.f32 %v3079, %v3383
        %v3385 = vpop.f32.mrb[0].mxu0
        %v3386 = vpop.f32.mrb[0].mxu0
        %v3387 = vadd.f32 %v3082, %v3386
        %v3388 = vpop.f32.mrb[0].mxu0
        %3389 = vmatprep.mubr.bf16.mxu0 %v2309
        %3390 = vmatmul.mubr.bf16.gmra.mrb[0].mxu0 %v2469
        %v3391 = vpop.f32.mrb[0].mxu0
        %v3392 = vadd.f32 %v3087, %v3391
        %v3393 = vpop.f32.mrb[0].mxu0
        %v3394 = vpop.f32.mrb[0].mxu0
        %v3395 = vadd.f32 %v3090, %v3394
        %v3396 = vpop.f32.mrb[0].mxu0
        %3397 = vmatprep.mubr.bf16.mxu0 %v2310
        %3398 = vmatmul.mubr.bf16.gmra.mrb[0].mxu0 %v2470
        %v3399 = vpop.f32.mrb[0].mxu0
        %v3400 = vadd.f32 %v3095, %v3399
        %v3401 = vpop.f32.mrb[0].mxu0
        %v3402 = vpop.f32.mrb[0].mxu0
        %v3403 = vadd.f32 %v3098, %v3402
        %v3404 = vpop.f32.mrb[0].mxu0
        %3405 = vmatprep.mubr.bf16.mxu0 %v2311
        %3406 = vmatmul.mubr.bf16.gmra.mrb[0].mxu0 %v2471
        %v3407 = vpop.f32.mrb[0].mxu0
        %v3408 = vadd.f32 %v3103, %v3407
        %v3409 = vpop.f32.mrb[0].mxu0
        %v3410 = vpop.f32.mrb[0].mxu0
        %v3411 = vadd.f32 %v3106, %v3410
        %v3412 = vpop.f32.mrb[0].mxu0
        %3413 = vmatprep.mubr.bf16.mxu0 %v2312
        %3414 = vmatmul.mubr.bf16.gmra.mrb[0].mxu0 %v2472
        %v3415 = vpop.f32.mrb[0].mxu0
        %v3416 = vadd.f32 %v3111, %v3415
        %v3417 = vpop.f32.mrb[0].mxu0
        %v3418 = vpop.f32.mrb[0].mxu0
        %v3419 = vadd.f32 %v3114, %v3418
        %v3420 = vpop.f32.mrb[0].mxu0
        %3421 = vdwg.mxu0
        %3422 = vmatprep.subr.bf16.mxu0 0
        %3423 = vmatpush1.bf16.msra.mxu0 %v3229
        %3424 = vmatprep.subr.bf16.mxu0 0
        %3425 = vmatpush1.bf16.msra.mxu0 %v3230
        %3426 = vmatprep.subr.bf16.mxu0 0
        %3427 = vmatpush1.bf16.msra.mxu0 %v3231
        %3428 = vmatprep.subr.bf16.mxu0 0
        %3429 = vmatpush1.bf16.msra.mxu0 %v3232
        %3430 = vmatprep.subr.bf16.mxu0 0
        %3431 = vmatpush1.bf16.msra.mxu0 %v3233
        %3432 = vmatprep.subr.bf16.mxu0 0
        %3433 = vmatpush1.bf16.msra.mxu0 %v3234
        %3434 = vmatprep.subr.bf16.mxu0 0
        %3435 = vmatpush1.bf16.msra.mxu0 %v3235
        %3436 = vmatprep.subr.bf16.mxu0 0
        %3437 = vmatpush1.bf16.msra.mxu0 %v3236
        %3438 = vmatprep.subr.bf16.mxu0 0
        %3439 = vmatpush1.bf16.msra.mxu0 0
        %3440 = vmatprep.subr.bf16.mxu0 0
        %3441 = vmatpush1.bf16.msra.mxu0 0
        %3442 = vmatprep.subr.bf16.mxu0 0
        %3443 = vmatpush1.bf16.msra.mxu0 0
        %3444 = vmatprep.subr.bf16.mxu0 0
        %3445 = vmatpush1.bf16.msra.mxu0 0
        %3446 = vmatprep.subr.bf16.mxu0 0
        %3447 = vmatpush1.bf16.msra.mxu0 0
        %3448 = vmatprep.subr.bf16.mxu0 0
        %3449 = vmatpush1.bf16.msra.mxu0 0
        %3450 = vmatprep.subr.bf16.mxu0 0
        %3451 = vmatpush1.bf16.msra.mxu0 0
        %3452 = vmatprep.subr.bf16.mxu0 0
        %3453 = vmatpush1.bf16.msra.mxu0 0
        %3454 = vmatprep.mubr.bf16.mxu0 0
        %3455 = vmatmul.mubr.bf16.gmra.mrb[0].mxu0 %v2538
        %v3456 = vpop.f32.mrb[0].mxu0
        %v3457 = vadd.f32 %v3296, %v3456
        %v3458 = vpop.f32.mrb[0].mxu0
        %v3459 = vpop.f32.mrb[0].mxu0
        %v3460 = vadd.f32 %v3299, %v3459
        %v3461 = vpop.f32.mrb[0].mxu0
        %3462 = vmatprep.mubr.bf16.mxu0 0
        %3463 = vmatmul.mubr.bf16.gmra.mrb[0].mxu0 %v2539
        %v3464 = vpop.f32.mrb[0].mxu0
        %v3465 = vadd.f32 %v3304, %v3464
        %v3466 = vpop.f32.mrb[0].mxu0
        %v3467 = vpop.f32.mrb[0].mxu0
        %v3468 = vadd.f32 %v3307, %v3467
        %v3469 = vpop.f32.mrb[0].mxu0
        %3470 = vmatprep.mubr.bf16.mxu0 0
        %3471 = vmatmul.mubr.bf16.gmra.mrb[0].mxu0 %v2538
        %v3472 = vpop.f32.mrb[0].mxu0
        %v3473 = vadd.f32 %v3312, %v3472
        %v3474 = vpop.f32.mrb[0].mxu0
        %v3475 = vpop.f32.mrb[0].mxu0
        %v3476 = vadd.f32 %v3315, %v3475
        %v3477 = vpop.f32.mrb[0].mxu0
        %3478 = vmatprep.mubr.bf16.mxu0 0
        %3479 = vmatmul.mubr.bf16.gmra.mrb[0].mxu0 %v2540
        %v3480 = vpop.f32.mrb[0].mxu0
        %v3481 = vadd.f32 %v3320, %v3480
        %v3482 = vpop.f32.mrb[0].mxu0
        %v3483 = vpop.f32.mrb[0].mxu0
        %v3484 = vadd.f32 %v3323, %v3483
        %v3485 = vpop.f32.mrb[0].mxu0
        %3486 = vmatprep.mubr.bf16.mxu0 0
        %3487 = vmatmul.mubr.bf16.gmra.mrb[0].mxu0 %v2541
        %v3488 = vpop.f32.mrb[0].mxu0
        %v3489 = vadd.f32 %v3328, %v3488
        %v3490 = vpop.f32.mrb[0].mxu0
        %v3491 = vpop.f32.mrb[0].mxu0
        %v3492 = vadd.f32 %v3331, %v3491
        %v3493 = vpop.f32.mrb[0].mxu0
        %3494 = vmatprep.mubr.bf16.mxu0 0
        %3495 = vmatmul.mubr.bf16.gmra.mrb[0].mxu0 %v2542
        %v3496 = vpop.f32.mrb[0].mxu0
        %v3497 = vadd.f32 %v3336, %v3496
        %v3498 = vpop.f32.mrb[0].mxu0
        %v3499 = vpop.f32.mrb[0].mxu0
        %v3500 = vadd.f32 %v3339, %v3499
        %v3501 = vpop.f32.mrb[0].mxu0
        %3502 = vmatprep.mubr.bf16.mxu0 0
        %3503 = vmatmul.mubr.bf16.gmra.mrb[0].mxu0 %v2543
        %v3504 = vpop.f32.mrb[0].mxu0
        %v3505 = vadd.f32 %v3344, %v3504
        %v3506 = vpop.f32.mrb[0].mxu0
        %v3507 = vpop.f32.mrb[0].mxu0
        %v3508 = vadd.f32 %v3347, %v3507
        %v3509 = vpop.f32.mrb[0].mxu0
        %3510 = vmatprep.mubr.bf16.mxu0 0
        %3511 = vmatmul.mubr.bf16.gmra.mrb[0].mxu0 %v2544
        %v3512 = vpop.f32.mrb[0].mxu0
        %v3513 = vadd.f32 %v3352, %v3512
        %v3514 = vpop.f32.mrb[0].mxu0
        %v3515 = vpop.f32.mrb[0].mxu0
        %v3516 = vadd.f32 %v3355, %v3515
        %v3517 = vpop.f32.mrb[0].mxu0
        %3518 = vmatprep.mubr.bf16.mxu0 0
        %3519 = vmatmul.mubr.bf16.gmra.mrb[0].mxu0 %v2545
        %v3520 = vpop.f32.mrb[0].mxu0
        %v3521 = vadd.f32 %v3360, %v3520
        %v3522 = vpop.f32.mrb[0].mxu0
        %v3523 = vpop.f32.mrb[0].mxu0
        %v3524 = vadd.f32 %v3363, %v3523
        %v3525 = vpop.f32.mrb[0].mxu0
        %3526 = vmatprep.mubr.bf16.mxu0 0
        %3527 = vmatmul.mubr.bf16.gmra.mrb[0].mxu0 %v2546
        %v3528 = vpop.f32.mrb[0].mxu0
        %v3529 = vadd.f32 %v3368, %v3528
        %v3530 = vpop.f32.mrb[0].mxu0
        %v3531 = vpop.f32.mrb[0].mxu0
        %v3532 = vadd.f32 %v3371, %v3531
        %v3533 = vpop.f32.mrb[0].mxu0
        %3534 = vmatprep.mubr.bf16.mxu0 0
        %3535 = vmatmul.mubr.bf16.gmra.mrb[0].mxu0 %v2547
        %v3536 = vpop.f32.mrb[0].mxu0
        %v3537 = vadd.f32 %v3376, %v3536
        %v3538 = vpop.f32.mrb[0].mxu0
        %v3539 = vpop.f32.mrb[0].mxu0
        %v3540 = vadd.f32 %v3379, %v3539
        %v3541 = vpop.f32.mrb[0].mxu0
        %3542 = vmatprep.mubr.bf16.mxu0 0
        %3543 = vmatmul.mubr.bf16.gmra.mrb[0].mxu0 %v2548
        %v3544 = vpop.f32.mrb[0].mxu0
        %v3545 = vadd.f32 %v3384, %v3544
        %v3546 = vpop.f32.mrb[0].mxu0
        %v3547 = vpop.f32.mrb[0].mxu0
        %v3548 = vadd.f32 %v3387, %v3547
        %v3549 = vpop.f32.mrb[0].mxu0
        %3550 = vmatprep.mubr.bf16.mxu0 0
        %3551 = vmatmul.mubr.bf16.gmra.mrb[0].mxu0 %v2549
        %v3552 = vpop.f32.mrb[0].mxu0
        %v3553 = vadd.f32 %v3392, %v3552
        %v3554 = vpop.f32.mrb[0].mxu0
        %v3555 = vpop.f32.mrb[0].mxu0
        %v3556 = vadd.f32 %v3395, %v3555
        %v3557 = vpop.f32.mrb[0].mxu0
        %3558 = vmatprep.mubr.bf16.mxu0 0
        %3559 = vmatmul.mubr.bf16.gmra.mrb[0].mxu0 %v2550
        %v3560 = vpop.f32.mrb[0].mxu0
        %v3561 = vadd.f32 %v3400, %v3560
        %v3562 = vpop.f32.mrb[0].mxu0
        %v3563 = vpop.f32.mrb[0].mxu0
        %v3564 = vadd.f32 %v3403, %v3563
        %v3565 = vpop.f32.mrb[0].mxu0
        %3566 = vmatprep.mubr.bf16.mxu0 0
        %3567 = vmatmul.mubr.bf16.gmra.mrb[0].mxu0 %v2551
        %v3568 = vpop.f32.mrb[0].mxu0
        %v3569 = vadd.f32 %v3408, %v3568
        %v3570 = vpop.f32.mrb[0].mxu0
        %v3571 = vpop.f32.mrb[0].mxu0
        %v3572 = vadd.f32 %v3411, %v3571
        %v3573 = vpop.f32.mrb[0].mxu0
        %3574 = vmatprep.mubr.bf16.mxu0 0
        %3575 = vmatmul.mubr.bf16.gmra.mrb[0].mxu0 %v2552
        %v3576 = vpop.f32.mrb[0].mxu0
        %v3577 = vadd.f32 %v3416, %v3576
        %v3578 = vpop.f32.mrb[0].mxu0
        %v3579 = vpop.f32.mrb[0].mxu0
        %v3580 = vadd.f32 %v3419, %v3579
        %v3581 = vpop.f32.mrb[0].mxu0
        %3582 = vdwg.mxu0
        %s3583 = scalar_lea.vmem [#allocation7], 384
        %v3584 = vld [vmem:[%s3583] sm:$0xf]
        %v3585 = vld [vmem:[%s3583 + $0x4] sm:$0xf]
        %v3586 = vld [vmem:[%s3583 + $0x8] sm:$0xf]
        %v3587 = vld [vmem:[%s3583 + $0xc] sm:$0xf]
        %v3588 = vld [vmem:[%s3583 + $0x10] sm:$0xf]
        %v3589 = vld [vmem:[%s3583 + $0x14] sm:$0xf]
        %v3590 = vld [vmem:[%s3583 + $0x18] sm:$0xf]
        %v3591 = vld [vmem:[%s3583 + $0x1c] sm:$0xf]
        %v3592 = vld [vmem:[%s3583 + $0x20] sm:$0xf]
        %v3593 = vld [vmem:[%s3583 + $0x24] sm:$0xf]
        %v3594 = vld [vmem:[%s3583 + $0x28] sm:$0xf]
        %v3595 = vld [vmem:[%s3583 + $0x2c] sm:$0xf]
        %v3596 = vld [vmem:[%s3583 + $0x30] sm:$0xf]
        %v3597 = vld [vmem:[%s3583 + $0x34] sm:$0xf]
        %v3598 = vld [vmem:[%s3583 + $0x38] sm:$0xf]
        %v3599 = vld [vmem:[%s3583 + $0x3c] sm:$0xf]
        %v3600 = vld [vmem:[%s3583 + $0x40] sm:$0xf]
        %v3601 = vld [vmem:[%s3583 + $0x44] sm:$0xf]
        %v3602 = vld [vmem:[%s3583 + $0x48] sm:$0xf]
        %v3603 = vld [vmem:[%s3583 + $0x4c] sm:$0xf]
        %v3604 = vld [vmem:[%s3583 + $0x50] sm:$0xf]
        %v3605 = vld [vmem:[%s3583 + $0x54] sm:$0xf]
        %v3606 = vld [vmem:[%s3583 + $0x58] sm:$0xf]
        %v3607 = vld [vmem:[%s3583 + $0x5c] sm:$0xf]
        %v3608 = vld [vmem:[%s3583 + $0x60] sm:$0xf]
        %v3609 = vld [vmem:[%s3583 + $0x64] sm:$0xf]
        %v3610 = vld [vmem:[%s3583 + $0x68] sm:$0xf]
        %v3611 = vld [vmem:[%s3583 + $0x6c] sm:$0xf]
        %v3612 = vld [vmem:[%s3583 + $0x70] sm:$0xf]
        %v3613 = vld [vmem:[%s3583 + $0x74] sm:$0xf]
        %v3614 = vld [vmem:[%s3583 + $0x78] sm:$0xf]
        %v3615 = vld [vmem:[%s3583 + $0x7c] sm:$0xf]
        %v3616 = vld [vmem:[%s3583 + $0x80] sm:$0xf]
        %v3617 = vld [vmem:[%s3583 + $0x84] sm:$0xf]
        %v3618 = vld [vmem:[%s3583 + $0x88] sm:$0xf]
        %v3619 = vld [vmem:[%s3583 + $0x8c] sm:$0xf]
        %v3620 = vld [vmem:[%s3583 + $0x90] sm:$0xf]
        %v3621 = vld [vmem:[%s3583 + $0x94] sm:$0xf]
        %v3622 = vld [vmem:[%s3583 + $0x98] sm:$0xf]
        %v3623 = vld [vmem:[%s3583 + $0x9c] sm:$0xf]
        %v3624 = vld [vmem:[%s3583 + $0xa0] sm:$0xf]
        %v3625 = vld [vmem:[%s3583 + $0xa4] sm:$0xf]
        %v3626 = vld [vmem:[%s3583 + $0xa8] sm:$0xf]
        %v3627 = vld [vmem:[%s3583 + $0xac] sm:$0xf]
        %v3628 = vld [vmem:[%s3583 + $0xb0] sm:$0xf]
        %v3629 = vld [vmem:[%s3583 + $0xb4] sm:$0xf]
        %v3630 = vld [vmem:[%s3583 + $0xb8] sm:$0xf]
        %v3631 = vld [vmem:[%s3583 + $0xbc] sm:$0xf]
        %v3680 = vunpack.c.l.b16 %v3584
        %v3681 = vunpack.c.l.b16 %v3585
        %v3682 = vunpack.c.l.b16 %v3586
        %v3683 = vunpack.c.l.b16 %v3587
        %v3684 = vunpack.c.l.b16 %v3588
        %v3685 = vunpack.c.l.b16 %v3589
        %v3686 = vunpack.c.l.b16 %v3590
        %v3687 = vunpack.c.l.b16 %v3591
        %v3688 = vunpack.c.l.b16 %v3592
        %v3689 = vunpack.c.l.b16 %v3593
        %v3690 = vunpack.c.l.b16 %v3594
        %v3691 = vunpack.c.l.b16 %v3595
        %v3692 = vunpack.c.l.b16 %v3596
        %v3693 = vunpack.c.l.b16 %v3597
        %v3694 = vunpack.c.l.b16 %v3598
        %v3695 = vunpack.c.l.b16 %v3599
        %v3696 = vunpack.c.l.b16 %v3600
        %v3697 = vunpack.c.l.b16 %v3601
        %v3698 = vunpack.c.l.b16 %v3602
        %v3699 = vunpack.c.l.b16 %v3603
        %v3700 = vunpack.c.l.b16 %v3604
        %v3701 = vunpack.c.l.b16 %v3605
        %v3702 = vunpack.c.l.b16 %v3606
        %v3703 = vunpack.c.l.b16 %v3607
        %v3704 = vunpack.c.l.b16 %v3608
        %v3705 = vunpack.c.l.b16 %v3609
        %v3706 = vunpack.c.l.b16 %v3610
        %v3707 = vunpack.c.l.b16 %v3611
        %v3708 = vunpack.c.l.b16 %v3612
        %v3709 = vunpack.c.l.b16 %v3613
        %v3710 = vunpack.c.l.b16 %v3614
        %v3711 = vunpack.c.l.b16 %v3615
        %v3712 = vunpack.c.l.b16 %v3616
        %v3713 = vunpack.c.l.b16 %v3617
        %v3714 = vunpack.c.l.b16 %v3618
        %v3715 = vunpack.c.l.b16 %v3619
        %v3716 = vunpack.c.l.b16 %v3620
        %v3717 = vunpack.c.l.b16 %v3621
        %v3718 = vunpack.c.l.b16 %v3622
        %v3719 = vunpack.c.l.b16 %v3623
        %v3720 = vunpack.c.l.b16 %v3624
        %v3721 = vunpack.c.l.b16 %v3625
        %v3722 = vunpack.c.l.b16 %v3626
        %v3723 = vunpack.c.l.b16 %v3627
        %v3724 = vunpack.c.l.b16 %v3628
        %v3725 = vunpack.c.l.b16 %v3629
        %v3726 = vunpack.c.l.b16 %v3630
        %v3727 = vunpack.c.l.b16 %v3631
        %v3728 = vpack.c.b16 %v3681, %v3680
        %v3729 = vpack.c.b16 %v3683, %v3682
        %v3730 = vpack.c.b16 %v3685, %v3684
        %v3731 = vpack.c.b16 %v3687, %v3686
        %v3732 = vpack.c.b16 %v3689, %v3688
        %v3733 = vpack.c.b16 %v3691, %v3690
        %v3734 = vpack.c.b16 %v3693, %v3692
        %v3735 = vpack.c.b16 %v3695, %v3694
        %v3736 = vpack.c.b16 %v3697, %v3696
        %v3737 = vpack.c.b16 %v3699, %v3698
        %v3738 = vpack.c.b16 %v3701, %v3700
        %v3739 = vpack.c.b16 %v3703, %v3702
        %v3740 = vpack.c.b16 %v3705, %v3704
        %v3741 = vpack.c.b16 %v3707, %v3706
        %v3742 = vpack.c.b16 %v3709, %v3708
        %v3743 = vpack.c.b16 %v3711, %v3710
        %v3744 = vpack.c.b16 %v3713, %v3712
        %v3745 = vpack.c.b16 %v3715, %v3714
        %v3746 = vpack.c.b16 %v3717, %v3716
        %v3747 = vpack.c.b16 %v3719, %v3718
        %v3748 = vpack.c.b16 %v3721, %v3720
        %v3749 = vpack.c.b16 %v3723, %v3722
        %v3750 = vpack.c.b16 %v3725, %v3724
        %v3751 = vpack.c.b16 %v3727, %v3726
        %3776 = vmatprep.subr.bf16.mxu0 0
        %3777 = vmatpush1.bf16.msra.mxu0 %v3728
        %3778 = vmatprep.subr.bf16.mxu0 0
        %3779 = vmatpush1.bf16.msra.mxu0 %v3729
        %3780 = vmatprep.subr.bf16.mxu0 0
        %3781 = vmatpush1.bf16.msra.mxu0 %v3730
        %3782 = vmatprep.subr.bf16.mxu0 0
        %3783 = vmatpush1.bf16.msra.mxu0 %v3731
        %3784 = vmatprep.subr.bf16.mxu0 0
        %3785 = vmatpush1.bf16.msra.mxu0 %v3732
        %3786 = vmatprep.subr.bf16.mxu0 0
        %3787 = vmatpush1.bf16.msra.mxu0 %v3733
        %3788 = vmatprep.subr.bf16.mxu0 0
        %3789 = vmatpush1.bf16.msra.mxu0 %v3734
        %3790 = vmatprep.subr.bf16.mxu0 0
        %3791 = vmatpush1.bf16.msra.mxu0 %v3735
        %3792 = vmatprep.subr.bf16.mxu0 0
        %3793 = vmatpush1.bf16.msra.mxu0 %v3736
        %3794 = vmatprep.subr.bf16.mxu0 0
        %3795 = vmatpush1.bf16.msra.mxu0 %v3737
        %3796 = vmatprep.subr.bf16.mxu0 0
        %3797 = vmatpush1.bf16.msra.mxu0 %v3738
        %3798 = vmatprep.subr.bf16.mxu0 0
        %3799 = vmatpush1.bf16.msra.mxu0 %v3739
        %3800 = vmatprep.subr.bf16.mxu0 0
        %3801 = vmatpush1.bf16.msra.mxu0 %v3740
        %3802 = vmatprep.subr.bf16.mxu0 0
        %3803 = vmatpush1.bf16.msra.mxu0 %v3741
        %3804 = vmatprep.subr.bf16.mxu0 0
        %3805 = vmatpush1.bf16.msra.mxu0 %v3742
        %3806 = vmatprep.subr.bf16.mxu0 0
        %3807 = vmatpush1.bf16.msra.mxu0 %v3743
        %3808 = vmatprep.mubr.bf16.mxu0 %v2299
        %3809 = vmatmul.mubr.bf16.gmra.mrb[0].mxu0 %v2458
        %v3810 = vpop.f32.mrb[0].mxu0
        %v3811 = vadd.f32 0.0, %v3810
        %v3812 = vpop.f32.mrb[0].mxu0
        %v3813 = vpop.f32.mrb[0].mxu0
        %v3814 = vadd.f32 0.0, %v3813
        %v3815 = vpop.f32.mrb[0].mxu0
        %3816 = vmatprep.mubr.bf16.mxu0 %v2300
        %3817 = vmatmul.mubr.bf16.gmra.mrb[0].mxu0 %v2460
        %v3818 = vpop.f32.mrb[0].mxu0
        %v3819 = vadd.f32 0.0, %v3818
        %v3820 = vpop.f32.mrb[0].mxu0
        %v3821 = vpop.f32.mrb[0].mxu0
        %v3822 = vadd.f32 0.0, %v3821
        %v3823 = vpop.f32.mrb[0].mxu0
        %3824 = vmatprep.mubr.bf16.mxu0 %v2301
        %3825 = vmatmul.mubr.bf16.gmra.mrb[0].mxu0 %v2461
        %v3826 = vpop.f32.mrb[0].mxu0
        %v3827 = vadd.f32 0.0, %v3826
        %v3828 = vpop.f32.mrb[0].mxu0
        %v3829 = vpop.f32.mrb[0].mxu0
        %v3830 = vadd.f32 0.0, %v3829
        %v3831 = vpop.f32.mrb[0].mxu0
        %3832 = vmatprep.mubr.bf16.mxu0 %v2302
        %3833 = vmatmul.mubr.bf16.gmra.mrb[0].mxu0 %v2462
        %v3834 = vpop.f32.mrb[0].mxu0
        %v3835 = vadd.f32 0.0, %v3834
        %v3836 = vpop.f32.mrb[0].mxu0
        %v3837 = vpop.f32.mrb[0].mxu0
        %v3838 = vadd.f32 0.0, %v3837
        %v3839 = vpop.f32.mrb[0].mxu0
        %3840 = vmatprep.mubr.bf16.mxu0 %v2303
        %3841 = vmatmul.mubr.bf16.gmra.mrb[0].mxu0 %v2463
        %v3842 = vpop.f32.mrb[0].mxu0
        %v3843 = vadd.f32 0.0, %v3842
        %v3844 = vpop.f32.mrb[0].mxu0
        %v3845 = vpop.f32.mrb[0].mxu0
        %v3846 = vadd.f32 0.0, %v3845
        %v3847 = vpop.f32.mrb[0].mxu0
        %3848 = vmatprep.mubr.bf16.mxu0 %v2304
        %3849 = vmatmul.mubr.bf16.gmra.mrb[0].mxu0 %v2464
        %v3850 = vpop.f32.mrb[0].mxu0
        %v3851 = vadd.f32 0.0, %v3850
        %v3852 = vpop.f32.mrb[0].mxu0
        %v3853 = vpop.f32.mrb[0].mxu0
        %v3854 = vadd.f32 0.0, %v3853
        %v3855 = vpop.f32.mrb[0].mxu0
        %3856 = vmatprep.mubr.bf16.mxu0 %v2305
        %3857 = vmatmul.mubr.bf16.gmra.mrb[0].mxu0 %v2465
        %v3858 = vpop.f32.mrb[0].mxu0
        %v3859 = vadd.f32 0.0, %v3858
        %v3860 = vpop.f32.mrb[0].mxu0
        %v3861 = vpop.f32.mrb[0].mxu0
        %v3862 = vadd.f32 0.0, %v3861
        %v3863 = vpop.f32.mrb[0].mxu0
        %3864 = vmatprep.mubr.bf16.mxu0 %v2306
        %3865 = vmatmul.mubr.bf16.gmra.mrb[0].mxu0 %v2466
        %v3866 = vpop.f32.mrb[0].mxu0
        %v3867 = vadd.f32 0.0, %v3866
        %v3868 = vpop.f32.mrb[0].mxu0
        %v3869 = vpop.f32.mrb[0].mxu0
        %v3870 = vadd.f32 0.0, %v3869
        %v3871 = vpop.f32.mrb[0].mxu0
        %3872 = vmatprep.mubr.bf16.mxu0 %v2307
        %3873 = vmatmul.mubr.bf16.gmra.mrb[0].mxu0 %v2467
        %v3874 = vpop.f32.mrb[0].mxu0
        %v3875 = vadd.f32 0.0, %v3874
        %v3876 = vpop.f32.mrb[0].mxu0
        %v3877 = vpop.f32.mrb[0].mxu0
        %v3878 = vadd.f32 0.0, %v3877
        %v3879 = vpop.f32.mrb[0].mxu0
        %3880 = vmatprep.mubr.bf16.mxu0 %v2308
        %3881 = vmatmul.mubr.bf16.gmra.mrb[0].mxu0 %v2468
        %v3882 = vpop.f32.mrb[0].mxu0
        %v3883 = vadd.f32 0.0, %v3882
        %v3884 = vpop.f32.mrb[0].mxu0
        %v3885 = vpop.f32.mrb[0].mxu0
        %v3886 = vadd.f32 0.0, %v3885
        %v3887 = vpop.f32.mrb[0].mxu0
        %3888 = vmatprep.mubr.bf16.mxu0 %v2309
        %3889 = vmatmul.mubr.bf16.gmra.mrb[0].mxu0 %v2469
        %v3890 = vpop.f32.mrb[0].mxu0
        %v3891 = vadd.f32 0.0, %v3890
        %v3892 = vpop.f32.mrb[0].mxu0
        %v3893 = vpop.f32.mrb[0].mxu0
        %v3894 = vadd.f32 0.0, %v3893
        %v3895 = vpop.f32.mrb[0].mxu0
        %3896 = vmatprep.mubr.bf16.mxu0 %v2310
        %3897 = vmatmul.mubr.bf16.gmra.mrb[0].mxu0 %v2470
        %v3898 = vpop.f32.mrb[0].mxu0
        %v3899 = vadd.f32 0.0, %v3898
        %v3900 = vpop.f32.mrb[0].mxu0
        %v3901 = vpop.f32.mrb[0].mxu0
        %v3902 = vadd.f32 0.0, %v3901
        %v3903 = vpop.f32.mrb[0].mxu0
        %3904 = vmatprep.mubr.bf16.mxu0 %v2311
        %3905 = vmatmul.mubr.bf16.gmra.mrb[0].mxu0 %v2471
        %v3906 = vpop.f32.mrb[0].mxu0
        %v3907 = vadd.f32 0.0, %v3906
        %v3908 = vpop.f32.mrb[0].mxu0
        %v3909 = vpop.f32.mrb[0].mxu0
        %v3910 = vadd.f32 0.0, %v3909
        %v3911 = vpop.f32.mrb[0].mxu0
        %3912 = vmatprep.mubr.bf16.mxu0 %v2312
        %3913 = vmatmul.mubr.bf16.gmra.mrb[0].mxu0 %v2472
        %v3914 = vpop.f32.mrb[0].mxu0
        %v3915 = vadd.f32 0.0, %v3914
        %v3916 = vpop.f32.mrb[0].mxu0
        %v3917 = vpop.f32.mrb[0].mxu0
        %v3918 = vadd.f32 0.0, %v3917
        %v3919 = vpop.f32.mrb[0].mxu0
        %3920 = vmatprep.mubr.bf16.mxu0 %v2313
        %3921 = vmatmul.mubr.bf16.gmra.mrb[0].mxu0 %v2473
        %v3922 = vpop.f32.mrb[0].mxu0
        %v3923 = vadd.f32 0.0, %v3922
        %v3924 = vpop.f32.mrb[0].mxu0
        %v3925 = vpop.f32.mrb[0].mxu0
        %v3926 = vadd.f32 0.0, %v3925
        %v3927 = vpop.f32.mrb[0].mxu0
        %3928 = vmatprep.mubr.bf16.mxu0 %v2312
        %3929 = vmatmul.mubr.bf16.gmra.mrb[0].mxu0 %v2472
        %v3930 = vpop.f32.mrb[0].mxu0
        %v3931 = vadd.f32 0.0, %v3930
        %v3932 = vpop.f32.mrb[0].mxu0
        %v3933 = vpop.f32.mrb[0].mxu0
        %v3934 = vadd.f32 0.0, %v3933
        %v3935 = vpop.f32.mrb[0].mxu0
        %3936 = vdwg.mxu0
        %3937 = vmatprep.subr.bf16.mxu0 0
        %3938 = vmatpush1.bf16.msra.mxu0 %v3744
        %3939 = vmatprep.subr.bf16.mxu0 0
        %3940 = vmatpush1.bf16.msra.mxu0 %v3745
        %3941 = vmatprep.subr.bf16.mxu0 0
        %3942 = vmatpush1.bf16.msra.mxu0 %v3746
        %3943 = vmatprep.subr.bf16.mxu0 0
        %3944 = vmatpush1.bf16.msra.mxu0 %v3747
        %3945 = vmatprep.subr.bf16.mxu0 0
        %3946 = vmatpush1.bf16.msra.mxu0 %v3748
        %3947 = vmatprep.subr.bf16.mxu0 0
        %3948 = vmatpush1.bf16.msra.mxu0 %v3749
        %3949 = vmatprep.subr.bf16.mxu0 0
        %3950 = vmatpush1.bf16.msra.mxu0 %v3750
        %3951 = vmatprep.subr.bf16.mxu0 0
        %3952 = vmatpush1.bf16.msra.mxu0 %v3751
        %3953 = vmatprep.subr.bf16.mxu0 0
        %3954 = vmatpush1.bf16.msra.mxu0 0
        %3955 = vmatprep.subr.bf16.mxu0 0
        %3956 = vmatpush1.bf16.msra.mxu0 0
        %3957 = vmatprep.subr.bf16.mxu0 0
        %3958 = vmatpush1.bf16.msra.mxu0 0
        %3959 = vmatprep.subr.bf16.mxu0 0
        %3960 = vmatpush1.bf16.msra.mxu0 0
        %3961 = vmatprep.subr.bf16.mxu0 0
        %3962 = vmatpush1.bf16.msra.mxu0 0
        %3963 = vmatprep.subr.bf16.mxu0 0
        %3964 = vmatpush1.bf16.msra.mxu0 0
        %3965 = vmatprep.subr.bf16.mxu0 0
        %3966 = vmatpush1.bf16.msra.mxu0 0
        %3967 = vmatprep.subr.bf16.mxu0 0
        %3968 = vmatpush1.bf16.msra.mxu0 0
        %3969 = vmatprep.mubr.bf16.mxu0 0
        %3970 = vmatmul.mubr.bf16.gmra.mrb[0].mxu0 %v2538
        %v3971 = vpop.f32.mrb[0].mxu0
        %v3972 = vadd.f32 %v3811, %v3971
        %v3973 = vpop.f32.mrb[0].mxu0
        %v3974 = vpop.f32.mrb[0].mxu0
        %v3975 = vadd.f32 %v3814, %v3974
        %v3976 = vpop.f32.mrb[0].mxu0
        %3977 = vmatprep.mubr.bf16.mxu0 0
        %3978 = vmatmul.mubr.bf16.gmra.mrb[0].mxu0 %v2540
        %v3979 = vpop.f32.mrb[0].mxu0
        %v3980 = vadd.f32 %v3819, %v3979
        %v3981 = vpop.f32.mrb[0].mxu0
        %v3982 = vpop.f32.mrb[0].mxu0
        %v3983 = vadd.f32 %v3822, %v3982
        %v3984 = vpop.f32.mrb[0].mxu0
        %3985 = vmatprep.mubr.bf16.mxu0 0
        %3986 = vmatmul.mubr.bf16.gmra.mrb[0].mxu0 %v2541
        %v3987 = vpop.f32.mrb[0].mxu0
        %v3988 = vadd.f32 %v3827, %v3987
        %v3989 = vpop.f32.mrb[0].mxu0
        %v3990 = vpop.f32.mrb[0].mxu0
        %v3991 = vadd.f32 %v3830, %v3990
        %v3992 = vpop.f32.mrb[0].mxu0
        %3993 = vmatprep.mubr.bf16.mxu0 0
        %3994 = vmatmul.mubr.bf16.gmra.mrb[0].mxu0 %v2542
        %v3995 = vpop.f32.mrb[0].mxu0
        %v3996 = vadd.f32 %v3835, %v3995
        %v3997 = vpop.f32.mrb[0].mxu0
        %v3998 = vpop.f32.mrb[0].mxu0
        %v3999 = vadd.f32 %v3838, %v3998
        %v4000 = vpop.f32.mrb[0].mxu0
        %4001 = vmatprep.mubr.bf16.mxu0 0
        %4002 = vmatmul.mubr.bf16.gmra.mrb[0].mxu0 %v2543
        %v4003 = vpop.f32.mrb[0].mxu0
        %v4004 = vadd.f32 %v3843, %v4003
        %v4005 = vpop.f32.mrb[0].mxu0
        %v4006 = vpop.f32.mrb[0].mxu0
        %v4007 = vadd.f32 %v3846, %v4006
        %v4008 = vpop.f32.mrb[0].mxu0
        %4009 = vmatprep.mubr.bf16.mxu0 0
        %4010 = vmatmul.mubr.bf16.gmra.mrb[0].mxu0 %v2544
        %v4011 = vpop.f32.mrb[0].mxu0
        %v4012 = vadd.f32 %v3851, %v4011
        %v4013 = vpop.f32.mrb[0].mxu0
        %v4014 = vpop.f32.mrb[0].mxu0
        %v4015 = vadd.f32 %v3854, %v4014
        %v4016 = vpop.f32.mrb[0].mxu0
        %4017 = vmatprep.mubr.bf16.mxu0 0
        %4018 = vmatmul.mubr.bf16.gmra.mrb[0].mxu0 %v2545
        %v4019 = vpop.f32.mrb[0].mxu0
        %v4020 = vadd.f32 %v3859, %v4019
        %v4021 = vpop.f32.mrb[0].mxu0
        %v4022 = vpop.f32.mrb[0].mxu0
        %v4023 = vadd.f32 %v3862, %v4022
        %v4024 = vpop.f32.mrb[0].mxu0
        %4025 = vmatprep.mubr.bf16.mxu0 0
        %4026 = vmatmul.mubr.bf16.gmra.mrb[0].mxu0 %v2546
        %v4027 = vpop.f32.mrb[0].mxu0
        %v4028 = vadd.f32 %v3867, %v4027
        %v4029 = vpop.f32.mrb[0].mxu0
        %v4030 = vpop.f32.mrb[0].mxu0
        %v4031 = vadd.f32 %v3870, %v4030
        %v4032 = vpop.f32.mrb[0].mxu0
        %4033 = vmatprep.mubr.bf16.mxu0 0
        %4034 = vmatmul.mubr.bf16.gmra.mrb[0].mxu0 %v2547
        %v4035 = vpop.f32.mrb[0].mxu0
        %v4036 = vadd.f32 %v3875, %v4035
        %v4037 = vpop.f32.mrb[0].mxu0
        %v4038 = vpop.f32.mrb[0].mxu0
        %v4039 = vadd.f32 %v3878, %v4038
        %v4040 = vpop.f32.mrb[0].mxu0
        %4041 = vmatprep.mubr.bf16.mxu0 0
        %4042 = vmatmul.mubr.bf16.gmra.mrb[0].mxu0 %v2548
        %v4043 = vpop.f32.mrb[0].mxu0
        %v4044 = vadd.f32 %v3883, %v4043
        %v4045 = vpop.f32.mrb[0].mxu0
        %v4046 = vpop.f32.mrb[0].mxu0
        %v4047 = vadd.f32 %v3886, %v4046
        %v4048 = vpop.f32.mrb[0].mxu0
        %4049 = vmatprep.mubr.bf16.mxu0 0
        %4050 = vmatmul.mubr.bf16.gmra.mrb[0].mxu0 %v2549
        %v4051 = vpop.f32.mrb[0].mxu0
        %v4052 = vadd.f32 %v3891, %v4051
        %v4053 = vpop.f32.mrb[0].mxu0
        %v4054 = vpop.f32.mrb[0].mxu0
        %v4055 = vadd.f32 %v3894, %v4054
        %v4056 = vpop.f32.mrb[0].mxu0
        %4057 = vmatprep.mubr.bf16.mxu0 0
        %4058 = vmatmul.mubr.bf16.gmra.mrb[0].mxu0 %v2550
        %v4059 = vpop.f32.mrb[0].mxu0
        %v4060 = vadd.f32 %v3899, %v4059
        %v4061 = vpop.f32.mrb[0].mxu0
        %v4062 = vpop.f32.mrb[0].mxu0
        %v4063 = vadd.f32 %v3902, %v4062
        %v4064 = vpop.f32.mrb[0].mxu0
        %4065 = vmatprep.mubr.bf16.mxu0 0
        %4066 = vmatmul.mubr.bf16.gmra.mrb[0].mxu0 %v2551
        %v4067 = vpop.f32.mrb[0].mxu0
        %v4068 = vadd.f32 %v3907, %v4067
        %v4069 = vpop.f32.mrb[0].mxu0
        %v4070 = vpop.f32.mrb[0].mxu0
        %v4071 = vadd.f32 %v3910, %v4070
        %v4072 = vpop.f32.mrb[0].mxu0
        %4073 = vmatprep.mubr.bf16.mxu0 0
        %4074 = vmatmul.mubr.bf16.gmra.mrb[0].mxu0 %v2552
        %v4075 = vpop.f32.mrb[0].mxu0
        %v4076 = vadd.f32 %v3915, %v4075
        %v4077 = vpop.f32.mrb[0].mxu0
        %v4078 = vpop.f32.mrb[0].mxu0
        %v4079 = vadd.f32 %v3918, %v4078
        %v4080 = vpop.f32.mrb[0].mxu0
        %4081 = vmatprep.mubr.bf16.mxu0 0
        %4082 = vmatmul.mubr.bf16.gmra.mrb[0].mxu0 %v2553
        %v4083 = vpop.f32.mrb[0].mxu0
        %v4084 = vadd.f32 %v3923, %v4083
        %v4085 = vpop.f32.mrb[0].mxu0
        %v4086 = vpop.f32.mrb[0].mxu0
        %v4087 = vadd.f32 %v3926, %v4086
        %v4088 = vpop.f32.mrb[0].mxu0
        %4089 = vmatprep.mubr.bf16.mxu0 0
        %4090 = vmatmul.mubr.bf16.gmra.mrb[0].mxu0 %v2552
        %v4091 = vpop.f32.mrb[0].mxu0
        %v4092 = vadd.f32 %v3931, %v4091
        %v4093 = vpop.f32.mrb[0].mxu0
        %v4094 = vpop.f32.mrb[0].mxu0
        %v4095 = vadd.f32 %v3934, %v4094
        %v4096 = vpop.f32.mrb[0].mxu0
        %4097 = vdwg.mxu0
        %v4098 = vadd.f32 %v3457, %v3972
        %v4099 = vadd.f32 %v3460, %v3975
        %v4100 = vadd.f32 %v3465, %v3980
        %v4101 = vadd.f32 %v3468, %v3983
        %v4102 = vadd.f32 %v3473, %v3988
        %v4103 = vadd.f32 %v3476, %v3991
        %v4104 = vadd.f32 %v3481, %v3996
        %v4105 = vadd.f32 %v3484, %v3999
        %v4106 = vadd.f32 %v3489, %v4004
        %v4107 = vadd.f32 %v3492, %v4007
        %v4108 = vadd.f32 %v3497, %v4012
        %v4109 = vadd.f32 %v3500, %v4015
        %v4110 = vadd.f32 %v3505, %v4020
        %v4111 = vadd.f32 %v3508, %v4023
        %v4112 = vadd.f32 %v3513, %v4028
        %v4113 = vadd.f32 %v3516, %v4031
        %v4114 = vadd.f32 %v3521, %v4036
        %v4115 = vadd.f32 %v3524, %v4039
        %v4116 = vadd.f32 %v3529, %v4044
        %v4117 = vadd.f32 %v3532, %v4047
        %v4118 = vadd.f32 %v3537, %v4052
        %v4119 = vadd.f32 %v3540, %v4055
        %v4120 = vadd.f32 %v3545, %v4060
        %v4121 = vadd.f32 %v3548, %v4063
        %v4122 = vadd.f32 %v3553, %v4068
        %v4123 = vadd.f32 %v3556, %v4071
        %v4124 = vadd.f32 %v3561, %v4076
        %v4125 = vadd.f32 %v3564, %v4079
        %v4126 = vadd.f32 %v3569, %v4084
        %v4127 = vadd.f32 %v3572, %v4087
        %v4128 = vadd.f32 %v3577, %v4092
        %v4129 = vadd.f32 %v3580, %v4095
        %v4130 = vadd.f32 %v4098, %v4099
        %v4131 = vadd.f32 %v4130, %v4100
        %v4132 = vadd.f32 %v4131, %v4101
        %v4133 = vadd.f32 %v4132, %v4102
        %v4134 = vadd.f32 %v4133, %v4103
        %v4135 = vadd.f32 %v4134, %v4104
        %v4136 = vadd.f32 %v4135, %v4105
        %v4137 = vadd.f32 %v4136, %v4106
        %v4138 = vadd.f32 %v4137, %v4107
        %v4139 = vadd.f32 %v4138, %v4108
        %v4140 = vadd.f32 %v4139, %v4109
        %v4141 = vadd.f32 %v4140, %v4110
        %v4142 = vadd.f32 %v4141, %v4111
        %v4143 = vadd.f32 %v4142, %v4112
        %v4144 = vadd.f32 %v4143, %v4113
        %v4145 = vadd.f32 %v4144, %v4114
        %v4146 = vadd.f32 %v4145, %v4115
        %v4147 = vadd.f32 %v4146, %v4116
        %v4148 = vadd.f32 %v4147, %v4117
        %v4149 = vadd.f32 %v4148, %v4118
        %v4150 = vadd.f32 %v4149, %v4119
        %v4151 = vadd.f32 %v4150, %v4120
        %v4152 = vadd.f32 %v4151, %v4121
        %v4153 = vadd.f32 %v4152, %v4122
        %v4154 = vadd.f32 %v4153, %v4123
        %v4155 = vadd.f32 %v4154, %v4124
        %v4156 = vadd.f32 %v4155, %v4125
        %v4157 = vadd.f32 %v4156, %v4126
        %v4158 = vadd.f32 %v4157, %v4127
        %v4159 = vadd.f32 %v4158, %v4128
        %v4160 = vadd.f32 %v4159, %v4129
        %v4161 = vrot.slane %v4160, 4
        %v4162 = vadd.f32 %v4160, %v4161
        %v4163 = vrot.slane %v4162, 2
        %v4164 = vadd.f32 %v4162, %v4163
        %v4165 = vrot.slane %v4164, 1
        %v4166 = vadd.f32 %v4164, %v4165
        %v4167 = vmul.f32 %v4098, %v4098
        %v4168 = vmul.f32 %v4099, %v4099
        %v4169 = vmul.f32 %v4100, %v4100
        %v4170 = vmul.f32 %v4101, %v4101
        %v4171 = vmul.f32 %v4102, %v4102
        %v4172 = vmul.f32 %v4103, %v4103
        %v4173 = vmul.f32 %v4104, %v4104
        %v4174 = vmul.f32 %v4105, %v4105
        %v4175 = vmul.f32 %v4106, %v4106
        %v4176 = vmul.f32 %v4107, %v4107
        %v4177 = vmul.f32 %v4108, %v4108
        %v4178 = vmul.f32 %v4109, %v4109
        %v4179 = vmul.f32 %v4110, %v4110
        %v4180 = vmul.f32 %v4111, %v4111
        %v4181 = vmul.f32 %v4112, %v4112
        %v4182 = vmul.f32 %v4113, %v4113
        %v4183 = vmul.f32 %v4114, %v4114
        %v4184 = vmul.f32 %v4115, %v4115
        %v4185 = vmul.f32 %v4116, %v4116
        %v4186 = vmul.f32 %v4117, %v4117
        %v4187 = vmul.f32 %v4118, %v4118
        %v4188 = vmul.f32 %v4119, %v4119
        %v4189 = vmul.f32 %v4120, %v4120
        %v4190 = vmul.f32 %v4121, %v4121
        %v4191 = vmul.f32 %v4122, %v4122
        %v4192 = vmul.f32 %v4123, %v4123
        %v4193 = vmul.f32 %v4124, %v4124
        %v4194 = vmul.f32 %v4125, %v4125
        %v4195 = vmul.f32 %v4126, %v4126
        %v4196 = vmul.f32 %v4127, %v4127
        %v4197 = vmul.f32 %v4128, %v4128
        %v4198 = vmul.f32 %v4129, %v4129
        %v4199 = vadd.f32 %v4167, %v4168
        %v4200 = vadd.f32 %v4199, %v4169
        %v4201 = vadd.f32 %v4200, %v4170
        %v4202 = vadd.f32 %v4201, %v4171
        %v4203 = vadd.f32 %v4202, %v4172
        %v4204 = vadd.f32 %v4203, %v4173
        %v4205 = vadd.f32 %v4204, %v4174
        %v4206 = vadd.f32 %v4205, %v4175
        %v4207 = vadd.f32 %v4206, %v4176
        %v4208 = vadd.f32 %v4207, %v4177
        %v4209 = vadd.f32 %v4208, %v4178
        %v4210 = vadd.f32 %v4209, %v4179
        %v4211 = vadd.f32 %v4210, %v4180
        %v4212 = vadd.f32 %v4211, %v4181
        %v4213 = vadd.f32 %v4212, %v4182
        %v4214 = vadd.f32 %v4213, %v4183
        %v4215 = vadd.f32 %v4214, %v4184
        %v4216 = vadd.f32 %v4215, %v4185
        %v4217 = vadd.f32 %v4216, %v4186
        %v4218 = vadd.f32 %v4217, %v4187
        %v4219 = vadd.f32 %v4218, %v4188
        %v4220 = vadd.f32 %v4219, %v4189
        %v4221 = vadd.f32 %v4220, %v4190
        %v4222 = vadd.f32 %v4221, %v4191
        %v4223 = vadd.f32 %v4222, %v4192
        %v4224 = vadd.f32 %v4223, %v4193
        %v4225 = vadd.f32 %v4224, %v4194
        %v4226 = vadd.f32 %v4225, %v4195
        %v4227 = vadd.f32 %v4226, %v4196
        %v4228 = vadd.f32 %v4227, %v4197
        %v4229 = vadd.f32 %v4228, %v4198
        %v4230 = vrot.slane %v4229, 4
        %v4231 = vadd.f32 %v4229, %v4230
        %v4232 = vrot.slane %v4231, 2
        %v4233 = vadd.f32 %v4231, %v4232
        %v4234 = vrot.slane %v4233, 1
        %v4235 = vadd.f32 %v4233, %v4234
        %v4236 = vmul.f32 %v4166, 0.00390625
        %v4237 = vmul.f32 %v4235, 0.00390625
        %v4238 = vmul.f32 %v4236, %v4236
        %v4239 = vsub.f32 %v4237, %v4238
        %v4240 = vmax.f32 %v4239, 0.0
        %v4241 = vsub.f32 %v4098, %v4236
        %v4242 = vsub.f32 %v4099, %v4236
        %v4243 = vsub.f32 %v4100, %v4236
        %v4244 = vsub.f32 %v4101, %v4236
        %v4245 = vsub.f32 %v4102, %v4236
        %v4246 = vsub.f32 %v4103, %v4236
        %v4247 = vsub.f32 %v4104, %v4236
        %v4248 = vsub.f32 %v4105, %v4236
        %v4249 = vsub.f32 %v4106, %v4236
        %v4250 = vsub.f32 %v4107, %v4236
        %v4251 = vsub.f32 %v4108, %v4236
        %v4252 = vsub.f32 %v4109, %v4236
        %v4253 = vsub.f32 %v4110, %v4236
        %v4254 = vsub.f32 %v4111, %v4236
        %v4255 = vsub.f32 %v4112, %v4236
        %v4256 = vsub.f32 %v4113, %v4236
        %v4257 = vsub.f32 %v4114, %v4236
        %v4258 = vsub.f32 %v4115, %v4236
        %v4259 = vsub.f32 %v4116, %v4236
        %v4260 = vsub.f32 %v4117, %v4236
        %v4261 = vsub.f32 %v4118, %v4236
        %v4262 = vsub.f32 %v4119, %v4236
        %v4263 = vsub.f32 %v4120, %v4236
        %v4264 = vsub.f32 %v4121, %v4236
        %v4265 = vsub.f32 %v4122, %v4236
        %v4266 = vsub.f32 %v4123, %v4236
        %v4267 = vsub.f32 %v4124, %v4236
        %v4268 = vsub.f32 %v4125, %v4236
        %v4269 = vsub.f32 %v4126, %v4236
        %v4270 = vsub.f32 %v4127, %v4236
        %v4271 = vsub.f32 %v4128, %v4236
        %v4272 = vsub.f32 %v4129, %v4236
        %v4273 = vadd.f32 %v4240, 1e-05
        %v4274 = vrsqrt.pop %v4273
        %v4275 = vmul.f32 %v4241, %v4274
        %v4276 = vmul.f32 %v4242, %v4274
        %v4277 = vmul.f32 %v4243, %v4274
        %v4278 = vmul.f32 %v4244, %v4274
        %v4279 = vmul.f32 %v4245, %v4274
        %v4280 = vmul.f32 %v4246, %v4274
        %v4281 = vmul.f32 %v4247, %v4274
        %v4282 = vmul.f32 %v4248, %v4274
        %v4283 = vmul.f32 %v4249, %v4274
        %v4284 = vmul.f32 %v4250, %v4274
        %v4285 = vmul.f32 %v4251, %v4274
        %v4286 = vmul.f32 %v4252, %v4274
        %v4287 = vmul.f32 %v4253, %v4274
        %v4288 = vmul.f32 %v4254, %v4274
        %v4289 = vmul.f32 %v4255, %v4274
        %v4290 = vmul.f32 %v4256, %v4274
        %v4291 = vmul.f32 %v4257, %v4274
        %v4292 = vmul.f32 %v4258, %v4274
        %v4293 = vmul.f32 %v4259, %v4274
        %v4294 = vmul.f32 %v4260, %v4274
        %v4295 = vmul.f32 %v4261, %v4274
        %v4296 = vmul.f32 %v4262, %v4274
        %v4297 = vmul.f32 %v4263, %v4274
        %v4298 = vmul.f32 %v4264, %v4274
        %v4299 = vmul.f32 %v4265, %v4274
        %v4300 = vmul.f32 %v4266, %v4274
        %v4301 = vmul.f32 %v4267, %v4274
        %v4302 = vmul.f32 %v4268, %v4274
        %v4303 = vmul.f32 %v4269, %v4274
        %v4304 = vmul.f32 %v4270, %v4274
        %v4305 = vmul.f32 %v4271, %v4274
        %v4306 = vmul.f32 %v4272, %v4274
        %v4307 = vadd.f32 %v219, %v4275
        %v4308 = vadd.f32 %v220, %v4276
        %v4309 = vadd.f32 %v221, %v4277
        %v4310 = vadd.f32 %v222, %v4278
        %v4311 = vadd.f32 %v223, %v4279
        %v4312 = vadd.f32 %v224, %v4280
        %v4313 = vadd.f32 %v225, %v4281
        %v4314 = vadd.f32 %v226, %v4282
        %v4315 = vadd.f32 %v227, %v4283
        %v4316 = vadd.f32 %v228, %v4284
        %v4317 = vadd.f32 %v229, %v4285
        %v4318 = vadd.f32 %v230, %v4286
        %v4319 = vadd.f32 %v231, %v4287
        %v4320 = vadd.f32 %v232, %v4288
        %v4321 = vadd.f32 %v233, %v4289
        %v4322 = vadd.f32 %v234, %v4290
        %v4323 = vadd.f32 %v235, %v4291
        %v4324 = vadd.f32 %v236, %v4292
        %v4325 = vadd.f32 %v237, %v4293
        %v4326 = vadd.f32 %v238, %v4294
        %v4327 = vadd.f32 %v239, %v4295
        %v4328 = vadd.f32 %v240, %v4296
        %v4329 = vadd.f32 %v241, %v4297
        %v4330 = vadd.f32 %v242, %v4298
        %v4331 = vadd.f32 %v243, %v4299
        %v4332 = vadd.f32 %v244, %v4300
        %v4333 = vadd.f32 %v245, %v4301
        %v4334 = vadd.f32 %v246, %v4302
        %v4335 = vadd.f32 %v247, %v4303
        %v4336 = vadd.f32 %v248, %v4304
        %v4337 = vadd.f32 %v249, %v4305
        %v4338 = vadd.f32 %v250, %v4306
        %4339 = vst [vmem:[%s217] sm:$0xff] %v4307
        %4340 = vst [vmem:[%s217 + $0x8] sm:$0xff] %v4308
        %4341 = vst [vmem:[%s217 + $0x10] sm:$0xff] %v4309
        %4342 = vst [vmem:[%s217 + $0x18] sm:$0xff] %v4310
        %4343 = vst [vmem:[%s217 + $0x20] sm:$0xff] %v4311
        %4344 = vst [vmem:[%s217 + $0x28] sm:$0xff] %v4312
        %4345 = vst [vmem:[%s217 + $0x30] sm:$0xff] %v4313
        %4346 = vst [vmem:[%s217 + $0x38] sm:$0xff] %v4314
        %4347 = vst [vmem:[%s217 + $0x40] sm:$0xff] %v4315
        %4348 = vst [vmem:[%s217 + $0x48] sm:$0xff] %v4316
        %4349 = vst [vmem:[%s217 + $0x50] sm:$0xff] %v4317
        %4350 = vst [vmem:[%s217 + $0x58] sm:$0xff] %v4318
        %4351 = vst [vmem:[%s217 + $0x60] sm:$0xff] %v4319
        %4352 = vst [vmem:[%s217 + $0x68] sm:$0xff] %v4320
        %4353 = vst [vmem:[%s217 + $0x70] sm:$0xff] %v4321
        %4354 = vst [vmem:[%s217 + $0x78] sm:$0xff] %v4322
        %4355 = vst [vmem:[%s217 + $0x80] sm:$0xff] %v4323
        %4356 = vst [vmem:[%s217 + $0x88] sm:$0xff] %v4324
        %4357 = vst [vmem:[%s217 + $0x90] sm:$0xff] %v4325
        %4358 = vst [vmem:[%s217 + $0x98] sm:$0xff] %v4326
        %4359 = vst [vmem:[%s217 + $0xa0] sm:$0xff] %v4327
        %4360 = vst [vmem:[%s217 + $0xa8] sm:$0xff] %v4328
        %4361 = vst [vmem:[%s217 + $0xb0] sm:$0xff] %v4329
        %4362 = vst [vmem:[%s217 + $0xb8] sm:$0xff] %v4330
        %4363 = vst [vmem:[%s217 + $0xc0] sm:$0xff] %v4331
        %4364 = vst [vmem:[%s217 + $0xc8] sm:$0xff] %v4332
        %4365 = vst [vmem:[%s217 + $0xd0] sm:$0xff] %v4333
        %4366 = vst [vmem:[%s217 + $0xd8] sm:$0xff] %v4334
        %4367 = vst [vmem:[%s217 + $0xe0] sm:$0xff] %v4335
        %4368 = vst [vmem:[%s217 + $0xe8] sm:$0xff] %v4336
        %4369 = vst [vmem:[%s217 + $0xf0] sm:$0xff] %v4337
        %4370 = vst [vmem:[%s217 + $0xf8] sm:$0xff] %v4338
        %s4371 = sand.u32 %s97, 1
        %s4372 = scalar_lea.sflag [#allocation4], %s4371
        %s4373 = sand.u32 %s97, 1
        %s4374 = smul.addr %s4373, 256
        %s4375 = scalar_lea.vmem [#allocation8], %s4374
        // Predicated region
        $region45: #{tpu_custom_call.1} parent=31 // pred_check
          %p4376 = pneg %p107
        $region46: #{tpu_custom_call.1} parent=31 // pred_check_branch
          %4378 = sbr.rel (%p4376) target = $region48
        $region47: #{tpu_custom_call.1} parent=31 // pred_region
          %s4380 = ssub.s32 4096, 4096
          %4381 = vsyncadd %s4372, %s4380
          %s4382 = smul.addr %s21, 32
          %s4383 = smul.addr %s4382, 128
          %s4384 = scalar_lea.hbm %s3, %s4383
          %s4385 = sshll.u32 %s4375, 4
          %s4386 = int_to_ptr.vmem [resolvable:$true] %s4385
          %4391 = dma.vmem_to_hbm [thread:$0]  %s4386, 4096, %s4384, %s4372, 128, 128, 8
        $region48: #{tpu_custom_call.1} parent=31 // pred_fallthru
          _
      $region32: #{tpu_custom_call.1} parent=5 // pred_fallthru
        _
      %p4392 = scmp.le.s32.totalorder 2, %s16
      // Predicated region
      $region49: #{tpu_custom_call.1} parent=5 // pred_check
        %p4393 = pneg %p4392
      $region50: #{tpu_custom_call.1} parent=5 // pred_check_branch
        %4395 = sbr.rel (%p4393) target = $region52
      $region51: #{tpu_custom_call.1} parent=5 // pred_region
        %s4396 = ssub.s32 %s16, 2
        // Predicated region
        $region53: #{tpu_custom_call.1} parent=51 // pred_check
          %p4397 = pneg %p113
        $region54: #{tpu_custom_call.1} parent=51 // pred_check_branch
          %4399 = sbr.rel (%p4397) target = $region56
        $region55: #{tpu_custom_call.1} parent=51 // pred_region
          %s4400 = sand.u32 %s98, 1
          %s4401 = scalar_lea.sflag [#allocation4], %s4400
          %s4402 = sand.u32 %s98, 1
          %s4403 = smul.addr %s4402, 256
          %s4404 = scalar_lea.vmem [#allocation8], %s4403
          %4405 = dma.done %s4401, 4096
        $region56: #{tpu_custom_call.1} parent=51 // pred_fallthru
          _
      $region52: #{tpu_custom_call.1} parent=5 // pred_fallthru
        _
    $region6: #{tpu_custom_call.1} parent=1 // loop_footer
      %s20 = sadd.s32 1, %s16
    $region7: #{tpu_custom_call.1} parent=1 // loop_footer_branch
      %15 = sbr.rel target = $region3
    $region8: #{tpu_custom_call.1} parent=1 // loop_exit
      _
    %4406 = vsyncpa [#allocation3], 1
    %s4407 = scalar_lea.sflag [#allocation3], 1
    %4408 = vsyncpa %s4407, 1
    %4409 = vsyncpa [#allocation6], 1
    %4410 = vsyncpa [#allocation4], 1
    %s4411 = scalar_lea.sflag [#allocation4], 1
    %4412 = vsyncpa %s4411, 1

// kernel: tpu_custom_call.1
$region0: #{tpu_custom_call.1}
  #allocation0 [shape = 'u32[]', space=smem, size = 0x4, offset = 0x4, fixed_abs, tag = 'smem constant byte address 0x4 - core index']
  #allocation1 [shape = 'u32[144,128]{1,0:T(1,128)}', space=vmem, size = 0x12000, scoped, tag = 'internal scratch']
  %s0 = inlined_call_operand.hbm [shape: f32[2,16,16,128], index: 0, kind: input, shape index: {}]
  %s1 = inlined_call_operand.hbm [shape: bf16[3,384,128], index: 1, kind: input, shape index: {}]
  %s2 = inlined_call_operand.hbm [shape: bf16[3,384,128], index: 2, kind: input, shape index: {}]
  %s3 = inlined_call_operand.hbm [shape: f32[2,16,16,128], index: 3, kind: output, shape index: {}]
  %s4 = sld [smem:[#allocation0]]
  $region57: #{tpu_custom_call.1} parent=0
    _
  %s6 = ssub.s32 1, %s4
  %s7 = scalar_select 0, %s6, %s4
  $region1: #{tpu_custom_call.1} parent=0
    #allocation2 [shape = 'u8[262144]{0}', space=vmem, size = 0x40000, scoped, tag = 'input window, operand 0']
    #allocation3 [shape = 's32[2]{0}', space=sflag, size = 0x8, scoped, tag = 'scoped memory for tpu_custom_call.1']
    #allocation4 [shape = 's32[2]{0}', space=sflag, size = 0x8, scoped, tag = 'scoped memory for tpu_custom_call.1']
    #allocation5 [shape = 'u8[294912]{0}', space=vmem, size = 0x48000, scoped, tag = 'input window, operand 1, single buffered']
    #allocation6 [shape = 's32[1]{0}', space=sflag, size = 0x4, scoped, tag = 'scoped memory for tpu_custom_call.1']
    #allocation7 [shape = 'u8[294912]{0}', space=vmem, size = 0x48000, scoped, tag = 'input window, operand 2, single buffered']
    #allocation8 [shape = 'u8[262144]{0}', space=vmem, size = 0x40000, scoped, tag = 'output window, operand 0']
    %8 = vsyncpa [#allocation3], 0
    %s9 = scalar_lea.sflag [#allocation3], 1
    %10 = vsyncpa %s9, 0
    %11 = vsyncpa [#allocation6], 0
    %12 = vsyncpa [#allocation4], 0
    %s13 = scalar_lea.sflag [#allocation4], 1
    %14 = vsyncpa %s13, 0
    loop: start=0, step=1, limit=4
    $region2: #{tpu_custom_call.1} parent=1 // loop_pre_header
      _
    $region3: #{tpu_custom_call.1} parent=1 // loop_header
      %s16 = sphi 0, %s20
      %p17 = scmp.ge.s32.totalorder %s16, 4
      %s26 = sphi 0, %s28
      %s29 = sphi 0, %s26
      %s30 = sphi 0, %s29
      %s46 = sphi 0, %s30
      %s50 = sphi 0, %s50
      %s52 = sphi 0, %s50
      %s53 = sphi 0, %s52
      %s67 = sphi 0, %s53
      %s71 = sphi 0, %s71
      %s73 = sphi 0, %s71
      %s74 = sphi 0, %s73
      %s88 = sphi 0, %s74
      %s94 = sphi 0, %s96
      %s97 = sphi 0, %s94
      %s98 = sphi 0, %s97
      %s114 = sphi 0, %s98
    $region4: #{tpu_custom_call.1} parent=1 // loop_header_branch
      %19 = sbr.rel (%p17) target = $region8
    $region5: #{tpu_custom_call.1} parent=1 // loop_body
      %s21 = ssub.s32 %s16, 1
      %s22 = ssub.s32 %s16, 2
      %s23 = sadd.s32 %s16, 1
      %s24 = ssub.s32 %s16, %s23
      %p25 = scmp.eq.s32.totalorder %s24, 0
      %s27 = sadd.s32 %s26, 1
      %s28 = scalar_select %p25, %s26, %s27
      %p31 = pneg %p25
      %p32 = scmp.eq.s32.totalorder %s16, 1
      %p33 = por %p31, %p32
      %p34 = scmp.ne.s32.totalorder %s26, %s29
      %p35 = scmp.eq.s32.totalorder %s16, 0
      %p36 = por %p34, %p35
      %p37 = scmp.ne.s32.totalorder %s26, %s29
      %p38 = scmp.eq.s32.totalorder %s21, 1
      %p39 = por %p37, %p38
      %p40 = scmp.ne.s32.totalorder %s29, %s30
      %p41 = scmp.eq.s32.totalorder %s21, 0
      %p42 = por %p40, %p41
      %p43 = scmp.ne.s32.totalorder %s29, %s30
      %p44 = scmp.eq.s32.totalorder %s22, 1
      %p45 = por %p43, %p44
      %p47 = scmp.ne.s32.totalorder %s30, %s46
      %p48 = scmp.eq.s32.totalorder %s22, 0
      %p49 = por %p47, %p48
      %s51 = sadd.s32 %s50, 1
      %p54 = scmp.eq.s32.totalorder %s16, 1
      %p55 = scmp.ne.s32.totalorder %s50, %s52
      %p56 = scmp.eq.s32.totalorder %s16, 0
      %p57 = por %p55, %p56
      %p58 = scmp.ne.s32.totalorder %s50, %s52
      %p59 = scmp.eq.s32.totalorder %s21, 1
      %p60 = por %p58, %p59
      %p61 = scmp.ne.s32.totalorder %s52, %s53
      %p62 = scmp.eq.s32.totalorder %s21, 0
      %p63 = por %p61, %p62
      %p64 = scmp.ne.s32.totalorder %s52, %s53
      %p65 = scmp.eq.s32.totalorder %s22, 1
      %p66 = por %p64, %p65
      %p68 = scmp.ne.s32.totalorder %s53, %s67
      %p69 = scmp.eq.s32.totalorder %s22, 0
      %p70 = por %p68, %p69
      %s72 = sadd.s32 %s71, 1
      %p75 = scmp.eq.s32.totalorder %s16, 1
      %p76 = scmp.ne.s32.totalorder %s71, %s73
      %p77 = scmp.eq.s32.totalorder %s16, 0
      %p78 = por %p76, %p77
      %p79 = scmp.ne.s32.totalorder %s71, %s73
      %p80 = scmp.eq.s32.totalorder %s21, 1
      %p81 = por %p79, %p80
      %p82 = scmp.ne.s32.totalorder %s73, %s74
      %p83 = scmp.eq.s32.totalorder %s21, 0
      %p84 = por %p82, %p83
      %p85 = scmp.ne.s32.totalorder %s73, %s74
      %p86 = scmp.eq.s32.totalorder %s22, 1
      %p87 = por %p85, %p86
      %p89 = scmp.ne.s32.totalorder %s74, %s88
      %p90 = scmp.eq.s32.totalorder %s22, 0
      %p91 = por %p89, %p90
      %s92 = ssub.s32 %s16, %s23
      %p93 = scmp.eq.s32.totalorder %s92, 0
      %s95 = sadd.s32 %s94, 1
      %s96 = scalar_select %p93, %s94, %s95
      %p99 = pneg %p93
      %p100 = scmp.eq.s32.totalorder %s16, 1
      %p101 = por %p99, %p100
      %p102 = scmp.ne.s32.totalorder %s94, %s97
      %p103 = scmp.eq.s32.totalorder %s16, 0
      %p104 = por %p102, %p103
      %p105 = scmp.ne.s32.totalorder %s94, %s97
      %p106 = scmp.eq.s32.totalorder %s21, 1
      %p107 = por %p105, %p106
      %p108 = scmp.ne.s32.totalorder %s97, %s98
      %p109 = scmp.eq.s32.totalorder %s21, 0
      %p110 = por %p108, %p109
      %p111 = scmp.ne.s32.totalorder %s97, %s98
      %p112 = scmp.eq.s32.totalorder %s22, 1
      %p113 = por %p111, %p112
      %p115 = scmp.ne.s32.totalorder %s98, %s114
      %p116 = scmp.eq.s32.totalorder %s22, 0
      %p117 = por %p115, %p116
      %p118 = scmp.le.s32.totalorder 1, %s16
      %p119 = scmp.lt.s32.totalorder %s16, 3
      %p120 = pnand %p118, %p119
      %p121 = pneg %p120
      // Predicated region
      $region9: #{tpu_custom_call.1} parent=5 // pred_check
        _
      $region10: #{tpu_custom_call.1} parent=5 // pred_check_branch
        %123 = sbr.rel (%p120) target = $region12
      $region11: #{tpu_custom_call.1} parent=5 // pred_region
        %s124 = ssub.s32 %s16, 1
        // Predicated region
        $region13: #{tpu_custom_call.1} parent=11 // pred_check
          %p125 = pneg %p63
        $region14: #{tpu_custom_call.1} parent=11 // pred_check_branch
          %127 = sbr.rel (%p125) target = $region16
        $region15: #{tpu_custom_call.1} parent=11 // pred_region
          %s129 = ssub.s32 9216, 9216
          %130 = vsyncadd [#allocation6], %s129
          %s131 = sshll.u32 [#allocation5], 4
          %s132 = int_to_ptr.vmem [resolvable:$true] %s131
          %137 = dma.hbm_to_vmem [thread:$0]  %s1, 9216, %s132, [#allocation6], 64, 64, 4
        $region16: #{tpu_custom_call.1} parent=11 // pred_fallthru
          _
        // Predicated region
        $region17: #{tpu_custom_call.1} parent=11 // pred_check
          %p138 = pneg %p84
        $region18: #{tpu_custom_call.1} parent=11 // pred_check_branch
          %140 = sbr.rel (%p138) target = $region20
        $region19: #{tpu_custom_call.1} parent=11 // pred_region
          %s142 = ssub.s32 9216, 9216
          %143 = vsyncadd [#allocation6], %s142
          %s144 = sshll.u32 [#allocation7], 4
          %s145 = int_to_ptr.vmem [resolvable:$true] %s144
          %150 = dma.hbm_to_vmem [thread:$0]  %s2, 9216, %s145, [#allocation6], 64, 64, 4
        $region20: #{tpu_custom_call.1} parent=11 // pred_fallthru
          _
      $region12: #{tpu_custom_call.1} parent=5 // pred_fallthru
        _
      %p151 = scmp.lt.s32.totalorder %s16, 2
      // Predicated region
      $region21: #{tpu_custom_call.1} parent=5 // pred_check
        %p152 = pneg %p151
      $region22: #{tpu_custom_call.1} parent=5 // pred_check_branch
        %154 = sbr.rel (%p152) target = $region24
      $region23: #{tpu_custom_call.1} parent=5 // pred_region
        // Predicated region
        $region25: #{tpu_custom_call.1} parent=23 // pred_check
          %p155 = pneg %p36
        $region26: #{tpu_custom_call.1} parent=23 // pred_check_branch
          %157 = sbr.rel (%p155) target = $region28
        $region27: #{tpu_custom_call.1} parent=23 // pred_region
          %s158 = sand.u32 %s26, 1
          %s159 = scalar_lea.sflag [#allocation3], %s158
          %s160 = sand.u32 %s26, 1
          %s161 = smul.addr %s160, 256
          %s162 = scalar_lea.vmem [#allocation2], %s161
          %s164 = ssub.s32 4096, 4096
          %165 = vsyncadd %s159, %s164
          %s166 = smul.addr %s16, 32
          %s167 = smul.addr %s166, 128
          %s168 = scalar_lea.hbm %s0, %s167
          %s169 = sshll.u32 %s162, 4
          %s170 = int_to_ptr.vmem [resolvable:$true] %s169
          %175 = dma.hbm_to_vmem [thread:$0]  %s168, 4096, %s170, %s159, 128, 128, 8
        $region28: #{tpu_custom_call.1} parent=23 // pred_fallthru
          _
      $region24: #{tpu_custom_call.1} parent=5 // pred_fallthru
        _
      %p176 = scmp.le.s32.totalorder 1, %s16
      %p177 = scmp.lt.s32.totalorder %s16, 3
      %p178 = pnand %p176, %p177
      %p179 = pneg %p178
      // Predicated region
      $region29: #{tpu_custom_call.1} parent=5 // pred_check
        _
      $region30: #{tpu_custom_call.1} parent=5 // pred_check_branch
        %181 = sbr.rel (%p178) target = $region32
      $region31: #{tpu_custom_call.1} parent=5 // pred_region
        %s182 = ssub.s32 %s16, 1
        %s183 = sand.u32 %s29, 1
        %s184 = scalar_lea.sflag [#allocation3], %s183
        %s185 = sand.u32 %s29, 1
        %s186 = smul.addr %s185, 256
        %s187 = scalar_lea.vmem [#allocation2], %s186
        // Predicated region
        $region33: #{tpu_custom_call.1} parent=31 // pred_check
          %p188 = pneg %p42
        $region34: #{tpu_custom_call.1} parent=31 // pred_check_branch
          %190 = sbr.rel (%p188) target = $region36
        $region35: #{tpu_custom_call.1} parent=31 // pred_region
          %191 = dma.done %s184, 4096
        $region36: #{tpu_custom_call.1} parent=31 // pred_fallthru
          _
        // Predicated region
        $region37: #{tpu_custom_call.1} parent=31 // pred_check
          %p192 = pneg %p63
        $region38: #{tpu_custom_call.1} parent=31 // pred_check_branch
          %194 = sbr.rel (%p192) target = $region40
        $region39: #{tpu_custom_call.1} parent=31 // pred_region
          %195 = dma.done [#allocation6], 9216
        $region40: #{tpu_custom_call.1} parent=31 // pred_fallthru
          _
        // Predicated region
        $region41: #{tpu_custom_call.1} parent=31 // pred_check
          %p196 = pneg %p84
        $region42: #{tpu_custom_call.1} parent=31 // pred_check_branch
          %198 = sbr.rel (%p196) target = $region44
        $region43: #{tpu_custom_call.1} parent=31 // pred_region
          %199 = dma.done [#allocation6], 9216
        $region44: #{tpu_custom_call.1} parent=31 // pred_fallthru
          _
        %s200 = sand.u32 %s29, 1
        %s201 = scalar_lea.sflag [#allocation3], %s200
        %s202 = sand.u32 %s29, 1
        %s203 = smul.addr %s202, 256
        %s204 = scalar_lea.vmem [#allocation2], %s203
        %p205 = pneg %p42
        %p206 = pneg %p39
        %p207 = pneg %p63
        %p208 = pneg %p60
        %p209 = pneg %p84
        %p210 = pneg %p81
        %p211 = pneg %p110
        %p212 = pneg %p107
        %s213 = sand.u32 %s97, 1
        %s214 = scalar_lea.sflag [#allocation4], %s213
        %s215 = sand.u32 %s97, 1
        %s216 = smul.addr %s215, 256
        %s217 = scalar_lea.vmem [#allocation8], %s216
        %v219 = vld [vmem:[%s187] sm:$0xff]
        %v220 = vld [vmem:[%s187 + $0x8] sm:$0xff]
        %v221 = vld [vmem:[%s187 + $0x10] sm:$0xff]
        %v222 = vld [vmem:[%s187 + $0x18] sm:$0xff]
        %v223 = vld [vmem:[%s187 + $0x20] sm:$0xff]
        %v224 = vld [vmem:[%s187 + $0x28] sm:$0xff]
        %v225 = vld [vmem:[%s187 + $0x30] sm:$0xff]
        %v226 = vld [vmem:[%s187 + $0x38] sm:$0xff]
        %v227 = vld [vmem:[%s187 + $0x40] sm:$0xff]
        %v228 = vld [vmem:[%s187 + $0x48] sm:$0xff]
        %v229 = vld [vmem:[%s187 + $0x50] sm:$0xff]
        %v230 = vld [vmem:[%s187 + $0x58] sm:$0xff]
        %v231 = vld [vmem:[%s187 + $0x60] sm:$0xff]
        %v232 = vld [vmem:[%s187 + $0x68] sm:$0xff]
        %v233 = vld [vmem:[%s187 + $0x70] sm:$0xff]
        %v234 = vld [vmem:[%s187 + $0x78] sm:$0xff]
        %v235 = vld [vmem:[%s187 + $0x80] sm:$0xff]
        %v236 = vld [vmem:[%s187 + $0x88] sm:$0xff]
        %v237 = vld [vmem:[%s187 + $0x90] sm:$0xff]
        %v238 = vld [vmem:[%s187 + $0x98] sm:$0xff]
        %v239 = vld [vmem:[%s187 + $0xa0] sm:$0xff]
        %v240 = vld [vmem:[%s187 + $0xa8] sm:$0xff]
        %v241 = vld [vmem:[%s187 + $0xb0] sm:$0xff]
        %v242 = vld [vmem:[%s187 + $0xb8] sm:$0xff]
        %v243 = vld [vmem:[%s187 + $0xc0] sm:$0xff]
        %v244 = vld [vmem:[%s187 + $0xc8] sm:$0xff]
        %v245 = vld [vmem:[%s187 + $0xd0] sm:$0xff]
        %v246 = vld [vmem:[%s187 + $0xd8] sm:$0xff]
        %v247 = vld [vmem:[%s187 + $0xe0] sm:$0xff]
        %v248 = vld [vmem:[%s187 + $0xe8] sm:$0xff]
        %v249 = vld [vmem:[%s187 + $0xf0] sm:$0xff]
        %v250 = vld [vmem:[%s187 + $0xf8] sm:$0xff]
        %v251 = vpack.c.bf16 %v220, %v219
        %v252 = vpack.c.bf16 %v222, %v221
        %v253 = vpack.c.bf16 %v224, %v223
        %v254 = vpack.c.bf16 %v226, %v225
        %v255 = vpack.c.bf16 %v228, %v227
        %v256 = vpack.c.bf16 %v230, %v229
        %v257 = vpack.c.bf16 %v232, %v231
        %v258 = vpack.c.bf16 %v234, %v233
        %v259 = vpack.c.bf16 %v236, %v235
        %v260 = vpack.c.bf16 %v238, %v237
        %v261 = vpack.c.bf16 %v240, %v239
        %v262 = vpack.c.bf16 %v242, %v241
        %v263 = vpack.c.bf16 %v244, %v243
        %v264 = vpack.c.bf16 %v246, %v245
        %v265 = vpack.c.bf16 %v248, %v247
        %v266 = vpack.c.bf16 %v250, %v249
        %v268 = vshrl.u32 %v252, 16
        %v271 = vshrl.u32 %v251, 16
        %v274 = vshrl.u32 %v253, 16
        %v277 = vshrl.u32 %v254, 16
        %v280 = vshrl.u32 %v255, 16
        %v283 = vshrl.u32 %v256, 16
        %v286 = vshrl.u32 %v257, 16
        %v289 = vshrl.u32 %v258, 16
        %v292 = vshrl.u32 %v259, 16
        %v295 = vshrl.u32 %v260, 16
        %v298 = vshrl.u32 %v261, 16
        %v301 = vshrl.u32 %v262, 16
        %v304 = vshrl.u32 %v263, 16
        %v307 = vshrl.u32 %v264, 16
        %v310 = vshrl.u32 %v265, 16
        %v313 = vshrl.u32 %v266, 16
        %v331 = vrot.slane %v268, 7
        %v332 = vshll.u32 %v252, 16
        %v334 = vor.u32 %v331, %v332
        %v335 = vrot.slane %v271, 7
        %v336 = vshll.u32 %v251, 16
        %v338 = vor.u32 %v335, %v336
        %v339 = vrot.slane %v274, 7
        %v340 = vshll.u32 %v253, 16
        %v342 = vor.u32 %v339, %v340
        %v343 = vrot.slane %v277, 7
        %v344 = vshll.u32 %v254, 16
        %v346 = vor.u32 %v343, %v344
        %v347 = vrot.slane %v280, 7
        %v348 = vshll.u32 %v255, 16
        %v350 = vor.u32 %v347, %v348
        %v351 = vrot.slane %v283, 7
        %v352 = vshll.u32 %v256, 16
        %v354 = vor.u32 %v351, %v352
        %v355 = vrot.slane %v286, 7
        %v356 = vshll.u32 %v257, 16
        %v358 = vor.u32 %v355, %v356
        %v359 = vrot.slane %v289, 7
        %v360 = vshll.u32 %v258, 16
        %v362 = vor.u32 %v359, %v360
        %v363 = vrot.slane %v292, 7
        %v364 = vshll.u32 %v259, 16
        %v366 = vor.u32 %v363, %v364
        %v367 = vrot.slane %v295, 7
        %v368 = vshll.u32 %v260, 16
        %v370 = vor.u32 %v367, %v368
        %v371 = vrot.slane %v298, 7
        %v372 = vshll.u32 %v261, 16
        %v374 = vor.u32 %v371, %v372
        %v375 = vrot.slane %v301, 7
        %v376 = vshll.u32 %v262, 16
        %v378 = vor.u32 %v375, %v376
        %v379 = vrot.slane %v304, 7
        %v380 = vshll.u32 %v263, 16
        %v382 = vor.u32 %v379, %v380
        %v383 = vrot.slane %v307, 7
        %v384 = vshll.u32 %v264, 16
        %v386 = vor.u32 %v383, %v384
        %v387 = vrot.slane %v310, 7
        %v388 = vshll.u32 %v265, 16
        %v390 = vor.u32 %v387, %v388
        %v391 = vrot.slane %v313, 7
        %v392 = vshll.u32 %v266, 16
        %v394 = vor.u32 %v391, %v392
        %vm411 = vcmask 1040384
        %vm412 = vsmask.f32 256
        %vm413 = vmand %vm411, %vm412
        %v414 = vsel %vm413, %v268, %v334
        %v415 = vsel %vm413, %v271, %v338
        %v416 = vsel %vm413, %v274, %v342
        %v417 = vsel %vm413, %v277, %v346
        %v418 = vsel %vm413, %v280, %v350
        %v419 = vsel %vm413, %v283, %v354
        %v420 = vsel %vm413, %v286, %v358
        %v421 = vsel %vm413, %v289, %v362
        %v422 = vsel %vm413, %v292, %v366
        %v423 = vsel %vm413, %v295, %v370
        %v424 = vsel %vm413, %v298, %v374
        %v425 = vsel %vm413, %v301, %v378
        %v426 = vsel %vm413, %v304, %v382
        %v427 = vsel %vm413, %v307, %v386
        %v428 = vsel %vm413, %v310, %v390
        %v429 = vsel %vm413, %v313, %v394
        %v430 = vrot.slane %v332, 1
        %v431 = vor.u32 %v268, %v430
        %v432 = vrot.slane %v336, 1
        %v433 = vor.u32 %v271, %v432
        %v434 = vrot.slane %v340, 1
        %v435 = vor.u32 %v274, %v434
        %v436 = vrot.slane %v344, 1
        %v437 = vor.u32 %v277, %v436
        %v438 = vrot.slane %v348, 1
        %v439 = vor.u32 %v280, %v438
        %v440 = vrot.slane %v352, 1
        %v441 = vor.u32 %v283, %v440
        %v442 = vrot.slane %v356, 1
        %v443 = vor.u32 %v286, %v442
        %v444 = vrot.slane %v360, 1
        %v445 = vor.u32 %v289, %v444
        %v446 = vrot.slane %v364, 1
        %v447 = vor.u32 %v292, %v446
        %v448 = vrot.slane %v368, 1
        %v449 = vor.u32 %v295, %v448
        %v450 = vrot.slane %v372, 1
        %v451 = vor.u32 %v298, %v450
        %v452 = vrot.slane %v376, 1
        %v453 = vor.u32 %v301, %v452
        %v454 = vrot.slane %v380, 1
        %v455 = vor.u32 %v304, %v454
        %v456 = vrot.slane %v384, 1
        %v457 = vor.u32 %v307, %v456
        %v458 = vrot.slane %v388, 1
        %v459 = vor.u32 %v310, %v458
        %v460 = vrot.slane %v392, 1
        %v461 = vor.u32 %v313, %v460
        %vm494 = vcmask 1047552
        %vm495 = vsmask.f32 7424
        %vm496 = vmand %vm494, %vm495
        %v497 = vsel %vm496, %v431, %v332
        %v498 = vsel %vm496, %v433, %v336
        %v499 = vsel %vm496, %v435, %v340
        %v500 = vsel %vm496, %v437, %v344
        %v501 = vsel %vm496, %v439, %v348
        %v502 = vsel %vm496, %v441, %v352
        %v503 = vsel %vm496, %v443, %v356
        %v504 = vsel %vm496, %v445, %v360
        %v505 = vsel %vm496, %v447, %v364
        %v506 = vsel %vm496, %v449, %v368
        %v507 = vsel %vm496, %v451, %v372
        %v508 = vsel %vm496, %v453, %v376
        %v509 = vsel %vm496, %v455, %v380
        %v510 = vsel %vm496, %v457, %v384
        %v511 = vsel %vm496, %v459, %v388
        %v512 = vsel %vm496, %v461, %v392
        %v513 = vld [vmem:[#allocation5] sm:$0xf]
        %v514 = vld [vmem:[#allocation5 + $0x4] sm:$0xf]
        %v515 = vld [vmem:[#allocation5 + $0x8] sm:$0xf]
        %v516 = vld [vmem:[#allocation5 + $0xc] sm:$0xf]
        %v517 = vld [vmem:[#allocation5 + $0x10] sm:$0xf]
        %v518 = vld [vmem:[#allocation5 + $0x14] sm:$0xf]
        %v519 = vld [vmem:[#allocation5 + $0x18] sm:$0xf]
        %v520 = vld [vmem:[#allocation5 + $0x1c] sm:$0xf]
        %v521 = vld [vmem:[#allocation5 + $0x20] sm:$0xf]
        %v522 = vld [vmem:[#allocation5 + $0x24] sm:$0xf]
        %v523 = vld [vmem:[#allocation5 + $0x28] sm:$0xf]
        %v524 = vld [vmem:[#allocation5 + $0x2c] sm:$0xf]
        %v525 = vld [vmem:[#allocation5 + $0x30] sm:$0xf]
        %v526 = vld [vmem:[#allocation5 + $0x34] sm:$0xf]
        %v527 = vld [vmem:[#allocation5 + $0x38] sm:$0xf]
        %v528 = vld [vmem:[#allocation5 + $0x3c] sm:$0xf]
        %v529 = vld [vmem:[#allocation5 + $0x40] sm:$0xf]
        %v530 = vld [vmem:[#allocation5 + $0x44] sm:$0xf]
        %v531 = vld [vmem:[#allocation5 + $0x48] sm:$0xf]
        %v532 = vld [vmem:[#allocation5 + $0x4c] sm:$0xf]
        %v533 = vld [vmem:[#allocation5 + $0x50] sm:$0xf]
        %v534 = vld [vmem:[#allocation5 + $0x54] sm:$0xf]
        %v535 = vld [vmem:[#allocation5 + $0x58] sm:$0xf]
        %v536 = vld [vmem:[#allocation5 + $0x5c] sm:$0xf]
        %v537 = vld [vmem:[#allocation5 + $0x60] sm:$0xf]
        %v538 = vld [vmem:[#allocation5 + $0x64] sm:$0xf]
        %v539 = vld [vmem:[#allocation5 + $0x68] sm:$0xf]
        %v540 = vld [vmem:[#allocation5 + $0x6c] sm:$0xf]
        %v541 = vld [vmem:[#allocation5 + $0x70] sm:$0xf]
        %v542 = vld [vmem:[#allocation5 + $0x74] sm:$0xf]
        %v543 = vld [vmem:[#allocation5 + $0x78] sm:$0xf]
        %v544 = vld [vmem:[#allocation5 + $0x7c] sm:$0xf]
        %v545 = vld [vmem:[#allocation5 + $0x80] sm:$0xf]
        %v546 = vld [vmem:[#allocation5 + $0x84] sm:$0xf]
        %v547 = vld [vmem:[#allocation5 + $0x88] sm:$0xf]
        %v548 = vld [vmem:[#allocation5 + $0x8c] sm:$0xf]
        %v549 = vld [vmem:[#allocation5 + $0x90] sm:$0xf]
        %v550 = vld [vmem:[#allocation5 + $0x94] sm:$0xf]
        %v551 = vld [vmem:[#allocation5 + $0x98] sm:$0xf]
        %v552 = vld [vmem:[#allocation5 + $0x9c] sm:$0xf]
        %v553 = vld [vmem:[#allocation5 + $0xa0] sm:$0xf]
        %v554 = vld [vmem:[#allocation5 + $0xa4] sm:$0xf]
        %v555 = vld [vmem:[#allocation5 + $0xa8] sm:$0xf]
        %v556 = vld [vmem:[#allocation5 + $0xac] sm:$0xf]
        %v557 = vld [vmem:[#allocation5 + $0xb0] sm:$0xf]
        %v558 = vld [vmem:[#allocation5 + $0xb4] sm:$0xf]
        %v559 = vld [vmem:[#allocation5 + $0xb8] sm:$0xf]
        %v560 = vld [vmem:[#allocation5 + $0xbc] sm:$0xf]
        %s561 = scalar_lea.vmem [#allocation5], 192
        %v562 = vld [vmem:[%s561] sm:$0xf]
        %v563 = vld [vmem:[%s561 + $0x4] sm:$0xf]
        %v564 = vld [vmem:[%s561 + $0x8] sm:$0xf]
        %v565 = vld [vmem:[%s561 + $0xc] sm:$0xf]
        %v566 = vld [vmem:[%s561 + $0x10] sm:$0xf]
        %v567 = vld [vmem:[%s561 + $0x14] sm:$0xf]
        %v568 = vld [vmem:[%s561 + $0x18] sm:$0xf]
        %v569 = vld [vmem:[%s561 + $0x1c] sm:$0xf]
        %v570 = vld [vmem:[%s561 + $0x20] sm:$0xf]
        %v571 = vld [vmem:[%s561 + $0x24] sm:$0xf]
        %v572 = vld [vmem:[%s561 + $0x28] sm:$0xf]
        %v573 = vld [vmem:[%s561 + $0x2c] sm:$0xf]
        %v574 = vld [vmem:[%s561 + $0x30] sm:$0xf]
        %v575 = vld [vmem:[%s561 + $0x34] sm:$0xf]
        %v576 = vld [vmem:[%s561 + $0x38] sm:$0xf]
        %v577 = vld [vmem:[%s561 + $0x3c] sm:$0xf]
        %v578 = vld [vmem:[%s561 + $0x40] sm:$0xf]
        %v579 = vld [vmem:[%s561 + $0x44] sm:$0xf]
        %v580 = vld [vmem:[%s561 + $0x48] sm:$0xf]
        %v581 = vld [vmem:[%s561 + $0x4c] sm:$0xf]
        %v582 = vld [vmem:[%s561 + $0x50] sm:$0xf]
        %v583 = vld [vmem:[%s561 + $0x54] sm:$0xf]
        %v584 = vld [vmem:[%s561 + $0x58] sm:$0xf]
        %v585 = vld [vmem:[%s561 + $0x5c] sm:$0xf]
        %v586 = vld [vmem:[%s561 + $0x60] sm:$0xf]
        %v587 = vld [vmem:[%s561 + $0x64] sm:$0xf]
        %v588 = vld [vmem:[%s561 + $0x68] sm:$0xf]
        %v589 = vld [vmem:[%s561 + $0x6c] sm:$0xf]
        %v590 = vld [vmem:[%s561 + $0x70] sm:$0xf]
        %v591 = vld [vmem:[%s561 + $0x74] sm:$0xf]
        %v592 = vld [vmem:[%s561 + $0x78] sm:$0xf]
        %v593 = vld [vmem:[%s561 + $0x7c] sm:$0xf]
        %v594 = vld [vmem:[%s561 + $0x80] sm:$0xf]
        %v595 = vld [vmem:[%s561 + $0x84] sm:$0xf]
        %v596 = vld [vmem:[%s561 + $0x88] sm:$0xf]
        %v597 = vld [vmem:[%s561 + $0x8c] sm:$0xf]
        %v598 = vld [vmem:[%s561 + $0x90] sm:$0xf]
        %v599 = vld [vmem:[%s561 + $0x94] sm:$0xf]
        %v600 = vld [vmem:[%s561 + $0x98] sm:$0xf]
        %v601 = vld [vmem:[%s561 + $0x9c] sm:$0xf]
        %v602 = vld [vmem:[%s561 + $0xa0] sm:$0xf]
        %v603 = vld [vmem:[%s561 + $0xa4] sm:$0xf]
        %v604 = vld [vmem:[%s561 + $0xa8] sm:$0xf]
        %v605 = vld [vmem:[%s561 + $0xac] sm:$0xf]
        %v606 = vld [vmem:[%s561 + $0xb0] sm:$0xf]
        %v607 = vld [vmem:[%s561 + $0xb4] sm:$0xf]
        %v608 = vld [vmem:[%s561 + $0xb8] sm:$0xf]
        %v609 = vld [vmem:[%s561 + $0xbc] sm:$0xf]
        %v658 = vunpack.c.l.b16 %v562
        %v659 = vunpack.c.l.b16 %v563
        %v660 = vunpack.c.l.b16 %v564
        %v661 = vunpack.c.l.b16 %v565
        %v662 = vunpack.c.l.b16 %v566
        %v663 = vunpack.c.l.b16 %v567
        %v664 = vunpack.c.l.b16 %v568
        %v665 = vunpack.c.l.b16 %v569
        %v666 = vunpack.c.l.b16 %v570
        %v667 = vunpack.c.l.b16 %v571
        %v668 = vunpack.c.l.b16 %v572
        %v669 = vunpack.c.l.b16 %v573
        %v670 = vunpack.c.l.b16 %v574
        %v671 = vunpack.c.l.b16 %v575
        %v672 = vunpack.c.l.b16 %v576
        %v673 = vunpack.c.l.b16 %v577
        %v674 = vunpack.c.l.b16 %v578
        %v675 = vunpack.c.l.b16 %v579
        %v676 = vunpack.c.l.b16 %v580
        %v677 = vunpack.c.l.b16 %v581
        %v678 = vunpack.c.l.b16 %v582
        %v679 = vunpack.c.l.b16 %v583
        %v680 = vunpack.c.l.b16 %v584
        %v681 = vunpack.c.l.b16 %v585
        %v682 = vunpack.c.l.b16 %v586
        %v683 = vunpack.c.l.b16 %v587
        %v684 = vunpack.c.l.b16 %v588
        %v685 = vunpack.c.l.b16 %v589
        %v686 = vunpack.c.l.b16 %v590
        %v687 = vunpack.c.l.b16 %v591
        %v688 = vunpack.c.l.b16 %v592
        %v689 = vunpack.c.l.b16 %v593
        %v690 = vunpack.c.l.b16 %v594
        %v691 = vunpack.c.l.b16 %v595
        %v692 = vunpack.c.l.b16 %v596
        %v693 = vunpack.c.l.b16 %v597
        %v694 = vunpack.c.l.b16 %v598
        %v695 = vunpack.c.l.b16 %v599
        %v696 = vunpack.c.l.b16 %v600
        %v697 = vunpack.c.l.b16 %v601
        %v698 = vunpack.c.l.b16 %v602
        %v699 = vunpack.c.l.b16 %v603
        %v700 = vunpack.c.l.b16 %v604
        %v701 = vunpack.c.l.b16 %v605
        %v702 = vunpack.c.l.b16 %v606
        %v703 = vunpack.c.l.b16 %v607
        %v704 = vunpack.c.l.b16 %v608
        %v705 = vunpack.c.l.b16 %v609
        %v706 = vpack.c.b16 %v659, %v658
        %v707 = vpack.c.b16 %v661, %v660
        %v708 = vpack.c.b16 %v663, %v662
        %v709 = vpack.c.b16 %v665, %v664
        %v710 = vpack.c.b16 %v667, %v666
        %v711 = vpack.c.b16 %v669, %v668
        %v712 = vpack.c.b16 %v671, %v670
        %v713 = vpack.c.b16 %v673, %v672
        %v714 = vpack.c.b16 %v675, %v674
        %v715 = vpack.c.b16 %v677, %v676
        %v716 = vpack.c.b16 %v679, %v678
        %v717 = vpack.c.b16 %v681, %v680
        %v718 = vpack.c.b16 %v683, %v682
        %v719 = vpack.c.b16 %v685, %v684
        %v720 = vpack.c.b16 %v687, %v686
        %v721 = vpack.c.b16 %v689, %v688
        %v722 = vpack.c.b16 %v691, %v690
        %v723 = vpack.c.b16 %v693, %v692
        %v724 = vpack.c.b16 %v695, %v694
        %v725 = vpack.c.b16 %v697, %v696
        %v726 = vpack.c.b16 %v699, %v698
        %v727 = vpack.c.b16 %v701, %v700
        %v728 = vpack.c.b16 %v703, %v702
        %v729 = vpack.c.b16 %v705, %v704
        %754 = vmatprep.subr.bf16.mxu0 0
        %755 = vmatpush1.bf16.msra.mxu0 %v706
        %756 = vmatprep.subr.bf16.mxu0 0
        %757 = vmatpush1.bf16.msra.mxu0 %v707
        %758 = vmatprep.subr.bf16.mxu0 0
        %759 = vmatpush1.bf16.msra.mxu0 %v708
        %760 = vmatprep.subr.bf16.mxu0 0
        %761 = vmatpush1.bf16.msra.mxu0 %v709
        %762 = vmatprep.subr.bf16.mxu0 0
        %763 = vmatpush1.bf16.msra.mxu0 %v710
        %764 = vmatprep.subr.bf16.mxu0 0
        %765 = vmatpush1.bf16.msra.mxu0 %v711
        %766 = vmatprep.subr.bf16.mxu0 0
        %767 = vmatpush1.bf16.msra.mxu0 %v712
        %768 = vmatprep.subr.bf16.mxu0 0
        %769 = vmatpush1.bf16.msra.mxu0 %v713
        %770 = vmatprep.subr.bf16.mxu0 0
        %771 = vmatpush1.bf16.msra.mxu0 %v714
        %772 = vmatprep.subr.bf16.mxu0 0
        %773 = vmatpush1.bf16.msra.mxu0 %v715
        %774 = vmatprep.subr.bf16.mxu0 0
        %775 = vmatpush1.bf16.msra.mxu0 %v716
        %776 = vmatprep.subr.bf16.mxu0 0
        %777 = vmatpush1.bf16.msra.mxu0 %v717
        %778 = vmatprep.subr.bf16.mxu0 0
        %779 = vmatpush1.bf16.msra.mxu0 %v718
        %780 = vmatprep.subr.bf16.mxu0 0
        %781 = vmatpush1.bf16.msra.mxu0 %v719
        %782 = vmatprep.subr.bf16.mxu0 0
        %783 = vmatpush1.bf16.msra.mxu0 %v720
        %784 = vmatprep.subr.bf16.mxu0 0
        %785 = vmatpush1.bf16.msra.mxu0 %v721
        %786 = vmatprep.mubr.bf16.mxu0 %v251
        %787 = vmatmul.mubr.bf16.gmra.mrb[0].mxu0 %v415
        %v788 = vpop.f32.mrb[0].mxu0
        %v789 = vadd.f32 0.0, %v788
        %v790 = vpop.f32.mrb[0].mxu0
        %v791 = vpop.f32.mrb[0].mxu0
        %v792 = vadd.f32 0.0, %v791
        %v793 = vpop.f32.mrb[0].mxu0
        %794 = vmatprep.mubr.bf16.mxu0 %v252
        %795 = vmatmul.mubr.bf16.gmra.mrb[0].mxu0 %v414
        %v796 = vpop.f32.mrb[0].mxu0
        %v797 = vadd.f32 0.0, %v796
        %v798 = vpop.f32.mrb[0].mxu0
        %v799 = vpop.f32.mrb[0].mxu0
        %v800 = vadd.f32 0.0, %v799
        %v801 = vpop.f32.mrb[0].mxu0
        %802 = vmatprep.mubr.bf16.mxu0 %v253
        %803 = vmatmul.mubr.bf16.gmra.mrb[0].mxu0 %v416
        %v804 = vpop.f32.mrb[0].mxu0
        %v805 = vadd.f32 0.0, %v804
        %v806 = vpop.f32.mrb[0].mxu0
        %v807 = vpop.f32.mrb[0].mxu0
        %v808 = vadd.f32 0.0, %v807
        %v809 = vpop.f32.mrb[0].mxu0
        %810 = vmatprep.mubr.bf16.mxu0 %v254
        %811 = vmatmul.mubr.bf16.gmra.mrb[0].mxu0 %v417
        %v812 = vpop.f32.mrb[0].mxu0
        %v813 = vadd.f32 0.0, %v812
        %v814 = vpop.f32.mrb[0].mxu0
        %v815 = vpop.f32.mrb[0].mxu0
        %v816 = vadd.f32 0.0, %v815
        %v817 = vpop.f32.mrb[0].mxu0
        %818 = vmatprep.mubr.bf16.mxu0 %v255
        %819 = vmatmul.mubr.bf16.gmra.mrb[0].mxu0 %v418
        %v820 = vpop.f32.mrb[0].mxu0
        %v821 = vadd.f32 0.0, %v820
        %v822 = vpop.f32.mrb[0].mxu0
        %v823 = vpop.f32.mrb[0].mxu0
        %v824 = vadd.f32 0.0, %v823
        %v825 = vpop.f32.mrb[0].mxu0
        %826 = vmatprep.mubr.bf16.mxu0 %v256
        %827 = vmatmul.mubr.bf16.gmra.mrb[0].mxu0 %v419
        %v828 = vpop.f32.mrb[0].mxu0
        %v829 = vadd.f32 0.0, %v828
        %v830 = vpop.f32.mrb[0].mxu0
        %v831 = vpop.f32.mrb[0].mxu0
        %v832 = vadd.f32 0.0, %v831
        %v833 = vpop.f32.mrb[0].mxu0
        %834 = vmatprep.mubr.bf16.mxu0 %v257
        %835 = vmatmul.mubr.bf16.gmra.mrb[0].mxu0 %v420
        %v836 = vpop.f32.mrb[0].mxu0
        %v837 = vadd.f32 0.0, %v836
        %v838 = vpop.f32.mrb[0].mxu0
        %v839 = vpop.f32.mrb[0].mxu0
        %v840 = vadd.f32 0.0, %v839
        %v841 = vpop.f32.mrb[0].mxu0
        %842 = vmatprep.mubr.bf16.mxu0 %v258
        %843 = vmatmul.mubr.bf16.gmra.mrb[0].mxu0 %v421
        %v844 = vpop.f32.mrb[0].mxu0
        %v845 = vadd.f32 0.0, %v844
        %v846 = vpop.f32.mrb[0].mxu0
        %v847 = vpop.f32.mrb[0].mxu0
        %v848 = vadd.f32 0.0, %v847
        %v849 = vpop.f32.mrb[0].mxu0
        %850 = vmatprep.mubr.bf16.mxu0 %v259
        %851 = vmatmul.mubr.bf16.gmra.mrb[0].mxu0 %v422
        %v852 = vpop.f32.mrb[0].mxu0
        %v853 = vadd.f32 0.0, %v852
        %v854 = vpop.f32.mrb[0].mxu0
        %v855 = vpop.f32.mrb[0].mxu0
        %v856 = vadd.f32 0.0, %v855
        %v857 = vpop.f32.mrb[0].mxu0
        %858 = vmatprep.mubr.bf16.mxu0 %v260
        %859 = vmatmul.mubr.bf16.gmra.mrb[0].mxu0 %v423
        %v860 = vpop.f32.mrb[0].mxu0
        %v861 = vadd.f32 0.0, %v860
        %v862 = vpop.f32.mrb[0].mxu0
        %v863 = vpop.f32.mrb[0].mxu0
        %v864 = vadd.f32 0.0, %v863
        %v865 = vpop.f32.mrb[0].mxu0
        %866 = vmatprep.mubr.bf16.mxu0 %v261
        %867 = vmatmul.mubr.bf16.gmra.mrb[0].mxu0 %v424
        %v868 = vpop.f32.mrb[0].mxu0
        %v869 = vadd.f32 0.0, %v868
        %v870 = vpop.f32.mrb[0].mxu0
        %v871 = vpop.f32.mrb[0].mxu0
        %v872 = vadd.f32 0.0, %v871
        %v873 = vpop.f32.mrb[0].mxu0
        %874 = vmatprep.mubr.bf16.mxu0 %v262
        %875 = vmatmul.mubr.bf16.gmra.mrb[0].mxu0 %v425
        %v876 = vpop.f32.mrb[0].mxu0
        %v877 = vadd.f32 0.0, %v876
        %v878 = vpop.f32.mrb[0].mxu0
        %v879 = vpop.f32.mrb[0].mxu0
        %v880 = vadd.f32 0.0, %v879
        %v881 = vpop.f32.mrb[0].mxu0
        %882 = vmatprep.mubr.bf16.mxu0 %v263
        %883 = vmatmul.mubr.bf16.gmra.mrb[0].mxu0 %v426
        %v884 = vpop.f32.mrb[0].mxu0
        %v885 = vadd.f32 0.0, %v884
        %v886 = vpop.f32.mrb[0].mxu0
        %v887 = vpop.f32.mrb[0].mxu0
        %v888 = vadd.f32 0.0, %v887
        %v889 = vpop.f32.mrb[0].mxu0
        %890 = vmatprep.mubr.bf16.mxu0 %v264
        %891 = vmatmul.mubr.bf16.gmra.mrb[0].mxu0 %v427
        %v892 = vpop.f32.mrb[0].mxu0
        %v893 = vadd.f32 0.0, %v892
        %v894 = vpop.f32.mrb[0].mxu0
        %v895 = vpop.f32.mrb[0].mxu0
        %v896 = vadd.f32 0.0, %v895
        %v897 = vpop.f32.mrb[0].mxu0
        %898 = vmatprep.mubr.bf16.mxu0 %v265
        %899 = vmatmul.mubr.bf16.gmra.mrb[0].mxu0 %v428
        %v900 = vpop.f32.mrb[0].mxu0
        %v901 = vadd.f32 0.0, %v900
        %v902 = vpop.f32.mrb[0].mxu0
        %v903 = vpop.f32.mrb[0].mxu0
        %v904 = vadd.f32 0.0, %v903
        %v905 = vpop.f32.mrb[0].mxu0
        %906 = vmatprep.mubr.bf16.mxu0 %v266
        %907 = vmatmul.mubr.bf16.gmra.mrb[0].mxu0 %v429
        %v908 = vpop.f32.mrb[0].mxu0
        %v909 = vadd.f32 0.0, %v908
        %v910 = vpop.f32.mrb[0].mxu0
        %v911 = vpop.f32.mrb[0].mxu0
        %v912 = vadd.f32 0.0, %v911
        %v913 = vpop.f32.mrb[0].mxu0
        %914 = vdwg.mxu0
        %915 = vmatprep.subr.bf16.mxu0 0
        %916 = vmatpush1.bf16.msra.mxu0 %v722
        %917 = vmatprep.subr.bf16.mxu0 0
        %918 = vmatpush1.bf16.msra.mxu0 %v723
        %919 = vmatprep.subr.bf16.mxu0 0
        %920 = vmatpush1.bf16.msra.mxu0 %v724
        %921 = vmatprep.subr.bf16.mxu0 0
        %922 = vmatpush1.bf16.msra.mxu0 %v725
        %923 = vmatprep.subr.bf16.mxu0 0
        %924 = vmatpush1.bf16.msra.mxu0 %v726
        %925 = vmatprep.subr.bf16.mxu0 0
        %926 = vmatpush1.bf16.msra.mxu0 %v727
        %927 = vmatprep.subr.bf16.mxu0 0
        %928 = vmatpush1.bf16.msra.mxu0 %v728
        %929 = vmatprep.subr.bf16.mxu0 0
        %930 = vmatpush1.bf16.msra.mxu0 %v729
        %931 = vmatprep.subr.bf16.mxu0 0
        %932 = vmatpush1.bf16.msra.mxu0 0
        %933 = vmatprep.subr.bf16.mxu0 0
        %934 = vmatpush1.bf16.msra.mxu0 0
        %935 = vmatprep.subr.bf16.mxu0 0
        %936 = vmatpush1.bf16.msra.mxu0 0
        %937 = vmatprep.subr.bf16.mxu0 0
        %938 = vmatpush1.bf16.msra.mxu0 0
        %939 = vmatprep.subr.bf16.mxu0 0
        %940 = vmatpush1.bf16.msra.mxu0 0
        %941 = vmatprep.subr.bf16.mxu0 0
        %942 = vmatpush1.bf16.msra.mxu0 0
        %943 = vmatprep.subr.bf16.mxu0 0
        %944 = vmatpush1.bf16.msra.mxu0 0
        %945 = vmatprep.subr.bf16.mxu0 0
        %946 = vmatpush1.bf16.msra.mxu0 0
        %947 = vmatprep.mubr.bf16.mxu0 0
        %948 = vmatmul.mubr.bf16.gmra.mrb[0].mxu0 %v498
        %v949 = vpop.f32.mrb[0].mxu0
        %v950 = vadd.f32 %v789, %v949
        %v951 = vpop.f32.mrb[0].mxu0
        %v952 = vpop.f32.mrb[0].mxu0
        %v953 = vadd.f32 %v792, %v952
        %v954 = vpop.f32.mrb[0].mxu0
        %955 = vmatprep.mubr.bf16.mxu0 0
        %956 = vmatmul.mubr.bf16.gmra.mrb[0].mxu0 %v497
        %v957 = vpop.f32.mrb[0].mxu0
        %v958 = vadd.f32 %v797, %v957
        %v959 = vpop.f32.mrb[0].mxu0
        %v960 = vpop.f32.mrb[0].mxu0
        %v961 = vadd.f32 %v800, %v960
        %v962 = vpop.f32.mrb[0].mxu0
        %963 = vmatprep.mubr.bf16.mxu0 0
        %964 = vmatmul.mubr.bf16.gmra.mrb[0].mxu0 %v499
        %v965 = vpop.f32.mrb[0].mxu0
        %v966 = vadd.f32 %v805, %v965
        %v967 = vpop.f32.mrb[0].mxu0
        %v968 = vpop.f32.mrb[0].mxu0
        %v969 = vadd.f32 %v808, %v968
        %v970 = vpop.f32.mrb[0].mxu0
        %971 = vmatprep.mubr.bf16.mxu0 0
        %972 = vmatmul.mubr.bf16.gmra.mrb[0].mxu0 %v500
        %v973 = vpop.f32.mrb[0].mxu0
        %v974 = vadd.f32 %v813, %v973
        %v975 = vpop.f32.mrb[0].mxu0
        %v976 = vpop.f32.mrb[0].mxu0
        %v977 = vadd.f32 %v816, %v976
        %v978 = vpop.f32.mrb[0].mxu0
        %979 = vmatprep.mubr.bf16.mxu0 0
        %980 = vmatmul.mubr.bf16.gmra.mrb[0].mxu0 %v501
        %v981 = vpop.f32.mrb[0].mxu0
        %v982 = vadd.f32 %v821, %v981
        %v983 = vpop.f32.mrb[0].mxu0
        %v984 = vpop.f32.mrb[0].mxu0
        %v985 = vadd.f32 %v824, %v984
        %v986 = vpop.f32.mrb[0].mxu0
        %987 = vmatprep.mubr.bf16.mxu0 0
        %988 = vmatmul.mubr.bf16.gmra.mrb[0].mxu0 %v502
        %v989 = vpop.f32.mrb[0].mxu0
        %v990 = vadd.f32 %v829, %v989
        %v991 = vpop.f32.mrb[0].mxu0
        %v992 = vpop.f32.mrb[0].mxu0
        %v993 = vadd.f32 %v832, %v992
        %v994 = vpop.f32.mrb[0].mxu0
        %995 = vmatprep.mubr.bf16.mxu0 0
        %996 = vmatmul.mubr.bf16.gmra.mrb[0].mxu0 %v503
        %v997 = vpop.f32.mrb[0].mxu0
        %v998 = vadd.f32 %v837, %v997
        %v999 = vpop.f32.mrb[0].mxu0
        %v1000 = vpop.f32.mrb[0].mxu0
        %v1001 = vadd.f32 %v840, %v1000
        %v1002 = vpop.f32.mrb[0].mxu0
        %1003 = vmatprep.mubr.bf16.mxu0 0
        %1004 = vmatmul.mubr.bf16.gmra.mrb[0].mxu0 %v504
        %v1005 = vpop.f32.mrb[0].mxu0
        %v1006 = vadd.f32 %v845, %v1005
        %v1007 = vpop.f32.mrb[0].mxu0
        %v1008 = vpop.f32.mrb[0].mxu0
        %v1009 = vadd.f32 %v848, %v1008
        %v1010 = vpop.f32.mrb[0].mxu0
        %1011 = vmatprep.mubr.bf16.mxu0 0
        %1012 = vmatmul.mubr.bf16.gmra.mrb[0].mxu0 %v505
        %v1013 = vpop.f32.mrb[0].mxu0
        %v1014 = vadd.f32 %v853, %v1013
        %v1015 = vpop.f32.mrb[0].mxu0
        %v1016 = vpop.f32.mrb[0].mxu0
        %v1017 = vadd.f32 %v856, %v1016
        %v1018 = vpop.f32.mrb[0].mxu0
        %1019 = vmatprep.mubr.bf16.mxu0 0
        %1020 = vmatmul.mubr.bf16.gmra.mrb[0].mxu0 %v506
        %v1021 = vpop.f32.mrb[0].mxu0
        %v1022 = vadd.f32 %v861, %v1021
        %v1023 = vpop.f32.mrb[0].mxu0
        %v1024 = vpop.f32.mrb[0].mxu0
        %v1025 = vadd.f32 %v864, %v1024
        %v1026 = vpop.f32.mrb[0].mxu0
        %1027 = vmatprep.mubr.bf16.mxu0 0
        %1028 = vmatmul.mubr.bf16.gmra.mrb[0].mxu0 %v507
        %v1029 = vpop.f32.mrb[0].mxu0
        %v1030 = vadd.f32 %v869, %v1029
        %v1031 = vpop.f32.mrb[0].mxu0
        %v1032 = vpop.f32.mrb[0].mxu0
        %v1033 = vadd.f32 %v872, %v1032
        %v1034 = vpop.f32.mrb[0].mxu0
        %1035 = vmatprep.mubr.bf16.mxu0 0
        %1036 = vmatmul.mubr.bf16.gmra.mrb[0].mxu0 %v508
        %v1037 = vpop.f32.mrb[0].mxu0
        %v1038 = vadd.f32 %v877, %v1037
        %v1039 = vpop.f32.mrb[0].mxu0
        %v1040 = vpop.f32.mrb[0].mxu0
        %v1041 = vadd.f32 %v880, %v1040
        %v1042 = vpop.f32.mrb[0].mxu0
        %1043 = vmatprep.mubr.bf16.mxu0 0
        %1044 = vmatmul.mubr.bf16.gmra.mrb[0].mxu0 %v509
        %v1045 = vpop.f32.mrb[0].mxu0
        %v1046 = vadd.f32 %v885, %v1045
        %v1047 = vpop.f32.mrb[0].mxu0
        %v1048 = vpop.f32.mrb[0].mxu0
        %v1049 = vadd.f32 %v888, %v1048
        %v1050 = vpop.f32.mrb[0].mxu0
        %1051 = vmatprep.mubr.bf16.mxu0 0
        %1052 = vmatmul.mubr.bf16.gmra.mrb[0].mxu0 %v510
        %v1053 = vpop.f32.mrb[0].mxu0
        %v1054 = vadd.f32 %v893, %v1053
        %v1055 = vpop.f32.mrb[0].mxu0
        %v1056 = vpop.f32.mrb[0].mxu0
        %v1057 = vadd.f32 %v896, %v1056
        %v1058 = vpop.f32.mrb[0].mxu0
        %1059 = vmatprep.mubr.bf16.mxu0 0
        %1060 = vmatmul.mubr.bf16.gmra.mrb[0].mxu0 %v511
        %v1061 = vpop.f32.mrb[0].mxu0
        %v1062 = vadd.f32 %v901, %v1061
        %v1063 = vpop.f32.mrb[0].mxu0
        %v1064 = vpop.f32.mrb[0].mxu0
        %v1065 = vadd.f32 %v904, %v1064
        %v1066 = vpop.f32.mrb[0].mxu0
        %1067 = vmatprep.mubr.bf16.mxu0 0
        %1068 = vmatmul.mubr.bf16.gmra.mrb[0].mxu0 %v512
        %v1069 = vpop.f32.mrb[0].mxu0
        %v1070 = vadd.f32 %v909, %v1069
        %v1071 = vpop.f32.mrb[0].mxu0
        %v1072 = vpop.f32.mrb[0].mxu0
        %v1073 = vadd.f32 %v912, %v1072
        %v1074 = vpop.f32.mrb[0].mxu0
        %1075 = vdwg.mxu0
        %v1124 = vunpack.c.l.b16 %v513
        %v1125 = vunpack.c.l.b16 %v514
        %v1126 = vunpack.c.l.b16 %v515
        %v1127 = vunpack.c.l.b16 %v516
        %v1128 = vunpack.c.l.b16 %v517
        %v1129 = vunpack.c.l.b16 %v518
        %v1130 = vunpack.c.l.b16 %v519
        %v1131 = vunpack.c.l.b16 %v520
        %v1132 = vunpack.c.l.b16 %v521
        %v1133 = vunpack.c.l.b16 %v522
        %v1134 = vunpack.c.l.b16 %v523
        %v1135 = vunpack.c.l.b16 %v524
        %v1136 = vunpack.c.l.b16 %v525
        %v1137 = vunpack.c.l.b16 %v526
        %v1138 = vunpack.c.l.b16 %v527
        %v1139 = vunpack.c.l.b16 %v528
        %v1140 = vunpack.c.l.b16 %v529
        %v1141 = vunpack.c.l.b16 %v530
        %v1142 = vunpack.c.l.b16 %v531
        %v1143 = vunpack.c.l.b16 %v532
        %v1144 = vunpack.c.l.b16 %v533
        %v1145 = vunpack.c.l.b16 %v534
        %v1146 = vunpack.c.l.b16 %v535
        %v1147 = vunpack.c.l.b16 %v536
        %v1148 = vunpack.c.l.b16 %v537
        %v1149 = vunpack.c.l.b16 %v538
        %v1150 = vunpack.c.l.b16 %v539
        %v1151 = vunpack.c.l.b16 %v540
        %v1152 = vunpack.c.l.b16 %v541
        %v1153 = vunpack.c.l.b16 %v542
        %v1154 = vunpack.c.l.b16 %v543
        %v1155 = vunpack.c.l.b16 %v544
        %v1156 = vunpack.c.l.b16 %v545
        %v1157 = vunpack.c.l.b16 %v546
        %v1158 = vunpack.c.l.b16 %v547
        %v1159 = vunpack.c.l.b16 %v548
        %v1160 = vunpack.c.l.b16 %v549
        %v1161 = vunpack.c.l.b16 %v550
        %v1162 = vunpack.c.l.b16 %v551
        %v1163 = vunpack.c.l.b16 %v552
        %v1164 = vunpack.c.l.b16 %v553
        %v1165 = vunpack.c.l.b16 %v554
        %v1166 = vunpack.c.l.b16 %v555
        %v1167 = vunpack.c.l.b16 %v556
        %v1168 = vunpack.c.l.b16 %v557
        %v1169 = vunpack.c.l.b16 %v558
        %v1170 = vunpack.c.l.b16 %v559
        %v1171 = vunpack.c.l.b16 %v560
        %v1172 = vpack.c.b16 %v1125, %v1124
        %v1173 = vpack.c.b16 %v1127, %v1126
        %v1174 = vpack.c.b16 %v1129, %v1128
        %v1175 = vpack.c.b16 %v1131, %v1130
        %v1176 = vpack.c.b16 %v1133, %v1132
        %v1177 = vpack.c.b16 %v1135, %v1134
        %v1178 = vpack.c.b16 %v1137, %v1136
        %v1179 = vpack.c.b16 %v1139, %v1138
        %v1180 = vpack.c.b16 %v1141, %v1140
        %v1181 = vpack.c.b16 %v1143, %v1142
        %v1182 = vpack.c.b16 %v1145, %v1144
        %v1183 = vpack.c.b16 %v1147, %v1146
        %v1184 = vpack.c.b16 %v1149, %v1148
        %v1185 = vpack.c.b16 %v1151, %v1150
        %v1186 = vpack.c.b16 %v1153, %v1152
        %v1187 = vpack.c.b16 %v1155, %v1154
        %v1188 = vpack.c.b16 %v1157, %v1156
        %v1189 = vpack.c.b16 %v1159, %v1158
        %v1190 = vpack.c.b16 %v1161, %v1160
        %v1191 = vpack.c.b16 %v1163, %v1162
        %v1192 = vpack.c.b16 %v1165, %v1164
        %v1193 = vpack.c.b16 %v1167, %v1166
        %v1194 = vpack.c.b16 %v1169, %v1168
        %v1195 = vpack.c.b16 %v1171, %v1170
        %1220 = vmatprep.subr.bf16.mxu0 0
        %1221 = vmatpush1.bf16.msra.mxu0 %v1172
        %1222 = vmatprep.subr.bf16.mxu0 0
        %1223 = vmatpush1.bf16.msra.mxu0 %v1173
        %1224 = vmatprep.subr.bf16.mxu0 0
        %1225 = vmatpush1.bf16.msra.mxu0 %v1174
        %1226 = vmatprep.subr.bf16.mxu0 0
        %1227 = vmatpush1.bf16.msra.mxu0 %v1175
        %1228 = vmatprep.subr.bf16.mxu0 0
        %1229 = vmatpush1.bf16.msra.mxu0 %v1176
        %1230 = vmatprep.subr.bf16.mxu0 0
        %1231 = vmatpush1.bf16.msra.mxu0 %v1177
        %1232 = vmatprep.subr.bf16.mxu0 0
        %1233 = vmatpush1.bf16.msra.mxu0 %v1178
        %1234 = vmatprep.subr.bf16.mxu0 0
        %1235 = vmatpush1.bf16.msra.mxu0 %v1179
        %1236 = vmatprep.subr.bf16.mxu0 0
        %1237 = vmatpush1.bf16.msra.mxu0 %v1180
        %1238 = vmatprep.subr.bf16.mxu0 0
        %1239 = vmatpush1.bf16.msra.mxu0 %v1181
        %1240 = vmatprep.subr.bf16.mxu0 0
        %1241 = vmatpush1.bf16.msra.mxu0 %v1182
        %1242 = vmatprep.subr.bf16.mxu0 0
        %1243 = vmatpush1.bf16.msra.mxu0 %v1183
        %1244 = vmatprep.subr.bf16.mxu0 0
        %1245 = vmatpush1.bf16.msra.mxu0 %v1184
        %1246 = vmatprep.subr.bf16.mxu0 0
        %1247 = vmatpush1.bf16.msra.mxu0 %v1185
        %1248 = vmatprep.subr.bf16.mxu0 0
        %1249 = vmatpush1.bf16.msra.mxu0 %v1186
        %1250 = vmatprep.subr.bf16.mxu0 0
        %1251 = vmatpush1.bf16.msra.mxu0 %v1187
        %1252 = vmatprep.mubr.bf16.mxu0 %v252
        %1253 = vmatmul.mubr.bf16.gmra.mrb[0].mxu0 %v414
        %v1254 = vpop.f32.mrb[0].mxu0
        %v1255 = vadd.f32 %v950, %v1254
        %v1256 = vpop.f32.mrb[0].mxu0
        %v1257 = vpop.f32.mrb[0].mxu0
        %v1258 = vadd.f32 %v953, %v1257
        %v1259 = vpop.f32.mrb[0].mxu0
        %1260 = vmatprep.mubr.bf16.mxu0 %v251
        %1261 = vmatmul.mubr.bf16.gmra.mrb[0].mxu0 %v415
        %v1262 = vpop.f32.mrb[0].mxu0
        %v1263 = vadd.f32 %v958, %v1262
        %v1264 = vpop.f32.mrb[0].mxu0
        %v1265 = vpop.f32.mrb[0].mxu0
        %v1266 = vadd.f32 %v961, %v1265
        %v1267 = vpop.f32.mrb[0].mxu0
        %1268 = vmatprep.mubr.bf16.mxu0 %v252
        %1269 = vmatmul.mubr.bf16.gmra.mrb[0].mxu0 %v414
        %v1270 = vpop.f32.mrb[0].mxu0
        %v1271 = vadd.f32 %v966, %v1270
        %v1272 = vpop.f32.mrb[0].mxu0
        %v1273 = vpop.f32.mrb[0].mxu0
        %v1274 = vadd.f32 %v969, %v1273
        %v1275 = vpop.f32.mrb[0].mxu0
        %1276 = vmatprep.mubr.bf16.mxu0 %v253
        %1277 = vmatmul.mubr.bf16.gmra.mrb[0].mxu0 %v416
        %v1278 = vpop.f32.mrb[0].mxu0
        %v1279 = vadd.f32 %v974, %v1278
        %v1280 = vpop.f32.mrb[0].mxu0
        %v1281 = vpop.f32.mrb[0].mxu0
        %v1282 = vadd.f32 %v977, %v1281
        %v1283 = vpop.f32.mrb[0].mxu0
        %1284 = vmatprep.mubr.bf16.mxu0 %v254
        %1285 = vmatmul.mubr.bf16.gmra.mrb[0].mxu0 %v417
        %v1286 = vpop.f32.mrb[0].mxu0
        %v1287 = vadd.f32 %v982, %v1286
        %v1288 = vpop.f32.mrb[0].mxu0
        %v1289 = vpop.f32.mrb[0].mxu0
        %v1290 = vadd.f32 %v985, %v1289
        %v1291 = vpop.f32.mrb[0].mxu0
        %1292 = vmatprep.mubr.bf16.mxu0 %v255
        %1293 = vmatmul.mubr.bf16.gmra.mrb[0].mxu0 %v418
        %v1294 = vpop.f32.mrb[0].mxu0
        %v1295 = vadd.f32 %v990, %v1294
        %v1296 = vpop.f32.mrb[0].mxu0
        %v1297 = vpop.f32.mrb[0].mxu0
        %v1298 = vadd.f32 %v993, %v1297
        %v1299 = vpop.f32.mrb[0].mxu0
        %1300 = vmatprep.mubr.bf16.mxu0 %v256
        %1301 = vmatmul.mubr.bf16.gmra.mrb[0].mxu0 %v419
        %v1302 = vpop.f32.mrb[0].mxu0
        %v1303 = vadd.f32 %v998, %v1302
        %v1304 = vpop.f32.mrb[0].mxu0
        %v1305 = vpop.f32.mrb[0].mxu0
        %v1306 = vadd.f32 %v1001, %v1305
        %v1307 = vpop.f32.mrb[0].mxu0
        %1308 = vmatprep.mubr.bf16.mxu0 %v257
        %1309 = vmatmul.mubr.bf16.gmra.mrb[0].mxu0 %v420
        %v1310 = vpop.f32.mrb[0].mxu0
        %v1311 = vadd.f32 %v1006, %v1310
        %v1312 = vpop.f32.mrb[0].mxu0
        %v1313 = vpop.f32.mrb[0].mxu0
        %v1314 = vadd.f32 %v1009, %v1313
        %v1315 = vpop.f32.mrb[0].mxu0
        %1316 = vmatprep.mubr.bf16.mxu0 %v258
        %1317 = vmatmul.mubr.bf16.gmra.mrb[0].mxu0 %v421
        %v1318 = vpop.f32.mrb[0].mxu0
        %v1319 = vadd.f32 %v1014, %v1318
        %v1320 = vpop.f32.mrb[0].mxu0
        %v1321 = vpop.f32.mrb[0].mxu0
        %v1322 = vadd.f32 %v1017, %v1321
        %v1323 = vpop.f32.mrb[0].mxu0
        %1324 = vmatprep.mubr.bf16.mxu0 %v259
        %1325 = vmatmul.mubr.bf16.gmra.mrb[0].mxu0 %v422
        %v1326 = vpop.f32.mrb[0].mxu0
        %v1327 = vadd.f32 %v1022, %v1326
        %v1328 = vpop.f32.mrb[0].mxu0
        %v1329 = vpop.f32.mrb[0].mxu0
        %v1330 = vadd.f32 %v1025, %v1329
        %v1331 = vpop.f32.mrb[0].mxu0
        %1332 = vmatprep.mubr.bf16.mxu0 %v260
        %1333 = vmatmul.mubr.bf16.gmra.mrb[0].mxu0 %v423
        %v1334 = vpop.f32.mrb[0].mxu0
        %v1335 = vadd.f32 %v1030, %v1334
        %v1336 = vpop.f32.mrb[0].mxu0
        %v1337 = vpop.f32.mrb[0].mxu0
        %v1338 = vadd.f32 %v1033, %v1337
        %v1339 = vpop.f32.mrb[0].mxu0
        %1340 = vmatprep.mubr.bf16.mxu0 %v261
        %1341 = vmatmul.mubr.bf16.gmra.mrb[0].mxu0 %v424
        %v1342 = vpop.f32.mrb[0].mxu0
        %v1343 = vadd.f32 %v1038, %v1342
        %v1344 = vpop.f32.mrb[0].mxu0
        %v1345 = vpop.f32.mrb[0].mxu0
        %v1346 = vadd.f32 %v1041, %v1345
        %v1347 = vpop.f32.mrb[0].mxu0
        %1348 = vmatprep.mubr.bf16.mxu0 %v262
        %1349 = vmatmul.mubr.bf16.gmra.mrb[0].mxu0 %v425
        %v1350 = vpop.f32.mrb[0].mxu0
        %v1351 = vadd.f32 %v1046, %v1350
        %v1352 = vpop.f32.mrb[0].mxu0
        %v1353 = vpop.f32.mrb[0].mxu0
        %v1354 = vadd.f32 %v1049, %v1353
        %v1355 = vpop.f32.mrb[0].mxu0
        %1356 = vmatprep.mubr.bf16.mxu0 %v263
        %1357 = vmatmul.mubr.bf16.gmra.mrb[0].mxu0 %v426
        %v1358 = vpop.f32.mrb[0].mxu0
        %v1359 = vadd.f32 %v1054, %v1358
        %v1360 = vpop.f32.mrb[0].mxu0
        %v1361 = vpop.f32.mrb[0].mxu0
        %v1362 = vadd.f32 %v1057, %v1361
        %v1363 = vpop.f32.mrb[0].mxu0
        %1364 = vmatprep.mubr.bf16.mxu0 %v264
        %1365 = vmatmul.mubr.bf16.gmra.mrb[0].mxu0 %v427
        %v1366 = vpop.f32.mrb[0].mxu0
        %v1367 = vadd.f32 %v1062, %v1366
        %v1368 = vpop.f32.mrb[0].mxu0
        %v1369 = vpop.f32.mrb[0].mxu0
        %v1370 = vadd.f32 %v1065, %v1369
        %v1371 = vpop.f32.mrb[0].mxu0
        %1372 = vmatprep.mubr.bf16.mxu0 %v265
        %1373 = vmatmul.mubr.bf16.gmra.mrb[0].mxu0 %v428
        %v1374 = vpop.f32.mrb[0].mxu0
        %v1375 = vadd.f32 %v1070, %v1374
        %v1376 = vpop.f32.mrb[0].mxu0
        %v1377 = vpop.f32.mrb[0].mxu0
        %v1378 = vadd.f32 %v1073, %v1377
        %v1379 = vpop.f32.mrb[0].mxu0
        %1380 = vdwg.mxu0
        %1381 = vmatprep.subr.bf16.mxu0 0
        %1382 = vmatpush1.bf16.msra.mxu0 %v1188
        %1383 = vmatprep.subr.bf16.mxu0 0
        %1384 = vmatpush1.bf16.msra.mxu0 %v1189
        %1385 = vmatprep.subr.bf16.mxu0 0
        %1386 = vmatpush1.bf16.msra.mxu0 %v1190
        %1387 = vmatprep.subr.bf16.mxu0 0
        %1388 = vmatpush1.bf16.msra.mxu0 %v1191
        %1389 = vmatprep.subr.bf16.mxu0 0
        %1390 = vmatpush1.bf16.msra.mxu0 %v1192
        %1391 = vmatprep.subr.bf16.mxu0 0
        %1392 = vmatpush1.bf16.msra.mxu0 %v1193
        %1393 = vmatprep.subr.bf16.mxu0 0
        %1394 = vmatpush1.bf16.msra.mxu0 %v1194
        %1395 = vmatprep.subr.bf16.mxu0 0
        %1396 = vmatpush1.bf16.msra.mxu0 %v1195
        %1397 = vmatprep.subr.bf16.mxu0 0
        %1398 = vmatpush1.bf16.msra.mxu0 0
        %1399 = vmatprep.subr.bf16.mxu0 0
        %1400 = vmatpush1.bf16.msra.mxu0 0
        %1401 = vmatprep.subr.bf16.mxu0 0
        %1402 = vmatpush1.bf16.msra.mxu0 0
        %1403 = vmatprep.subr.bf16.mxu0 0
        %1404 = vmatpush1.bf16.msra.mxu0 0
        %1405 = vmatprep.subr.bf16.mxu0 0
        %1406 = vmatpush1.bf16.msra.mxu0 0
        %1407 = vmatprep.subr.bf16.mxu0 0
        %1408 = vmatpush1.bf16.msra.mxu0 0
        %1409 = vmatprep.subr.bf16.mxu0 0
        %1410 = vmatpush1.bf16.msra.mxu0 0
        %1411 = vmatprep.subr.bf16.mxu0 0
        %1412 = vmatpush1.bf16.msra.mxu0 0
        %1413 = vmatprep.mubr.bf16.mxu0 0
        %1414 = vmatmul.mubr.bf16.gmra.mrb[0].mxu0 %v497
        %v1415 = vpop.f32.mrb[0].mxu0
        %v1416 = vadd.f32 %v1255, %v1415
        %v1417 = vpop.f32.mrb[0].mxu0
        %v1418 = vpop.f32.mrb[0].mxu0
        %v1419 = vadd.f32 %v1258, %v1418
        %v1420 = vpop.f32.mrb[0].mxu0
        %1421 = vmatprep.mubr.bf16.mxu0 0
        %1422 = vmatmul.mubr.bf16.gmra.mrb[0].mxu0 %v498
        %v1423 = vpop.f32.mrb[0].mxu0
        %v1424 = vadd.f32 %v1263, %v1423
        %v1425 = vpop.f32.mrb[0].mxu0
        %v1426 = vpop.f32.mrb[0].mxu0
        %v1427 = vadd.f32 %v1266, %v1426
        %v1428 = vpop.f32.mrb[0].mxu0
        %1429 = vmatprep.mubr.bf16.mxu0 0
        %1430 = vmatmul.mubr.bf16.gmra.mrb[0].mxu0 %v497
        %v1431 = vpop.f32.mrb[0].mxu0
        %v1432 = vadd.f32 %v1271, %v1431
        %v1433 = vpop.f32.mrb[0].mxu0
        %v1434 = vpop.f32.mrb[0].mxu0
        %v1435 = vadd.f32 %v1274, %v1434
        %v1436 = vpop.f32.mrb[0].mxu0
        %1437 = vmatprep.mubr.bf16.mxu0 0
        %1438 = vmatmul.mubr.bf16.gmra.mrb[0].mxu0 %v499
        %v1439 = vpop.f32.mrb[0].mxu0
        %v1440 = vadd.f32 %v1279, %v1439
        %v1441 = vpop.f32.mrb[0].mxu0
        %v1442 = vpop.f32.mrb[0].mxu0
        %v1443 = vadd.f32 %v1282, %v1442
        %v1444 = vpop.f32.mrb[0].mxu0
        %1445 = vmatprep.mubr.bf16.mxu0 0
        %1446 = vmatmul.mubr.bf16.gmra.mrb[0].mxu0 %v500
        %v1447 = vpop.f32.mrb[0].mxu0
        %v1448 = vadd.f32 %v1287, %v1447
        %v1449 = vpop.f32.mrb[0].mxu0
        %v1450 = vpop.f32.mrb[0].mxu0
        %v1451 = vadd.f32 %v1290, %v1450
        %v1452 = vpop.f32.mrb[0].mxu0
        %1453 = vmatprep.mubr.bf16.mxu0 0
        %1454 = vmatmul.mubr.bf16.gmra.mrb[0].mxu0 %v501
        %v1455 = vpop.f32.mrb[0].mxu0
        %v1456 = vadd.f32 %v1295, %v1455
        %v1457 = vpop.f32.mrb[0].mxu0
        %v1458 = vpop.f32.mrb[0].mxu0
        %v1459 = vadd.f32 %v1298, %v1458
        %v1460 = vpop.f32.mrb[0].mxu0
        %1461 = vmatprep.mubr.bf16.mxu0 0
        %1462 = vmatmul.mubr.bf16.gmra.mrb[0].mxu0 %v502
        %v1463 = vpop.f32.mrb[0].mxu0
        %v1464 = vadd.f32 %v1303, %v1463
        %v1465 = vpop.f32.mrb[0].mxu0
        %v1466 = vpop.f32.mrb[0].mxu0
        %v1467 = vadd.f32 %v1306, %v1466
        %v1468 = vpop.f32.mrb[0].mxu0
        %1469 = vmatprep.mubr.bf16.mxu0 0
        %1470 = vmatmul.mubr.bf16.gmra.mrb[0].mxu0 %v503
        %v1471 = vpop.f32.mrb[0].mxu0
        %v1472 = vadd.f32 %v1311, %v1471
        %v1473 = vpop.f32.mrb[0].mxu0
        %v1474 = vpop.f32.mrb[0].mxu0
        %v1475 = vadd.f32 %v1314, %v1474
        %v1476 = vpop.f32.mrb[0].mxu0
        %1477 = vmatprep.mubr.bf16.mxu0 0
        %1478 = vmatmul.mubr.bf16.gmra.mrb[0].mxu0 %v504
        %v1479 = vpop.f32.mrb[0].mxu0
        %v1480 = vadd.f32 %v1319, %v1479
        %v1481 = vpop.f32.mrb[0].mxu0
        %v1482 = vpop.f32.mrb[0].mxu0
        %v1483 = vadd.f32 %v1322, %v1482
        %v1484 = vpop.f32.mrb[0].mxu0
        %1485 = vmatprep.mubr.bf16.mxu0 0
        %1486 = vmatmul.mubr.bf16.gmra.mrb[0].mxu0 %v505
        %v1487 = vpop.f32.mrb[0].mxu0
        %v1488 = vadd.f32 %v1327, %v1487
        %v1489 = vpop.f32.mrb[0].mxu0
        %v1490 = vpop.f32.mrb[0].mxu0
        %v1491 = vadd.f32 %v1330, %v1490
        %v1492 = vpop.f32.mrb[0].mxu0
        %1493 = vmatprep.mubr.bf16.mxu0 0
        %1494 = vmatmul.mubr.bf16.gmra.mrb[0].mxu0 %v506
        %v1495 = vpop.f32.mrb[0].mxu0
        %v1496 = vadd.f32 %v1335, %v1495
        %v1497 = vpop.f32.mrb[0].mxu0
        %v1498 = vpop.f32.mrb[0].mxu0
        %v1499 = vadd.f32 %v1338, %v1498
        %v1500 = vpop.f32.mrb[0].mxu0
        %1501 = vmatprep.mubr.bf16.mxu0 0
        %1502 = vmatmul.mubr.bf16.gmra.mrb[0].mxu0 %v507
        %v1503 = vpop.f32.mrb[0].mxu0
        %v1504 = vadd.f32 %v1343, %v1503
        %v1505 = vpop.f32.mrb[0].mxu0
        %v1506 = vpop.f32.mrb[0].mxu0
        %v1507 = vadd.f32 %v1346, %v1506
        %v1508 = vpop.f32.mrb[0].mxu0
        %1509 = vmatprep.mubr.bf16.mxu0 0
        %1510 = vmatmul.mubr.bf16.gmra.mrb[0].mxu0 %v508
        %v1511 = vpop.f32.mrb[0].mxu0
        %v1512 = vadd.f32 %v1351, %v1511
        %v1513 = vpop.f32.mrb[0].mxu0
        %v1514 = vpop.f32.mrb[0].mxu0
        %v1515 = vadd.f32 %v1354, %v1514
        %v1516 = vpop.f32.mrb[0].mxu0
        %1517 = vmatprep.mubr.bf16.mxu0 0
        %1518 = vmatmul.mubr.bf16.gmra.mrb[0].mxu0 %v509
        %v1519 = vpop.f32.mrb[0].mxu0
        %v1520 = vadd.f32 %v1359, %v1519
        %v1521 = vpop.f32.mrb[0].mxu0
        %v1522 = vpop.f32.mrb[0].mxu0
        %v1523 = vadd.f32 %v1362, %v1522
        %v1524 = vpop.f32.mrb[0].mxu0
        %1525 = vmatprep.mubr.bf16.mxu0 0
        %1526 = vmatmul.mubr.bf16.gmra.mrb[0].mxu0 %v510
        %v1527 = vpop.f32.mrb[0].mxu0
        %v1528 = vadd.f32 %v1367, %v1527
        %v1529 = vpop.f32.mrb[0].mxu0
        %v1530 = vpop.f32.mrb[0].mxu0
        %v1531 = vadd.f32 %v1370, %v1530
        %v1532 = vpop.f32.mrb[0].mxu0
        %1533 = vmatprep.mubr.bf16.mxu0 0
        %1534 = vmatmul.mubr.bf16.gmra.mrb[0].mxu0 %v511
        %v1535 = vpop.f32.mrb[0].mxu0
        %v1536 = vadd.f32 %v1375, %v1535
        %v1537 = vpop.f32.mrb[0].mxu0
        %v1538 = vpop.f32.mrb[0].mxu0
        %v1539 = vadd.f32 %v1378, %v1538
        %v1540 = vpop.f32.mrb[0].mxu0
        %1541 = vdwg.mxu0
        %s1542 = scalar_lea.vmem [#allocation5], 384
        %v1543 = vld [vmem:[%s1542] sm:$0xf]
        %v1544 = vld [vmem:[%s1542 + $0x4] sm:$0xf]
        %v1545 = vld [vmem:[%s1542 + $0x8] sm:$0xf]
        %v1546 = vld [vmem:[%s1542 + $0xc] sm:$0xf]
        %v1547 = vld [vmem:[%s1542 + $0x10] sm:$0xf]
        %v1548 = vld [vmem:[%s1542 + $0x14] sm:$0xf]
        %v1549 = vld [vmem:[%s1542 + $0x18] sm:$0xf]
        %v1550 = vld [vmem:[%s1542 + $0x1c] sm:$0xf]
        %v1551 = vld [vmem:[%s1542 + $0x20] sm:$0xf]
        %v1552 = vld [vmem:[%s1542 + $0x24] sm:$0xf]
        %v1553 = vld [vmem:[%s1542 + $0x28] sm:$0xf]
        %v1554 = vld [vmem:[%s1542 + $0x2c] sm:$0xf]
        %v1555 = vld [vmem:[%s1542 + $0x30] sm:$0xf]
        %v1556 = vld [vmem:[%s1542 + $0x34] sm:$0xf]
        %v1557 = vld [vmem:[%s1542 + $0x38] sm:$0xf]
        %v1558 = vld [vmem:[%s1542 + $0x3c] sm:$0xf]
        %v1559 = vld [vmem:[%s1542 + $0x40] sm:$0xf]
        %v1560 = vld [vmem:[%s1542 + $0x44] sm:$0xf]
        %v1561 = vld [vmem:[%s1542 + $0x48] sm:$0xf]
        %v1562 = vld [vmem:[%s1542 + $0x4c] sm:$0xf]
        %v1563 = vld [vmem:[%s1542 + $0x50] sm:$0xf]
        %v1564 = vld [vmem:[%s1542 + $0x54] sm:$0xf]
        %v1565 = vld [vmem:[%s1542 + $0x58] sm:$0xf]
        %v1566 = vld [vmem:[%s1542 + $0x5c] sm:$0xf]
        %v1567 = vld [vmem:[%s1542 + $0x60] sm:$0xf]
        %v1568 = vld [vmem:[%s1542 + $0x64] sm:$0xf]
        %v1569 = vld [vmem:[%s1542 + $0x68] sm:$0xf]
        %v1570 = vld [vmem:[%s1542 + $0x6c] sm:$0xf]
        %v1571 = vld [vmem:[%s1542 + $0x70] sm:$0xf]
        %v1572 = vld [vmem:[%s1542 + $0x74] sm:$0xf]
        %v1573 = vld [vmem:[%s1542 + $0x78] sm:$0xf]
        %v1574 = vld [vmem:[%s1542 + $0x7c] sm:$0xf]
        %v1575 = vld [vmem:[%s1542 + $0x80] sm:$0xf]
        %v1576 = vld [vmem:[%s1542 + $0x84] sm:$0xf]
        %v1577 = vld [vmem:[%s1542 + $0x88] sm:$0xf]
        %v1578 = vld [vmem:[%s1542 + $0x8c] sm:$0xf]
        %v1579 = vld [vmem:[%s1542 + $0x90] sm:$0xf]
        %v1580 = vld [vmem:[%s1542 + $0x94] sm:$0xf]
        %v1581 = vld [vmem:[%s1542 + $0x98] sm:$0xf]
        %v1582 = vld [vmem:[%s1542 + $0x9c] sm:$0xf]
        %v1583 = vld [vmem:[%s1542 + $0xa0] sm:$0xf]
        %v1584 = vld [vmem:[%s1542 + $0xa4] sm:$0xf]
        %v1585 = vld [vmem:[%s1542 + $0xa8] sm:$0xf]
        %v1586 = vld [vmem:[%s1542 + $0xac] sm:$0xf]
        %v1587 = vld [vmem:[%s1542 + $0xb0] sm:$0xf]
        %v1588 = vld [vmem:[%s1542 + $0xb4] sm:$0xf]
        %v1589 = vld [vmem:[%s1542 + $0xb8] sm:$0xf]
        %v1590 = vld [vmem:[%s1542 + $0xbc] sm:$0xf]
        %v1639 = vunpack.c.l.b16 %v1543
        %v1640 = vunpack.c.l.b16 %v1544
        %v1641 = vunpack.c.l.b16 %v1545
        %v1642 = vunpack.c.l.b16 %v1546
        %v1643 = vunpack.c.l.b16 %v1547
        %v1644 = vunpack.c.l.b16 %v1548
        %v1645 = vunpack.c.l.b16 %v1549
        %v1646 = vunpack.c.l.b16 %v1550
        %v1647 = vunpack.c.l.b16 %v1551
        %v1648 = vunpack.c.l.b16 %v1552
        %v1649 = vunpack.c.l.b16 %v1553
        %v1650 = vunpack.c.l.b16 %v1554
        %v1651 = vunpack.c.l.b16 %v1555
        %v1652 = vunpack.c.l.b16 %v1556
        %v1653 = vunpack.c.l.b16 %v1557
        %v1654 = vunpack.c.l.b16 %v1558
        %v1655 = vunpack.c.l.b16 %v1559
        %v1656 = vunpack.c.l.b16 %v1560
        %v1657 = vunpack.c.l.b16 %v1561
        %v1658 = vunpack.c.l.b16 %v1562
        %v1659 = vunpack.c.l.b16 %v1563
        %v1660 = vunpack.c.l.b16 %v1564
        %v1661 = vunpack.c.l.b16 %v1565
        %v1662 = vunpack.c.l.b16 %v1566
        %v1663 = vunpack.c.l.b16 %v1567
        %v1664 = vunpack.c.l.b16 %v1568
        %v1665 = vunpack.c.l.b16 %v1569
        %v1666 = vunpack.c.l.b16 %v1570
        %v1667 = vunpack.c.l.b16 %v1571
        %v1668 = vunpack.c.l.b16 %v1572
        %v1669 = vunpack.c.l.b16 %v1573
        %v1670 = vunpack.c.l.b16 %v1574
        %v1671 = vunpack.c.l.b16 %v1575
        %v1672 = vunpack.c.l.b16 %v1576
        %v1673 = vunpack.c.l.b16 %v1577
        %v1674 = vunpack.c.l.b16 %v1578
        %v1675 = vunpack.c.l.b16 %v1579
        %v1676 = vunpack.c.l.b16 %v1580
        %v1677 = vunpack.c.l.b16 %v1581
        %v1678 = vunpack.c.l.b16 %v1582
        %v1679 = vunpack.c.l.b16 %v1583
        %v1680 = vunpack.c.l.b16 %v1584
        %v1681 = vunpack.c.l.b16 %v1585
        %v1682 = vunpack.c.l.b16 %v1586
        %v1683 = vunpack.c.l.b16 %v1587
        %v1684 = vunpack.c.l.b16 %v1588
        %v1685 = vunpack.c.l.b16 %v1589
        %v1686 = vunpack.c.l.b16 %v1590
        %v1687 = vpack.c.b16 %v1640, %v1639
        %v1688 = vpack.c.b16 %v1642, %v1641
        %v1689 = vpack.c.b16 %v1644, %v1643
        %v1690 = vpack.c.b16 %v1646, %v1645
        %v1691 = vpack.c.b16 %v1648, %v1647
        %v1692 = vpack.c.b16 %v1650, %v1649
        %v1693 = vpack.c.b16 %v1652, %v1651
        %v1694 = vpack.c.b16 %v1654, %v1653
        %v1695 = vpack.c.b16 %v1656, %v1655
        %v1696 = vpack.c.b16 %v1658, %v1657
        %v1697 = vpack.c.b16 %v1660, %v1659
        %v1698 = vpack.c.b16 %v1662, %v1661
        %v1699 = vpack.c.b16 %v1664, %v1663
        %v1700 = vpack.c.b16 %v1666, %v1665
        %v1701 = vpack.c.b16 %v1668, %v1667
        %v1702 = vpack.c.b16 %v1670, %v1669
        %v1703 = vpack.c.b16 %v1672, %v1671
        %v1704 = vpack.c.b16 %v1674, %v1673
        %v1705 = vpack.c.b16 %v1676, %v1675
        %v1706 = vpack.c.b16 %v1678, %v1677
        %v1707 = vpack.c.b16 %v1680, %v1679
        %v1708 = vpack.c.b16 %v1682, %v1681
        %v1709 = vpack.c.b16 %v1684, %v1683
        %v1710 = vpack.c.b16 %v1686, %v1685
        %1735 = vmatprep.subr.bf16.mxu0 0
        %1736 = vmatpush1.bf16.msra.mxu0 %v1687
        %1737 = vmatprep.subr.bf16.mxu0 0
        %1738 = vmatpush1.bf16.msra.mxu0 %v1688
        %1739 = vmatprep.subr.bf16.mxu0 0
        %1740 = vmatpush1.bf16.msra.mxu0 %v1689
        %1741 = vmatprep.subr.bf16.mxu0 0
        %1742 = vmatpush1.bf16.msra.mxu0 %v1690
        %1743 = vmatprep.subr.bf16.mxu0 0
        %1744 = vmatpush1.bf16.msra.mxu0 %v1691
        %1745 = vmatprep.subr.bf16.mxu0 0
        %1746 = vmatpush1.bf16.msra.mxu0 %v1692
        %1747 = vmatprep.subr.bf16.mxu0 0
        %1748 = vmatpush1.bf16.msra.mxu0 %v1693
        %1749 = vmatprep.subr.bf16.mxu0 0
        %1750 = vmatpush1.bf16.msra.mxu0 %v1694
        %1751 = vmatprep.subr.bf16.mxu0 0
        %1752 = vmatpush1.bf16.msra.mxu0 %v1695
        %1753 = vmatprep.subr.bf16.mxu0 0
        %1754 = vmatpush1.bf16.msra.mxu0 %v1696
        %1755 = vmatprep.subr.bf16.mxu0 0
        %1756 = vmatpush1.bf16.msra.mxu0 %v1697
        %1757 = vmatprep.subr.bf16.mxu0 0
        %1758 = vmatpush1.bf16.msra.mxu0 %v1698
        %1759 = vmatprep.subr.bf16.mxu0 0
        %1760 = vmatpush1.bf16.msra.mxu0 %v1699
        %1761 = vmatprep.subr.bf16.mxu0 0
        %1762 = vmatpush1.bf16.msra.mxu0 %v1700
        %1763 = vmatprep.subr.bf16.mxu0 0
        %1764 = vmatpush1.bf16.msra.mxu0 %v1701
        %1765 = vmatprep.subr.bf16.mxu0 0
        %1766 = vmatpush1.bf16.msra.mxu0 %v1702
        %1767 = vmatprep.mubr.bf16.mxu0 %v252
        %1768 = vmatmul.mubr.bf16.gmra.mrb[0].mxu0 %v414
        %v1769 = vpop.f32.mrb[0].mxu0
        %v1770 = vadd.f32 0.0, %v1769
        %v1771 = vpop.f32.mrb[0].mxu0
        %v1772 = vpop.f32.mrb[0].mxu0
        %v1773 = vadd.f32 0.0, %v1772
        %v1774 = vpop.f32.mrb[0].mxu0
        %1775 = vmatprep.mubr.bf16.mxu0 %v253
        %1776 = vmatmul.mubr.bf16.gmra.mrb[0].mxu0 %v416
        %v1777 = vpop.f32.mrb[0].mxu0
        %v1778 = vadd.f32 0.0, %v1777
        %v1779 = vpop.f32.mrb[0].mxu0
        %v1780 = vpop.f32.mrb[0].mxu0
        %v1781 = vadd.f32 0.0, %v1780
        %v1782 = vpop.f32.mrb[0].mxu0
        %1783 = vmatprep.mubr.bf16.mxu0 %v254
        %1784 = vmatmul.mubr.bf16.gmra.mrb[0].mxu0 %v417
        %v1785 = vpop.f32.mrb[0].mxu0
        %v1786 = vadd.f32 0.0, %v1785
        %v1787 = vpop.f32.mrb[0].mxu0
        %v1788 = vpop.f32.mrb[0].mxu0
        %v1789 = vadd.f32 0.0, %v1788
        %v1790 = vpop.f32.mrb[0].mxu0
        %1791 = vmatprep.mubr.bf16.mxu0 %v255
        %1792 = vmatmul.mubr.bf16.gmra.mrb[0].mxu0 %v418
        %v1793 = vpop.f32.mrb[0].mxu0
        %v1794 = vadd.f32 0.0, %v1793
        %v1795 = vpop.f32.mrb[0].mxu0
        %v1796 = vpop.f32.mrb[0].mxu0
        %v1797 = vadd.f32 0.0, %v1796
        %v1798 = vpop.f32.mrb[0].mxu0
        %1799 = vmatprep.mubr.bf16.mxu0 %v256
        %1800 = vmatmul.mubr.bf16.gmra.mrb[0].mxu0 %v419
        %v1801 = vpop.f32.mrb[0].mxu0
        %v1802 = vadd.f32 0.0, %v1801
        %v1803 = vpop.f32.mrb[0].mxu0
        %v1804 = vpop.f32.mrb[0].mxu0
        %v1805 = vadd.f32 0.0, %v1804
        %v1806 = vpop.f32.mrb[0].mxu0
        %1807 = vmatprep.mubr.bf16.mxu0 %v257
        %1808 = vmatmul.mubr.bf16.gmra.mrb[0].mxu0 %v420
        %v1809 = vpop.f32.mrb[0].mxu0
        %v1810 = vadd.f32 0.0, %v1809
        %v1811 = vpop.f32.mrb[0].mxu0
        %v1812 = vpop.f32.mrb[0].mxu0
        %v1813 = vadd.f32 0.0, %v1812
        %v1814 = vpop.f32.mrb[0].mxu0
        %1815 = vmatprep.mubr.bf16.mxu0 %v258
        %1816 = vmatmul.mubr.bf16.gmra.mrb[0].mxu0 %v421
        %v1817 = vpop.f32.mrb[0].mxu0
        %v1818 = vadd.f32 0.0, %v1817
        %v1819 = vpop.f32.mrb[0].mxu0
        %v1820 = vpop.f32.mrb[0].mxu0
        %v1821 = vadd.f32 0.0, %v1820
        %v1822 = vpop.f32.mrb[0].mxu0
        %1823 = vmatprep.mubr.bf16.mxu0 %v259
        %1824 = vmatmul.mubr.bf16.gmra.mrb[0].mxu0 %v422
        %v1825 = vpop.f32.mrb[0].mxu0
        %v1826 = vadd.f32 0.0, %v1825
        %v1827 = vpop.f32.mrb[0].mxu0
        %v1828 = vpop.f32.mrb[0].mxu0
        %v1829 = vadd.f32 0.0, %v1828
        %v1830 = vpop.f32.mrb[0].mxu0
        %1831 = vmatprep.mubr.bf16.mxu0 %v260
        %1832 = vmatmul.mubr.bf16.gmra.mrb[0].mxu0 %v423
        %v1833 = vpop.f32.mrb[0].mxu0
        %v1834 = vadd.f32 0.0, %v1833
        %v1835 = vpop.f32.mrb[0].mxu0
        %v1836 = vpop.f32.mrb[0].mxu0
        %v1837 = vadd.f32 0.0, %v1836
        %v1838 = vpop.f32.mrb[0].mxu0
        %1839 = vmatprep.mubr.bf16.mxu0 %v261
        %1840 = vmatmul.mubr.bf16.gmra.mrb[0].mxu0 %v424
        %v1841 = vpop.f32.mrb[0].mxu0
        %v1842 = vadd.f32 0.0, %v1841
        %v1843 = vpop.f32.mrb[0].mxu0
        %v1844 = vpop.f32.mrb[0].mxu0
        %v1845 = vadd.f32 0.0, %v1844
        %v1846 = vpop.f32.mrb[0].mxu0
        %1847 = vmatprep.mubr.bf16.mxu0 %v262
        %1848 = vmatmul.mubr.bf16.gmra.mrb[0].mxu0 %v425
        %v1849 = vpop.f32.mrb[0].mxu0
        %v1850 = vadd.f32 0.0, %v1849
        %v1851 = vpop.f32.mrb[0].mxu0
        %v1852 = vpop.f32.mrb[0].mxu0
        %v1853 = vadd.f32 0.0, %v1852
        %v1854 = vpop.f32.mrb[0].mxu0
        %1855 = vmatprep.mubr.bf16.mxu0 %v263
        %1856 = vmatmul.mubr.bf16.gmra.mrb[0].mxu0 %v426
        %v1857 = vpop.f32.mrb[0].mxu0
        %v1858 = vadd.f32 0.0, %v1857
        %v1859 = vpop.f32.mrb[0].mxu0
        %v1860 = vpop.f32.mrb[0].mxu0
        %v1861 = vadd.f32 0.0, %v1860
        %v1862 = vpop.f32.mrb[0].mxu0
        %1863 = vmatprep.mubr.bf16.mxu0 %v264
        %1864 = vmatmul.mubr.bf16.gmra.mrb[0].mxu0 %v427
        %v1865 = vpop.f32.mrb[0].mxu0
        %v1866 = vadd.f32 0.0, %v1865
        %v1867 = vpop.f32.mrb[0].mxu0
        %v1868 = vpop.f32.mrb[0].mxu0
        %v1869 = vadd.f32 0.0, %v1868
        %v1870 = vpop.f32.mrb[0].mxu0
        %1871 = vmatprep.mubr.bf16.mxu0 %v265
        %1872 = vmatmul.mubr.bf16.gmra.mrb[0].mxu0 %v428
        %v1873 = vpop.f32.mrb[0].mxu0
        %v1874 = vadd.f32 0.0, %v1873
        %v1875 = vpop.f32.mrb[0].mxu0
        %v1876 = vpop.f32.mrb[0].mxu0
        %v1877 = vadd.f32 0.0, %v1876
        %v1878 = vpop.f32.mrb[0].mxu0
        %1879 = vmatprep.mubr.bf16.mxu0 %v266
        %1880 = vmatmul.mubr.bf16.gmra.mrb[0].mxu0 %v429
        %v1881 = vpop.f32.mrb[0].mxu0
        %v1882 = vadd.f32 0.0, %v1881
        %v1883 = vpop.f32.mrb[0].mxu0
        %v1884 = vpop.f32.mrb[0].mxu0
        %v1885 = vadd.f32 0.0, %v1884
        %v1886 = vpop.f32.mrb[0].mxu0
        %1887 = vmatprep.mubr.bf16.mxu0 %v265
        %1888 = vmatmul.mubr.bf16.gmra.mrb[0].mxu0 %v428
        %v1889 = vpop.f32.mrb[0].mxu0
        %v1890 = vadd.f32 0.0, %v1889
        %v1891 = vpop.f32.mrb[0].mxu0
        %v1892 = vpop.f32.mrb[0].mxu0
        %v1893 = vadd.f32 0.0, %v1892
        %v1894 = vpop.f32.mrb[0].mxu0
        %1895 = vdwg.mxu0
        %1896 = vmatprep.subr.bf16.mxu0 0
        %1897 = vmatpush1.bf16.msra.mxu0 %v1703
        %1898 = vmatprep.subr.bf16.mxu0 0
        %1899 = vmatpush1.bf16.msra.mxu0 %v1704
        %1900 = vmatprep.subr.bf16.mxu0 0
        %1901 = vmatpush1.bf16.msra.mxu0 %v1705
        %1902 = vmatprep.subr.bf16.mxu0 0
        %1903 = vmatpush1.bf16.msra.mxu0 %v1706
        %1904 = vmatprep.subr.bf16.mxu0 0
        %1905 = vmatpush1.bf16.msra.mxu0 %v1707
        %1906 = vmatprep.subr.bf16.mxu0 0
        %1907 = vmatpush1.bf16.msra.mxu0 %v1708
        %1908 = vmatprep.subr.bf16.mxu0 0
        %1909 = vmatpush1.bf16.msra.mxu0 %v1709
        %1910 = vmatprep.subr.bf16.mxu0 0
        %1911 = vmatpush1.bf16.msra.mxu0 %v1710
        %1912 = vmatprep.subr.bf16.mxu0 0
        %1913 = vmatpush1.bf16.msra.mxu0 0
        %1914 = vmatprep.subr.bf16.mxu0 0
        %1915 = vmatpush1.bf16.msra.mxu0 0
        %1916 = vmatprep.subr.bf16.mxu0 0
        %1917 = vmatpush1.bf16.msra.mxu0 0
        %1918 = vmatprep.subr.bf16.mxu0 0
        %1919 = vmatpush1.bf16.msra.mxu0 0
        %1920 = vmatprep.subr.bf16.mxu0 0
        %1921 = vmatpush1.bf16.msra.mxu0 0
        %1922 = vmatprep.subr.bf16.mxu0 0
        %1923 = vmatpush1.bf16.msra.mxu0 0
        %1924 = vmatprep.subr.bf16.mxu0 0
        %1925 = vmatpush1.bf16.msra.mxu0 0
        %1926 = vmatprep.subr.bf16.mxu0 0
        %1927 = vmatpush1.bf16.msra.mxu0 0
        %1928 = vmatprep.mubr.bf16.mxu0 0
        %1929 = vmatmul.mubr.bf16.gmra.mrb[0].mxu0 %v497
        %v1930 = vpop.f32.mrb[0].mxu0
        %v1931 = vadd.f32 %v1770, %v1930
        %v1932 = vpop.f32.mrb[0].mxu0
        %v1933 = vpop.f32.mrb[0].mxu0
        %v1934 = vadd.f32 %v1773, %v1933
        %v1935 = vpop.f32.mrb[0].mxu0
        %1936 = vmatprep.mubr.bf16.mxu0 0
        %1937 = vmatmul.mubr.bf16.gmra.mrb[0].mxu0 %v499
        %v1938 = vpop.f32.mrb[0].mxu0
        %v1939 = vadd.f32 %v1778, %v1938
        %v1940 = vpop.f32.mrb[0].mxu0
        %v1941 = vpop.f32.mrb[0].mxu0
        %v1942 = vadd.f32 %v1781, %v1941
        %v1943 = vpop.f32.mrb[0].mxu0
        %1944 = vmatprep.mubr.bf16.mxu0 0
        %1945 = vmatmul.mubr.bf16.gmra.mrb[0].mxu0 %v500
        %v1946 = vpop.f32.mrb[0].mxu0
        %v1947 = vadd.f32 %v1786, %v1946
        %v1948 = vpop.f32.mrb[0].mxu0
        %v1949 = vpop.f32.mrb[0].mxu0
        %v1950 = vadd.f32 %v1789, %v1949
        %v1951 = vpop.f32.mrb[0].mxu0
        %1952 = vmatprep.mubr.bf16.mxu0 0
        %1953 = vmatmul.mubr.bf16.gmra.mrb[0].mxu0 %v501
        %v1954 = vpop.f32.mrb[0].mxu0
        %v1955 = vadd.f32 %v1794, %v1954
        %v1956 = vpop.f32.mrb[0].mxu0
        %v1957 = vpop.f32.mrb[0].mxu0
        %v1958 = vadd.f32 %v1797, %v1957
        %v1959 = vpop.f32.mrb[0].mxu0
        %1960 = vmatprep.mubr.bf16.mxu0 0
        %1961 = vmatmul.mubr.bf16.gmra.mrb[0].mxu0 %v502
        %v1962 = vpop.f32.mrb[0].mxu0
        %v1963 = vadd.f32 %v1802, %v1962
        %v1964 = vpop.f32.mrb[0].mxu0
        %v1965 = vpop.f32.mrb[0].mxu0
        %v1966 = vadd.f32 %v1805, %v1965
        %v1967 = vpop.f32.mrb[0].mxu0
        %1968 = vmatprep.mubr.bf16.mxu0 0
        %1969 = vmatmul.mubr.bf16.gmra.mrb[0].mxu0 %v503
        %v1970 = vpop.f32.mrb[0].mxu0
        %v1971 = vadd.f32 %v1810, %v1970
        %v1972 = vpop.f32.mrb[0].mxu0
        %v1973 = vpop.f32.mrb[0].mxu0
        %v1974 = vadd.f32 %v1813, %v1973
        %v1975 = vpop.f32.mrb[0].mxu0
        %1976 = vmatprep.mubr.bf16.mxu0 0
        %1977 = vmatmul.mubr.bf16.gmra.mrb[0].mxu0 %v504
        %v1978 = vpop.f32.mrb[0].mxu0
        %v1979 = vadd.f32 %v1818, %v1978
        %v1980 = vpop.f32.mrb[0].mxu0
        %v1981 = vpop.f32.mrb[0].mxu0
        %v1982 = vadd.f32 %v1821, %v1981
        %v1983 = vpop.f32.mrb[0].mxu0
        %1984 = vmatprep.mubr.bf16.mxu0 0
        %1985 = vmatmul.mubr.bf16.gmra.mrb[0].mxu0 %v505
        %v1986 = vpop.f32.mrb[0].mxu0
        %v1987 = vadd.f32 %v1826, %v1986
        %v1988 = vpop.f32.mrb[0].mxu0
        %v1989 = vpop.f32.mrb[0].mxu0
        %v1990 = vadd.f32 %v1829, %v1989
        %v1991 = vpop.f32.mrb[0].mxu0
        %1992 = vmatprep.mubr.bf16.mxu0 0
        %1993 = vmatmul.mubr.bf16.gmra.mrb[0].mxu0 %v506
        %v1994 = vpop.f32.mrb[0].mxu0
        %v1995 = vadd.f32 %v1834, %v1994
        %v1996 = vpop.f32.mrb[0].mxu0
        %v1997 = vpop.f32.mrb[0].mxu0
        %v1998 = vadd.f32 %v1837, %v1997
        %v1999 = vpop.f32.mrb[0].mxu0
        %2000 = vmatprep.mubr.bf16.mxu0 0
        %2001 = vmatmul.mubr.bf16.gmra.mrb[0].mxu0 %v507
        %v2002 = vpop.f32.mrb[0].mxu0
        %v2003 = vadd.f32 %v1842, %v2002
        %v2004 = vpop.f32.mrb[0].mxu0
        %v2005 = vpop.f32.mrb[0].mxu0
        %v2006 = vadd.f32 %v1845, %v2005
        %v2007 = vpop.f32.mrb[0].mxu0
        %2008 = vmatprep.mubr.bf16.mxu0 0
        %2009 = vmatmul.mubr.bf16.gmra.mrb[0].mxu0 %v508
        %v2010 = vpop.f32.mrb[0].mxu0
        %v2011 = vadd.f32 %v1850, %v2010
        %v2012 = vpop.f32.mrb[0].mxu0
        %v2013 = vpop.f32.mrb[0].mxu0
        %v2014 = vadd.f32 %v1853, %v2013
        %v2015 = vpop.f32.mrb[0].mxu0
        %2016 = vmatprep.mubr.bf16.mxu0 0
        %2017 = vmatmul.mubr.bf16.gmra.mrb[0].mxu0 %v509
        %v2018 = vpop.f32.mrb[0].mxu0
        %v2019 = vadd.f32 %v1858, %v2018
        %v2020 = vpop.f32.mrb[0].mxu0
        %v2021 = vpop.f32.mrb[0].mxu0
        %v2022 = vadd.f32 %v1861, %v2021
        %v2023 = vpop.f32.mrb[0].mxu0
        %2024 = vmatprep.mubr.bf16.mxu0 0
        %2025 = vmatmul.mubr.bf16.gmra.mrb[0].mxu0 %v510
        %v2026 = vpop.f32.mrb[0].mxu0
        %v2027 = vadd.f32 %v1866, %v2026
        %v2028 = vpop.f32.mrb[0].mxu0
        %v2029 = vpop.f32.mrb[0].mxu0
        %v2030 = vadd.f32 %v1869, %v2029
        %v2031 = vpop.f32.mrb[0].mxu0
        %2032 = vmatprep.mubr.bf16.mxu0 0
        %2033 = vmatmul.mubr.bf16.gmra.mrb[0].mxu0 %v511
        %v2034 = vpop.f32.mrb[0].mxu0
        %v2035 = vadd.f32 %v1874, %v2034
        %v2036 = vpop.f32.mrb[0].mxu0
        %v2037 = vpop.f32.mrb[0].mxu0
        %v2038 = vadd.f32 %v1877, %v2037
        %v2039 = vpop.f32.mrb[0].mxu0
        %2040 = vmatprep.mubr.bf16.mxu0 0
        %2041 = vmatmul.mubr.bf16.gmra.mrb[0].mxu0 %v512
        %v2042 = vpop.f32.mrb[0].mxu0
        %v2043 = vadd.f32 %v1882, %v2042
        %v2044 = vpop.f32.mrb[0].mxu0
        %v2045 = vpop.f32.mrb[0].mxu0
        %v2046 = vadd.f32 %v1885, %v2045
        %v2047 = vpop.f32.mrb[0].mxu0
        %2048 = vmatprep.mubr.bf16.mxu0 0
        %2049 = vmatmul.mubr.bf16.gmra.mrb[0].mxu0 %v511
        %v2050 = vpop.f32.mrb[0].mxu0
        %v2051 = vadd.f32 %v1890, %v2050
        %v2052 = vpop.f32.mrb[0].mxu0
        %v2053 = vpop.f32.mrb[0].mxu0
        %v2054 = vadd.f32 %v1893, %v2053
        %v2055 = vpop.f32.mrb[0].mxu0
        %2056 = vdwg.mxu0
        %v2057 = vadd.f32 %v1416, %v1931
        %v2058 = vadd.f32 %v1419, %v1934
        %v2059 = vadd.f32 %v1424, %v1939
        %v2060 = vadd.f32 %v1427, %v1942
        %v2061 = vadd.f32 %v1432, %v1947
        %v2062 = vadd.f32 %v1435, %v1950
        %v2063 = vadd.f32 %v1440, %v1955
        %v2064 = vadd.f32 %v1443, %v1958
        %v2065 = vadd.f32 %v1448, %v1963
        %v2066 = vadd.f32 %v1451, %v1966
        %v2067 = vadd.f32 %v1456, %v1971
        %v2068 = vadd.f32 %v1459, %v1974
        %v2069 = vadd.f32 %v1464, %v1979
        %v2070 = vadd.f32 %v1467, %v1982
        %v2071 = vadd.f32 %v1472, %v1987
        %v2072 = vadd.f32 %v1475, %v1990
        %v2073 = vadd.f32 %v1480, %v1995
        %v2074 = vadd.f32 %v1483, %v1998
        %v2075 = vadd.f32 %v1488, %v2003
        %v2076 = vadd.f32 %v1491, %v2006
        %v2077 = vadd.f32 %v1496, %v2011
        %v2078 = vadd.f32 %v1499, %v2014
        %v2079 = vadd.f32 %v1504, %v2019
        %v2080 = vadd.f32 %v1507, %v2022
        %v2081 = vadd.f32 %v1512, %v2027
        %v2082 = vadd.f32 %v1515, %v2030
        %v2083 = vadd.f32 %v1520, %v2035
        %v2084 = vadd.f32 %v1523, %v2038
        %v2085 = vadd.f32 %v1528, %v2043
        %v2086 = vadd.f32 %v1531, %v2046
        %v2087 = vadd.f32 %v1536, %v2051
        %v2088 = vadd.f32 %v1539, %v2054
        %v2089 = vadd.f32 %v2057, %v2058
        %v2090 = vadd.f32 %v2089, %v2059
        %v2091 = vadd.f32 %v2090, %v2060
        %v2092 = vadd.f32 %v2091, %v2061
        %v2093 = vadd.f32 %v2092, %v2062
        %v2094 = vadd.f32 %v2093, %v2063
        %v2095 = vadd.f32 %v2094, %v2064
        %v2096 = vadd.f32 %v2095, %v2065
        %v2097 = vadd.f32 %v2096, %v2066
        %v2098 = vadd.f32 %v2097, %v2067
        %v2099 = vadd.f32 %v2098, %v2068
        %v2100 = vadd.f32 %v2099, %v2069
        %v2101 = vadd.f32 %v2100, %v2070
        %v2102 = vadd.f32 %v2101, %v2071
        %v2103 = vadd.f32 %v2102, %v2072
        %v2104 = vadd.f32 %v2103, %v2073
        %v2105 = vadd.f32 %v2104, %v2074
        %v2106 = vadd.f32 %v2105, %v2075
        %v2107 = vadd.f32 %v2106, %v2076
        %v2108 = vadd.f32 %v2107, %v2077
        %v2109 = vadd.f32 %v2108, %v2078
        %v2110 = vadd.f32 %v2109, %v2079
        %v2111 = vadd.f32 %v2110, %v2080
        %v2112 = vadd.f32 %v2111, %v2081
        %v2113 = vadd.f32 %v2112, %v2082
        %v2114 = vadd.f32 %v2113, %v2083
        %v2115 = vadd.f32 %v2114, %v2084
        %v2116 = vadd.f32 %v2115, %v2085
        %v2117 = vadd.f32 %v2116, %v2086
        %v2118 = vadd.f32 %v2117, %v2087
        %v2119 = vadd.f32 %v2118, %v2088
        %v2120 = vrot.slane %v2119, 4
        %v2121 = vadd.f32 %v2119, %v2120
        %v2122 = vrot.slane %v2121, 2
        %v2123 = vadd.f32 %v2121, %v2122
        %v2124 = vrot.slane %v2123, 1
        %v2125 = vadd.f32 %v2123, %v2124
        %v2126 = vmul.f32 %v2057, %v2057
        %v2127 = vmul.f32 %v2058, %v2058
        %v2128 = vmul.f32 %v2059, %v2059
        %v2129 = vmul.f32 %v2060, %v2060
        %v2130 = vmul.f32 %v2061, %v2061
        %v2131 = vmul.f32 %v2062, %v2062
        %v2132 = vmul.f32 %v2063, %v2063
        %v2133 = vmul.f32 %v2064, %v2064
        %v2134 = vmul.f32 %v2065, %v2065
        %v2135 = vmul.f32 %v2066, %v2066
        %v2136 = vmul.f32 %v2067, %v2067
        %v2137 = vmul.f32 %v2068, %v2068
        %v2138 = vmul.f32 %v2069, %v2069
        %v2139 = vmul.f32 %v2070, %v2070
        %v2140 = vmul.f32 %v2071, %v2071
        %v2141 = vmul.f32 %v2072, %v2072
        %v2142 = vmul.f32 %v2073, %v2073
        %v2143 = vmul.f32 %v2074, %v2074
        %v2144 = vmul.f32 %v2075, %v2075
        %v2145 = vmul.f32 %v2076, %v2076
        %v2146 = vmul.f32 %v2077, %v2077
        %v2147 = vmul.f32 %v2078, %v2078
        %v2148 = vmul.f32 %v2079, %v2079
        %v2149 = vmul.f32 %v2080, %v2080
        %v2150 = vmul.f32 %v2081, %v2081
        %v2151 = vmul.f32 %v2082, %v2082
        %v2152 = vmul.f32 %v2083, %v2083
        %v2153 = vmul.f32 %v2084, %v2084
        %v2154 = vmul.f32 %v2085, %v2085
        %v2155 = vmul.f32 %v2086, %v2086
        %v2156 = vmul.f32 %v2087, %v2087
        %v2157 = vmul.f32 %v2088, %v2088
        %v2158 = vadd.f32 %v2126, %v2127
        %v2159 = vadd.f32 %v2158, %v2128
        %v2160 = vadd.f32 %v2159, %v2129
        %v2161 = vadd.f32 %v2160, %v2130
        %v2162 = vadd.f32 %v2161, %v2131
        %v2163 = vadd.f32 %v2162, %v2132
        %v2164 = vadd.f32 %v2163, %v2133
        %v2165 = vadd.f32 %v2164, %v2134
        %v2166 = vadd.f32 %v2165, %v2135
        %v2167 = vadd.f32 %v2166, %v2136
        %v2168 = vadd.f32 %v2167, %v2137
        %v2169 = vadd.f32 %v2168, %v2138
        %v2170 = vadd.f32 %v2169, %v2139
        %v2171 = vadd.f32 %v2170, %v2140
        %v2172 = vadd.f32 %v2171, %v2141
        %v2173 = vadd.f32 %v2172, %v2142
        %v2174 = vadd.f32 %v2173, %v2143
        %v2175 = vadd.f32 %v2174, %v2144
        %v2176 = vadd.f32 %v2175, %v2145
        %v2177 = vadd.f32 %v2176, %v2146
        %v2178 = vadd.f32 %v2177, %v2147
        %v2179 = vadd.f32 %v2178, %v2148
        %v2180 = vadd.f32 %v2179, %v2149
        %v2181 = vadd.f32 %v2180, %v2150
        %v2182 = vadd.f32 %v2181, %v2151
        %v2183 = vadd.f32 %v2182, %v2152
        %v2184 = vadd.f32 %v2183, %v2153
        %v2185 = vadd.f32 %v2184, %v2154
        %v2186 = vadd.f32 %v2185, %v2155
        %v2187 = vadd.f32 %v2186, %v2156
        %v2188 = vadd.f32 %v2187, %v2157
        %v2189 = vrot.slane %v2188, 4
        %v2190 = vadd.f32 %v2188, %v2189
        %v2191 = vrot.slane %v2190, 2
        %v2192 = vadd.f32 %v2190, %v2191
        %v2193 = vrot.slane %v2192, 1
        %v2194 = vadd.f32 %v2192, %v2193
        %v2195 = vmul.f32 %v2125, 0.00390625
        %v2196 = vmul.f32 %v2194, 0.00390625
        %v2197 = vmul.f32 %v2195, %v2195
        %v2198 = vsub.f32 %v2196, %v2197
        %v2199 = vmax.f32 %v2198, 0.0
        %v2200 = vsub.f32 %v2057, %v2195
        %v2201 = vsub.f32 %v2058, %v2195
        %v2202 = vsub.f32 %v2059, %v2195
        %v2203 = vsub.f32 %v2060, %v2195
        %v2204 = vsub.f32 %v2061, %v2195
        %v2205 = vsub.f32 %v2062, %v2195
        %v2206 = vsub.f32 %v2063, %v2195
        %v2207 = vsub.f32 %v2064, %v2195
        %v2208 = vsub.f32 %v2065, %v2195
        %v2209 = vsub.f32 %v2066, %v2195
        %v2210 = vsub.f32 %v2067, %v2195
        %v2211 = vsub.f32 %v2068, %v2195
        %v2212 = vsub.f32 %v2069, %v2195
        %v2213 = vsub.f32 %v2070, %v2195
        %v2214 = vsub.f32 %v2071, %v2195
        %v2215 = vsub.f32 %v2072, %v2195
        %v2216 = vsub.f32 %v2073, %v2195
        %v2217 = vsub.f32 %v2074, %v2195
        %v2218 = vsub.f32 %v2075, %v2195
        %v2219 = vsub.f32 %v2076, %v2195
        %v2220 = vsub.f32 %v2077, %v2195
        %v2221 = vsub.f32 %v2078, %v2195
        %v2222 = vsub.f32 %v2079, %v2195
        %v2223 = vsub.f32 %v2080, %v2195
        %v2224 = vsub.f32 %v2081, %v2195
        %v2225 = vsub.f32 %v2082, %v2195
        %v2226 = vsub.f32 %v2083, %v2195
        %v2227 = vsub.f32 %v2084, %v2195
        %v2228 = vsub.f32 %v2085, %v2195
        %v2229 = vsub.f32 %v2086, %v2195
        %v2230 = vsub.f32 %v2087, %v2195
        %v2231 = vsub.f32 %v2088, %v2195
        %v2232 = vadd.f32 %v2199, 1e-05
        %v2233 = vrsqrt.pop %v2232
        %v2234 = vmul.f32 %v2200, %v2233
        %v2235 = vmul.f32 %v2201, %v2233
        %v2236 = vmul.f32 %v2202, %v2233
        %v2237 = vmul.f32 %v2203, %v2233
        %v2238 = vmul.f32 %v2204, %v2233
        %v2239 = vmul.f32 %v2205, %v2233
        %v2240 = vmul.f32 %v2206, %v2233
        %v2241 = vmul.f32 %v2207, %v2233
        %v2242 = vmul.f32 %v2208, %v2233
        %v2243 = vmul.f32 %v2209, %v2233
        %v2244 = vmul.f32 %v2210, %v2233
        %v2245 = vmul.f32 %v2211, %v2233
        %v2246 = vmul.f32 %v2212, %v2233
        %v2247 = vmul.f32 %v2213, %v2233
        %v2248 = vmul.f32 %v2214, %v2233
        %v2249 = vmul.f32 %v2215, %v2233
        %v2250 = vmul.f32 %v2216, %v2233
        %v2251 = vmul.f32 %v2217, %v2233
        %v2252 = vmul.f32 %v2218, %v2233
        %v2253 = vmul.f32 %v2219, %v2233
        %v2254 = vmul.f32 %v2220, %v2233
        %v2255 = vmul.f32 %v2221, %v2233
        %v2256 = vmul.f32 %v2222, %v2233
        %v2257 = vmul.f32 %v2223, %v2233
        %v2258 = vmul.f32 %v2224, %v2233
        %v2259 = vmul.f32 %v2225, %v2233
        %v2260 = vmul.f32 %v2226, %v2233
        %v2261 = vmul.f32 %v2227, %v2233
        %v2262 = vmul.f32 %v2228, %v2233
        %v2263 = vmul.f32 %v2229, %v2233
        %v2264 = vmul.f32 %v2230, %v2233
        %v2265 = vmul.f32 %v2231, %v2233
        %v2266 = vmax.f32 %v2234, 0.0
        %v2267 = vmax.f32 %v2235, 0.0
        %v2268 = vmax.f32 %v2236, 0.0
        %v2269 = vmax.f32 %v2237, 0.0
        %v2270 = vmax.f32 %v2238, 0.0
        %v2271 = vmax.f32 %v2239, 0.0
        %v2272 = vmax.f32 %v2240, 0.0
        %v2273 = vmax.f32 %v2241, 0.0
        %v2274 = vmax.f32 %v2242, 0.0
        %v2275 = vmax.f32 %v2243, 0.0
        %v2276 = vmax.f32 %v2244, 0.0
        %v2277 = vmax.f32 %v2245, 0.0
        %v2278 = vmax.f32 %v2246, 0.0
        %v2279 = vmax.f32 %v2247, 0.0
        %v2280 = vmax.f32 %v2248, 0.0
        %v2281 = vmax.f32 %v2249, 0.0
        %v2282 = vmax.f32 %v2250, 0.0
        %v2283 = vmax.f32 %v2251, 0.0
        %v2284 = vmax.f32 %v2252, 0.0
        %v2285 = vmax.f32 %v2253, 0.0
        %v2286 = vmax.f32 %v2254, 0.0
        %v2287 = vmax.f32 %v2255, 0.0
        %v2288 = vmax.f32 %v2256, 0.0
        %v2289 = vmax.f32 %v2257, 0.0
        %v2290 = vmax.f32 %v2258, 0.0
        %v2291 = vmax.f32 %v2259, 0.0
        %v2292 = vmax.f32 %v2260, 0.0
        %v2293 = vmax.f32 %v2261, 0.0
        %v2294 = vmax.f32 %v2262, 0.0
        %v2295 = vmax.f32 %v2263, 0.0
        %v2296 = vmax.f32 %v2264, 0.0
        %v2297 = vmax.f32 %v2265, 0.0
        %v2298 = vpack.c.bf16 %v2267, %v2266
        %v2299 = vpack.c.bf16 %v2269, %v2268
        %v2300 = vpack.c.bf16 %v2271, %v2270
        %v2301 = vpack.c.bf16 %v2273, %v2272
        %v2302 = vpack.c.bf16 %v2275, %v2274
        %v2303 = vpack.c.bf16 %v2277, %v2276
        %v2304 = vpack.c.bf16 %v2279, %v2278
        %v2305 = vpack.c.bf16 %v2281, %v2280
        %v2306 = vpack.c.bf16 %v2283, %v2282
        %v2307 = vpack.c.bf16 %v2285, %v2284
        %v2308 = vpack.c.bf16 %v2287, %v2286
        %v2309 = vpack.c.bf16 %v2289, %v2288
        %v2310 = vpack.c.bf16 %v2291, %v2290
        %v2311 = vpack.c.bf16 %v2293, %v2292
        %v2312 = vpack.c.bf16 %v2295, %v2294
        %v2313 = vpack.c.bf16 %v2297, %v2296
        %v2315 = vshrl.u32 %v2299, 16
        %v2318 = vshrl.u32 %v2298, 16
        %v2321 = vshrl.u32 %v2300, 16
        %v2324 = vshrl.u32 %v2301, 16
        %v2327 = vshrl.u32 %v2302, 16
        %v2330 = vshrl.u32 %v2303, 16
        %v2333 = vshrl.u32 %v2304, 16
        %v2336 = vshrl.u32 %v2305, 16
        %v2339 = vshrl.u32 %v2306, 16
        %v2342 = vshrl.u32 %v2307, 16
        %v2345 = vshrl.u32 %v2308, 16
        %v2348 = vshrl.u32 %v2309, 16
        %v2351 = vshrl.u32 %v2310, 16
        %v2354 = vshrl.u32 %v2311, 16
        %v2357 = vshrl.u32 %v2312, 16
        %v2360 = vshrl.u32 %v2313, 16
        %v2378 = vrot.slane %v2315, 7
        %v2379 = vshll.u32 %v2299, 16
        %v2381 = vor.u32 %v2378, %v2379
        %v2382 = vrot.slane %v2318, 7
        %v2383 = vshll.u32 %v2298, 16
        %v2385 = vor.u32 %v2382, %v2383
        %v2386 = vrot.slane %v2321, 7
        %v2387 = vshll.u32 %v2300, 16
        %v2389 = vor.u32 %v2386, %v2387
        %v2390 = vrot.slane %v2324, 7
        %v2391 = vshll.u32 %v2301, 16
        %v2393 = vor.u32 %v2390, %v2391
        %v2394 = vrot.slane %v2327, 7
        %v2395 = vshll.u32 %v2302, 16
        %v2397 = vor.u32 %v2394, %v2395
        %v2398 = vrot.slane %v2330, 7
        %v2399 = vshll.u32 %v2303, 16
        %v2401 = vor.u32 %v2398, %v2399
        %v2402 = vrot.slane %v2333, 7
        %v2403 = vshll.u32 %v2304, 16
        %v2405 = vor.u32 %v2402, %v2403
        %v2406 = vrot.slane %v2336, 7
        %v2407 = vshll.u32 %v2305, 16
        %v2409 = vor.u32 %v2406, %v2407
        %v2410 = vrot.slane %v2339, 7
        %v2411 = vshll.u32 %v2306, 16
        %v2413 = vor.u32 %v2410, %v2411
        %v2414 = vrot.slane %v2342, 7
        %v2415 = vshll.u32 %v2307, 16
        %v2417 = vor.u32 %v2414, %v2415
        %v2418 = vrot.slane %v2345, 7
        %v2419 = vshll.u32 %v2308, 16
        %v2421 = vor.u32 %v2418, %v2419
        %v2422 = vrot.slane %v2348, 7
        %v2423 = vshll.u32 %v2309, 16
        %v2425 = vor.u32 %v2422, %v2423
        %v2426 = vrot.slane %v2351, 7
        %v2427 = vshll.u32 %v2310, 16
        %v2429 = vor.u32 %v2426, %v2427
        %v2430 = vrot.slane %v2354, 7
        %v2431 = vshll.u32 %v2311, 16
        %v2433 = vor.u32 %v2430, %v2431
        %v2434 = vrot.slane %v2357, 7
        %v2435 = vshll.u32 %v2312, 16
        %v2437 = vor.u32 %v2434, %v2435
        %v2438 = vrot.slane %v2360, 7
        %v2439 = vshll.u32 %v2313, 16
        %v2441 = vor.u32 %v2438, %v2439
        %v2458 = vsel %vm413, %v2315, %v2381
        %v2459 = vsel %vm413, %v2318, %v2385
        %v2460 = vsel %vm413, %v2321, %v2389
        %v2461 = vsel %vm413, %v2324, %v2393
        %v2462 = vsel %vm413, %v2327, %v2397
        %v2463 = vsel %vm413, %v2330, %v2401
        %v2464 = vsel %vm413, %v2333, %v2405
        %v2465 = vsel %vm413, %v2336, %v2409
        %v2466 = vsel %vm413, %v2339, %v2413
        %v2467 = vsel %vm413, %v2342, %v2417
        %v2468 = vsel %vm413, %v2345, %v2421
        %v2469 = vsel %vm413, %v2348, %v2425
        %v2470 = vsel %vm413, %v2351, %v2429
        %v2471 = vsel %vm413, %v2354, %v2433
        %v2472 = vsel %vm413, %v2357, %v2437
        %v2473 = vsel %vm413, %v2360, %v2441
        %v2474 = vrot.slane %v2379, 1
        %v2475 = vor.u32 %v2315, %v2474
        %v2476 = vrot.slane %v2383, 1
        %v2477 = vor.u32 %v2318, %v2476
        %v2478 = vrot.slane %v2387, 1
        %v2479 = vor.u32 %v2321, %v2478
        %v2480 = vrot.slane %v2391, 1
        %v2481 = vor.u32 %v2324, %v2480
        %v2482 = vrot.slane %v2395, 1
        %v2483 = vor.u32 %v2327, %v2482
        %v2484 = vrot.slane %v2399, 1
        %v2485 = vor.u32 %v2330, %v2484
        %v2486 = vrot.slane %v2403, 1
        %v2487 = vor.u32 %v2333, %v2486
        %v2488 = vrot.slane %v2407, 1
        %v2489 = vor.u32 %v2336, %v2488
        %v2490 = vrot.slane %v2411, 1
        %v2491 = vor.u32 %v2339, %v2490
        %v2492 = vrot.slane %v2415, 1
        %v2493 = vor.u32 %v2342, %v2492
        %v2494 = vrot.slane %v2419, 1
        %v2495 = vor.u32 %v2345, %v2494
        %v2496 = vrot.slane %v2423, 1
        %v2497 = vor.u32 %v2348, %v2496
        %v2498 = vrot.slane %v2427, 1
        %v2499 = vor.u32 %v2351, %v2498
        %v2500 = vrot.slane %v2431, 1
        %v2501 = vor.u32 %v2354, %v2500
        %v2502 = vrot.slane %v2435, 1
        %v2503 = vor.u32 %v2357, %v2502
        %v2504 = vrot.slane %v2439, 1
        %v2505 = vor.u32 %v2360, %v2504
        %v2538 = vsel %vm496, %v2475, %v2379
        %v2539 = vsel %vm496, %v2477, %v2383
        %v2540 = vsel %vm496, %v2479, %v2387
        %v2541 = vsel %vm496, %v2481, %v2391
        %v2542 = vsel %vm496, %v2483, %v2395
        %v2543 = vsel %vm496, %v2485, %v2399
        %v2544 = vsel %vm496, %v2487, %v2403
        %v2545 = vsel %vm496, %v2489, %v2407
        %v2546 = vsel %vm496, %v2491, %v2411
        %v2547 = vsel %vm496, %v2493, %v2415
        %v2548 = vsel %vm496, %v2495, %v2419
        %v2549 = vsel %vm496, %v2497, %v2423
        %v2550 = vsel %vm496, %v2499, %v2427
        %v2551 = vsel %vm496, %v2501, %v2431
        %v2552 = vsel %vm496, %v2503, %v2435
        %v2553 = vsel %vm496, %v2505, %v2439
        %v2554 = vld [vmem:[#allocation7] sm:$0xf]
        %v2555 = vld [vmem:[#allocation7 + $0x4] sm:$0xf]
        %v2556 = vld [vmem:[#allocation7 + $0x8] sm:$0xf]
        %v2557 = vld [vmem:[#allocation7 + $0xc] sm:$0xf]
        %v2558 = vld [vmem:[#allocation7 + $0x10] sm:$0xf]
        %v2559 = vld [vmem:[#allocation7 + $0x14] sm:$0xf]
        %v2560 = vld [vmem:[#allocation7 + $0x18] sm:$0xf]
        %v2561 = vld [vmem:[#allocation7 + $0x1c] sm:$0xf]
        %v2562 = vld [vmem:[#allocation7 + $0x20] sm:$0xf]
        %v2563 = vld [vmem:[#allocation7 + $0x24] sm:$0xf]
        %v2564 = vld [vmem:[#allocation7 + $0x28] sm:$0xf]
        %v2565 = vld [vmem:[#allocation7 + $0x2c] sm:$0xf]
        %v2566 = vld [vmem:[#allocation7 + $0x30] sm:$0xf]
        %v2567 = vld [vmem:[#allocation7 + $0x34] sm:$0xf]
        %v2568 = vld [vmem:[#allocation7 + $0x38] sm:$0xf]
        %v2569 = vld [vmem:[#allocation7 + $0x3c] sm:$0xf]
        %v2570 = vld [vmem:[#allocation7 + $0x40] sm:$0xf]
        %v2571 = vld [vmem:[#allocation7 + $0x44] sm:$0xf]
        %v2572 = vld [vmem:[#allocation7 + $0x48] sm:$0xf]
        %v2573 = vld [vmem:[#allocation7 + $0x4c] sm:$0xf]
        %v2574 = vld [vmem:[#allocation7 + $0x50] sm:$0xf]
        %v2575 = vld [vmem:[#allocation7 + $0x54] sm:$0xf]
        %v2576 = vld [vmem:[#allocation7 + $0x58] sm:$0xf]
        %v2577 = vld [vmem:[#allocation7 + $0x5c] sm:$0xf]
        %v2578 = vld [vmem:[#allocation7 + $0x60] sm:$0xf]
        %v2579 = vld [vmem:[#allocation7 + $0x64] sm:$0xf]
        %v2580 = vld [vmem:[#allocation7 + $0x68] sm:$0xf]
        %v2581 = vld [vmem:[#allocation7 + $0x6c] sm:$0xf]
        %v2582 = vld [vmem:[#allocation7 + $0x70] sm:$0xf]
        %v2583 = vld [vmem:[#allocation7 + $0x74] sm:$0xf]
        %v2584 = vld [vmem:[#allocation7 + $0x78] sm:$0xf]
        %v2585 = vld [vmem:[#allocation7 + $0x7c] sm:$0xf]
        %v2586 = vld [vmem:[#allocation7 + $0x80] sm:$0xf]
        %v2587 = vld [vmem:[#allocation7 + $0x84] sm:$0xf]
        %v2588 = vld [vmem:[#allocation7 + $0x88] sm:$0xf]
        %v2589 = vld [vmem:[#allocation7 + $0x8c] sm:$0xf]
        %v2590 = vld [vmem:[#allocation7 + $0x90] sm:$0xf]
        %v2591 = vld [vmem:[#allocation7 + $0x94] sm:$0xf]
        %v2592 = vld [vmem:[#allocation7 + $0x98] sm:$0xf]
        %v2593 = vld [vmem:[#allocation7 + $0x9c] sm:$0xf]
        %v2594 = vld [vmem:[#allocation7 + $0xa0] sm:$0xf]
        %v2595 = vld [vmem:[#allocation7 + $0xa4] sm:$0xf]
        %v2596 = vld [vmem:[#allocation7 + $0xa8] sm:$0xf]
        %v2597 = vld [vmem:[#allocation7 + $0xac] sm:$0xf]
        %v2598 = vld [vmem:[#allocation7 + $0xb0] sm:$0xf]
        %v2599 = vld [vmem:[#allocation7 + $0xb4] sm:$0xf]
        %v2600 = vld [vmem:[#allocation7 + $0xb8] sm:$0xf]
        %v2601 = vld [vmem:[#allocation7 + $0xbc] sm:$0xf]
        %s2602 = scalar_lea.vmem [#allocation7], 192
        %v2603 = vld [vmem:[%s2602] sm:$0xf]
        %v2604 = vld [vmem:[%s2602 + $0x4] sm:$0xf]
        %v2605 = vld [vmem:[%s2602 + $0x8] sm:$0xf]
        %v2606 = vld [vmem:[%s2602 + $0xc] sm:$0xf]
        %v2607 = vld [vmem:[%s2602 + $0x10] sm:$0xf]
        %v2608 = vld [vmem:[%s2602 + $0x14] sm:$0xf]
        %v2609 = vld [vmem:[%s2602 + $0x18] sm:$0xf]
        %v2610 = vld [vmem:[%s2602 + $0x1c] sm:$0xf]
        %v2611 = vld [vmem:[%s2602 + $0x20] sm:$0xf]
        %v2612 = vld [vmem:[%s2602 + $0x24] sm:$0xf]
        %v2613 = vld [vmem:[%s2602 + $0x28] sm:$0xf]
        %v2614 = vld [vmem:[%s2602 + $0x2c] sm:$0xf]
        %v2615 = vld [vmem:[%s2602 + $0x30] sm:$0xf]
        %v2616 = vld [vmem:[%s2602 + $0x34] sm:$0xf]
        %v2617 = vld [vmem:[%s2602 + $0x38] sm:$0xf]
        %v2618 = vld [vmem:[%s2602 + $0x3c] sm:$0xf]
        %v2619 = vld [vmem:[%s2602 + $0x40] sm:$0xf]
        %v2620 = vld [vmem:[%s2602 + $0x44] sm:$0xf]
        %v2621 = vld [vmem:[%s2602 + $0x48] sm:$0xf]
        %v2622 = vld [vmem:[%s2602 + $0x4c] sm:$0xf]
        %v2623 = vld [vmem:[%s2602 + $0x50] sm:$0xf]
        %v2624 = vld [vmem:[%s2602 + $0x54] sm:$0xf]
        %v2625 = vld [vmem:[%s2602 + $0x58] sm:$0xf]
        %v2626 = vld [vmem:[%s2602 + $0x5c] sm:$0xf]
        %v2627 = vld [vmem:[%s2602 + $0x60] sm:$0xf]
        %v2628 = vld [vmem:[%s2602 + $0x64] sm:$0xf]
        %v2629 = vld [vmem:[%s2602 + $0x68] sm:$0xf]
        %v2630 = vld [vmem:[%s2602 + $0x6c] sm:$0xf]
        %v2631 = vld [vmem:[%s2602 + $0x70] sm:$0xf]
        %v2632 = vld [vmem:[%s2602 + $0x74] sm:$0xf]
        %v2633 = vld [vmem:[%s2602 + $0x78] sm:$0xf]
        %v2634 = vld [vmem:[%s2602 + $0x7c] sm:$0xf]
        %v2635 = vld [vmem:[%s2602 + $0x80] sm:$0xf]
        %v2636 = vld [vmem:[%s2602 + $0x84] sm:$0xf]
        %v2637 = vld [vmem:[%s2602 + $0x88] sm:$0xf]
        %v2638 = vld [vmem:[%s2602 + $0x8c] sm:$0xf]
        %v2639 = vld [vmem:[%s2602 + $0x90] sm:$0xf]
        %v2640 = vld [vmem:[%s2602 + $0x94] sm:$0xf]
        %v2641 = vld [vmem:[%s2602 + $0x98] sm:$0xf]
        %v2642 = vld [vmem:[%s2602 + $0x9c] sm:$0xf]
        %v2643 = vld [vmem:[%s2602 + $0xa0] sm:$0xf]
        %v2644 = vld [vmem:[%s2602 + $0xa4] sm:$0xf]
        %v2645 = vld [vmem:[%s2602 + $0xa8] sm:$0xf]
        %v2646 = vld [vmem:[%s2602 + $0xac] sm:$0xf]
        %v2647 = vld [vmem:[%s2602 + $0xb0] sm:$0xf]
        %v2648 = vld [vmem:[%s2602 + $0xb4] sm:$0xf]
        %v2649 = vld [vmem:[%s2602 + $0xb8] sm:$0xf]
        %v2650 = vld [vmem:[%s2602 + $0xbc] sm:$0xf]
        %v2699 = vunpack.c.l.b16 %v2603
        %v2700 = vunpack.c.l.b16 %v2604
        %v2701 = vunpack.c.l.b16 %v2605
        %v2702 = vunpack.c.l.b16 %v2606
        %v2703 = vunpack.c.l.b16 %v2607
        %v2704 = vunpack.c.l.b16 %v2608
        %v2705 = vunpack.c.l.b16 %v2609
        %v2706 = vunpack.c.l.b16 %v2610
        %v2707 = vunpack.c.l.b16 %v2611
        %v2708 = vunpack.c.l.b16 %v2612
        %v2709 = vunpack.c.l.b16 %v2613
        %v2710 = vunpack.c.l.b16 %v2614
        %v2711 = vunpack.c.l.b16 %v2615
        %v2712 = vunpack.c.l.b16 %v2616
        %v2713 = vunpack.c.l.b16 %v2617
        %v2714 = vunpack.c.l.b16 %v2618
        %v2715 = vunpack.c.l.b16 %v2619
        %v2716 = vunpack.c.l.b16 %v2620
        %v2717 = vunpack.c.l.b16 %v2621
        %v2718 = vunpack.c.l.b16 %v2622
        %v2719 = vunpack.c.l.b16 %v2623
        %v2720 = vunpack.c.l.b16 %v2624
        %v2721 = vunpack.c.l.b16 %v2625
        %v2722 = vunpack.c.l.b16 %v2626
        %v2723 = vunpack.c.l.b16 %v2627
        %v2724 = vunpack.c.l.b16 %v2628
        %v2725 = vunpack.c.l.b16 %v2629
        %v2726 = vunpack.c.l.b16 %v2630
        %v2727 = vunpack.c.l.b16 %v2631
        %v2728 = vunpack.c.l.b16 %v2632
        %v2729 = vunpack.c.l.b16 %v2633
        %v2730 = vunpack.c.l.b16 %v2634
        %v2731 = vunpack.c.l.b16 %v2635
        %v2732 = vunpack.c.l.b16 %v2636
        %v2733 = vunpack.c.l.b16 %v2637
        %v2734 = vunpack.c.l.b16 %v2638
        %v2735 = vunpack.c.l.b16 %v2639
        %v2736 = vunpack.c.l.b16 %v2640
        %v2737 = vunpack.c.l.b16 %v2641
        %v2738 = vunpack.c.l.b16 %v2642
        %v2739 = vunpack.c.l.b16 %v2643
        %v2740 = vunpack.c.l.b16 %v2644
        %v2741 = vunpack.c.l.b16 %v2645
        %v2742 = vunpack.c.l.b16 %v2646
        %v2743 = vunpack.c.l.b16 %v2647
        %v2744 = vunpack.c.l.b16 %v2648
        %v2745 = vunpack.c.l.b16 %v2649
        %v2746 = vunpack.c.l.b16 %v2650
        %v2747 = vpack.c.b16 %v2700, %v2699
        %v2748 = vpack.c.b16 %v2702, %v2701
        %v2749 = vpack.c.b16 %v2704, %v2703
        %v2750 = vpack.c.b16 %v2706, %v2705
        %v2751 = vpack.c.b16 %v2708, %v2707
        %v2752 = vpack.c.b16 %v2710, %v2709
        %v2753 = vpack.c.b16 %v2712, %v2711
        %v2754 = vpack.c.b16 %v2714, %v2713
        %v2755 = vpack.c.b16 %v2716, %v2715
        %v2756 = vpack.c.b16 %v2718, %v2717
        %v2757 = vpack.c.b16 %v2720, %v2719
        %v2758 = vpack.c.b16 %v2722, %v2721
        %v2759 = vpack.c.b16 %v2724, %v2723
        %v2760 = vpack.c.b16 %v2726, %v2725
        %v2761 = vpack.c.b16 %v2728, %v2727
        %v2762 = vpack.c.b16 %v2730, %v2729
        %v2763 = vpack.c.b16 %v2732, %v2731
        %v2764 = vpack.c.b16 %v2734, %v2733
        %v2765 = vpack.c.b16 %v2736, %v2735
        %v2766 = vpack.c.b16 %v2738, %v2737
        %v2767 = vpack.c.b16 %v2740, %v2739
        %v2768 = vpack.c.b16 %v2742, %v2741
        %v2769 = vpack.c.b16 %v2744, %v2743
        %v2770 = vpack.c.b16 %v2746, %v2745
        %2795 = vmatprep.subr.bf16.mxu0 0
        %2796 = vmatpush1.bf16.msra.mxu0 %v2747
        %2797 = vmatprep.subr.bf16.mxu0 0
        %2798 = vmatpush1.bf16.msra.mxu0 %v2748
        %2799 = vmatprep.subr.bf16.mxu0 0
        %2800 = vmatpush1.bf16.msra.mxu0 %v2749
        %2801 = vmatprep.subr.bf16.mxu0 0
        %2802 = vmatpush1.bf16.msra.mxu0 %v2750
        %2803 = vmatprep.subr.bf16.mxu0 0
        %2804 = vmatpush1.bf16.msra.mxu0 %v2751
        %2805 = vmatprep.subr.bf16.mxu0 0
        %2806 = vmatpush1.bf16.msra.mxu0 %v2752
        %2807 = vmatprep.subr.bf16.mxu0 0
        %2808 = vmatpush1.bf16.msra.mxu0 %v2753
        %2809 = vmatprep.subr.bf16.mxu0 0
        %2810 = vmatpush1.bf16.msra.mxu0 %v2754
        %2811 = vmatprep.subr.bf16.mxu0 0
        %2812 = vmatpush1.bf16.msra.mxu0 %v2755
        %2813 = vmatprep.subr.bf16.mxu0 0
        %2814 = vmatpush1.bf16.msra.mxu0 %v2756
        %2815 = vmatprep.subr.bf16.mxu0 0
        %2816 = vmatpush1.bf16.msra.mxu0 %v2757
        %2817 = vmatprep.subr.bf16.mxu0 0
        %2818 = vmatpush1.bf16.msra.mxu0 %v2758
        %2819 = vmatprep.subr.bf16.mxu0 0
        %2820 = vmatpush1.bf16.msra.mxu0 %v2759
        %2821 = vmatprep.subr.bf16.mxu0 0
        %2822 = vmatpush1.bf16.msra.mxu0 %v2760
        %2823 = vmatprep.subr.bf16.mxu0 0
        %2824 = vmatpush1.bf16.msra.mxu0 %v2761
        %2825 = vmatprep.subr.bf16.mxu0 0
        %2826 = vmatpush1.bf16.msra.mxu0 %v2762
        %2827 = vmatprep.mubr.bf16.mxu0 %v2298
        %2828 = vmatmul.mubr.bf16.gmra.mrb[0].mxu0 %v2459
        %v2829 = vpop.f32.mrb[0].mxu0
        %v2830 = vadd.f32 0.0, %v2829
        %v2831 = vpop.f32.mrb[0].mxu0
        %v2832 = vpop.f32.mrb[0].mxu0
        %v2833 = vadd.f32 0.0, %v2832
        %v2834 = vpop.f32.mrb[0].mxu0
        %2835 = vmatprep.mubr.bf16.mxu0 %v2299
        %2836 = vmatmul.mubr.bf16.gmra.mrb[0].mxu0 %v2458
        %v2837 = vpop.f32.mrb[0].mxu0
        %v2838 = vadd.f32 0.0, %v2837
        %v2839 = vpop.f32.mrb[0].mxu0
        %v2840 = vpop.f32.mrb[0].mxu0
        %v2841 = vadd.f32 0.0, %v2840
        %v2842 = vpop.f32.mrb[0].mxu0
        %2843 = vmatprep.mubr.bf16.mxu0 %v2300
        %2844 = vmatmul.mubr.bf16.gmra.mrb[0].mxu0 %v2460
        %v2845 = vpop.f32.mrb[0].mxu0
        %v2846 = vadd.f32 0.0, %v2845
        %v2847 = vpop.f32.mrb[0].mxu0
        %v2848 = vpop.f32.mrb[0].mxu0
        %v2849 = vadd.f32 0.0, %v2848
        %v2850 = vpop.f32.mrb[0].mxu0
        %2851 = vmatprep.mubr.bf16.mxu0 %v2301
        %2852 = vmatmul.mubr.bf16.gmra.mrb[0].mxu0 %v2461
        %v2853 = vpop.f32.mrb[0].mxu0
        %v2854 = vadd.f32 0.0, %v2853
        %v2855 = vpop.f32.mrb[0].mxu0
        %v2856 = vpop.f32.mrb[0].mxu0
        %v2857 = vadd.f32 0.0, %v2856
        %v2858 = vpop.f32.mrb[0].mxu0
        %2859 = vmatprep.mubr.bf16.mxu0 %v2302
        %2860 = vmatmul.mubr.bf16.gmra.mrb[0].mxu0 %v2462
        %v2861 = vpop.f32.mrb[0].mxu0
        %v2862 = vadd.f32 0.0, %v2861
        %v2863 = vpop.f32.mrb[0].mxu0
        %v2864 = vpop.f32.mrb[0].mxu0
        %v2865 = vadd.f32 0.0, %v2864
        %v2866 = vpop.f32.mrb[0].mxu0
        %2867 = vmatprep.mubr.bf16.mxu0 %v2303
        %2868 = vmatmul.mubr.bf16.gmra.mrb[0].mxu0 %v2463
        %v2869 = vpop.f32.mrb[0].mxu0
        %v2870 = vadd.f32 0.0, %v2869
        %v2871 = vpop.f32.mrb[0].mxu0
        %v2872 = vpop.f32.mrb[0].mxu0
        %v2873 = vadd.f32 0.0, %v2872
        %v2874 = vpop.f32.mrb[0].mxu0
        %2875 = vmatprep.mubr.bf16.mxu0 %v2304
        %2876 = vmatmul.mubr.bf16.gmra.mrb[0].mxu0 %v2464
        %v2877 = vpop.f32.mrb[0].mxu0
        %v2878 = vadd.f32 0.0, %v2877
        %v2879 = vpop.f32.mrb[0].mxu0
        %v2880 = vpop.f32.mrb[0].mxu0
        %v2881 = vadd.f32 0.0, %v2880
        %v2882 = vpop.f32.mrb[0].mxu0
        %2883 = vmatprep.mubr.bf16.mxu0 %v2305
        %2884 = vmatmul.mubr.bf16.gmra.mrb[0].mxu0 %v2465
        %v2885 = vpop.f32.mrb[0].mxu0
        %v2886 = vadd.f32 0.0, %v2885
        %v2887 = vpop.f32.mrb[0].mxu0
        %v2888 = vpop.f32.mrb[0].mxu0
        %v2889 = vadd.f32 0.0, %v2888
        %v2890 = vpop.f32.mrb[0].mxu0
        %2891 = vmatprep.mubr.bf16.mxu0 %v2306
        %2892 = vmatmul.mubr.bf16.gmra.mrb[0].mxu0 %v2466
        %v2893 = vpop.f32.mrb[0].mxu0
        %v2894 = vadd.f32 0.0, %v2893
        %v2895 = vpop.f32.mrb[0].mxu0
        %v2896 = vpop.f32.mrb[0].mxu0
        %v2897 = vadd.f32 0.0, %v2896
        %v2898 = vpop.f32.mrb[0].mxu0
        %2899 = vmatprep.mubr.bf16.mxu0 %v2307
        %2900 = vmatmul.mubr.bf16.gmra.mrb[0].mxu0 %v2467
        %v2901 = vpop.f32.mrb[0].mxu0
        %v2902 = vadd.f32 0.0, %v2901
        %v2903 = vpop.f32.mrb[0].mxu0
        %v2904 = vpop.f32.mrb[0].mxu0
        %v2905 = vadd.f32 0.0, %v2904
        %v2906 = vpop.f32.mrb[0].mxu0
        %2907 = vmatprep.mubr.bf16.mxu0 %v2308
        %2908 = vmatmul.mubr.bf16.gmra.mrb[0].mxu0 %v2468
        %v2909 = vpop.f32.mrb[0].mxu0
        %v2910 = vadd.f32 0.0, %v2909
        %v2911 = vpop.f32.mrb[0].mxu0
        %v2912 = vpop.f32.mrb[0].mxu0
        %v2913 = vadd.f32 0.0, %v2912
        %v2914 = vpop.f32.mrb[0].mxu0
        %2915 = vmatprep.mubr.bf16.mxu0 %v2309
        %2916 = vmatmul.mubr.bf16.gmra.mrb[0].mxu0 %v2469
        %v2917 = vpop.f32.mrb[0].mxu0
        %v2918 = vadd.f32 0.0, %v2917
        %v2919 = vpop.f32.mrb[0].mxu0
        %v2920 = vpop.f32.mrb[0].mxu0
        %v2921 = vadd.f32 0.0, %v2920
        %v2922 = vpop.f32.mrb[0].mxu0
        %2923 = vmatprep.mubr.bf16.mxu0 %v2310
        %2924 = vmatmul.mubr.bf16.gmra.mrb[0].mxu0 %v2470
        %v2925 = vpop.f32.mrb[0].mxu0
        %v2926 = vadd.f32 0.0, %v2925
        %v2927 = vpop.f32.mrb[0].mxu0
        %v2928 = vpop.f32.mrb[0].mxu0
        %v2929 = vadd.f32 0.0, %v2928
        %v2930 = vpop.f32.mrb[0].mxu0
        %2931 = vmatprep.mubr.bf16.mxu0 %v2311
        %2932 = vmatmul.mubr.bf16.gmra.mrb[0].mxu0 %v2471
        %v2933 = vpop.f32.mrb[0].mxu0
        %v2934 = vadd.f32 0.0, %v2933
        %v2935 = vpop.f32.mrb[0].mxu0
        %v2936 = vpop.f32.mrb[0].mxu0
        %v2937 = vadd.f32 0.0, %v2936
        %v2938 = vpop.f32.mrb[0].mxu0
        %2939 = vmatprep.mubr.bf16.mxu0 %v2312
        %2940 = vmatmul.mubr.bf16.gmra.mrb[0].mxu0 %v2472
        %v2941 = vpop.f32.mrb[0].mxu0
        %v2942 = vadd.f32 0.0, %v2941
        %v2943 = vpop.f32.mrb[0].mxu0
        %v2944 = vpop.f32.mrb[0].mxu0
        %v2945 = vadd.f32 0.0, %v2944
        %v2946 = vpop.f32.mrb[0].mxu0
        %2947 = vmatprep.mubr.bf16.mxu0 %v2313
        %2948 = vmatmul.mubr.bf16.gmra.mrb[0].mxu0 %v2473
        %v2949 = vpop.f32.mrb[0].mxu0
        %v2950 = vadd.f32 0.0, %v2949
        %v2951 = vpop.f32.mrb[0].mxu0
        %v2952 = vpop.f32.mrb[0].mxu0
        %v2953 = vadd.f32 0.0, %v2952
        %v2954 = vpop.f32.mrb[0].mxu0
        %2955 = vdwg.mxu0
        %2956 = vmatprep.subr.bf16.mxu0 0
        %2957 = vmatpush1.bf16.msra.mxu0 %v2763
        %2958 = vmatprep.subr.bf16.mxu0 0
        %2959 = vmatpush1.bf16.msra.mxu0 %v2764
        %2960 = vmatprep.subr.bf16.mxu0 0
        %2961 = vmatpush1.bf16.msra.mxu0 %v2765
        %2962 = vmatprep.subr.bf16.mxu0 0
        %2963 = vmatpush1.bf16.msra.mxu0 %v2766
        %2964 = vmatprep.subr.bf16.mxu0 0
        %2965 = vmatpush1.bf16.msra.mxu0 %v2767
        %2966 = vmatprep.subr.bf16.mxu0 0
        %2967 = vmatpush1.bf16.msra.mxu0 %v2768
        %2968 = vmatprep.subr.bf16.mxu0 0
        %2969 = vmatpush1.bf16.msra.mxu0 %v2769
        %2970 = vmatprep.subr.bf16.mxu0 0
        %2971 = vmatpush1.bf16.msra.mxu0 %v2770
        %2972 = vmatprep.subr.bf16.mxu0 0
        %2973 = vmatpush1.bf16.msra.mxu0 0
        %2974 = vmatprep.subr.bf16.mxu0 0
        %2975 = vmatpush1.bf16.msra.mxu0 0
        %2976 = vmatprep.subr.bf16.mxu0 0
        %2977 = vmatpush1.bf16.msra.mxu0 0
        %2978 = vmatprep.subr.bf16.mxu0 0
        %2979 = vmatpush1.bf16.msra.mxu0 0
        %2980 = vmatprep.subr.bf16.mxu0 0
        %2981 = vmatpush1.bf16.msra.mxu0 0
        %2982 = vmatprep.subr.bf16.mxu0 0
        %2983 = vmatpush1.bf16.msra.mxu0 0
        %2984 = vmatprep.subr.bf16.mxu0 0
        %2985 = vmatpush1.bf16.msra.mxu0 0
        %2986 = vmatprep.subr.bf16.mxu0 0
        %2987 = vmatpush1.bf16.msra.mxu0 0
        %2988 = vmatprep.mubr.bf16.mxu0 0
        %2989 = vmatmul.mubr.bf16.gmra.mrb[0].mxu0 %v2539
        %v2990 = vpop.f32.mrb[0].mxu0
        %v2991 = vadd.f32 %v2830, %v2990
        %v2992 = vpop.f32.mrb[0].mxu0
        %v2993 = vpop.f32.mrb[0].mxu0
        %v2994 = vadd.f32 %v2833, %v2993
        %v2995 = vpop.f32.mrb[0].mxu0
        %2996 = vmatprep.mubr.bf16.mxu0 0
        %2997 = vmatmul.mubr.bf16.gmra.mrb[0].mxu0 %v2538
        %v2998 = vpop.f32.mrb[0].mxu0
        %v2999 = vadd.f32 %v2838, %v2998
        %v3000 = vpop.f32.mrb[0].mxu0
        %v3001 = vpop.f32.mrb[0].mxu0
        %v3002 = vadd.f32 %v2841, %v3001
        %v3003 = vpop.f32.mrb[0].mxu0
        %3004 = vmatprep.mubr.bf16.mxu0 0
        %3005 = vmatmul.mubr.bf16.gmra.mrb[0].mxu0 %v2540
        %v3006 = vpop.f32.mrb[0].mxu0
        %v3007 = vadd.f32 %v2846, %v3006
        %v3008 = vpop.f32.mrb[0].mxu0
        %v3009 = vpop.f32.mrb[0].mxu0
        %v3010 = vadd.f32 %v2849, %v3009
        %v3011 = vpop.f32.mrb[0].mxu0
        %3012 = vmatprep.mubr.bf16.mxu0 0
        %3013 = vmatmul.mubr.bf16.gmra.mrb[0].mxu0 %v2541
        %v3014 = vpop.f32.mrb[0].mxu0
        %v3015 = vadd.f32 %v2854, %v3014
        %v3016 = vpop.f32.mrb[0].mxu0
        %v3017 = vpop.f32.mrb[0].mxu0
        %v3018 = vadd.f32 %v2857, %v3017
        %v3019 = vpop.f32.mrb[0].mxu0
        %3020 = vmatprep.mubr.bf16.mxu0 0
        %3021 = vmatmul.mubr.bf16.gmra.mrb[0].mxu0 %v2542
        %v3022 = vpop.f32.mrb[0].mxu0
        %v3023 = vadd.f32 %v2862, %v3022
        %v3024 = vpop.f32.mrb[0].mxu0
        %v3025 = vpop.f32.mrb[0].mxu0
        %v3026 = vadd.f32 %v2865, %v3025
        %v3027 = vpop.f32.mrb[0].mxu0
        %3028 = vmatprep.mubr.bf16.mxu0 0
        %3029 = vmatmul.mubr.bf16.gmra.mrb[0].mxu0 %v2543
        %v3030 = vpop.f32.mrb[0].mxu0
        %v3031 = vadd.f32 %v2870, %v3030
        %v3032 = vpop.f32.mrb[0].mxu0
        %v3033 = vpop.f32.mrb[0].mxu0
        %v3034 = vadd.f32 %v2873, %v3033
        %v3035 = vpop.f32.mrb[0].mxu0
        %3036 = vmatprep.mubr.bf16.mxu0 0
        %3037 = vmatmul.mubr.bf16.gmra.mrb[0].mxu0 %v2544
        %v3038 = vpop.f32.mrb[0].mxu0
        %v3039 = vadd.f32 %v2878, %v3038
        %v3040 = vpop.f32.mrb[0].mxu0
        %v3041 = vpop.f32.mrb[0].mxu0
        %v3042 = vadd.f32 %v2881, %v3041
        %v3043 = vpop.f32.mrb[0].mxu0
        %3044 = vmatprep.mubr.bf16.mxu0 0
        %3045 = vmatmul.mubr.bf16.gmra.mrb[0].mxu0 %v2545
        %v3046 = vpop.f32.mrb[0].mxu0
        %v3047 = vadd.f32 %v2886, %v3046
        %v3048 = vpop.f32.mrb[0].mxu0
        %v3049 = vpop.f32.mrb[0].mxu0
        %v3050 = vadd.f32 %v2889, %v3049
        %v3051 = vpop.f32.mrb[0].mxu0
        %3052 = vmatprep.mubr.bf16.mxu0 0
        %3053 = vmatmul.mubr.bf16.gmra.mrb[0].mxu0 %v2546
        %v3054 = vpop.f32.mrb[0].mxu0
        %v3055 = vadd.f32 %v2894, %v3054
        %v3056 = vpop.f32.mrb[0].mxu0
        %v3057 = vpop.f32.mrb[0].mxu0
        %v3058 = vadd.f32 %v2897, %v3057
        %v3059 = vpop.f32.mrb[0].mxu0
        %3060 = vmatprep.mubr.bf16.mxu0 0
        %3061 = vmatmul.mubr.bf16.gmra.mrb[0].mxu0 %v2547
        %v3062 = vpop.f32.mrb[0].mxu0
        %v3063 = vadd.f32 %v2902, %v3062
        %v3064 = vpop.f32.mrb[0].mxu0
        %v3065 = vpop.f32.mrb[0].mxu0
        %v3066 = vadd.f32 %v2905, %v3065
        %v3067 = vpop.f32.mrb[0].mxu0
        %3068 = vmatprep.mubr.bf16.mxu0 0
        %3069 = vmatmul.mubr.bf16.gmra.mrb[0].mxu0 %v2548
        %v3070 = vpop.f32.mrb[0].mxu0
        %v3071 = vadd.f32 %v2910, %v3070
        %v3072 = vpop.f32.mrb[0].mxu0
        %v3073 = vpop.f32.mrb[0].mxu0
        %v3074 = vadd.f32 %v2913, %v3073
        %v3075 = vpop.f32.mrb[0].mxu0
        %3076 = vmatprep.mubr.bf16.mxu0 0
        %3077 = vmatmul.mubr.bf16.gmra.mrb[0].mxu0 %v2549
        %v3078 = vpop.f32.mrb[0].mxu0
        %v3079 = vadd.f32 %v2918, %v3078
        %v3080 = vpop.f32.mrb[0].mxu0
        %v3081 = vpop.f32.mrb[0].mxu0
        %v3082 = vadd.f32 %v2921, %v3081
        %v3083 = vpop.f32.mrb[0].mxu0
        %3084 = vmatprep.mubr.bf16.mxu0 0
        %3085 = vmatmul.mubr.bf16.gmra.mrb[0].mxu0 %v2550
        %v3086 = vpop.f32.mrb[0].mxu0
        %v3087 = vadd.f32 %v2926, %v3086
        %v3088 = vpop.f32.mrb[0].mxu0
        %v3089 = vpop.f32.mrb[0].mxu0
        %v3090 = vadd.f32 %v2929, %v3089
        %v3091 = vpop.f32.mrb[0].mxu0
        %3092 = vmatprep.mubr.bf16.mxu0 0
        %3093 = vmatmul.mubr.bf16.gmra.mrb[0].mxu0 %v2551
        %v3094 = vpop.f32.mrb[0].mxu0
        %v3095 = vadd.f32 %v2934, %v3094
        %v3096 = vpop.f32.mrb[0].mxu0
        %v3097 = vpop.f32.mrb[0].mxu0
        %v3098 = vadd.f32 %v2937, %v3097
        %v3099 = vpop.f32.mrb[0].mxu0
        %3100 = vmatprep.mubr.bf16.mxu0 0
        %3101 = vmatmul.mubr.bf16.gmra.mrb[0].mxu0 %v2552
        %v3102 = vpop.f32.mrb[0].mxu0
        %v3103 = vadd.f32 %v2942, %v3102
        %v3104 = vpop.f32.mrb[0].mxu0
        %v3105 = vpop.f32.mrb[0].mxu0
        %v3106 = vadd.f32 %v2945, %v3105
        %v3107 = vpop.f32.mrb[0].mxu0
        %3108 = vmatprep.mubr.bf16.mxu0 0
        %3109 = vmatmul.mubr.bf16.gmra.mrb[0].mxu0 %v2553
        %v3110 = vpop.f32.mrb[0].mxu0
        %v3111 = vadd.f32 %v2950, %v3110
        %v3112 = vpop.f32.mrb[0].mxu0
        %v3113 = vpop.f32.mrb[0].mxu0
        %v3114 = vadd.f32 %v2953, %v3113
        %v3115 = vpop.f32.mrb[0].mxu0
        %3116 = vdwg.mxu0
        %v3165 = vunpack.c.l.b16 %v2554
        %v3166 = vunpack.c.l.b16 %v2555
        %v3167 = vunpack.c.l.b16 %v2556
        %v3168 = vunpack.c.l.b16 %v2557
        %v3169 = vunpack.c.l.b16 %v2558
        %v3170 = vunpack.c.l.b16 %v2559
        %v3171 = vunpack.c.l.b16 %v2560
        %v3172 = vunpack.c.l.b16 %v2561
        %v3173 = vunpack.c.l.b16 %v2562
        %v3174 = vunpack.c.l.b16 %v2563
        %v3175 = vunpack.c.l.b16 %v2564
        %v3176 = vunpack.c.l.b16 %v2565
        %v3177 = vunpack.c.l.b16 %v2566
        %v3178 = vunpack.c.l.b16 %v2567
        %v3179 = vunpack.c.l.b16 %v2568
        %v3180 = vunpack.c.l.b16 %v2569
        %v3181 = vunpack.c.l.b16 %v2570
        %v3182 = vunpack.c.l.b16 %v2571
        %v3183 = vunpack.c.l.b16 %v2572
        %v3184 = vunpack.c.l.b16 %v2573
        %v3185 = vunpack.c.l.b16 %v2574
        %v3186 = vunpack.c.l.b16 %v2575
        %v3187 = vunpack.c.l.b16 %v2576
        %v3188 = vunpack.c.l.b16 %v2577
        %v3189 = vunpack.c.l.b16 %v2578
        %v3190 = vunpack.c.l.b16 %v2579
        %v3191 = vunpack.c.l.b16 %v2580
        %v3192 = vunpack.c.l.b16 %v2581
        %v3193 = vunpack.c.l.b16 %v2582
        %v3194 = vunpack.c.l.b16 %v2583
        %v3195 = vunpack.c.l.b16 %v2584
        %v3196 = vunpack.c.l.b16 %v2585
        %v3197 = vunpack.c.l.b16 %v2586
        %v3198 = vunpack.c.l.b16 %v2587
        %v3199 = vunpack.c.l.b16 %v2588
        %v3200 = vunpack.c.l.b16 %v2589
        %v3201 = vunpack.c.l.b16 %v2590
        %v3202 = vunpack.c.l.b16 %v2591
        %v3203 = vunpack.c.l.b16 %v2592
        %v3204 = vunpack.c.l.b16 %v2593
        %v3205 = vunpack.c.l.b16 %v2594
        %v3206 = vunpack.c.l.b16 %v2595
        %v3207 = vunpack.c.l.b16 %v2596
        %v3208 = vunpack.c.l.b16 %v2597
        %v3209 = vunpack.c.l.b16 %v2598
        %v3210 = vunpack.c.l.b16 %v2599
        %v3211 = vunpack.c.l.b16 %v2600
        %v3212 = vunpack.c.l.b16 %v2601
        %v3213 = vpack.c.b16 %v3166, %v3165
        %v3214 = vpack.c.b16 %v3168, %v3167
        %v3215 = vpack.c.b16 %v3170, %v3169
        %v3216 = vpack.c.b16 %v3172, %v3171
        %v3217 = vpack.c.b16 %v3174, %v3173
        %v3218 = vpack.c.b16 %v3176, %v3175
        %v3219 = vpack.c.b16 %v3178, %v3177
        %v3220 = vpack.c.b16 %v3180, %v3179
        %v3221 = vpack.c.b16 %v3182, %v3181
        %v3222 = vpack.c.b16 %v3184, %v3183
        %v3223 = vpack.c.b16 %v3186, %v3185
        %v3224 = vpack.c.b16 %v3188, %v3187
        %v3225 = vpack.c.b16 %v3190, %v3189
        %v3226 = vpack.c.b16 %v3192, %v3191
        %v3227 = vpack.c.b16 %v3194, %v3193
        %v3228 = vpack.c.b16 %v3196, %v3195
        %v3229 = vpack.c.b16 %v3198, %v3197
        %v3230 = vpack.c.b16 %v3200, %v3199
        %v3231 = vpack.c.b16 %v3202, %v3201
        %v3232 = vpack.c.b16 %v3204, %v3203
        %v3233 = vpack.c.b16 %v3206, %v3205
        %v3234 = vpack.c.b16 %v3208, %v3207
        %v3235 = vpack.c.b16 %v3210, %v3209
        %v3236 = vpack.c.b16 %v3212, %v3211
        %3261 = vmatprep.subr.bf16.mxu0 0
        %3262 = vmatpush1.bf16.msra.mxu0 %v3213
        %3263 = vmatprep.subr.bf16.mxu0 0
        %3264 = vmatpush1.bf16.msra.mxu0 %v3214
        %3265 = vmatprep.subr.bf16.mxu0 0
        %3266 = vmatpush1.bf16.msra.mxu0 %v3215
        %3267 = vmatprep.subr.bf16.mxu0 0
        %3268 = vmatpush1.bf16.msra.mxu0 %v3216
        %3269 = vmatprep.subr.bf16.mxu0 0
        %3270 = vmatpush1.bf16.msra.mxu0 %v3217
        %3271 = vmatprep.subr.bf16.mxu0 0
        %3272 = vmatpush1.bf16.msra.mxu0 %v3218
        %3273 = vmatprep.subr.bf16.mxu0 0
        %3274 = vmatpush1.bf16.msra.mxu0 %v3219
        %3275 = vmatprep.subr.bf16.mxu0 0
        %3276 = vmatpush1.bf16.msra.mxu0 %v3220
        %3277 = vmatprep.subr.bf16.mxu0 0
        %3278 = vmatpush1.bf16.msra.mxu0 %v3221
        %3279 = vmatprep.subr.bf16.mxu0 0
        %3280 = vmatpush1.bf16.msra.mxu0 %v3222
        %3281 = vmatprep.subr.bf16.mxu0 0
        %3282 = vmatpush1.bf16.msra.mxu0 %v3223
        %3283 = vmatprep.subr.bf16.mxu0 0
        %3284 = vmatpush1.bf16.msra.mxu0 %v3224
        %3285 = vmatprep.subr.bf16.mxu0 0
        %3286 = vmatpush1.bf16.msra.mxu0 %v3225
        %3287 = vmatprep.subr.bf16.mxu0 0
        %3288 = vmatpush1.bf16.msra.mxu0 %v3226
        %3289 = vmatprep.subr.bf16.mxu0 0
        %3290 = vmatpush1.bf16.msra.mxu0 %v3227
        %3291 = vmatprep.subr.bf16.mxu0 0
        %3292 = vmatpush1.bf16.msra.mxu0 %v3228
        %3293 = vmatprep.mubr.bf16.mxu0 %v2299
        %3294 = vmatmul.mubr.bf16.gmra.mrb[0].mxu0 %v2458
        %v3295 = vpop.f32.mrb[0].mxu0
        %v3296 = vadd.f32 %v2991, %v3295
        %v3297 = vpop.f32.mrb[0].mxu0
        %v3298 = vpop.f32.mrb[0].mxu0
        %v3299 = vadd.f32 %v2994, %v3298
        %v3300 = vpop.f32.mrb[0].mxu0
        %3301 = vmatprep.mubr.bf16.mxu0 %v2298
        %3302 = vmatmul.mubr.bf16.gmra.mrb[0].mxu0 %v2459
        %v3303 = vpop.f32.mrb[0].mxu0
        %v3304 = vadd.f32 %v2999, %v3303
        %v3305 = vpop.f32.mrb[0].mxu0
        %v3306 = vpop.f32.mrb[0].mxu0
        %v3307 = vadd.f32 %v3002, %v3306
        %v3308 = vpop.f32.mrb[0].mxu0
        %3309 = vmatprep.mubr.bf16.mxu0 %v2299
        %3310 = vmatmul.mubr.bf16.gmra.mrb[0].mxu0 %v2458
        %v3311 = vpop.f32.mrb[0].mxu0
        %v3312 = vadd.f32 %v3007, %v3311
        %v3313 = vpop.f32.mrb[0].mxu0
        %v3314 = vpop.f32.mrb[0].mxu0
        %v3315 = vadd.f32 %v3010, %v3314
        %v3316 = vpop.f32.mrb[0].mxu0
        %3317 = vmatprep.mubr.bf16.mxu0 %v2300
        %3318 = vmatmul.mubr.bf16.gmra.mrb[0].mxu0 %v2460
        %v3319 = vpop.f32.mrb[0].mxu0
        %v3320 = vadd.f32 %v3015, %v3319
        %v3321 = vpop.f32.mrb[0].mxu0
        %v3322 = vpop.f32.mrb[0].mxu0
        %v3323 = vadd.f32 %v3018, %v3322
        %v3324 = vpop.f32.mrb[0].mxu0
        %3325 = vmatprep.mubr.bf16.mxu0 %v2301
        %3326 = vmatmul.mubr.bf16.gmra.mrb[0].mxu0 %v2461
        %v3327 = vpop.f32.mrb[0].mxu0
        %v3328 = vadd.f32 %v3023, %v3327
        %v3329 = vpop.f32.mrb[0].mxu0
        %v3330 = vpop.f32.mrb[0].mxu0
        %v3331 = vadd.f32 %v3026, %v3330
        %v3332 = vpop.f32.mrb[0].mxu0
        %3333 = vmatprep.mubr.bf16.mxu0 %v2302
        %3334 = vmatmul.mubr.bf16.gmra.mrb[0].mxu0 %v2462
        %v3335 = vpop.f32.mrb[0].mxu0
        %v3336 = vadd.f32 %v3031, %v3335
        %v3337 = vpop.f32.mrb[0].mxu0
        %v3338 = vpop.f32.mrb[0].mxu0
        %v3339 = vadd.f32 %v3034, %v3338
        %v3340 = vpop.f32.mrb[0].mxu0
        %3341 = vmatprep.mubr.bf16.mxu0 %v2303
        %3342 = vmatmul.mubr.bf16.gmra.mrb[0].mxu0 %v2463
        %v3343 = vpop.f32.mrb[0].mxu0
        %v3344 = vadd.f32 %v3039, %v3343
        %v3345 = vpop.f32.mrb[0].mxu0
        %v3346 = vpop.f32.mrb[0].mxu0
        %v3347 = vadd.f32 %v3042, %v3346
        %v3348 = vpop.f32.mrb[0].mxu0
        %3349 = vmatprep.mubr.bf16.mxu0 %v2304
        %3350 = vmatmul.mubr.bf16.gmra.mrb[0].mxu0 %v2464
        %v3351 = vpop.f32.mrb[0].mxu0
        %v3352 = vadd.f32 %v3047, %v3351
        %v3353 = vpop.f32.mrb[0].mxu0
        %v3354 = vpop.f32.mrb[0].mxu0
        %v3355 = vadd.f32 %v3050, %v3354
        %v3356 = vpop.f32.mrb[0].mxu0
        %3357 = vmatprep.mubr.bf16.mxu0 %v2305
        %3358 = vmatmul.mubr.bf16.gmra.mrb[0].mxu0 %v2465
        %v3359 = vpop.f32.mrb[0].mxu0
        %v3360 = vadd.f32 %v3055, %v3359
        %v3361 = vpop.f32.mrb[0].mxu0
        %v3362 = vpop.f32.mrb[0].mxu0
        %v3363 = vadd.f32 %v3058, %v3362
        %v3364 = vpop.f32.mrb[0].mxu0
        %3365 = vmatprep.mubr.bf16.mxu0 %v2306
        %3366 = vmatmul.mubr.bf16.gmra.mrb[0].mxu0 %v2466
        %v3367 = vpop.f32.mrb[0].mxu0
        %v3368 = vadd.f32 %v3063, %v3367
        %v3369 = vpop.f32.mrb[0].mxu0
        %v3370 = vpop.f32.mrb[0].mxu0
        %v3371 = vadd.f32 %v3066, %v3370
        %v3372 = vpop.f32.mrb[0].mxu0
        %3373 = vmatprep.mubr.bf16.mxu0 %v2307
        %3374 = vmatmul.mubr.bf16.gmra.mrb[0].mxu0 %v2467
        %v3375 = vpop.f32.mrb[0].mxu0
        %v3376 = vadd.f32 %v3071, %v3375
        %v3377 = vpop.f32.mrb[0].mxu0
        %v3378 = vpop.f32.mrb[0].mxu0
        %v3379 = vadd.f32 %v3074, %v3378
        %v3380 = vpop.f32.mrb[0].mxu0
        %3381 = vmatprep.mubr.bf16.mxu0 %v2308
        %3382 = vmatmul.mubr.bf16.gmra.mrb[0].mxu0 %v2468
        %v3383 = vpop.f32.mrb[0].mxu0
        %v3384 = vadd.f32 %v3079, %v3383
        %v3385 = vpop.f32.mrb[0].mxu0
        %v3386 = vpop.f32.mrb[0].mxu0
        %v3387 = vadd.f32 %v3082, %v3386
        %v3388 = vpop.f32.mrb[0].mxu0
        %3389 = vmatprep.mubr.bf16.mxu0 %v2309
        %3390 = vmatmul.mubr.bf16.gmra.mrb[0].mxu0 %v2469
        %v3391 = vpop.f32.mrb[0].mxu0
        %v3392 = vadd.f32 %v3087, %v3391
        %v3393 = vpop.f32.mrb[0].mxu0
        %v3394 = vpop.f32.mrb[0].mxu0
        %v3395 = vadd.f32 %v3090, %v3394
        %v3396 = vpop.f32.mrb[0].mxu0
        %3397 = vmatprep.mubr.bf16.mxu0 %v2310
        %3398 = vmatmul.mubr.bf16.gmra.mrb[0].mxu0 %v2470
        %v3399 = vpop.f32.mrb[0].mxu0
        %v3400 = vadd.f32 %v3095, %v3399
        %v3401 = vpop.f32.mrb[0].mxu0
        %v3402 = vpop.f32.mrb[0].mxu0
        %v3403 = vadd.f32 %v3098, %v3402
        %v3404 = vpop.f32.mrb[0].mxu0
        %3405 = vmatprep.mubr.bf16.mxu0 %v2311
        %3406 = vmatmul.mubr.bf16.gmra.mrb[0].mxu0 %v2471
        %v3407 = vpop.f32.mrb[0].mxu0
        %v3408 = vadd.f32 %v3103, %v3407
        %v3409 = vpop.f32.mrb[0].mxu0
        %v3410 = vpop.f32.mrb[0].mxu0
        %v3411 = vadd.f32 %v3106, %v3410
        %v3412 = vpop.f32.mrb[0].mxu0
        %3413 = vmatprep.mubr.bf16.mxu0 %v2312
        %3414 = vmatmul.mubr.bf16.gmra.mrb[0].mxu0 %v2472
        %v3415 = vpop.f32.mrb[0].mxu0
        %v3416 = vadd.f32 %v3111, %v3415
        %v3417 = vpop.f32.mrb[0].mxu0
        %v3418 = vpop.f32.mrb[0].mxu0
        %v3419 = vadd.f32 %v3114, %v3418
        %v3420 = vpop.f32.mrb[0].mxu0
        %3421 = vdwg.mxu0
        %3422 = vmatprep.subr.bf16.mxu0 0
        %3423 = vmatpush1.bf16.msra.mxu0 %v3229
        %3424 = vmatprep.subr.bf16.mxu0 0
        %3425 = vmatpush1.bf16.msra.mxu0 %v3230
        %3426 = vmatprep.subr.bf16.mxu0 0
        %3427 = vmatpush1.bf16.msra.mxu0 %v3231
        %3428 = vmatprep.subr.bf16.mxu0 0
        %3429 = vmatpush1.bf16.msra.mxu0 %v3232
        %3430 = vmatprep.subr.bf16.mxu0 0
        %3431 = vmatpush1.bf16.msra.mxu0 %v3233
        %3432 = vmatprep.subr.bf16.mxu0 0
        %3433 = vmatpush1.bf16.msra.mxu0 %v3234
        %3434 = vmatprep.subr.bf16.mxu0 0
        %3435 = vmatpush1.bf16.msra.mxu0 %v3235
        %3436 = vmatprep.subr.bf16.mxu0 0
        %3437 = vmatpush1.bf16.msra.mxu0 %v3236
        %3438 = vmatprep.subr.bf16.mxu0 0
        %3439 = vmatpush1.bf16.msra.mxu0 0
        %3440 = vmatprep.subr.bf16.mxu0 0
        %3441 = vmatpush1.bf16.msra.mxu0 0
        %3442 = vmatprep.subr.bf16.mxu0 0
        %3443 = vmatpush1.bf16.msra.mxu0 0
        %3444 = vmatprep.subr.bf16.mxu0 0
        %3445 = vmatpush1.bf16.msra.mxu0 0
        %3446 = vmatprep.subr.bf16.mxu0 0
        %3447 = vmatpush1.bf16.msra.mxu0 0
        %3448 = vmatprep.subr.bf16.mxu0 0
        %3449 = vmatpush1.bf16.msra.mxu0 0
        %3450 = vmatprep.subr.bf16.mxu0 0
        %3451 = vmatpush1.bf16.msra.mxu0 0
        %3452 = vmatprep.subr.bf16.mxu0 0
        %3453 = vmatpush1.bf16.msra.mxu0 0
        %3454 = vmatprep.mubr.bf16.mxu0 0
        %3455 = vmatmul.mubr.bf16.gmra.mrb[0].mxu0 %v2538
        %v3456 = vpop.f32.mrb[0].mxu0
        %v3457 = vadd.f32 %v3296, %v3456
        %v3458 = vpop.f32.mrb[0].mxu0
        %v3459 = vpop.f32.mrb[0].mxu0
        %v3460 = vadd.f32 %v3299, %v3459
        %v3461 = vpop.f32.mrb[0].mxu0
        %3462 = vmatprep.mubr.bf16.mxu0 0
        %3463 = vmatmul.mubr.bf16.gmra.mrb[0].mxu0 %v2539
        %v3464 = vpop.f32.mrb[0].mxu0
        %v3465 = vadd.f32 %v3304, %v3464
        %v3466 = vpop.f32.mrb[0].mxu0
        %v3467 = vpop.f32.mrb[0].mxu0
        %v3468 = vadd.f32 %v3307, %v3467
        %v3469 = vpop.f32.mrb[0].mxu0
        %3470 = vmatprep.mubr.bf16.mxu0 0
        %3471 = vmatmul.mubr.bf16.gmra.mrb[0].mxu0 %v2538
        %v3472 = vpop.f32.mrb[0].mxu0
        %v3473 = vadd.f32 %v3312, %v3472
        %v3474 = vpop.f32.mrb[0].mxu0
        %v3475 = vpop.f32.mrb[0].mxu0
        %v3476 = vadd.f32 %v3315, %v3475
        %v3477 = vpop.f32.mrb[0].mxu0
        %3478 = vmatprep.mubr.bf16.mxu0 0
        %3479 = vmatmul.mubr.bf16.gmra.mrb[0].mxu0 %v2540
        %v3480 = vpop.f32.mrb[0].mxu0
        %v3481 = vadd.f32 %v3320, %v3480
        %v3482 = vpop.f32.mrb[0].mxu0
        %v3483 = vpop.f32.mrb[0].mxu0
        %v3484 = vadd.f32 %v3323, %v3483
        %v3485 = vpop.f32.mrb[0].mxu0
        %3486 = vmatprep.mubr.bf16.mxu0 0
        %3487 = vmatmul.mubr.bf16.gmra.mrb[0].mxu0 %v2541
        %v3488 = vpop.f32.mrb[0].mxu0
        %v3489 = vadd.f32 %v3328, %v3488
        %v3490 = vpop.f32.mrb[0].mxu0
        %v3491 = vpop.f32.mrb[0].mxu0
        %v3492 = vadd.f32 %v3331, %v3491
        %v3493 = vpop.f32.mrb[0].mxu0
        %3494 = vmatprep.mubr.bf16.mxu0 0
        %3495 = vmatmul.mubr.bf16.gmra.mrb[0].mxu0 %v2542
        %v3496 = vpop.f32.mrb[0].mxu0
        %v3497 = vadd.f32 %v3336, %v3496
        %v3498 = vpop.f32.mrb[0].mxu0
        %v3499 = vpop.f32.mrb[0].mxu0
        %v3500 = vadd.f32 %v3339, %v3499
        %v3501 = vpop.f32.mrb[0].mxu0
        %3502 = vmatprep.mubr.bf16.mxu0 0
        %3503 = vmatmul.mubr.bf16.gmra.mrb[0].mxu0 %v2543
        %v3504 = vpop.f32.mrb[0].mxu0
        %v3505 = vadd.f32 %v3344, %v3504
        %v3506 = vpop.f32.mrb[0].mxu0
        %v3507 = vpop.f32.mrb[0].mxu0
        %v3508 = vadd.f32 %v3347, %v3507
        %v3509 = vpop.f32.mrb[0].mxu0
        %3510 = vmatprep.mubr.bf16.mxu0 0
        %3511 = vmatmul.mubr.bf16.gmra.mrb[0].mxu0 %v2544
        %v3512 = vpop.f32.mrb[0].mxu0
        %v3513 = vadd.f32 %v3352, %v3512
        %v3514 = vpop.f32.mrb[0].mxu0
        %v3515 = vpop.f32.mrb[0].mxu0
        %v3516 = vadd.f32 %v3355, %v3515
        %v3517 = vpop.f32.mrb[0].mxu0
        %3518 = vmatprep.mubr.bf16.mxu0 0
        %3519 = vmatmul.mubr.bf16.gmra.mrb[0].mxu0 %v2545
        %v3520 = vpop.f32.mrb[0].mxu0
        %v3521 = vadd.f32 %v3360, %v3520
        %v3522 = vpop.f32.mrb[0].mxu0
        %v3523 = vpop.f32.mrb[0].mxu0
        %v3524 = vadd.f32 %v3363, %v3523
        %v3525 = vpop.f32.mrb[0].mxu0
        %3526 = vmatprep.mubr.bf16.mxu0 0
        %3527 = vmatmul.mubr.bf16.gmra.mrb[0].mxu0 %v2546
        %v3528 = vpop.f32.mrb[0].mxu0
        %v3529 = vadd.f32 %v3368, %v3528
        %v3530 = vpop.f32.mrb[0].mxu0
        %v3531 = vpop.f32.mrb[0].mxu0
        %v3532 = vadd.f32 %v3371, %v3531
        %v3533 = vpop.f32.mrb[0].mxu0
        %3534 = vmatprep.mubr.bf16.mxu0 0
        %3535 = vmatmul.mubr.bf16.gmra.mrb[0].mxu0 %v2547
        %v3536 = vpop.f32.mrb[0].mxu0
        %v3537 = vadd.f32 %v3376, %v3536
        %v3538 = vpop.f32.mrb[0].mxu0
        %v3539 = vpop.f32.mrb[0].mxu0
        %v3540 = vadd.f32 %v3379, %v3539
        %v3541 = vpop.f32.mrb[0].mxu0
        %3542 = vmatprep.mubr.bf16.mxu0 0
        %3543 = vmatmul.mubr.bf16.gmra.mrb[0].mxu0 %v2548
        %v3544 = vpop.f32.mrb[0].mxu0
        %v3545 = vadd.f32 %v3384, %v3544
        %v3546 = vpop.f32.mrb[0].mxu0
        %v3547 = vpop.f32.mrb[0].mxu0
        %v3548 = vadd.f32 %v3387, %v3547
        %v3549 = vpop.f32.mrb[0].mxu0
        %3550 = vmatprep.mubr.bf16.mxu0 0
        %3551 = vmatmul.mubr.bf16.gmra.mrb[0].mxu0 %v2549
        %v3552 = vpop.f32.mrb[0].mxu0
        %v3553 = vadd.f32 %v3392, %v3552
        %v3554 = vpop.f32.mrb[0].mxu0
        %v3555 = vpop.f32.mrb[0].mxu0
        %v3556 = vadd.f32 %v3395, %v3555
        %v3557 = vpop.f32.mrb[0].mxu0
        %3558 = vmatprep.mubr.bf16.mxu0 0
        %3559 = vmatmul.mubr.bf16.gmra.mrb[0].mxu0 %v2550
        %v3560 = vpop.f32.mrb[0].mxu0
        %v3561 = vadd.f32 %v3400, %v3560
        %v3562 = vpop.f32.mrb[0].mxu0
        %v3563 = vpop.f32.mrb[0].mxu0
        %v3564 = vadd.f32 %v3403, %v3563
        %v3565 = vpop.f32.mrb[0].mxu0
        %3566 = vmatprep.mubr.bf16.mxu0 0
        %3567 = vmatmul.mubr.bf16.gmra.mrb[0].mxu0 %v2551
        %v3568 = vpop.f32.mrb[0].mxu0
        %v3569 = vadd.f32 %v3408, %v3568
        %v3570 = vpop.f32.mrb[0].mxu0
        %v3571 = vpop.f32.mrb[0].mxu0
        %v3572 = vadd.f32 %v3411, %v3571
        %v3573 = vpop.f32.mrb[0].mxu0
        %3574 = vmatprep.mubr.bf16.mxu0 0
        %3575 = vmatmul.mubr.bf16.gmra.mrb[0].mxu0 %v2552
        %v3576 = vpop.f32.mrb[0].mxu0
        %v3577 = vadd.f32 %v3416, %v3576
        %v3578 = vpop.f32.mrb[0].mxu0
        %v3579 = vpop.f32.mrb[0].mxu0
        %v3580 = vadd.f32 %v3419, %v3579
        %v3581 = vpop.f32.mrb[0].mxu0
        %3582 = vdwg.mxu0
        %s3583 = scalar_lea.vmem [#allocation7], 384
        %v3584 = vld [vmem:[%s3583] sm:$0xf]
        %v3585 = vld [vmem:[%s3583 + $0x4] sm:$0xf]
        %v3586 = vld [vmem:[%s3583 + $0x8] sm:$0xf]
        %v3587 = vld [vmem:[%s3583 + $0xc] sm:$0xf]
        %v3588 = vld [vmem:[%s3583 + $0x10] sm:$0xf]
        %v3589 = vld [vmem:[%s3583 + $0x14] sm:$0xf]
        %v3590 = vld [vmem:[%s3583 + $0x18] sm:$0xf]
        %v3591 = vld [vmem:[%s3583 + $0x1c] sm:$0xf]
        %v3592 = vld [vmem:[%s3583 + $0x20] sm:$0xf]
        %v3593 = vld [vmem:[%s3583 + $0x24] sm:$0xf]
        %v3594 = vld [vmem:[%s3583 + $0x28] sm:$0xf]
        %v3595 = vld [vmem:[%s3583 + $0x2c] sm:$0xf]
        %v3596 = vld [vmem:[%s3583 + $0x30] sm:$0xf]
        %v3597 = vld [vmem:[%s3583 + $0x34] sm:$0xf]
        %v3598 = vld [vmem:[%s3583 + $0x38] sm:$0xf]
        %v3599 = vld [vmem:[%s3583 + $0x3c] sm:$0xf]
        %v3600 = vld [vmem:[%s3583 + $0x40] sm:$0xf]
        %v3601 = vld [vmem:[%s3583 + $0x44] sm:$0xf]
        %v3602 = vld [vmem:[%s3583 + $0x48] sm:$0xf]
        %v3603 = vld [vmem:[%s3583 + $0x4c] sm:$0xf]
        %v3604 = vld [vmem:[%s3583 + $0x50] sm:$0xf]
        %v3605 = vld [vmem:[%s3583 + $0x54] sm:$0xf]
        %v3606 = vld [vmem:[%s3583 + $0x58] sm:$0xf]
        %v3607 = vld [vmem:[%s3583 + $0x5c] sm:$0xf]
        %v3608 = vld [vmem:[%s3583 + $0x60] sm:$0xf]
        %v3609 = vld [vmem:[%s3583 + $0x64] sm:$0xf]
        %v3610 = vld [vmem:[%s3583 + $0x68] sm:$0xf]
        %v3611 = vld [vmem:[%s3583 + $0x6c] sm:$0xf]
        %v3612 = vld [vmem:[%s3583 + $0x70] sm:$0xf]
        %v3613 = vld [vmem:[%s3583 + $0x74] sm:$0xf]
        %v3614 = vld [vmem:[%s3583 + $0x78] sm:$0xf]
        %v3615 = vld [vmem:[%s3583 + $0x7c] sm:$0xf]
        %v3616 = vld [vmem:[%s3583 + $0x80] sm:$0xf]
        %v3617 = vld [vmem:[%s3583 + $0x84] sm:$0xf]
        %v3618 = vld [vmem:[%s3583 + $0x88] sm:$0xf]
        %v3619 = vld [vmem:[%s3583 + $0x8c] sm:$0xf]
        %v3620 = vld [vmem:[%s3583 + $0x90] sm:$0xf]
        %v3621 = vld [vmem:[%s3583 + $0x94] sm:$0xf]
        %v3622 = vld [vmem:[%s3583 + $0x98] sm:$0xf]
        %v3623 = vld [vmem:[%s3583 + $0x9c] sm:$0xf]
        %v3624 = vld [vmem:[%s3583 + $0xa0] sm:$0xf]
        %v3625 = vld [vmem:[%s3583 + $0xa4] sm:$0xf]
        %v3626 = vld [vmem:[%s3583 + $0xa8] sm:$0xf]
        %v3627 = vld [vmem:[%s3583 + $0xac] sm:$0xf]
        %v3628 = vld [vmem:[%s3583 + $0xb0] sm:$0xf]
        %v3629 = vld [vmem:[%s3583 + $0xb4] sm:$0xf]
        %v3630 = vld [vmem:[%s3583 + $0xb8] sm:$0xf]
        %v3631 = vld [vmem:[%s3583 + $0xbc] sm:$0xf]
        %v3680 = vunpack.c.l.b16 %v3584
        %v3681 = vunpack.c.l.b16 %v3585
        %v3682 = vunpack.c.l.b16 %v3586
        %v3683 = vunpack.c.l.b16 %v3587
        %v3684 = vunpack.c.l.b16 %v3588
        %v3685 = vunpack.c.l.b16 %v3589
        %v3686 = vunpack.c.l.b16 %v3590
        %v3687 = vunpack.c.l.b16 %v3591
        %v3688 = vunpack.c.l.b16 %v3592
        %v3689 = vunpack.c.l.b16 %v3593
        %v3690 = vunpack.c.l.b16 %v3594
        %v3691 = vunpack.c.l.b16 %v3595
        %v3692 = vunpack.c.l.b16 %v3596
        %v3693 = vunpack.c.l.b16 %v3597
        %v3694 = vunpack.c.l.b16 %v3598
        %v3695 = vunpack.c.l.b16 %v3599
        %v3696 = vunpack.c.l.b16 %v3600
        %v3697 = vunpack.c.l.b16 %v3601
        %v3698 = vunpack.c.l.b16 %v3602
        %v3699 = vunpack.c.l.b16 %v3603
        %v3700 = vunpack.c.l.b16 %v3604
        %v3701 = vunpack.c.l.b16 %v3605
        %v3702 = vunpack.c.l.b16 %v3606
        %v3703 = vunpack.c.l.b16 %v3607
        %v3704 = vunpack.c.l.b16 %v3608
        %v3705 = vunpack.c.l.b16 %v3609
        %v3706 = vunpack.c.l.b16 %v3610
        %v3707 = vunpack.c.l.b16 %v3611
        %v3708 = vunpack.c.l.b16 %v3612
        %v3709 = vunpack.c.l.b16 %v3613
        %v3710 = vunpack.c.l.b16 %v3614
        %v3711 = vunpack.c.l.b16 %v3615
        %v3712 = vunpack.c.l.b16 %v3616
        %v3713 = vunpack.c.l.b16 %v3617
        %v3714 = vunpack.c.l.b16 %v3618
        %v3715 = vunpack.c.l.b16 %v3619
        %v3716 = vunpack.c.l.b16 %v3620
        %v3717 = vunpack.c.l.b16 %v3621
        %v3718 = vunpack.c.l.b16 %v3622
        %v3719 = vunpack.c.l.b16 %v3623
        %v3720 = vunpack.c.l.b16 %v3624
        %v3721 = vunpack.c.l.b16 %v3625
        %v3722 = vunpack.c.l.b16 %v3626
        %v3723 = vunpack.c.l.b16 %v3627
        %v3724 = vunpack.c.l.b16 %v3628
        %v3725 = vunpack.c.l.b16 %v3629
        %v3726 = vunpack.c.l.b16 %v3630
        %v3727 = vunpack.c.l.b16 %v3631
        %v3728 = vpack.c.b16 %v3681, %v3680
        %v3729 = vpack.c.b16 %v3683, %v3682
        %v3730 = vpack.c.b16 %v3685, %v3684
        %v3731 = vpack.c.b16 %v3687, %v3686
        %v3732 = vpack.c.b16 %v3689, %v3688
        %v3733 = vpack.c.b16 %v3691, %v3690
        %v3734 = vpack.c.b16 %v3693, %v3692
        %v3735 = vpack.c.b16 %v3695, %v3694
        %v3736 = vpack.c.b16 %v3697, %v3696
        %v3737 = vpack.c.b16 %v3699, %v3698
        %v3738 = vpack.c.b16 %v3701, %v3700
        %v3739 = vpack.c.b16 %v3703, %v3702
        %v3740 = vpack.c.b16 %v3705, %v3704
        %v3741 = vpack.c.b16 %v3707, %v3706
        %v3742 = vpack.c.b16 %v3709, %v3708
        %v3743 = vpack.c.b16 %v3711, %v3710
        %v3744 = vpack.c.b16 %v3713, %v3712
        %v3745 = vpack.c.b16 %v3715, %v3714
        %v3746 = vpack.c.b16 %v3717, %v3716
        %v3747 = vpack.c.b16 %v3719, %v3718
        %v3748 = vpack.c.b16 %v3721, %v3720
        %v3749 = vpack.c.b16 %v3723, %v3722
        %v3750 = vpack.c.b16 %v3725, %v3724
        %v3751 = vpack.c.b16 %v3727, %v3726
        %3776 = vmatprep.subr.bf16.mxu0 0
        %3777 = vmatpush1.bf16.msra.mxu0 %v3728
        %3778 = vmatprep.subr.bf16.mxu0 0
        %3779 = vmatpush1.bf16.msra.mxu0 %v3729
        %3780 = vmatprep.subr.bf16.mxu0 0
        %3781 = vmatpush1.bf16.msra.mxu0 %v3730
        %3782 = vmatprep.subr.bf16.mxu0 0
        %3783 = vmatpush1.bf16.msra.mxu0 %v3731
        %3784 = vmatprep.subr.bf16.mxu0 0
        %3785 = vmatpush1.bf16.msra.mxu0 %v3732
        %3786 = vmatprep.subr.bf16.mxu0 0
        %3787 = vmatpush1.bf16.msra.mxu0 %v3733
        %3788 = vmatprep.subr.bf16.mxu0 0
        %3789 = vmatpush1.bf16.msra.mxu0 %v3734
        %3790 = vmatprep.subr.bf16.mxu0 0
        %3791 = vmatpush1.bf16.msra.mxu0 %v3735
        %3792 = vmatprep.subr.bf16.mxu0 0
        %3793 = vmatpush1.bf16.msra.mxu0 %v3736
        %3794 = vmatprep.subr.bf16.mxu0 0
        %3795 = vmatpush1.bf16.msra.mxu0 %v3737
        %3796 = vmatprep.subr.bf16.mxu0 0
        %3797 = vmatpush1.bf16.msra.mxu0 %v3738
        %3798 = vmatprep.subr.bf16.mxu0 0
        %3799 = vmatpush1.bf16.msra.mxu0 %v3739
        %3800 = vmatprep.subr.bf16.mxu0 0
        %3801 = vmatpush1.bf16.msra.mxu0 %v3740
        %3802 = vmatprep.subr.bf16.mxu0 0
        %3803 = vmatpush1.bf16.msra.mxu0 %v3741
        %3804 = vmatprep.subr.bf16.mxu0 0
        %3805 = vmatpush1.bf16.msra.mxu0 %v3742
        %3806 = vmatprep.subr.bf16.mxu0 0
        %3807 = vmatpush1.bf16.msra.mxu0 %v3743
        %3808 = vmatprep.mubr.bf16.mxu0 %v2299
        %3809 = vmatmul.mubr.bf16.gmra.mrb[0].mxu0 %v2458
        %v3810 = vpop.f32.mrb[0].mxu0
        %v3811 = vadd.f32 0.0, %v3810
        %v3812 = vpop.f32.mrb[0].mxu0
        %v3813 = vpop.f32.mrb[0].mxu0
        %v3814 = vadd.f32 0.0, %v3813
        %v3815 = vpop.f32.mrb[0].mxu0
        %3816 = vmatprep.mubr.bf16.mxu0 %v2300
        %3817 = vmatmul.mubr.bf16.gmra.mrb[0].mxu0 %v2460
        %v3818 = vpop.f32.mrb[0].mxu0
        %v3819 = vadd.f32 0.0, %v3818
        %v3820 = vpop.f32.mrb[0].mxu0
        %v3821 = vpop.f32.mrb[0].mxu0
        %v3822 = vadd.f32 0.0, %v3821
        %v3823 = vpop.f32.mrb[0].mxu0
        %3824 = vmatprep.mubr.bf16.mxu0 %v2301
        %3825 = vmatmul.mubr.bf16.gmra.mrb[0].mxu0 %v2461
        %v3826 = vpop.f32.mrb[0].mxu0
        %v3827 = vadd.f32 0.0, %v3826
        %v3828 = vpop.f32.mrb[0].mxu0
        %v3829 = vpop.f32.mrb[0].mxu0
        %v3830 = vadd.f32 0.0, %v3829
        %v3831 = vpop.f32.mrb[0].mxu0
        %3832 = vmatprep.mubr.bf16.mxu0 %v2302
        %3833 = vmatmul.mubr.bf16.gmra.mrb[0].mxu0 %v2462
        %v3834 = vpop.f32.mrb[0].mxu0
        %v3835 = vadd.f32 0.0, %v3834
        %v3836 = vpop.f32.mrb[0].mxu0
        %v3837 = vpop.f32.mrb[0].mxu0
        %v3838 = vadd.f32 0.0, %v3837
        %v3839 = vpop.f32.mrb[0].mxu0
        %3840 = vmatprep.mubr.bf16.mxu0 %v2303
        %3841 = vmatmul.mubr.bf16.gmra.mrb[0].mxu0 %v2463
        %v3842 = vpop.f32.mrb[0].mxu0
        %v3843 = vadd.f32 0.0, %v3842
        %v3844 = vpop.f32.mrb[0].mxu0
        %v3845 = vpop.f32.mrb[0].mxu0
        %v3846 = vadd.f32 0.0, %v3845
        %v3847 = vpop.f32.mrb[0].mxu0
        %3848 = vmatprep.mubr.bf16.mxu0 %v2304
        %3849 = vmatmul.mubr.bf16.gmra.mrb[0].mxu0 %v2464
        %v3850 = vpop.f32.mrb[0].mxu0
        %v3851 = vadd.f32 0.0, %v3850
        %v3852 = vpop.f32.mrb[0].mxu0
        %v3853 = vpop.f32.mrb[0].mxu0
        %v3854 = vadd.f32 0.0, %v3853
        %v3855 = vpop.f32.mrb[0].mxu0
        %3856 = vmatprep.mubr.bf16.mxu0 %v2305
        %3857 = vmatmul.mubr.bf16.gmra.mrb[0].mxu0 %v2465
        %v3858 = vpop.f32.mrb[0].mxu0
        %v3859 = vadd.f32 0.0, %v3858
        %v3860 = vpop.f32.mrb[0].mxu0
        %v3861 = vpop.f32.mrb[0].mxu0
        %v3862 = vadd.f32 0.0, %v3861
        %v3863 = vpop.f32.mrb[0].mxu0
        %3864 = vmatprep.mubr.bf16.mxu0 %v2306
        %3865 = vmatmul.mubr.bf16.gmra.mrb[0].mxu0 %v2466
        %v3866 = vpop.f32.mrb[0].mxu0
        %v3867 = vadd.f32 0.0, %v3866
        %v3868 = vpop.f32.mrb[0].mxu0
        %v3869 = vpop.f32.mrb[0].mxu0
        %v3870 = vadd.f32 0.0, %v3869
        %v3871 = vpop.f32.mrb[0].mxu0
        %3872 = vmatprep.mubr.bf16.mxu0 %v2307
        %3873 = vmatmul.mubr.bf16.gmra.mrb[0].mxu0 %v2467
        %v3874 = vpop.f32.mrb[0].mxu0
        %v3875 = vadd.f32 0.0, %v3874
        %v3876 = vpop.f32.mrb[0].mxu0
        %v3877 = vpop.f32.mrb[0].mxu0
        %v3878 = vadd.f32 0.0, %v3877
        %v3879 = vpop.f32.mrb[0].mxu0
        %3880 = vmatprep.mubr.bf16.mxu0 %v2308
        %3881 = vmatmul.mubr.bf16.gmra.mrb[0].mxu0 %v2468
        %v3882 = vpop.f32.mrb[0].mxu0
        %v3883 = vadd.f32 0.0, %v3882
        %v3884 = vpop.f32.mrb[0].mxu0
        %v3885 = vpop.f32.mrb[0].mxu0
        %v3886 = vadd.f32 0.0, %v3885
        %v3887 = vpop.f32.mrb[0].mxu0
        %3888 = vmatprep.mubr.bf16.mxu0 %v2309
        %3889 = vmatmul.mubr.bf16.gmra.mrb[0].mxu0 %v2469
        %v3890 = vpop.f32.mrb[0].mxu0
        %v3891 = vadd.f32 0.0, %v3890
        %v3892 = vpop.f32.mrb[0].mxu0
        %v3893 = vpop.f32.mrb[0].mxu0
        %v3894 = vadd.f32 0.0, %v3893
        %v3895 = vpop.f32.mrb[0].mxu0
        %3896 = vmatprep.mubr.bf16.mxu0 %v2310
        %3897 = vmatmul.mubr.bf16.gmra.mrb[0].mxu0 %v2470
        %v3898 = vpop.f32.mrb[0].mxu0
        %v3899 = vadd.f32 0.0, %v3898
        %v3900 = vpop.f32.mrb[0].mxu0
        %v3901 = vpop.f32.mrb[0].mxu0
        %v3902 = vadd.f32 0.0, %v3901
        %v3903 = vpop.f32.mrb[0].mxu0
        %3904 = vmatprep.mubr.bf16.mxu0 %v2311
        %3905 = vmatmul.mubr.bf16.gmra.mrb[0].mxu0 %v2471
        %v3906 = vpop.f32.mrb[0].mxu0
        %v3907 = vadd.f32 0.0, %v3906
        %v3908 = vpop.f32.mrb[0].mxu0
        %v3909 = vpop.f32.mrb[0].mxu0
        %v3910 = vadd.f32 0.0, %v3909
        %v3911 = vpop.f32.mrb[0].mxu0
        %3912 = vmatprep.mubr.bf16.mxu0 %v2312
        %3913 = vmatmul.mubr.bf16.gmra.mrb[0].mxu0 %v2472
        %v3914 = vpop.f32.mrb[0].mxu0
        %v3915 = vadd.f32 0.0, %v3914
        %v3916 = vpop.f32.mrb[0].mxu0
        %v3917 = vpop.f32.mrb[0].mxu0
        %v3918 = vadd.f32 0.0, %v3917
        %v3919 = vpop.f32.mrb[0].mxu0
        %3920 = vmatprep.mubr.bf16.mxu0 %v2313
        %3921 = vmatmul.mubr.bf16.gmra.mrb[0].mxu0 %v2473
        %v3922 = vpop.f32.mrb[0].mxu0
        %v3923 = vadd.f32 0.0, %v3922
        %v3924 = vpop.f32.mrb[0].mxu0
        %v3925 = vpop.f32.mrb[0].mxu0
        %v3926 = vadd.f32 0.0, %v3925
        %v3927 = vpop.f32.mrb[0].mxu0
        %3928 = vmatprep.mubr.bf16.mxu0 %v2312
        %3929 = vmatmul.mubr.bf16.gmra.mrb[0].mxu0 %v2472
        %v3930 = vpop.f32.mrb[0].mxu0
        %v3931 = vadd.f32 0.0, %v3930
        %v3932 = vpop.f32.mrb[0].mxu0
        %v3933 = vpop.f32.mrb[0].mxu0
        %v3934 = vadd.f32 0.0, %v3933
        %v3935 = vpop.f32.mrb[0].mxu0
        %3936 = vdwg.mxu0
        %3937 = vmatprep.subr.bf16.mxu0 0
        %3938 = vmatpush1.bf16.msra.mxu0 %v3744
        %3939 = vmatprep.subr.bf16.mxu0 0
        %3940 = vmatpush1.bf16.msra.mxu0 %v3745
        %3941 = vmatprep.subr.bf16.mxu0 0
        %3942 = vmatpush1.bf16.msra.mxu0 %v3746
        %3943 = vmatprep.subr.bf16.mxu0 0
        %3944 = vmatpush1.bf16.msra.mxu0 %v3747
        %3945 = vmatprep.subr.bf16.mxu0 0
        %3946 = vmatpush1.bf16.msra.mxu0 %v3748
        %3947 = vmatprep.subr.bf16.mxu0 0
        %3948 = vmatpush1.bf16.msra.mxu0 %v3749
        %3949 = vmatprep.subr.bf16.mxu0 0
        %3950 = vmatpush1.bf16.msra.mxu0 %v3750
        %3951 = vmatprep.subr.bf16.mxu0 0
        %3952 = vmatpush1.bf16.msra.mxu0 %v3751
        %3953 = vmatprep.subr.bf16.mxu0 0
        %3954 = vmatpush1.bf16.msra.mxu0 0
        %3955 = vmatprep.subr.bf16.mxu0 0
        %3956 = vmatpush1.bf16.msra.mxu0 0
        %3957 = vmatprep.subr.bf16.mxu0 0
        %3958 = vmatpush1.bf16.msra.mxu0 0
        %3959 = vmatprep.subr.bf16.mxu0 0
        %3960 = vmatpush1.bf16.msra.mxu0 0
        %3961 = vmatprep.subr.bf16.mxu0 0
        %3962 = vmatpush1.bf16.msra.mxu0 0
        %3963 = vmatprep.subr.bf16.mxu0 0
        %3964 = vmatpush1.bf16.msra.mxu0 0
        %3965 = vmatprep.subr.bf16.mxu0 0
        %3966 = vmatpush1.bf16.msra.mxu0 0
        %3967 = vmatprep.subr.bf16.mxu0 0
        %3968 = vmatpush1.bf16.msra.mxu0 0
        %3969 = vmatprep.mubr.bf16.mxu0 0
        %3970 = vmatmul.mubr.bf16.gmra.mrb[0].mxu0 %v2538
        %v3971 = vpop.f32.mrb[0].mxu0
        %v3972 = vadd.f32 %v3811, %v3971
        %v3973 = vpop.f32.mrb[0].mxu0
        %v3974 = vpop.f32.mrb[0].mxu0
        %v3975 = vadd.f32 %v3814, %v3974
        %v3976 = vpop.f32.mrb[0].mxu0
        %3977 = vmatprep.mubr.bf16.mxu0 0
        %3978 = vmatmul.mubr.bf16.gmra.mrb[0].mxu0 %v2540
        %v3979 = vpop.f32.mrb[0].mxu0
        %v3980 = vadd.f32 %v3819, %v3979
        %v3981 = vpop.f32.mrb[0].mxu0
        %v3982 = vpop.f32.mrb[0].mxu0
        %v3983 = vadd.f32 %v3822, %v3982
        %v3984 = vpop.f32.mrb[0].mxu0
        %3985 = vmatprep.mubr.bf16.mxu0 0
        %3986 = vmatmul.mubr.bf16.gmra.mrb[0].mxu0 %v2541
        %v3987 = vpop.f32.mrb[0].mxu0
        %v3988 = vadd.f32 %v3827, %v3987
        %v3989 = vpop.f32.mrb[0].mxu0
        %v3990 = vpop.f32.mrb[0].mxu0
        %v3991 = vadd.f32 %v3830, %v3990
        %v3992 = vpop.f32.mrb[0].mxu0
        %3993 = vmatprep.mubr.bf16.mxu0 0
        %3994 = vmatmul.mubr.bf16.gmra.mrb[0].mxu0 %v2542
        %v3995 = vpop.f32.mrb[0].mxu0
        %v3996 = vadd.f32 %v3835, %v3995
        %v3997 = vpop.f32.mrb[0].mxu0
        %v3998 = vpop.f32.mrb[0].mxu0
        %v3999 = vadd.f32 %v3838, %v3998
        %v4000 = vpop.f32.mrb[0].mxu0
        %4001 = vmatprep.mubr.bf16.mxu0 0
        %4002 = vmatmul.mubr.bf16.gmra.mrb[0].mxu0 %v2543
        %v4003 = vpop.f32.mrb[0].mxu0
        %v4004 = vadd.f32 %v3843, %v4003
        %v4005 = vpop.f32.mrb[0].mxu0
        %v4006 = vpop.f32.mrb[0].mxu0
        %v4007 = vadd.f32 %v3846, %v4006
        %v4008 = vpop.f32.mrb[0].mxu0
        %4009 = vmatprep.mubr.bf16.mxu0 0
        %4010 = vmatmul.mubr.bf16.gmra.mrb[0].mxu0 %v2544
        %v4011 = vpop.f32.mrb[0].mxu0
        %v4012 = vadd.f32 %v3851, %v4011
        %v4013 = vpop.f32.mrb[0].mxu0
        %v4014 = vpop.f32.mrb[0].mxu0
        %v4015 = vadd.f32 %v3854, %v4014
        %v4016 = vpop.f32.mrb[0].mxu0
        %4017 = vmatprep.mubr.bf16.mxu0 0
        %4018 = vmatmul.mubr.bf16.gmra.mrb[0].mxu0 %v2545
        %v4019 = vpop.f32.mrb[0].mxu0
        %v4020 = vadd.f32 %v3859, %v4019
        %v4021 = vpop.f32.mrb[0].mxu0
        %v4022 = vpop.f32.mrb[0].mxu0
        %v4023 = vadd.f32 %v3862, %v4022
        %v4024 = vpop.f32.mrb[0].mxu0
        %4025 = vmatprep.mubr.bf16.mxu0 0
        %4026 = vmatmul.mubr.bf16.gmra.mrb[0].mxu0 %v2546
        %v4027 = vpop.f32.mrb[0].mxu0
        %v4028 = vadd.f32 %v3867, %v4027
        %v4029 = vpop.f32.mrb[0].mxu0
        %v4030 = vpop.f32.mrb[0].mxu0
        %v4031 = vadd.f32 %v3870, %v4030
        %v4032 = vpop.f32.mrb[0].mxu0
        %4033 = vmatprep.mubr.bf16.mxu0 0
        %4034 = vmatmul.mubr.bf16.gmra.mrb[0].mxu0 %v2547
        %v4035 = vpop.f32.mrb[0].mxu0
        %v4036 = vadd.f32 %v3875, %v4035
        %v4037 = vpop.f32.mrb[0].mxu0
        %v4038 = vpop.f32.mrb[0].mxu0
        %v4039 = vadd.f32 %v3878, %v4038
        %v4040 = vpop.f32.mrb[0].mxu0
        %4041 = vmatprep.mubr.bf16.mxu0 0
        %4042 = vmatmul.mubr.bf16.gmra.mrb[0].mxu0 %v2548
        %v4043 = vpop.f32.mrb[0].mxu0
        %v4044 = vadd.f32 %v3883, %v4043
        %v4045 = vpop.f32.mrb[0].mxu0
        %v4046 = vpop.f32.mrb[0].mxu0
        %v4047 = vadd.f32 %v3886, %v4046
        %v4048 = vpop.f32.mrb[0].mxu0
        %4049 = vmatprep.mubr.bf16.mxu0 0
        %4050 = vmatmul.mubr.bf16.gmra.mrb[0].mxu0 %v2549
        %v4051 = vpop.f32.mrb[0].mxu0
        %v4052 = vadd.f32 %v3891, %v4051
        %v4053 = vpop.f32.mrb[0].mxu0
        %v4054 = vpop.f32.mrb[0].mxu0
        %v4055 = vadd.f32 %v3894, %v4054
        %v4056 = vpop.f32.mrb[0].mxu0
        %4057 = vmatprep.mubr.bf16.mxu0 0
        %4058 = vmatmul.mubr.bf16.gmra.mrb[0].mxu0 %v2550
        %v4059 = vpop.f32.mrb[0].mxu0
        %v4060 = vadd.f32 %v3899, %v4059
        %v4061 = vpop.f32.mrb[0].mxu0
        %v4062 = vpop.f32.mrb[0].mxu0
        %v4063 = vadd.f32 %v3902, %v4062
        %v4064 = vpop.f32.mrb[0].mxu0
        %4065 = vmatprep.mubr.bf16.mxu0 0
        %4066 = vmatmul.mubr.bf16.gmra.mrb[0].mxu0 %v2551
        %v4067 = vpop.f32.mrb[0].mxu0
        %v4068 = vadd.f32 %v3907, %v4067
        %v4069 = vpop.f32.mrb[0].mxu0
        %v4070 = vpop.f32.mrb[0].mxu0
        %v4071 = vadd.f32 %v3910, %v4070
        %v4072 = vpop.f32.mrb[0].mxu0
        %4073 = vmatprep.mubr.bf16.mxu0 0
        %4074 = vmatmul.mubr.bf16.gmra.mrb[0].mxu0 %v2552
        %v4075 = vpop.f32.mrb[0].mxu0
        %v4076 = vadd.f32 %v3915, %v4075
        %v4077 = vpop.f32.mrb[0].mxu0
        %v4078 = vpop.f32.mrb[0].mxu0
        %v4079 = vadd.f32 %v3918, %v4078
        %v4080 = vpop.f32.mrb[0].mxu0
        %4081 = vmatprep.mubr.bf16.mxu0 0
        %4082 = vmatmul.mubr.bf16.gmra.mrb[0].mxu0 %v2553
        %v4083 = vpop.f32.mrb[0].mxu0
        %v4084 = vadd.f32 %v3923, %v4083
        %v4085 = vpop.f32.mrb[0].mxu0
        %v4086 = vpop.f32.mrb[0].mxu0
        %v4087 = vadd.f32 %v3926, %v4086
        %v4088 = vpop.f32.mrb[0].mxu0
        %4089 = vmatprep.mubr.bf16.mxu0 0
        %4090 = vmatmul.mubr.bf16.gmra.mrb[0].mxu0 %v2552
        %v4091 = vpop.f32.mrb[0].mxu0
        %v4092 = vadd.f32 %v3931, %v4091
        %v4093 = vpop.f32.mrb[0].mxu0
        %v4094 = vpop.f32.mrb[0].mxu0
        %v4095 = vadd.f32 %v3934, %v4094
        %v4096 = vpop.f32.mrb[0].mxu0
        %4097 = vdwg.mxu0
        %v4098 = vadd.f32 %v3457, %v3972
        %v4099 = vadd.f32 %v3460, %v3975
        %v4100 = vadd.f32 %v3465, %v3980
        %v4101 = vadd.f32 %v3468, %v3983
        %v4102 = vadd.f32 %v3473, %v3988
        %v4103 = vadd.f32 %v3476, %v3991
        %v4104 = vadd.f32 %v3481, %v3996
        %v4105 = vadd.f32 %v3484, %v3999
        %v4106 = vadd.f32 %v3489, %v4004
        %v4107 = vadd.f32 %v3492, %v4007
        %v4108 = vadd.f32 %v3497, %v4012
        %v4109 = vadd.f32 %v3500, %v4015
        %v4110 = vadd.f32 %v3505, %v4020
        %v4111 = vadd.f32 %v3508, %v4023
        %v4112 = vadd.f32 %v3513, %v4028
        %v4113 = vadd.f32 %v3516, %v4031
        %v4114 = vadd.f32 %v3521, %v4036
        %v4115 = vadd.f32 %v3524, %v4039
        %v4116 = vadd.f32 %v3529, %v4044
        %v4117 = vadd.f32 %v3532, %v4047
        %v4118 = vadd.f32 %v3537, %v4052
        %v4119 = vadd.f32 %v3540, %v4055
        %v4120 = vadd.f32 %v3545, %v4060
        %v4121 = vadd.f32 %v3548, %v4063
        %v4122 = vadd.f32 %v3553, %v4068
        %v4123 = vadd.f32 %v3556, %v4071
        %v4124 = vadd.f32 %v3561, %v4076
        %v4125 = vadd.f32 %v3564, %v4079
        %v4126 = vadd.f32 %v3569, %v4084
        %v4127 = vadd.f32 %v3572, %v4087
        %v4128 = vadd.f32 %v3577, %v4092
        %v4129 = vadd.f32 %v3580, %v4095
        %v4130 = vadd.f32 %v4098, %v4099
        %v4131 = vadd.f32 %v4130, %v4100
        %v4132 = vadd.f32 %v4131, %v4101
        %v4133 = vadd.f32 %v4132, %v4102
        %v4134 = vadd.f32 %v4133, %v4103
        %v4135 = vadd.f32 %v4134, %v4104
        %v4136 = vadd.f32 %v4135, %v4105
        %v4137 = vadd.f32 %v4136, %v4106
        %v4138 = vadd.f32 %v4137, %v4107
        %v4139 = vadd.f32 %v4138, %v4108
        %v4140 = vadd.f32 %v4139, %v4109
        %v4141 = vadd.f32 %v4140, %v4110
        %v4142 = vadd.f32 %v4141, %v4111
        %v4143 = vadd.f32 %v4142, %v4112
        %v4144 = vadd.f32 %v4143, %v4113
        %v4145 = vadd.f32 %v4144, %v4114
        %v4146 = vadd.f32 %v4145, %v4115
        %v4147 = vadd.f32 %v4146, %v4116
        %v4148 = vadd.f32 %v4147, %v4117
        %v4149 = vadd.f32 %v4148, %v4118
        %v4150 = vadd.f32 %v4149, %v4119
        %v4151 = vadd.f32 %v4150, %v4120
        %v4152 = vadd.f32 %v4151, %v4121
        %v4153 = vadd.f32 %v4152, %v4122
        %v4154 = vadd.f32 %v4153, %v4123
        %v4155 = vadd.f32 %v4154, %v4124
        %v4156 = vadd.f32 %v4155, %v4125
        %v4157 = vadd.f32 %v4156, %v4126
        %v4158 = vadd.f32 %v4157, %v4127
        %v4159 = vadd.f32 %v4158, %v4128
        %v4160 = vadd.f32 %v4159, %v4129
        %v4161 = vrot.slane %v4160, 4
        %v4162 = vadd.f32 %v4160, %v4161
        %v4163 = vrot.slane %v4162, 2
        %v4164 = vadd.f32 %v4162, %v4163
        %v4165 = vrot.slane %v4164, 1
        %v4166 = vadd.f32 %v4164, %v4165
        %v4167 = vmul.f32 %v4098, %v4098
        %v4168 = vmul.f32 %v4099, %v4099
        %v4169 = vmul.f32 %v4100, %v4100
        %v4170 = vmul.f32 %v4101, %v4101
        %v4171 = vmul.f32 %v4102, %v4102
        %v4172 = vmul.f32 %v4103, %v4103
        %v4173 = vmul.f32 %v4104, %v4104
        %v4174 = vmul.f32 %v4105, %v4105
        %v4175 = vmul.f32 %v4106, %v4106
        %v4176 = vmul.f32 %v4107, %v4107
        %v4177 = vmul.f32 %v4108, %v4108
        %v4178 = vmul.f32 %v4109, %v4109
        %v4179 = vmul.f32 %v4110, %v4110
        %v4180 = vmul.f32 %v4111, %v4111
        %v4181 = vmul.f32 %v4112, %v4112
        %v4182 = vmul.f32 %v4113, %v4113
        %v4183 = vmul.f32 %v4114, %v4114
        %v4184 = vmul.f32 %v4115, %v4115
        %v4185 = vmul.f32 %v4116, %v4116
        %v4186 = vmul.f32 %v4117, %v4117
        %v4187 = vmul.f32 %v4118, %v4118
        %v4188 = vmul.f32 %v4119, %v4119
        %v4189 = vmul.f32 %v4120, %v4120
        %v4190 = vmul.f32 %v4121, %v4121
        %v4191 = vmul.f32 %v4122, %v4122
        %v4192 = vmul.f32 %v4123, %v4123
        %v4193 = vmul.f32 %v4124, %v4124
        %v4194 = vmul.f32 %v4125, %v4125
        %v4195 = vmul.f32 %v4126, %v4126
        %v4196 = vmul.f32 %v4127, %v4127
        %v4197 = vmul.f32 %v4128, %v4128
        %v4198 = vmul.f32 %v4129, %v4129
        %v4199 = vadd.f32 %v4167, %v4168
        %v4200 = vadd.f32 %v4199, %v4169
        %v4201 = vadd.f32 %v4200, %v4170
        %v4202 = vadd.f32 %v4201, %v4171
        %v4203 = vadd.f32 %v4202, %v4172
        %v4204 = vadd.f32 %v4203, %v4173
        %v4205 = vadd.f32 %v4204, %v4174
        %v4206 = vadd.f32 %v4205, %v4175
        %v4207 = vadd.f32 %v4206, %v4176
        %v4208 = vadd.f32 %v4207, %v4177
        %v4209 = vadd.f32 %v4208, %v4178
        %v4210 = vadd.f32 %v4209, %v4179
        %v4211 = vadd.f32 %v4210, %v4180
        %v4212 = vadd.f32 %v4211, %v4181
        %v4213 = vadd.f32 %v4212, %v4182
        %v4214 = vadd.f32 %v4213, %v4183
        %v4215 = vadd.f32 %v4214, %v4184
        %v4216 = vadd.f32 %v4215, %v4185
        %v4217 = vadd.f32 %v4216, %v4186
        %v4218 = vadd.f32 %v4217, %v4187
        %v4219 = vadd.f32 %v4218, %v4188
        %v4220 = vadd.f32 %v4219, %v4189
        %v4221 = vadd.f32 %v4220, %v4190
        %v4222 = vadd.f32 %v4221, %v4191
        %v4223 = vadd.f32 %v4222, %v4192
        %v4224 = vadd.f32 %v4223, %v4193
        %v4225 = vadd.f32 %v4224, %v4194
        %v4226 = vadd.f32 %v4225, %v4195
        %v4227 = vadd.f32 %v4226, %v4196
        %v4228 = vadd.f32 %v4227, %v4197
        %v4229 = vadd.f32 %v4228, %v4198
        %v4230 = vrot.slane %v4229, 4
        %v4231 = vadd.f32 %v4229, %v4230
        %v4232 = vrot.slane %v4231, 2
        %v4233 = vadd.f32 %v4231, %v4232
        %v4234 = vrot.slane %v4233, 1
        %v4235 = vadd.f32 %v4233, %v4234
        %v4236 = vmul.f32 %v4166, 0.00390625
        %v4237 = vmul.f32 %v4235, 0.00390625
        %v4238 = vmul.f32 %v4236, %v4236
        %v4239 = vsub.f32 %v4237, %v4238
        %v4240 = vmax.f32 %v4239, 0.0
        %v4241 = vsub.f32 %v4098, %v4236
        %v4242 = vsub.f32 %v4099, %v4236
        %v4243 = vsub.f32 %v4100, %v4236
        %v4244 = vsub.f32 %v4101, %v4236
        %v4245 = vsub.f32 %v4102, %v4236
        %v4246 = vsub.f32 %v4103, %v4236
        %v4247 = vsub.f32 %v4104, %v4236
        %v4248 = vsub.f32 %v4105, %v4236
        %v4249 = vsub.f32 %v4106, %v4236
        %v4250 = vsub.f32 %v4107, %v4236
        %v4251 = vsub.f32 %v4108, %v4236
        %v4252 = vsub.f32 %v4109, %v4236
        %v4253 = vsub.f32 %v4110, %v4236
        %v4254 = vsub.f32 %v4111, %v4236
        %v4255 = vsub.f32 %v4112, %v4236
        %v4256 = vsub.f32 %v4113, %v4236
        %v4257 = vsub.f32 %v4114, %v4236
        %v4258 = vsub.f32 %v4115, %v4236
        %v4259 = vsub.f32 %v4116, %v4236
        %v4260 = vsub.f32 %v4117, %v4236
        %v4261 = vsub.f32 %v4118, %v4236
        %v4262 = vsub.f32 %v4119, %v4236
        %v4263 = vsub.f32 %v4120, %v4236
        %v4264 = vsub.f32 %v4121, %v4236
        %v4265 = vsub.f32 %v4122, %v4236
        %v4266 = vsub.f32 %v4123, %v4236
        %v4267 = vsub.f32 %v4124, %v4236
        %v4268 = vsub.f32 %v4125, %v4236
        %v4269 = vsub.f32 %v4126, %v4236
        %v4270 = vsub.f32 %v4127, %v4236
        %v4271 = vsub.f32 %v4128, %v4236
        %v4272 = vsub.f32 %v4129, %v4236
        %v4273 = vadd.f32 %v4240, 1e-05
        %v4274 = vrsqrt.pop %v4273
        %v4275 = vmul.f32 %v4241, %v4274
        %v4276 = vmul.f32 %v4242, %v4274
        %v4277 = vmul.f32 %v4243, %v4274
        %v4278 = vmul.f32 %v4244, %v4274
        %v4279 = vmul.f32 %v4245, %v4274
        %v4280 = vmul.f32 %v4246, %v4274
        %v4281 = vmul.f32 %v4247, %v4274
        %v4282 = vmul.f32 %v4248, %v4274
        %v4283 = vmul.f32 %v4249, %v4274
        %v4284 = vmul.f32 %v4250, %v4274
        %v4285 = vmul.f32 %v4251, %v4274
        %v4286 = vmul.f32 %v4252, %v4274
        %v4287 = vmul.f32 %v4253, %v4274
        %v4288 = vmul.f32 %v4254, %v4274
        %v4289 = vmul.f32 %v4255, %v4274
        %v4290 = vmul.f32 %v4256, %v4274
        %v4291 = vmul.f32 %v4257, %v4274
        %v4292 = vmul.f32 %v4258, %v4274
        %v4293 = vmul.f32 %v4259, %v4274
        %v4294 = vmul.f32 %v4260, %v4274
        %v4295 = vmul.f32 %v4261, %v4274
        %v4296 = vmul.f32 %v4262, %v4274
        %v4297 = vmul.f32 %v4263, %v4274
        %v4298 = vmul.f32 %v4264, %v4274
        %v4299 = vmul.f32 %v4265, %v4274
        %v4300 = vmul.f32 %v4266, %v4274
        %v4301 = vmul.f32 %v4267, %v4274
        %v4302 = vmul.f32 %v4268, %v4274
        %v4303 = vmul.f32 %v4269, %v4274
        %v4304 = vmul.f32 %v4270, %v4274
        %v4305 = vmul.f32 %v4271, %v4274
        %v4306 = vmul.f32 %v4272, %v4274
        %v4307 = vadd.f32 %v219, %v4275
        %v4308 = vadd.f32 %v220, %v4276
        %v4309 = vadd.f32 %v221, %v4277
        %v4310 = vadd.f32 %v222, %v4278
        %v4311 = vadd.f32 %v223, %v4279
        %v4312 = vadd.f32 %v224, %v4280
        %v4313 = vadd.f32 %v225, %v4281
        %v4314 = vadd.f32 %v226, %v4282
        %v4315 = vadd.f32 %v227, %v4283
        %v4316 = vadd.f32 %v228, %v4284
        %v4317 = vadd.f32 %v229, %v4285
        %v4318 = vadd.f32 %v230, %v4286
        %v4319 = vadd.f32 %v231, %v4287
        %v4320 = vadd.f32 %v232, %v4288
        %v4321 = vadd.f32 %v233, %v4289
        %v4322 = vadd.f32 %v234, %v4290
        %v4323 = vadd.f32 %v235, %v4291
        %v4324 = vadd.f32 %v236, %v4292
        %v4325 = vadd.f32 %v237, %v4293
        %v4326 = vadd.f32 %v238, %v4294
        %v4327 = vadd.f32 %v239, %v4295
        %v4328 = vadd.f32 %v240, %v4296
        %v4329 = vadd.f32 %v241, %v4297
        %v4330 = vadd.f32 %v242, %v4298
        %v4331 = vadd.f32 %v243, %v4299
        %v4332 = vadd.f32 %v244, %v4300
        %v4333 = vadd.f32 %v245, %v4301
        %v4334 = vadd.f32 %v246, %v4302
        %v4335 = vadd.f32 %v247, %v4303
        %v4336 = vadd.f32 %v248, %v4304
        %v4337 = vadd.f32 %v249, %v4305
        %v4338 = vadd.f32 %v250, %v4306
        %4339 = vst [vmem:[%s217] sm:$0xff] %v4307
        %4340 = vst [vmem:[%s217 + $0x8] sm:$0xff] %v4308
        %4341 = vst [vmem:[%s217 + $0x10] sm:$0xff] %v4309
        %4342 = vst [vmem:[%s217 + $0x18] sm:$0xff] %v4310
        %4343 = vst [vmem:[%s217 + $0x20] sm:$0xff] %v4311
        %4344 = vst [vmem:[%s217 + $0x28] sm:$0xff] %v4312
        %4345 = vst [vmem:[%s217 + $0x30] sm:$0xff] %v4313
        %4346 = vst [vmem:[%s217 + $0x38] sm:$0xff] %v4314
        %4347 = vst [vmem:[%s217 + $0x40] sm:$0xff] %v4315
        %4348 = vst [vmem:[%s217 + $0x48] sm:$0xff] %v4316
        %4349 = vst [vmem:[%s217 + $0x50] sm:$0xff] %v4317
        %4350 = vst [vmem:[%s217 + $0x58] sm:$0xff] %v4318
        %4351 = vst [vmem:[%s217 + $0x60] sm:$0xff] %v4319
        %4352 = vst [vmem:[%s217 + $0x68] sm:$0xff] %v4320
        %4353 = vst [vmem:[%s217 + $0x70] sm:$0xff] %v4321
        %4354 = vst [vmem:[%s217 + $0x78] sm:$0xff] %v4322
        %4355 = vst [vmem:[%s217 + $0x80] sm:$0xff] %v4323
        %4356 = vst [vmem:[%s217 + $0x88] sm:$0xff] %v4324
        %4357 = vst [vmem:[%s217 + $0x90] sm:$0xff] %v4325
        %4358 = vst [vmem:[%s217 + $0x98] sm:$0xff] %v4326
        %4359 = vst [vmem:[%s217 + $0xa0] sm:$0xff] %v4327
        %4360 = vst [vmem:[%s217 + $0xa8] sm:$0xff] %v4328
        %4361 = vst [vmem:[%s217 + $0xb0] sm:$0xff] %v4329
        %4362 = vst [vmem:[%s217 + $0xb8] sm:$0xff] %v4330
        %4363 = vst [vmem:[%s217 + $0xc0] sm:$0xff] %v4331
        %4364 = vst [vmem:[%s217 + $0xc8] sm:$0xff] %v4332
        %4365 = vst [vmem:[%s217 + $0xd0] sm:$0xff] %v4333
        %4366 = vst [vmem:[%s217 + $0xd8] sm:$0xff] %v4334
        %4367 = vst [vmem:[%s217 + $0xe0] sm:$0xff] %v4335
        %4368 = vst [vmem:[%s217 + $0xe8] sm:$0xff] %v4336
        %4369 = vst [vmem:[%s217 + $0xf0] sm:$0xff] %v4337
        %4370 = vst [vmem:[%s217 + $0xf8] sm:$0xff] %v4338
        %s4371 = sand.u32 %s97, 1
        %s4372 = scalar_lea.sflag [#allocation4], %s4371
        %s4373 = sand.u32 %s97, 1
        %s4374 = smul.addr %s4373, 256
        %s4375 = scalar_lea.vmem [#allocation8], %s4374
        // Predicated region
        $region45: #{tpu_custom_call.1} parent=31 // pred_check
          %p4376 = pneg %p107
        $region46: #{tpu_custom_call.1} parent=31 // pred_check_branch
          %4378 = sbr.rel (%p4376) target = $region48
        $region47: #{tpu_custom_call.1} parent=31 // pred_region
          %s4380 = ssub.s32 4096, 4096
          %4381 = vsyncadd %s4372, %s4380
          %s4382 = smul.addr %s21, 32
          %s4383 = smul.addr %s4382, 128
          %s4384 = scalar_lea.hbm %s3, %s4383
          %s4385 = sshll.u32 %s4375, 4
          %s4386 = int_to_ptr.vmem [resolvable:$true] %s4385
          %4391 = dma.vmem_to_hbm [thread:$0]  %s4386, 4096, %s4384, %s4372, 128, 128, 8
        $region48: #{tpu_custom_call.1} parent=31 // pred_fallthru
          _
      $region32: #{tpu_custom_call.1} parent=5 // pred_fallthru
        _
      %p4392 = scmp.le.s32.totalorder 2, %s16
      // Predicated region
      $region49: #{tpu_custom_call.1} parent=5 // pred_check
        %p4393 = pneg %p4392
      $region50: #{tpu_custom_call.1} parent=5 // pred_check_branch
        %4395 = sbr.rel (%p4393) target = $region52
      $region51: #{tpu_custom_call.1} parent=5 // pred_region
        %s4396 = ssub.s32 %s16, 2
        // Predicated region
        $region53: #{tpu_custom_call.1} parent=51 // pred_check
          %p4397 = pneg %p113
        $region54: #{tpu_custom_call.1} parent=51 // pred_check_branch
          %4399 = sbr.rel (%p4397) target = $region56
        $region55: #{tpu_custom_call.1} parent=51 // pred_region
          %s4400 = sand.u32 %s98, 1
          %s4401 = scalar_lea.sflag [#allocation4], %s4400
          %s4402 = sand.u32 %s98, 1
          %s4403 = smul.addr %s4402, 256
          %s4404 = scalar_lea.vmem [#allocation8], %s4403
          %4405 = dma.done %s4401, 4096
        $region56: #{tpu_custom_call.1} parent=51 // pred_fallthru
          _
      $region52: #{tpu_custom_call.1} parent=5 // pred_fallthru
        _
    $region6: #{tpu_custom_call.1} parent=1 // loop_footer
      %s20 = sadd.s32 1, %s16
    $region7: #{tpu_custom_call.1} parent=1 // loop_footer_branch
      %15 = sbr.rel target = $region3
    $region8: #{tpu_custom_call.1} parent=1 // loop_exit
      _
    %4406 = vsyncpa [#allocation3], 1
    %s4407 = scalar_lea.sflag [#allocation3], 1
    %4408 = vsyncpa %s4407, 1
    %4409 = vsyncpa [#allocation6], 1
    %4410 = vsyncpa [#allocation4], 1
    %s4411 = scalar_lea.sflag [#allocation4], 1
    %4412 = vsyncpa %s4411, 1

</llo_original>
